<compile_context>
chip_gen: v5e
topology: v5e:2x2
jax: 0.10.0
libtpu: 0.0.40
codegen_flags: <defaults>
</compile_context>

<pallas_src>
import math
import functools

import jax
import jax.numpy as jnp
from jax.experimental import pallas as pl
from jax.experimental.pallas import tpu as pltpu

BN_EPS = 1e-5
IN_EPS = 1e-5

# Tile knobs.
K_WHOLE_MAX = 2048   # keep K un-tiled (single k step, no accumulator) up to this
TK_TILE = 2048       # reduction tile when K is tiled (weight block <= 2 MB bf16)
TM_MAX = 128


def _round_up(a, b):
    return -(-a // b) * b


# ------------- fused matmul + shift + residual + ReLU kernels -----------------

def _mm_single_kernel(a_ref, w_ref, t_ref, *rest, relu, has_res):
    # Single k step: no accumulator scratch, compute + epilogue + direct store.
    if has_res:
        r_ref, o_ref = rest
    else:
        (o_ref,) = rest
        r_ref = None
    y = jnp.dot(a_ref[...], w_ref[...], preferred_element_type=jnp.float32)
    y = y + t_ref[...]
    if has_res:
        y = y + r_ref[...]
    if relu:
        y = jnp.maximum(y, 0.0)
    o_ref[...] = y


def _mm_multi_kernel(a_ref, w_ref, t_ref, *rest, relu, has_res):
    # General k-tiled path with f32 accumulator (not exercised at these shapes).
    if has_res:
        r_ref, o_ref, acc_ref = rest
    else:
        o_ref, acc_ref = rest
        r_ref = None

    @pl.when(pl.program_id(2) == 0)
    def _():
        acc_ref[...] = jnp.zeros_like(acc_ref)

    acc_ref[...] += jnp.dot(a_ref[...], w_ref[...],
                            preferred_element_type=jnp.float32)

    @pl.when(pl.program_id(2) == pl.num_programs(2) - 1)
    def _():
        y = acc_ref[...] + t_ref[...]
        if has_res:
            y = y + r_ref[...]
        if relu:
            y = jnp.maximum(y, 0.0)
        o_ref[...] = y


def fused_matmul(a, w, shift, residual=None, relu=False):
    """y = relu?((a @ w) + shift + residual?) ; bf16 MXU, f32 accumulate.

    a: [M, K], w: [K, N] (BN scale pre-folded into columns, bf16),
    shift: [N] f32, residual: optional [M, N] f32.  Returns [M, N] f32.
    Internally pads M to 8, K and N to 128 (lane-dense loads/stores).
    """
    M, K = a.shape
    K2, N = w.shape
    assert K == K2

    Np = max(_round_up(N, 128), 128)
    Kp = _round_up(K, 128)

    # Adaptive M tiling: avoid padding tiny M up to 128.
    Mp = _round_up(M, 8)
    if Mp <= 512:
        tm = Mp
    else:
        tm = TM_MAX
        Mp = _round_up(M, TM_MAX)

    # K: whole when it fits (always true here with the center-tap shortcut).
    if Kp <= K_WHOLE_MAX:
        tk = Kp
    else:
        tk = TK_TILE
        Kp = _round_up(Kp, tk)
    single_k = (tk == Kp)

    # N tiling: split the weight stream for wide layers so both v7x TensorCores
    # get a parallel tile; neutral on single-TC v5e/v6e.
    if Np >= 512 and Np % 256 == 0:
        tn = 256
    else:
        tn = Np

    a = a.astype(jnp.bfloat16)
    w = w.astype(jnp.bfloat16)
    if Mp != M or Kp != K:
        a = jnp.pad(a, ((0, Mp - M), (0, Kp - K)))
    if Kp != K or Np != N:
        w = jnp.pad(w, ((0, Kp - K), (0, Np - N)))

    shift2 = shift.reshape(1, N).astype(jnp.float32)
    if Np != N:
        shift2 = jnp.pad(shift2, ((0, 0), (0, Np - N)))

    has_res = residual is not None
    args = [a, w, shift2]
    if has_res:
        r = residual.astype(jnp.float32)
        if Mp != M or Np != N:
            r = jnp.pad(r, ((0, Mp - M), (0, Np - N)))
        args.append(r)

    if single_k:
        in_specs = [
            pl.BlockSpec((tm, Kp), lambda i, j: (i, 0)),
            pl.BlockSpec((Kp, tn), lambda i, j: (0, j)),
            pl.BlockSpec((1, tn), lambda i, j: (0, j)),
        ]
        if has_res:
            in_specs.append(pl.BlockSpec((tm, tn), lambda i, j: (i, j)))
        out = pl.pallas_call(
            functools.partial(_mm_single_kernel, relu=relu, has_res=has_res),
            out_shape=jax.ShapeDtypeStruct((Mp, Np), jnp.float32),
            grid=(Mp // tm, Np // tn),
            in_specs=in_specs,
            out_specs=pl.BlockSpec((tm, tn), lambda i, j: (i, j)),
            compiler_params=pltpu.CompilerParams(
                dimension_semantics=("parallel", "parallel")),
        )(*args)
    else:
        in_specs = [
            pl.BlockSpec((tm, tk), lambda i, j, k: (i, k)),
            pl.BlockSpec((tk, tn), lambda i, j, k: (k, j)),
            pl.BlockSpec((1, tn), lambda i, j, k: (0, j)),
        ]
        if has_res:
            in_specs.append(pl.BlockSpec((tm, tn), lambda i, j, k: (i, j)))
        out = pl.pallas_call(
            functools.partial(_mm_multi_kernel, relu=relu, has_res=has_res),
            out_shape=jax.ShapeDtypeStruct((Mp, Np), jnp.float32),
            grid=(Mp // tm, Np // tn, Kp // tk),
            in_specs=in_specs,
            out_specs=pl.BlockSpec((tm, tn), lambda i, j, k: (i, j)),
            scratch_shapes=[pltpu.VMEM((tm, tn), jnp.float32)],
            compiler_params=pltpu.CompilerParams(
                dimension_semantics=("parallel", "parallel", "arbitrary")),
        )(*args)

    if Mp != M or Np != N:
        out = out[:M, :N]
    return out


# ---------------------------- conv wrappers -----------------------------------

def conv3d_bn(x, w, stride, shift, residual=None, relu=False):
    """3x3x3 ME conv (dense analog, pad=1) fused with BN-eval epilogue.

    x: [B, D, H, W, Cin] f32, w: [27*Cin, Cout] bf16 (scale pre-folded, rows in
    (kd, kh, kw, cin) order), residual: flat [M, Cout].
    """
    B, D, H, W, Cin = x.shape
    Cout = w.shape[-1]
    Do = (D - 1) // stride + 1
    Ho = (H - 1) // stride + 1
    Wo = (W - 1) // stride + 1
    M = B * Do * Ho * Wo

    if D == 1 and H == 1 and W == 1:
        # Center-tap shortcut: with a 1x1x1 input every non-center tap reads
        # zero padding, so the conv is exactly a 1x1 matmul on the center rows.
        w_c = w[13 * Cin:14 * Cin, :]
        patches = x.reshape(M, Cin)
        out = fused_matmul(patches, w_c, shift, residual=residual, relu=relu)
        return out.reshape(B, Do, Ho, Wo, Cout)

    # General path: patch gather as one fused XLA pad/slice/concat in bf16.
    xb = x.astype(jnp.bfloat16)
    xp = jnp.pad(xb, ((0, 0), (1, 1), (1, 1), (1, 1), (0, 0)))
    cols = []
    for kd in range(3):
        for kh in range(3):
            for kw in range(3):
                sl = jax.lax.slice(
                    xp,
                    (0, kd, kh, kw, 0),
                    (B,
                     kd + stride * (Do - 1) + 1,
                     kh + stride * (Ho - 1) + 1,
                     kw + stride * (Wo - 1) + 1,
                     Cin),
                    (1, stride, stride, stride, 1))
                cols.append(sl.reshape(M, Cin))
    patches = jnp.concatenate(cols, axis=1)            # [M, 27*Cin] bf16
    # TODO(synk): for large voxel grids, fuse this window gather into the matmul
    # (tap as a reduction grid axis over the padded activation) to avoid the
    # [M, 27*Cin] HBM materialization; negligible at 16^3 inputs.

    out = fused_matmul(patches, w, shift, residual=residual, relu=relu)
    return out.reshape(B, Do, Ho, Wo, Cout)


def conv1x1_bn(x, w, stride, shift):
    """Downsample branch: 1x1x1 conv with coordinate stride + BN-eval (fused)."""
    xs = x[:, ::stride, ::stride, ::stride, :]
    B, Do, Ho, Wo, Cin = xs.shape
    return fused_matmul(xs.reshape(-1, Cin), w, shift)  # flat [M, Cout] f32


# ---------------------------- elementwise kernels ------------------------------

def _instance_norm_relu_kernel(x_ref, o_ref, *, eps):
    x = x_ref[...]                                     # [1, S, C]
    mean = jnp.mean(x, axis=1, keepdims=True)
    var = jnp.mean(jnp.square(x - mean), axis=1, keepdims=True)
    y = (x - mean) * jax.lax.rsqrt(var + eps)
    o_ref[...] = jnp.maximum(y, 0.0)


def instance_norm_relu(x, eps=IN_EPS):
    """x: [B, S, C]; normalize over S per (batch, channel), then ReLU."""
    B, S, C = x.shape
    return pl.pallas_call(
        functools.partial(_instance_norm_relu_kernel, eps=eps),
        out_shape=jax.ShapeDtypeStruct((B, S, C), jnp.float32),
        grid=(B,),
        in_specs=[pl.BlockSpec((1, S, C), lambda b: (b, 0, 0))],
        out_specs=pl.BlockSpec((1, S, C), lambda b: (b, 0, 0)),
        compiler_params=pltpu.CompilerParams(
            dimension_semantics=("parallel",)),
    )(x)


def max_pool_2x2x2(x):
    """MinkowskiMaxPooling(kernel=2, stride=2): free reshape + 8-way max tree.
    TODO(synk): odd trailing voxels are dropped (floor), as before."""
    B, D, H, W, C = x.shape
    Do, Ho, Wo = D // 2, H // 2, W // 2
    xr = x[:, :Do * 2, :Ho * 2, :Wo * 2, :].reshape(B, Do, 2, Ho, 2, Wo, 2, C)
    return jnp.max(xr, axis=(2, 4, 6))


# ------------------------------- model -----------------------------------------

def basic_block(x, p, stride):
    B = x.shape[0]
    Cin = x.shape[-1]
    # conv1 (3x3x3, stride) + BN1 + ReLU  -> one fused Pallas call
    out = conv3d_bn(x, p["conv1_w"], stride, p["bn1_shift"], relu=True)
    Do, Ho, Wo = out.shape[1:4]
    M = B * Do * Ho * Wo
    # residual branch (downsample conv1x1 + BN, fused)
    if "ds_w" in p:
        res = conv1x1_bn(x, p["ds_w"], stride, p["ds_bn_shift"])
    else:
        res = x.reshape(M, Cin)
    # conv2 (3x3x3, stride 1) + BN2 + residual add + ReLU -> one fused call
    out = conv3d_bn(out, p["conv2_w"], 1, p["bn2_shift"],
                    residual=res, relu=True)
    return out


def resnet_forward(x, params):
    B = x.shape[0]
    # conv1 stem: conv3 s2 -> InstanceNorm -> ReLU -> MaxPool(2,2)
    co = params["stem_conv"].shape[-1]
    x = conv3d_bn(x, params["stem_conv"], 2, jnp.zeros((co,), jnp.float32))
    sp = x.shape[1:4]
    x = instance_norm_relu(x.reshape(B, sp[0] * sp[1] * sp[2], -1))
    x = x.reshape(B, *sp, -1)
    x = max_pool_2x2x2(x)
    # layer1..layer4 (BasicBlock, LAYERS=(1,1,1,1), stride=2 each)
    for blk in params["blocks"]:
        x = basic_block(x, blk, stride=2)
    # conv5: Dropout -> conv3 s3 -> InstanceNorm -> GELU
    # TODO(synk): MinkowskiDropout is stochastic in training; eval-mode identity.
    co = params["conv5_w"].shape[-1]
    x = conv3d_bn(x, params["conv5_w"], 3, jnp.zeros((co,), jnp.float32))
    # Tiny tail ([B, 1, 512] here): plain jnp (XLA fuses), exact-erf GELU.
    # NOTE: at this dense input size conv5 has a single output voxel, so the
    # instance norm maps it to exactly zero (mathematically consistent).
    Bc, Dc, Hc, Wc, Cc = x.shape
    xf = x.reshape(Bc, Dc * Hc * Wc, Cc)
    mean = jnp.mean(xf, axis=1, keepdims=True)
    var = jnp.mean(jnp.square(xf - mean), axis=1, keepdims=True)
    xf = (xf - mean) * jax.lax.rsqrt(var + IN_EPS)
    xf = jax.nn.gelu(xf, approximate=False)
    pooled = jnp.max(xf, axis=1)                       # MinkowskiGlobalMaxPooling
    # final MinkowskiLinear: tiny [B,C]@[C,out]; plain dot per perf review
    logits = jnp.dot(pooled, params["fc_w"]) + params["fc_b"]
    return logits


# ------------------------------ parameters --------------------------------------

def _conv_weight_f32(key, kvol, cin, cout):
    # kaiming_normal_(mode='fan_out', nonlinearity='relu');
    # stored flat [kvol*cin, cout] with rows in (kd, kh, kw, cin) order.
    std = math.sqrt(2.0 / (cout * kvol))
    return std * jax.random.normal(key, (kvol * cin, cout), dtype=jnp.float32)


def _bn_fold(w_f32, c):
    """Fold BN-eval scale into weight columns; return (bf16 weight, shift)."""
    gamma = jnp.ones((c,), jnp.float32)
    beta = jnp.zeros((c,), jnp.float32)
    mean = jnp.zeros((c,), jnp.float32)
    var = jnp.ones((c,), jnp.float32)
    s = gamma * jax.lax.rsqrt(var + BN_EPS)
    shift = beta - mean * s
    return (w_f32 * s[None, :]).astype(jnp.bfloat16), shift


def init_params(key, in_channels, out_channels):
    keys = jax.random.split(key, 20)
    ki = iter(range(20))
    params = {}
    init_dim = 64
    planes = (64, 128, 256, 512)

    params["stem_conv"] = _conv_weight_f32(
        keys[next(ki)], 27, in_channels, init_dim).astype(jnp.bfloat16)

    blocks = []
    inplanes = init_dim
    for planes_c in planes:
        blk = {}
        blk["conv1_w"], blk["bn1_shift"] = _bn_fold(
            _conv_weight_f32(keys[next(ki)], 27, inplanes, planes_c), planes_c)
        blk["conv2_w"], blk["bn2_shift"] = _bn_fold(
            _conv_weight_f32(keys[next(ki)], 27, planes_c, planes_c), planes_c)
        # stride=2 always -> downsample branch (1x1 conv + BN)
        blk["ds_w"], blk["ds_bn_shift"] = _bn_fold(
            _conv_weight_f32(keys[next(ki)], 1, inplanes, planes_c), planes_c)
        blocks.append(blk)
        inplanes = planes_c
    params["blocks"] = blocks

    params["conv5_w"] = _conv_weight_f32(
        keys[next(ki)], 27, inplanes, inplanes).astype(jnp.bfloat16)

    # nn.Linear default init: uniform(-1/sqrt(fan_in), 1/sqrt(fan_in))
    bound = 1.0 / math.sqrt(inplanes)
    params["fc_w"] = jax.random.uniform(keys[next(ki)], (inplanes, out_channels),
                                        minval=-bound, maxval=bound,
                                        dtype=jnp.float32)
    params["fc_b"] = jax.random.uniform(keys[next(ki)], (out_channels,),
                                        minval=-bound, maxval=bound,
                                        dtype=jnp.float32)
    return params


# --------------------------------- main ------------------------------------------

if __name__ == "__main__":
    key = jax.random.PRNGKey(0)
    kx, kp = jax.random.split(key)

    in_channels, out_channels = 4, 10
    # dense voxel grid [B, D, H, W, C]  (ME SparseTensor densified)
    x = jax.random.normal(kx, (2, 16, 16, 16, in_channels), dtype=jnp.float32)
    params = init_params(kp, in_channels, out_channels)

    fwd = jax.jit(resnet_forward)
    out = fwd(x, params)
    out = jax.block_until_ready(out)
    assert out.shape == (2, out_channels)
    assert bool(jnp.all(jnp.isfinite(out)))
    print("KERNEL_OK")
</pallas_src>

<mosaic_0001>
module attributes {stable_mosaic.version = 11 : i64} {
  func.func @_mm_single_kernel(%arg0: i32, %arg1: i32, %arg2: memref<128x128xbf16, #tpu.memory_space<vmem>>, %arg3: memref<128x128xbf16, #tpu.memory_space<vmem>>, %arg4: memref<1x128xf32, #tpu.memory_space<vmem>>, %arg5: memref<128x128xf32, #tpu.memory_space<vmem>>) attributes {dimension_semantics = [#tpu.dimension_semantics<parallel>, #tpu.dimension_semantics<parallel>], iteration_bounds = array<i64: 8, 1>, scalar_prefetch = 0 : i64, scratch_operands = 0 : i64, tpu.core_type = #tpu.core_type<tc>, window_params = [{transform_indices = @transform_0, window_bounds = array<i64: 128, 128>}, {transform_indices = @transform_1, window_bounds = array<i64: 128, 128>}, {transform_indices = @transform_2, window_bounds = array<i64: 1, 128>}, {transform_indices = @transform_3, window_bounds = array<i64: 128, 128>}]} {
    %c0 = arith.constant 0 : index
    %c0_0 = arith.constant 0 : index
    %0 = vector.load %arg2[%c0, %c0_0] : memref<128x128xbf16, #tpu.memory_space<vmem>>, vector<128x128xbf16>
    %c0_1 = arith.constant 0 : index
    %c0_2 = arith.constant 0 : index
    %1 = vector.load %arg3[%c0_1, %c0_2] : memref<128x128xbf16, #tpu.memory_space<vmem>>, vector<128x128xbf16>
    %cst = arith.constant dense<0.000000e+00> : vector<128x128xf32>
    %2 = tpu.matmul %0, %1, %cst {dimension_numbers = #tpu.dot_dimension_numbers<[1], [0], [0], [1], [0, 0, 1, 1], [], []>} : vector<128x128xbf16>, vector<128x128xbf16>, vector<128x128xf32> -> vector<128x128xf32>
    %c0_3 = arith.constant 0 : index
    %c0_4 = arith.constant 0 : index
    %3 = vector.load %arg4[%c0_3, %c0_4] : memref<1x128xf32, #tpu.memory_space<vmem>>, vector<1x128xf32>
    %4 = vector.broadcast %3 : vector<1x128xf32> to vector<128x128xf32>
    %5 = arith.addf %2, %4 : vector<128x128xf32>
    %c0_5 = arith.constant 0 : index
    %c0_6 = arith.constant 0 : index
    %6 = vector.load %arg5[%c0_5, %c0_6] : memref<128x128xf32, #tpu.memory_space<vmem>>, vector<128x128xf32>
    tpu.vector_store %arg5[%c0_5, %c0_6], %5 {strides = array<i32>} : memref<128x128xf32, #tpu.memory_space<vmem>>, vector<128x128xf32>,
    return
  }
  func.func @transform_0(%arg0: i32, %arg1: i32) -> (i32, i32) {
    %c0_i32 = arith.constant 0 : i32
    %c0_i32_0 = arith.constant 0 : i32
    return %arg0, %c0_i32 : i32, i32
  }
  func.func @transform_1(%arg0: i32, %arg1: i32) -> (i32, i32) {
    %c0_i32 = arith.constant 0 : i32
    %c0_i32_0 = arith.constant 0 : i32
    return %c0_i32, %arg1 : i32, i32
  }
  func.func @transform_2(%arg0: i32, %arg1: i32) -> (i32, i32) {
    %c0_i32 = arith.constant 0 : i32
    %c0_i32_0 = arith.constant 0 : i32
    return %c0_i32, %arg1 : i32, i32
  }
  func.func @transform_3(%arg0: i32, %arg1: i32) -> (i32, i32) {
    %c0_i32 = arith.constant 0 : i32
    return %arg0, %arg1 : i32, i32
  }
}

module attributes {stable_mosaic.version = 11 : i64} {
  func.func @_instance_norm_relu_kernel(%arg0: i32, %arg1: memref<1x512x64xf32, #tpu.memory_space<vmem>>, %arg2: memref<1x512x64xf32, #tpu.memory_space<vmem>>) attributes {dimension_semantics = [#tpu.dimension_semantics<parallel>], iteration_bounds = array<i64: 2>, scalar_prefetch = 0 : i64, scratch_operands = 0 : i64, tpu.core_type = #tpu.core_type<tc>, window_params = [{transform_indices = @transform_0, window_bounds = array<i64: 1, 512, 64>}, {transform_indices = @transform_1, window_bounds = array<i64: 1, 512, 64>}]} {
    %c0 = arith.constant 0 : index
    %c0_0 = arith.constant 0 : index
    %c0_1 = arith.constant 0 : index
    %0 = vector.load %arg1[%c0, %c0_0, %c0_1] : memref<1x512x64xf32, #tpu.memory_space<vmem>>, vector<1x512x64xf32>
    %cst = arith.constant dense<0.000000e+00> : vector<1x64xf32>
    %1 = vector.multi_reduction <add>, %0, %cst [1] : vector<1x512x64xf32> to vector<1x64xf32>
    %2 = vector.shape_cast %1 : vector<1x64xf32> to vector<1x1x64xf32>
    %cst_2 = arith.constant 5.120000e+02 : f32
    %3 = vector.broadcast %cst_2 : f32 to vector<1x1x64xf32>
    %4 = arith.divf %2, %3 : vector<1x1x64xf32>
    %5 = vector.broadcast %4 : vector<1x1x64xf32> to vector<1x512x64xf32>
    %6 = arith.subf %0, %5 : vector<1x512x64xf32>
    %7 = arith.mulf %6, %6 : vector<1x512x64xf32>
    %cst_3 = arith.constant dense<0.000000e+00> : vector<1x64xf32>
    %8 = vector.multi_reduction <add>, %7, %cst_3 [1] : vector<1x512x64xf32> to vector<1x64xf32>
    %9 = vector.shape_cast %8 : vector<1x64xf32> to vector<1x1x64xf32>
    %cst_4 = arith.constant 5.120000e+02 : f32
    %10 = vector.broadcast %cst_4 : f32 to vector<1x1x64xf32>
    %11 = arith.divf %9, %10 : vector<1x1x64xf32>
    %12 = vector.broadcast %4 : vector<1x1x64xf32> to vector<1x512x64xf32>
    %13 = arith.subf %0, %12 : vector<1x512x64xf32>
    %cst_5 = arith.constant 9.99999974E-6 : f32
    %14 = vector.broadcast %cst_5 : f32 to vector<1x1x64xf32>
    %15 = arith.addf %11, %14 : vector<1x1x64xf32>
    %16 = math.rsqrt %15 : vector<1x1x64xf32>
    %17 = vector.broadcast %16 : vector<1x1x64xf32> to vector<1x512x64xf32>
    %18 = arith.mulf %13, %17 : vector<1x512x64xf32>
    %cst_6 = arith.constant 0.000000e+00 : f32
    %19 = vector.broadcast %cst_6 : f32 to vector<1x512x64xf32>
    %20 = arith.maximumf %18, %19 : vector<1x512x64xf32>
    %c0_7 = arith.constant 0 : index
    %c0_8 = arith.constant 0 : index
    %c0_9 = arith.constant 0 : index
    %21 = vector.load %arg2[%c0_7, %c0_8, %c0_9] : memref<1x512x64xf32, #tpu.memory_space<vmem>>, vector<1x512x64xf32>
    tpu.vector_store %arg2[%c0_7, %c0_8, %c0_9], %20 {strides = array<i32>} : memref<1x512x64xf32, #tpu.memory_space<vmem>>, vector<1x512x64xf32>,
    return
  }
  func.func @transform_0(%arg0: i32) -> (i32, i32, i32) {
    %c0_i32 = arith.constant 0 : i32
    %c0_i32_0 = arith.constant 0 : i32
    %c0_i32_1 = arith.constant 0 : i32
    return %arg0, %c0_i32, %c0_i32_0 : i32, i32, i32
  }
  func.func @transform_1(%arg0: i32) -> (i32, i32, i32) {
    %c0_i32 = arith.constant 0 : i32
    %c0_i32_0 = arith.constant 0 : i32
    %c0_i32_1 = arith.constant 0 : i32
    return %arg0, %c0_i32, %c0_i32_0 : i32, i32, i32
  }
}

module attributes {stable_mosaic.version = 11 : i64} {
  func.func @_mm_single_kernel(%arg0: i32, %arg1: i32, %arg2: memref<16x1792xbf16, #tpu.memory_space<vmem>>, %arg3: memref<1792x128xbf16, #tpu.memory_space<vmem>>, %arg4: memref<1x128xf32, #tpu.memory_space<vmem>>, %arg5: memref<16x128xf32, #tpu.memory_space<vmem>>) attributes {dimension_semantics = [#tpu.dimension_semantics<parallel>, #tpu.dimension_semantics<parallel>], iteration_bounds = array<i64: 1, 1>, scalar_prefetch = 0 : i64, scratch_operands = 0 : i64, tpu.core_type = #tpu.core_type<tc>, window_params = [{transform_indices = @transform_0, window_bounds = array<i64: 16, 1792>}, {transform_indices = @transform_1, window_bounds = array<i64: 1792, 128>}, {transform_indices = @transform_2, window_bounds = array<i64: 1, 128>}, {transform_indices = @transform_3, window_bounds = array<i64: 16, 128>}]} {
    %c0 = arith.constant 0 : index
    %c0_0 = arith.constant 0 : index
    %0 = vector.load %arg2[%c0, %c0_0] : memref<16x1792xbf16, #tpu.memory_space<vmem>>, vector<16x1792xbf16>
    %c0_1 = arith.constant 0 : index
    %c0_2 = arith.constant 0 : index
    %1 = vector.load %arg3[%c0_1, %c0_2] : memref<1792x128xbf16, #tpu.memory_space<vmem>>, vector<1792x128xbf16>
    %cst = arith.constant dense<0.000000e+00> : vector<16x128xf32>
    %2 = tpu.matmul %0, %1, %cst {dimension_numbers = #tpu.dot_dimension_numbers<[1], [0], [0], [1], [0, 0, 1, 1], [], []>} : vector<16x1792xbf16>, vector<1792x128xbf16>, vector<16x128xf32> -> vector<16x128xf32>
    %c0_3 = arith.constant 0 : index
    %c0_4 = arith.constant 0 : index
    %3 = vector.load %arg4[%c0_3, %c0_4] : memref<1x128xf32, #tpu.memory_space<vmem>>, vector<1x128xf32>
    %4 = vector.broadcast %3 : vector<1x128xf32> to vector<16x128xf32>
    %5 = arith.addf %2, %4 : vector<16x128xf32>
    %cst_5 = arith.constant 0.000000e+00 : f32
    %6 = vector.broadcast %cst_5 : f32 to vector<16x128xf32>
    %7 = arith.maximumf %5, %6 : vector<16x128xf32>
    %c0_6 = arith.constant 0 : index
    %c0_7 = arith.constant 0 : index
    %8 = vector.load %arg5[%c0_6, %c0_7] : memref<16x128xf32, #tpu.memory_space<vmem>>, vector<16x128xf32>
    tpu.vector_store %arg5[%c0_6, %c0_7], %7 {strides = array<i32>} : memref<16x128xf32, #tpu.memory_space<vmem>>, vector<16x128xf32>,
    return
  }
  func.func @transform_0(%arg0: i32, %arg1: i32) -> (i32, i32) {
    %c0_i32 = arith.constant 0 : i32
    %c0_i32_0 = arith.constant 0 : i32
    return %arg0, %c0_i32 : i32, i32
  }
  func.func @transform_1(%arg0: i32, %arg1: i32) -> (i32, i32) {
    %c0_i32 = arith.constant 0 : i32
    %c0_i32_0 = arith.constant 0 : i32
    return %c0_i32, %arg1 : i32, i32
  }
  func.func @transform_2(%arg0: i32, %arg1: i32) -> (i32, i32) {
    %c0_i32 = arith.constant 0 : i32
    %c0_i32_0 = arith.constant 0 : i32
    return %c0_i32, %arg1 : i32, i32
  }
  func.func @transform_3(%arg0: i32, %arg1: i32) -> (i32, i32) {
    %c0_i32 = arith.constant 0 : i32
    return %arg0, %arg1 : i32, i32
  }
}

module attributes {stable_mosaic.version = 11 : i64} {
  func.func @_mm_single_kernel(%arg0: i32, %arg1: i32, %arg2: memref<16x128xbf16, #tpu.memory_space<vmem>>, %arg3: memref<128x128xbf16, #tpu.memory_space<vmem>>, %arg4: memref<1x128xf32, #tpu.memory_space<vmem>>, %arg5: memref<16x128xf32, #tpu.memory_space<vmem>>) attributes {dimension_semantics = [#tpu.dimension_semantics<parallel>, #tpu.dimension_semantics<parallel>], iteration_bounds = array<i64: 1, 1>, scalar_prefetch = 0 : i64, scratch_operands = 0 : i64, tpu.core_type = #tpu.core_type<tc>, window_params = [{transform_indices = @transform_0, window_bounds = array<i64: 16, 128>}, {transform_indices = @transform_1, window_bounds = array<i64: 128, 128>}, {transform_indices = @transform_2, window_bounds = array<i64: 1, 128>}, {transform_indices = @transform_3, window_bounds = array<i64: 16, 128>}]} {
    %c0 = arith.constant 0 : index
    %c0_0 = arith.constant 0 : index
    %0 = vector.load %arg2[%c0, %c0_0] : memref<16x128xbf16, #tpu.memory_space<vmem>>, vector<16x128xbf16>
    %c0_1 = arith.constant 0 : index
    %c0_2 = arith.constant 0 : index
    %1 = vector.load %arg3[%c0_1, %c0_2] : memref<128x128xbf16, #tpu.memory_space<vmem>>, vector<128x128xbf16>
    %cst = arith.constant dense<0.000000e+00> : vector<16x128xf32>
    %2 = tpu.matmul %0, %1, %cst {dimension_numbers = #tpu.dot_dimension_numbers<[1], [0], [0], [1], [0, 0, 1, 1], [], []>} : vector<16x128xbf16>, vector<128x128xbf16>, vector<16x128xf32> -> vector<16x128xf32>
    %c0_3 = arith.constant 0 : index
    %c0_4 = arith.constant 0 : index
    %3 = vector.load %arg4[%c0_3, %c0_4] : memref<1x128xf32, #tpu.memory_space<vmem>>, vector<1x128xf32>
    %4 = vector.broadcast %3 : vector<1x128xf32> to vector<16x128xf32>
    %5 = arith.addf %2, %4 : vector<16x128xf32>
    %c0_5 = arith.constant 0 : index
    %c0_6 = arith.constant 0 : index
    %6 = vector.load %arg5[%c0_5, %c0_6] : memref<16x128xf32, #tpu.memory_space<vmem>>, vector<16x128xf32>
    tpu.vector_store %arg5[%c0_5, %c0_6], %5 {strides = array<i32>} : memref<16x128xf32, #tpu.memory_space<vmem>>, vector<16x128xf32>,
    return
  }
  func.func @transform_0(%arg0: i32, %arg1: i32) -> (i32, i32) {
    %c0_i32 = arith.constant 0 : i32
    %c0_i32_0 = arith.constant 0 : i32
    return %arg0, %c0_i32 : i32, i32
  }
  func.func @transform_1(%arg0: i32, %arg1: i32) -> (i32, i32) {
    %c0_i32 = arith.constant 0 : i32
    %c0_i32_0 = arith.constant 0 : i32
    return %c0_i32, %arg1 : i32, i32
  }
  func.func @transform_2(%arg0: i32, %arg1: i32) -> (i32, i32) {
    %c0_i32 = arith.constant 0 : i32
    %c0_i32_0 = arith.constant 0 : i32
    return %c0_i32, %arg1 : i32, i32
  }
  func.func @transform_3(%arg0: i32, %arg1: i32) -> (i32, i32) {
    %c0_i32 = arith.constant 0 : i32
    return %arg0, %arg1 : i32, i32
  }
}

module attributes {stable_mosaic.version = 11 : i64} {
  func.func @_mm_single_kernel(%arg0: i32, %arg1: i32, %arg2: memref<16x1792xbf16, #tpu.memory_space<vmem>>, %arg3: memref<1792x128xbf16, #tpu.memory_space<vmem>>, %arg4: memref<1x128xf32, #tpu.memory_space<vmem>>, %arg5: memref<16x128xf32, #tpu.memory_space<vmem>>, %arg6: memref<16x128xf32, #tpu.memory_space<vmem>>) attributes {dimension_semantics = [#tpu.dimension_semantics<parallel>, #tpu.dimension_semantics<parallel>], iteration_bounds = array<i64: 1, 1>, scalar_prefetch = 0 : i64, scratch_operands = 0 : i64, tpu.core_type = #tpu.core_type<tc>, window_params = [{transform_indices = @transform_0, window_bounds = array<i64: 16, 1792>}, {transform_indices = @transform_1, window_bounds = array<i64: 1792, 128>}, {transform_indices = @transform_2, window_bounds = array<i64: 1, 128>}, {transform_indices = @transform_3, window_bounds = array<i64: 16, 128>}, {transform_indices = @transform_4, window_bounds = array<i64: 16, 128>}]} {
    %c0 = arith.constant 0 : index
    %c0_0 = arith.constant 0 : index
    %0 = vector.load %arg2[%c0, %c0_0] : memref<16x1792xbf16, #tpu.memory_space<vmem>>, vector<16x1792xbf16>
    %c0_1 = arith.constant 0 : index
    %c0_2 = arith.constant 0 : index
    %1 = vector.load %arg3[%c0_1, %c0_2] : memref<1792x128xbf16, #tpu.memory_space<vmem>>, vector<1792x128xbf16>
    %cst = arith.constant dense<0.000000e+00> : vector<16x128xf32>
    %2 = tpu.matmul %0, %1, %cst {dimension_numbers = #tpu.dot_dimension_numbers<[1], [0], [0], [1], [0, 0, 1, 1], [], []>} : vector<16x1792xbf16>, vector<1792x128xbf16>, vector<16x128xf32> -> vector<16x128xf32>
    %c0_3 = arith.constant 0 : index
    %c0_4 = arith.constant 0 : index
    %3 = vector.load %arg4[%c0_3, %c0_4] : memref<1x128xf32, #tpu.memory_space<vmem>>, vector<1x128xf32>
    %4 = vector.broadcast %3 : vector<1x128xf32> to vector<16x128xf32>
    %5 = arith.addf %2, %4 : vector<16x128xf32>
    %c0_5 = arith.constant 0 : index
    %c0_6 = arith.constant 0 : index
    %6 = vector.load %arg5[%c0_5, %c0_6] : memref<16x128xf32, #tpu.memory_space<vmem>>, vector<16x128xf32>
    %7 = arith.addf %5, %6 : vector<16x128xf32>
    %cst_7 = arith.constant 0.000000e+00 : f32
    %8 = vector.broadcast %cst_7 : f32 to vector<16x128xf32>
    %9 = arith.maximumf %7, %8 : vector<16x128xf32>
    %c0_8 = arith.constant 0 : index
    %c0_9 = arith.constant 0 : index
    %10 = vector.load %arg6[%c0_8, %c0_9] : memref<16x128xf32, #tpu.memory_space<vmem>>, vector<16x128xf32>
    tpu.vector_store %arg6[%c0_8, %c0_9], %9 {strides = array<i32>} : memref<16x128xf32, #tpu.memory_space<vmem>>, vector<16x128xf32>,
    return
  }
  func.func @transform_0(%arg0: i32, %arg1: i32) -> (i32, i32) {
    %c0_i32 = arith.constant 0 : i32
    %c0_i32_0 = arith.constant 0 : i32
    return %arg0, %c0_i32 : i32, i32
  }
  func.func @transform_1(%arg0: i32, %arg1: i32) -> (i32, i32) {
    %c0_i32 = arith.constant 0 : i32
    %c0_i32_0 = arith.constant 0 : i32
    return %c0_i32, %arg1 : i32, i32
  }
  func.func @transform_2(%arg0: i32, %arg1: i32) -> (i32, i32) {
    %c0_i32 = arith.constant 0 : i32
    %c0_i32_0 = arith.constant 0 : i32
    return %c0_i32, %arg1 : i32, i32
  }
  func.func @transform_3(%arg0: i32, %arg1: i32) -> (i32, i32) {
    %c0_i32 = arith.constant 0 : i32
    return %arg0, %arg1 : i32, i32
  }
  func.func @transform_4(%arg0: i32, %arg1: i32) -> (i32, i32) {
    %c0_i32 = arith.constant 0 : i32
    return %arg0, %arg1 : i32, i32
  }
}

module attributes {stable_mosaic.version = 11 : i64} {
  func.func @_mm_single_kernel(%arg0: i32, %arg1: i32, %arg2: memref<8x1792xbf16, #tpu.memory_space<vmem>>, %arg3: memref<1792x128xbf16, #tpu.memory_space<vmem>>, %arg4: memref<1x128xf32, #tpu.memory_space<vmem>>, %arg5: memref<8x128xf32, #tpu.memory_space<vmem>>) attributes {dimension_semantics = [#tpu.dimension_semantics<parallel>, #tpu.dimension_semantics<parallel>], iteration_bounds = array<i64: 1, 1>, scalar_prefetch = 0 : i64, scratch_operands = 0 : i64, tpu.core_type = #tpu.core_type<tc>, window_params = [{transform_indices = @transform_0, window_bounds = array<i64: 8, 1792>}, {transform_indices = @transform_1, window_bounds = array<i64: 1792, 128>}, {transform_indices = @transform_2, window_bounds = array<i64: 1, 128>}, {transform_indices = @transform_3, window_bounds = array<i64: 8, 128>}]} {
    %c0 = arith.constant 0 : index
    %c0_0 = arith.constant 0 : index
    %0 = vector.load %arg2[%c0, %c0_0] : memref<8x1792xbf16, #tpu.memory_space<vmem>>, vector<8x1792xbf16>
    %c0_1 = arith.constant 0 : index
    %c0_2 = arith.constant 0 : index
    %1 = vector.load %arg3[%c0_1, %c0_2] : memref<1792x128xbf16, #tpu.memory_space<vmem>>, vector<1792x128xbf16>
    %cst = arith.constant dense<0.000000e+00> : vector<8x128xf32>
    %2 = tpu.matmul %0, %1, %cst {dimension_numbers = #tpu.dot_dimension_numbers<[1], [0], [0], [1], [0, 0, 1, 1], [], []>} : vector<8x1792xbf16>, vector<1792x128xbf16>, vector<8x128xf32> -> vector<8x128xf32>
    %c0_3 = arith.constant 0 : index
    %c0_4 = arith.constant 0 : index
    %3 = vector.load %arg4[%c0_3, %c0_4] : memref<1x128xf32, #tpu.memory_space<vmem>>, vector<1x128xf32>
    %4 = vector.broadcast %3 : vector<1x128xf32> to vector<8x128xf32>
    %5 = arith.addf %2, %4 : vector<8x128xf32>
    %cst_5 = arith.constant 0.000000e+00 : f32
    %6 = vector.broadcast %cst_5 : f32 to vector<8x128xf32>
    %7 = arith.maximumf %5, %6 : vector<8x128xf32>
    %c0_6 = arith.constant 0 : index
    %c0_7 = arith.constant 0 : index
    %8 = vector.load %arg5[%c0_6, %c0_7] : memref<8x128xf32, #tpu.memory_space<vmem>>, vector<8x128xf32>
    tpu.vector_store %arg5[%c0_6, %c0_7], %7 {strides = array<i32>} : memref<8x128xf32, #tpu.memory_space<vmem>>, vector<8x128xf32>,
    return
  }
  func.func @transform_0(%arg0: i32, %arg1: i32) -> (i32, i32) {
    %c0_i32 = arith.constant 0 : i32
    %c0_i32_0 = arith.constant 0 : i32
    return %arg0, %c0_i32 : i32, i32
  }
  func.func @transform_1(%arg0: i32, %arg1: i32) -> (i32, i32) {
    %c0_i32 = arith.constant 0 : i32
    %c0_i32_0 = arith.constant 0 : i32
    return %c0_i32, %arg1 : i32, i32
  }
  func.func @transform_2(%arg0: i32, %arg1: i32) -> (i32, i32) {
    %c0_i32 = arith.constant 0 : i32
    %c0_i32_0 = arith.constant 0 : i32
    return %c0_i32, %arg1 : i32, i32
  }
  func.func @transform_3(%arg0: i32, %arg1: i32) -> (i32, i32) {
    %c0_i32 = arith.constant 0 : i32
    return %arg0, %arg1 : i32, i32
  }
}

module attributes {stable_mosaic.version = 11 : i64} {
  func.func @_mm_single_kernel(%arg0: i32, %arg1: i32, %arg2: memref<8x128xbf16, #tpu.memory_space<vmem>>, %arg3: memref<128x128xbf16, #tpu.memory_space<vmem>>, %arg4: memref<1x128xf32, #tpu.memory_space<vmem>>, %arg5: memref<8x128xf32, #tpu.memory_space<vmem>>) attributes {dimension_semantics = [#tpu.dimension_semantics<parallel>, #tpu.dimension_semantics<parallel>], iteration_bounds = array<i64: 1, 1>, scalar_prefetch = 0 : i64, scratch_operands = 0 : i64, tpu.core_type = #tpu.core_type<tc>, window_params = [{transform_indices = @transform_0, window_bounds = array<i64: 8, 128>}, {transform_indices = @transform_1, window_bounds = array<i64: 128, 128>}, {transform_indices = @transform_2, window_bounds = array<i64: 1, 128>}, {transform_indices = @transform_3, window_bounds = array<i64: 8, 128>}]} {
    %c0 = arith.constant 0 : index
    %c0_0 = arith.constant 0 : index
    %0 = vector.load %arg2[%c0, %c0_0] : memref<8x128xbf16, #tpu.memory_space<vmem>>, vector<8x128xbf16>
    %c0_1 = arith.constant 0 : index
    %c0_2 = arith.constant 0 : index
    %1 = vector.load %arg3[%c0_1, %c0_2] : memref<128x128xbf16, #tpu.memory_space<vmem>>, vector<128x128xbf16>
    %cst = arith.constant dense<0.000000e+00> : vector<8x128xf32>
    %2 = tpu.matmul %0, %1, %cst {dimension_numbers = #tpu.dot_dimension_numbers<[1], [0], [0], [1], [0, 0, 1, 1], [], []>} : vector<8x128xbf16>, vector<128x128xbf16>, vector<8x128xf32> -> vector<8x128xf32>
    %c0_3 = arith.constant 0 : index
    %c0_4 = arith.constant 0 : index
    %3 = vector.load %arg4[%c0_3, %c0_4] : memref<1x128xf32, #tpu.memory_space<vmem>>, vector<1x128xf32>
    %4 = vector.broadcast %3 : vector<1x128xf32> to vector<8x128xf32>
    %5 = arith.addf %2, %4 : vector<8x128xf32>
    %c0_5 = arith.constant 0 : index
    %c0_6 = arith.constant 0 : index
    %6 = vector.load %arg5[%c0_5, %c0_6] : memref<8x128xf32, #tpu.memory_space<vmem>>, vector<8x128xf32>
    tpu.vector_store %arg5[%c0_5, %c0_6], %5 {strides = array<i32>} : memref<8x128xf32, #tpu.memory_space<vmem>>, vector<8x128xf32>,
    return
  }
  func.func @transform_0(%arg0: i32, %arg1: i32) -> (i32, i32) {
    %c0_i32 = arith.constant 0 : i32
    %c0_i32_0 = arith.constant 0 : i32
    return %arg0, %c0_i32 : i32, i32
  }
  func.func @transform_1(%arg0: i32, %arg1: i32) -> (i32, i32) {
    %c0_i32 = arith.constant 0 : i32
    %c0_i32_0 = arith.constant 0 : i32
    return %c0_i32, %arg1 : i32, i32
  }
  func.func @transform_2(%arg0: i32, %arg1: i32) -> (i32, i32) {
    %c0_i32 = arith.constant 0 : i32
    %c0_i32_0 = arith.constant 0 : i32
    return %c0_i32, %arg1 : i32, i32
  }
  func.func @transform_3(%arg0: i32, %arg1: i32) -> (i32, i32) {
    %c0_i32 = arith.constant 0 : i32
    return %arg0, %arg1 : i32, i32
  }
}

module attributes {stable_mosaic.version = 11 : i64} {
  func.func @_mm_single_kernel(%arg0: i32, %arg1: i32, %arg2: memref<8x128xbf16, #tpu.memory_space<vmem>>, %arg3: memref<128x128xbf16, #tpu.memory_space<vmem>>, %arg4: memref<1x128xf32, #tpu.memory_space<vmem>>, %arg5: memref<8x128xf32, #tpu.memory_space<vmem>>, %arg6: memref<8x128xf32, #tpu.memory_space<vmem>>) attributes {dimension_semantics = [#tpu.dimension_semantics<parallel>, #tpu.dimension_semantics<parallel>], iteration_bounds = array<i64: 1, 1>, scalar_prefetch = 0 : i64, scratch_operands = 0 : i64, tpu.core_type = #tpu.core_type<tc>, window_params = [{transform_indices = @transform_0, window_bounds = array<i64: 8, 128>}, {transform_indices = @transform_1, window_bounds = array<i64: 128, 128>}, {transform_indices = @transform_2, window_bounds = array<i64: 1, 128>}, {transform_indices = @transform_3, window_bounds = array<i64: 8, 128>}, {transform_indices = @transform_4, window_bounds = array<i64: 8, 128>}]} {
    %c0 = arith.constant 0 : index
    %c0_0 = arith.constant 0 : index
    %0 = vector.load %arg2[%c0, %c0_0] : memref<8x128xbf16, #tpu.memory_space<vmem>>, vector<8x128xbf16>
    %c0_1 = arith.constant 0 : index
    %c0_2 = arith.constant 0 : index
    %1 = vector.load %arg3[%c0_1, %c0_2] : memref<128x128xbf16, #tpu.memory_space<vmem>>, vector<128x128xbf16>
    %cst = arith.constant dense<0.000000e+00> : vector<8x128xf32>
    %2 = tpu.matmul %0, %1, %cst {dimension_numbers = #tpu.dot_dimension_numbers<[1], [0], [0], [1], [0, 0, 1, 1], [], []>} : vector<8x128xbf16>, vector<128x128xbf16>, vector<8x128xf32> -> vector<8x128xf32>
    %c0_3 = arith.constant 0 : index
    %c0_4 = arith.constant 0 : index
    %3 = vector.load %arg4[%c0_3, %c0_4] : memref<1x128xf32, #tpu.memory_space<vmem>>, vector<1x128xf32>
    %4 = vector.broadcast %3 : vector<1x128xf32> to vector<8x128xf32>
    %5 = arith.addf %2, %4 : vector<8x128xf32>
    %c0_5 = arith.constant 0 : index
    %c0_6 = arith.constant 0 : index
    %6 = vector.load %arg5[%c0_5, %c0_6] : memref<8x128xf32, #tpu.memory_space<vmem>>, vector<8x128xf32>
    %7 = arith.addf %5, %6 : vector<8x128xf32>
    %cst_7 = arith.constant 0.000000e+00 : f32
    %8 = vector.broadcast %cst_7 : f32 to vector<8x128xf32>
    %9 = arith.maximumf %7, %8 : vector<8x128xf32>
    %c0_8 = arith.constant 0 : index
    %c0_9 = arith.constant 0 : index
    %10 = vector.load %arg6[%c0_8, %c0_9] : memref<8x128xf32, #tpu.memory_space<vmem>>, vector<8x128xf32>
    tpu.vector_store %arg6[%c0_8, %c0_9], %9 {strides = array<i32>} : memref<8x128xf32, #tpu.memory_space<vmem>>, vector<8x128xf32>,
    return
  }
  func.func @transform_0(%arg0: i32, %arg1: i32) -> (i32, i32) {
    %c0_i32 = arith.constant 0 : i32
    %c0_i32_0 = arith.constant 0 : i32
    return %arg0, %c0_i32 : i32, i32
  }
  func.func @transform_1(%arg0: i32, %arg1: i32) -> (i32, i32) {
    %c0_i32 = arith.constant 0 : i32
    %c0_i32_0 = arith.constant 0 : i32
    return %c0_i32, %arg1 : i32, i32
  }
  func.func @transform_2(%arg0: i32, %arg1: i32) -> (i32, i32) {
    %c0_i32 = arith.constant 0 : i32
    %c0_i32_0 = arith.constant 0 : i32
    return %c0_i32, %arg1 : i32, i32
  }
  func.func @transform_3(%arg0: i32, %arg1: i32) -> (i32, i32) {
    %c0_i32 = arith.constant 0 : i32
    return %arg0, %arg1 : i32, i32
  }
  func.func @transform_4(%arg0: i32, %arg1: i32) -> (i32, i32) {
    %c0_i32 = arith.constant 0 : i32
    return %arg0, %arg1 : i32, i32
  }
}

module attributes {stable_mosaic.version = 11 : i64} {
  func.func @_mm_single_kernel(%arg0: i32, %arg1: i32, %arg2: memref<8x128xbf16, #tpu.memory_space<vmem>>, %arg3: memref<128x256xbf16, #tpu.memory_space<vmem>>, %arg4: memref<1x256xf32, #tpu.memory_space<vmem>>, %arg5: memref<8x256xf32, #tpu.memory_space<vmem>>) attributes {dimension_semantics = [#tpu.dimension_semantics<parallel>, #tpu.dimension_semantics<parallel>], iteration_bounds = array<i64: 1, 1>, scalar_prefetch = 0 : i64, scratch_operands = 0 : i64, tpu.core_type = #tpu.core_type<tc>, window_params = [{transform_indices = @transform_0, window_bounds = array<i64: 8, 128>}, {transform_indices = @transform_1, window_bounds = array<i64: 128, 256>}, {transform_indices = @transform_2, window_bounds = array<i64: 1, 256>}, {transform_indices = @transform_3, window_bounds = array<i64: 8, 256>}]} {
    %c0 = arith.constant 0 : index
    %c0_0 = arith.constant 0 : index
    %0 = vector.load %arg2[%c0, %c0_0] : memref<8x128xbf16, #tpu.memory_space<vmem>>, vector<8x128xbf16>
    %c0_1 = arith.constant 0 : index
    %c0_2 = arith.constant 0 : index
    %1 = vector.load %arg3[%c0_1, %c0_2] : memref<128x256xbf16, #tpu.memory_space<vmem>>, vector<128x256xbf16>
    %cst = arith.constant dense<0.000000e+00> : vector<8x256xf32>
    %2 = tpu.matmul %0, %1, %cst {dimension_numbers = #tpu.dot_dimension_numbers<[1], [0], [0], [1], [0, 0, 1, 1], [], []>} : vector<8x128xbf16>, vector<128x256xbf16>, vector<8x256xf32> -> vector<8x256xf32>
    %c0_3 = arith.constant 0 : index
    %c0_4 = arith.constant 0 : index
    %3 = vector.load %arg4[%c0_3, %c0_4] : memref<1x256xf32, #tpu.memory_space<vmem>>, vector<1x256xf32>
    %4 = vector.broadcast %3 : vector<1x256xf32> to vector<8x256xf32>
    %5 = arith.addf %2, %4 : vector<8x256xf32>
    %cst_5 = arith.constant 0.000000e+00 : f32
    %6 = vector.broadcast %cst_5 : f32 to vector<8x256xf32>
    %7 = arith.maximumf %5, %6 : vector<8x256xf32>
    %c0_6 = arith.constant 0 : index
    %c0_7 = arith.constant 0 : index
    %8 = vector.load %arg5[%c0_6, %c0_7] : memref<8x256xf32, #tpu.memory_space<vmem>>, vector<8x256xf32>
    tpu.vector_store %arg5[%c0_6, %c0_7], %7 {strides = array<i32>} : memref<8x256xf32, #tpu.memory_space<vmem>>, vector<8x256xf32>,
    return
  }
  func.func @transform_0(%arg0: i32, %arg1: i32) -> (i32, i32) {
    %c0_i32 = arith.constant 0 : i32
    %c0_i32_0 = arith.constant 0 : i32
    return %arg0, %c0_i32 : i32, i32
  }
  func.func @transform_1(%arg0: i32, %arg1: i32) -> (i32, i32) {
    %c0_i32 = arith.constant 0 : i32
    %c0_i32_0 = arith.constant 0 : i32
    return %c0_i32, %arg1 : i32, i32
  }
  func.func @transform_2(%arg0: i32, %arg1: i32) -> (i32, i32) {
    %c0_i32 = arith.constant 0 : i32
    %c0_i32_0 = arith.constant 0 : i32
    return %c0_i32, %arg1 : i32, i32
  }
  func.func @transform_3(%arg0: i32, %arg1: i32) -> (i32, i32) {
    %c0_i32 = arith.constant 0 : i32
    return %arg0, %arg1 : i32, i32
  }
}

module attributes {stable_mosaic.version = 11 : i64} {
  func.func @_mm_single_kernel(%arg0: i32, %arg1: i32, %arg2: memref<8x128xbf16, #tpu.memory_space<vmem>>, %arg3: memref<128x256xbf16, #tpu.memory_space<vmem>>, %arg4: memref<1x256xf32, #tpu.memory_space<vmem>>, %arg5: memref<8x256xf32, #tpu.memory_space<vmem>>) attributes {dimension_semantics = [#tpu.dimension_semantics<parallel>, #tpu.dimension_semantics<parallel>], iteration_bounds = array<i64: 1, 1>, scalar_prefetch = 0 : i64, scratch_operands = 0 : i64, tpu.core_type = #tpu.core_type<tc>, window_params = [{transform_indices = @transform_0, window_bounds = array<i64: 8, 128>}, {transform_indices = @transform_1, window_bounds = array<i64: 128, 256>}, {transform_indices = @transform_2, window_bounds = array<i64: 1, 256>}, {transform_indices = @transform_3, window_bounds = array<i64: 8, 256>}]} {
    %c0 = arith.constant 0 : index
    %c0_0 = arith.constant 0 : index
    %0 = vector.load %arg2[%c0, %c0_0] : memref<8x128xbf16, #tpu.memory_space<vmem>>, vector<8x128xbf16>
    %c0_1 = arith.constant 0 : index
    %c0_2 = arith.constant 0 : index
    %1 = vector.load %arg3[%c0_1, %c0_2] : memref<128x256xbf16, #tpu.memory_space<vmem>>, vector<128x256xbf16>
    %cst = arith.constant dense<0.000000e+00> : vector<8x256xf32>
    %2 = tpu.matmul %0, %1, %cst {dimension_numbers = #tpu.dot_dimension_numbers<[1], [0], [0], [1], [0, 0, 1, 1], [], []>} : vector<8x128xbf16>, vector<128x256xbf16>, vector<8x256xf32> -> vector<8x256xf32>
    %c0_3 = arith.constant 0 : index
    %c0_4 = arith.constant 0 : index
    %3 = vector.load %arg4[%c0_3, %c0_4] : memref<1x256xf32, #tpu.memory_space<vmem>>, vector<1x256xf32>
    %4 = vector.broadcast %3 : vector<1x256xf32> to vector<8x256xf32>
    %5 = arith.addf %2, %4 : vector<8x256xf32>
    %c0_5 = arith.constant 0 : index
    %c0_6 = arith.constant 0 : index
    %6 = vector.load %arg5[%c0_5, %c0_6] : memref<8x256xf32, #tpu.memory_space<vmem>>, vector<8x256xf32>
    tpu.vector_store %arg5[%c0_5, %c0_6], %5 {strides = array<i32>} : memref<8x256xf32, #tpu.memory_space<vmem>>, vector<8x256xf32>,
    return
  }
  func.func @transform_0(%arg0: i32, %arg1: i32) -> (i32, i32) {
    %c0_i32 = arith.constant 0 : i32
    %c0_i32_0 = arith.constant 0 : i32
    return %arg0, %c0_i32 : i32, i32
  }
  func.func @transform_1(%arg0: i32, %arg1: i32) -> (i32, i32) {
    %c0_i32 = arith.constant 0 : i32
    %c0_i32_0 = arith.constant 0 : i32
    return %c0_i32, %arg1 : i32, i32
  }
  func.func @transform_2(%arg0: i32, %arg1: i32) -> (i32, i32) {
    %c0_i32 = arith.constant 0 : i32
    %c0_i32_0 = arith.constant 0 : i32
    return %c0_i32, %arg1 : i32, i32
  }
  func.func @transform_3(%arg0: i32, %arg1: i32) -> (i32, i32) {
    %c0_i32 = arith.constant 0 : i32
    return %arg0, %arg1 : i32, i32
  }
}

module attributes {stable_mosaic.version = 11 : i64} {
  func.func @_mm_single_kernel(%arg0: i32, %arg1: i32, %arg2: memref<8x256xbf16, #tpu.memory_space<vmem>>, %arg3: memref<256x256xbf16, #tpu.memory_space<vmem>>, %arg4: memref<1x256xf32, #tpu.memory_space<vmem>>, %arg5: memref<8x256xf32, #tpu.memory_space<vmem>>, %arg6: memref<8x256xf32, #tpu.memory_space<vmem>>) attributes {dimension_semantics = [#tpu.dimension_semantics<parallel>, #tpu.dimension_semantics<parallel>], iteration_bounds = array<i64: 1, 1>, scalar_prefetch = 0 : i64, scratch_operands = 0 : i64, tpu.core_type = #tpu.core_type<tc>, window_params = [{transform_indices = @transform_0, window_bounds = array<i64: 8, 256>}, {transform_indices = @transform_1, window_bounds = array<i64: 256, 256>}, {transform_indices = @transform_2, window_bounds = array<i64: 1, 256>}, {transform_indices = @transform_3, window_bounds = array<i64: 8, 256>}, {transform_indices = @transform_4, window_bounds = array<i64: 8, 256>}]} {
    %c0 = arith.constant 0 : index
    %c0_0 = arith.constant 0 : index
    %0 = vector.load %arg2[%c0, %c0_0] : memref<8x256xbf16, #tpu.memory_space<vmem>>, vector<8x256xbf16>
    %c0_1 = arith.constant 0 : index
    %c0_2 = arith.constant 0 : index
    %1 = vector.load %arg3[%c0_1, %c0_2] : memref<256x256xbf16, #tpu.memory_space<vmem>>, vector<256x256xbf16>
    %cst = arith.constant dense<0.000000e+00> : vector<8x256xf32>
    %2 = tpu.matmul %0, %1, %cst {dimension_numbers = #tpu.dot_dimension_numbers<[1], [0], [0], [1], [0, 0, 1, 1], [], []>} : vector<8x256xbf16>, vector<256x256xbf16>, vector<8x256xf32> -> vector<8x256xf32>
    %c0_3 = arith.constant 0 : index
    %c0_4 = arith.constant 0 : index
    %3 = vector.load %arg4[%c0_3, %c0_4] : memref<1x256xf32, #tpu.memory_space<vmem>>, vector<1x256xf32>
    %4 = vector.broadcast %3 : vector<1x256xf32> to vector<8x256xf32>
    %5 = arith.addf %2, %4 : vector<8x256xf32>
    %c0_5 = arith.constant 0 : index
    %c0_6 = arith.constant 0 : index
    %6 = vector.load %arg5[%c0_5, %c0_6] : memref<8x256xf32, #tpu.memory_space<vmem>>, vector<8x256xf32>
    %7 = arith.addf %5, %6 : vector<8x256xf32>
    %cst_7 = arith.constant 0.000000e+00 : f32
    %8 = vector.broadcast %cst_7 : f32 to vector<8x256xf32>
    %9 = arith.maximumf %7, %8 : vector<8x256xf32>
    %c0_8 = arith.constant 0 : index
    %c0_9 = arith.constant 0 : index
    %10 = vector.load %arg6[%c0_8, %c0_9] : memref<8x256xf32, #tpu.memory_space<vmem>>, vector<8x256xf32>
    tpu.vector_store %arg6[%c0_8, %c0_9], %9 {strides = array<i32>} : memref<8x256xf32, #tpu.memory_space<vmem>>, vector<8x256xf32>,
    return
  }
  func.func @transform_0(%arg0: i32, %arg1: i32) -> (i32, i32) {
    %c0_i32 = arith.constant 0 : i32
    %c0_i32_0 = arith.constant 0 : i32
    return %arg0, %c0_i32 : i32, i32
  }
  func.func @transform_1(%arg0: i32, %arg1: i32) -> (i32, i32) {
    %c0_i32 = arith.constant 0 : i32
    %c0_i32_0 = arith.constant 0 : i32
    return %c0_i32, %arg1 : i32, i32
  }
  func.func @transform_2(%arg0: i32, %arg1: i32) -> (i32, i32) {
    %c0_i32 = arith.constant 0 : i32
    %c0_i32_0 = arith.constant 0 : i32
    return %c0_i32, %arg1 : i32, i32
  }
  func.func @transform_3(%arg0: i32, %arg1: i32) -> (i32, i32) {
    %c0_i32 = arith.constant 0 : i32
    return %arg0, %arg1 : i32, i32
  }
  func.func @transform_4(%arg0: i32, %arg1: i32) -> (i32, i32) {
    %c0_i32 = arith.constant 0 : i32
    return %arg0, %arg1 : i32, i32
  }
}

module attributes {stable_mosaic.version = 11 : i64} {
  func.func @_mm_single_kernel(%arg0: i32, %arg1: i32, %arg2: memref<8x256xbf16, #tpu.memory_space<vmem>>, %arg3: memref<256x256xbf16, #tpu.memory_space<vmem>>, %arg4: memref<1x256xf32, #tpu.memory_space<vmem>>, %arg5: memref<8x256xf32, #tpu.memory_space<vmem>>) attributes {dimension_semantics = [#tpu.dimension_semantics<parallel>, #tpu.dimension_semantics<parallel>], iteration_bounds = array<i64: 1, 2>, scalar_prefetch = 0 : i64, scratch_operands = 0 : i64, tpu.core_type = #tpu.core_type<tc>, window_params = [{transform_indices = @transform_0, window_bounds = array<i64: 8, 256>}, {transform_indices = @transform_1, window_bounds = array<i64: 256, 256>}, {transform_indices = @transform_2, window_bounds = array<i64: 1, 256>}, {transform_indices = @transform_3, window_bounds = array<i64: 8, 256>}]} {
    %c0 = arith.constant 0 : index
    %c0_0 = arith.constant 0 : index
    %0 = vector.load %arg2[%c0, %c0_0] : memref<8x256xbf16, #tpu.memory_space<vmem>>, vector<8x256xbf16>
    %c0_1 = arith.constant 0 : index
    %c0_2 = arith.constant 0 : index
    %1 = vector.load %arg3[%c0_1, %c0_2] : memref<256x256xbf16, #tpu.memory_space<vmem>>, vector<256x256xbf16>
    %cst = arith.constant dense<0.000000e+00> : vector<8x256xf32>
    %2 = tpu.matmul %0, %1, %cst {dimension_numbers = #tpu.dot_dimension_numbers<[1], [0], [0], [1], [0, 0, 1, 1], [], []>} : vector<8x256xbf16>, vector<256x256xbf16>, vector<8x256xf32> -> vector<8x256xf32>
    %c0_3 = arith.constant 0 : index
    %c0_4 = arith.constant 0 : index
    %3 = vector.load %arg4[%c0_3, %c0_4] : memref<1x256xf32, #tpu.memory_space<vmem>>, vector<1x256xf32>
    %4 = vector.broadcast %3 : vector<1x256xf32> to vector<8x256xf32>
    %5 = arith.addf %2, %4 : vector<8x256xf32>
    %cst_5 = arith.constant 0.000000e+00 : f32
    %6 = vector.broadcast %cst_5 : f32 to vector<8x256xf32>
    %7 = arith.maximumf %5, %6 : vector<8x256xf32>
    %c0_6 = arith.constant 0 : index
    %c0_7 = arith.constant 0 : index
    %8 = vector.load %arg5[%c0_6, %c0_7] : memref<8x256xf32, #tpu.memory_space<vmem>>, vector<8x256xf32>
    tpu.vector_store %arg5[%c0_6, %c0_7], %7 {strides = array<i32>} : memref<8x256xf32, #tpu.memory_space<vmem>>, vector<8x256xf32>,
    return
  }
  func.func @transform_0(%arg0: i32, %arg1: i32) -> (i32, i32) {
    %c0_i32 = arith.constant 0 : i32
    %c0_i32_0 = arith.constant 0 : i32
    return %arg0, %c0_i32 : i32, i32
  }
  func.func @transform_1(%arg0: i32, %arg1: i32) -> (i32, i32) {
    %c0_i32 = arith.constant 0 : i32
    %c0_i32_0 = arith.constant 0 : i32
    return %c0_i32, %arg1 : i32, i32
  }
  func.func @transform_2(%arg0: i32, %arg1: i32) -> (i32, i32) {
    %c0_i32 = arith.constant 0 : i32
    %c0_i32_0 = arith.constant 0 : i32
    return %c0_i32, %arg1 : i32, i32
  }
  func.func @transform_3(%arg0: i32, %arg1: i32) -> (i32, i32) {
    %c0_i32 = arith.constant 0 : i32
    return %arg0, %arg1 : i32, i32
  }
}

module attributes {stable_mosaic.version = 11 : i64} {
  func.func @_mm_single_kernel(%arg0: i32, %arg1: i32, %arg2: memref<8x256xbf16, #tpu.memory_space<vmem>>, %arg3: memref<256x256xbf16, #tpu.memory_space<vmem>>, %arg4: memref<1x256xf32, #tpu.memory_space<vmem>>, %arg5: memref<8x256xf32, #tpu.memory_space<vmem>>) attributes {dimension_semantics = [#tpu.dimension_semantics<parallel>, #tpu.dimension_semantics<parallel>], iteration_bounds = array<i64: 1, 2>, scalar_prefetch = 0 : i64, scratch_operands = 0 : i64, tpu.core_type = #tpu.core_type<tc>, window_params = [{transform_indices = @transform_0, window_bounds = array<i64: 8, 256>}, {transform_indices = @transform_1, window_bounds = array<i64: 256, 256>}, {transform_indices = @transform_2, window_bounds = array<i64: 1, 256>}, {transform_indices = @transform_3, window_bounds = array<i64: 8, 256>}]} {
    %c0 = arith.constant 0 : index
    %c0_0 = arith.constant 0 : index
    %0 = vector.load %arg2[%c0, %c0_0] : memref<8x256xbf16, #tpu.memory_space<vmem>>, vector<8x256xbf16>
    %c0_1 = arith.constant 0 : index
    %c0_2 = arith.constant 0 : index
    %1 = vector.load %arg3[%c0_1, %c0_2] : memref<256x256xbf16, #tpu.memory_space<vmem>>, vector<256x256xbf16>
    %cst = arith.constant dense<0.000000e+00> : vector<8x256xf32>
    %2 = tpu.matmul %0, %1, %cst {dimension_numbers = #tpu.dot_dimension_numbers<[1], [0], [0], [1], [0, 0, 1, 1], [], []>} : vector<8x256xbf16>, vector<256x256xbf16>, vector<8x256xf32> -> vector<8x256xf32>
    %c0_3 = arith.constant 0 : index
    %c0_4 = arith.constant 0 : index
    %3 = vector.load %arg4[%c0_3, %c0_4] : memref<1x256xf32, #tpu.memory_space<vmem>>, vector<1x256xf32>
    %4 = vector.broadcast %3 : vector<1x256xf32> to vector<8x256xf32>
    %5 = arith.addf %2, %4 : vector<8x256xf32>
    %c0_5 = arith.constant 0 : index
    %c0_6 = arith.constant 0 : index
    %6 = vector.load %arg5[%c0_5, %c0_6] : memref<8x256xf32, #tpu.memory_space<vmem>>, vector<8x256xf32>
    tpu.vector_store %arg5[%c0_5, %c0_6], %5 {strides = array<i32>} : memref<8x256xf32, #tpu.memory_space<vmem>>, vector<8x256xf32>,
    return
  }
  func.func @transform_0(%arg0: i32, %arg1: i32) -> (i32, i32) {
    %c0_i32 = arith.constant 0 : i32
    %c0_i32_0 = arith.constant 0 : i32
    return %arg0, %c0_i32 : i32, i32
  }
  func.func @transform_1(%arg0: i32, %arg1: i32) -> (i32, i32) {
    %c0_i32 = arith.constant 0 : i32
    %c0_i32_0 = arith.constant 0 : i32
    return %c0_i32, %arg1 : i32, i32
  }
  func.func @transform_2(%arg0: i32, %arg1: i32) -> (i32, i32) {
    %c0_i32 = arith.constant 0 : i32
    %c0_i32_0 = arith.constant 0 : i32
    return %c0_i32, %arg1 : i32, i32
  }
  func.func @transform_3(%arg0: i32, %arg1: i32) -> (i32, i32) {
    %c0_i32 = arith.constant 0 : i32
    return %arg0, %arg1 : i32, i32
  }
}

module attributes {stable_mosaic.version = 11 : i64} {
  func.func @_mm_single_kernel(%arg0: i32, %arg1: i32, %arg2: memref<8x512xbf16, #tpu.memory_space<vmem>>, %arg3: memref<512x256xbf16, #tpu.memory_space<vmem>>, %arg4: memref<1x256xf32, #tpu.memory_space<vmem>>, %arg5: memref<8x256xf32, #tpu.memory_space<vmem>>, %arg6: memref<8x256xf32, #tpu.memory_space<vmem>>) attributes {dimension_semantics = [#tpu.dimension_semantics<parallel>, #tpu.dimension_semantics<parallel>], iteration_bounds = array<i64: 1, 2>, scalar_prefetch = 0 : i64, scratch_operands = 0 : i64, tpu.core_type = #tpu.core_type<tc>, window_params = [{transform_indices = @transform_0, window_bounds = array<i64: 8, 512>}, {transform_indices = @transform_1, window_bounds = array<i64: 512, 256>}, {transform_indices = @transform_2, window_bounds = array<i64: 1, 256>}, {transform_indices = @transform_3, window_bounds = array<i64: 8, 256>}, {transform_indices = @transform_4, window_bounds = array<i64: 8, 256>}]} {
    %c0 = arith.constant 0 : index
    %c0_0 = arith.constant 0 : index
    %0 = vector.load %arg2[%c0, %c0_0] : memref<8x512xbf16, #tpu.memory_space<vmem>>, vector<8x512xbf16>
    %c0_1 = arith.constant 0 : index
    %c0_2 = arith.constant 0 : index
    %1 = vector.load %arg3[%c0_1, %c0_2] : memref<512x256xbf16, #tpu.memory_space<vmem>>, vector<512x256xbf16>
    %cst = arith.constant dense<0.000000e+00> : vector<8x256xf32>
    %2 = tpu.matmul %0, %1, %cst {dimension_numbers = #tpu.dot_dimension_numbers<[1], [0], [0], [1], [0, 0, 1, 1], [], []>} : vector<8x512xbf16>, vector<512x256xbf16>, vector<8x256xf32> -> vector<8x256xf32>
    %c0_3 = arith.constant 0 : index
    %c0_4 = arith.constant 0 : index
    %3 = vector.load %arg4[%c0_3, %c0_4] : memref<1x256xf32, #tpu.memory_space<vmem>>, vector<1x256xf32>
    %4 = vector.broadcast %3 : vector<1x256xf32> to vector<8x256xf32>
    %5 = arith.addf %2, %4 : vector<8x256xf32>
    %c0_5 = arith.constant 0 : index
    %c0_6 = arith.constant 0 : index
    %6 = vector.load %arg5[%c0_5, %c0_6] : memref<8x256xf32, #tpu.memory_space<vmem>>, vector<8x256xf32>
    %7 = arith.addf %5, %6 : vector<8x256xf32>
    %cst_7 = arith.constant 0.000000e+00 : f32
    %8 = vector.broadcast %cst_7 : f32 to vector<8x256xf32>
    %9 = arith.maximumf %7, %8 : vector<8x256xf32>
    %c0_8 = arith.constant 0 : index
    %c0_9 = arith.constant 0 : index
    %10 = vector.load %arg6[%c0_8, %c0_9] : memref<8x256xf32, #tpu.memory_space<vmem>>, vector<8x256xf32>
    tpu.vector_store %arg6[%c0_8, %c0_9], %9 {strides = array<i32>} : memref<8x256xf32, #tpu.memory_space<vmem>>, vector<8x256xf32>,
    return
  }
  func.func @transform_0(%arg0: i32, %arg1: i32) -> (i32, i32) {
    %c0_i32 = arith.constant 0 : i32
    %c0_i32_0 = arith.constant 0 : i32
    return %arg0, %c0_i32 : i32, i32
  }
  func.func @transform_1(%arg0: i32, %arg1: i32) -> (i32, i32) {
    %c0_i32 = arith.constant 0 : i32
    %c0_i32_0 = arith.constant 0 : i32
    return %c0_i32, %arg1 : i32, i32
  }
  func.func @transform_2(%arg0: i32, %arg1: i32) -> (i32, i32) {
    %c0_i32 = arith.constant 0 : i32
    %c0_i32_0 = arith.constant 0 : i32
    return %c0_i32, %arg1 : i32, i32
  }
  func.func @transform_3(%arg0: i32, %arg1: i32) -> (i32, i32) {
    %c0_i32 = arith.constant 0 : i32
    return %arg0, %arg1 : i32, i32
  }
  func.func @transform_4(%arg0: i32, %arg1: i32) -> (i32, i32) {
    %c0_i32 = arith.constant 0 : i32
    return %arg0, %arg1 : i32, i32
  }
}

module attributes {stable_mosaic.version = 11 : i64} {
  func.func @_mm_single_kernel(%arg0: i32, %arg1: i32, %arg2: memref<8x512xbf16, #tpu.memory_space<vmem>>, %arg3: memref<512x256xbf16, #tpu.memory_space<vmem>>, %arg4: memref<1x256xf32, #tpu.memory_space<vmem>>, %arg5: memref<8x256xf32, #tpu.memory_space<vmem>>) attributes {dimension_semantics = [#tpu.dimension_semantics<parallel>, #tpu.dimension_semantics<parallel>], iteration_bounds = array<i64: 1, 2>, scalar_prefetch = 0 : i64, scratch_operands = 0 : i64, tpu.core_type = #tpu.core_type<tc>, window_params = [{transform_indices = @transform_0, window_bounds = array<i64: 8, 512>}, {transform_indices = @transform_1, window_bounds = array<i64: 512, 256>}, {transform_indices = @transform_2, window_bounds = array<i64: 1, 256>}, {transform_indices = @transform_3, window_bounds = array<i64: 8, 256>}]} {
    %c0 = arith.constant 0 : index
    %c0_0 = arith.constant 0 : index
    %0 = vector.load %arg2[%c0, %c0_0] : memref<8x512xbf16, #tpu.memory_space<vmem>>, vector<8x512xbf16>
    %c0_1 = arith.constant 0 : index
    %c0_2 = arith.constant 0 : index
    %1 = vector.load %arg3[%c0_1, %c0_2] : memref<512x256xbf16, #tpu.memory_space<vmem>>, vector<512x256xbf16>
    %cst = arith.constant dense<0.000000e+00> : vector<8x256xf32>
    %2 = tpu.matmul %0, %1, %cst {dimension_numbers = #tpu.dot_dimension_numbers<[1], [0], [0], [1], [0, 0, 1, 1], [], []>} : vector<8x512xbf16>, vector<512x256xbf16>, vector<8x256xf32> -> vector<8x256xf32>
    %c0_3 = arith.constant 0 : index
    %c0_4 = arith.constant 0 : index
    %3 = vector.load %arg4[%c0_3, %c0_4] : memref<1x256xf32, #tpu.memory_space<vmem>>, vector<1x256xf32>
    %4 = vector.broadcast %3 : vector<1x256xf32> to vector<8x256xf32>
    %5 = arith.addf %2, %4 : vector<8x256xf32>
    %c0_5 = arith.constant 0 : index
    %c0_6 = arith.constant 0 : index
    %6 = vector.load %arg5[%c0_5, %c0_6] : memref<8x256xf32, #tpu.memory_space<vmem>>, vector<8x256xf32>
    tpu.vector_store %arg5[%c0_5, %c0_6], %5 {strides = array<i32>} : memref<8x256xf32, #tpu.memory_space<vmem>>, vector<8x256xf32>,
    return
  }
  func.func @transform_0(%arg0: i32, %arg1: i32) -> (i32, i32) {
    %c0_i32 = arith.constant 0 : i32
    %c0_i32_0 = arith.constant 0 : i32
    return %arg0, %c0_i32 : i32, i32
  }
  func.func @transform_1(%arg0: i32, %arg1: i32) -> (i32, i32) {
    %c0_i32 = arith.constant 0 : i32
    %c0_i32_0 = arith.constant 0 : i32
    return %c0_i32, %arg1 : i32, i32
  }
  func.func @transform_2(%arg0: i32, %arg1: i32) -> (i32, i32) {
    %c0_i32 = arith.constant 0 : i32
    %c0_i32_0 = arith.constant 0 : i32
    return %c0_i32, %arg1 : i32, i32
  }
  func.func @transform_3(%arg0: i32, %arg1: i32) -> (i32, i32) {
    %c0_i32 = arith.constant 0 : i32
    return %arg0, %arg1 : i32, i32
  }
}

</mosaic_0001>

<llo_original>
// kernel: resnet_forward.15
$region0: #{resnet_forward.15}
  #allocation0 [shape = 'u32[]', space=smem, size = 0x4, offset = 0x4, fixed_abs, tag = 'smem constant byte address 0x4 - core index']
  #allocation1 [shape = 'u32[72,128]{1,0:T(1,128)}', space=vmem, size = 0x9000, scoped, tag = 'internal scratch']
  %s0 = inlined_call_operand.vmem [shape: bf16[1024,128], index: 0, kind: input, shape index: {}]
  %s1 = inlined_call_operand.vmem [shape: bf16[128,128], index: 1, kind: input, shape index: {}]
  %s2 = inlined_call_operand.vmem [shape: f32[1,128], index: 2, kind: input, shape index: {}]
  %s3 = inlined_call_operand.vmem [shape: f32[1024,128], index: 3, kind: output, shape index: {}]
  %s4 = sld [smem:[#allocation0]]
  $region45: #{resnet_forward.15} parent=0
    _
  %s6 = ssub.s32 1, %s4
  %s7 = scalar_select 0, %s6, %s4
  loop: start=0, step=1, limit=10
  $region2: #{resnet_forward.15} parent=0 // loop_pre_header
    _
  $region3: #{resnet_forward.15} parent=0 // loop_header
    %s9 = sphi 0, %s13
    %p10 = scmp.ge.s32.totalorder %s9, 10
    %s16 = sphi 0, %s28
    %s17 = sphi 0, %s24
    %s18 = sphi 0, %s16
    %s19 = sphi 0, %s17
    %s20 = sphi 0, %s18
    %s21 = sphi 0, %s19
    %s31 = sphi 0, %s33
    %s34 = sphi 0, %s31
    %s35 = sphi 0, %s34
    %s51 = sphi 0, %s35
    %s57 = sphi 0, %s59
    %s60 = sphi 0, %s57
    %s61 = sphi 0, %s60
    %s77 = sphi 0, %s61
    %s83 = sphi 0, %s85
    %s86 = sphi 0, %s83
    %s87 = sphi 0, %s86
    %s103 = sphi 0, %s87
    %s111 = sphi 0, %s113
    %s114 = sphi 0, %s111
    %s115 = sphi 0, %s114
    %s131 = sphi 0, %s115
  $region4: #{resnet_forward.15} parent=0 // loop_header_branch
    %12 = sbr.rel (%p10) target = $region8
  $region5: #{resnet_forward.15} parent=0 // loop_body
    %s14 = ssub.s32 %s9, 1
    %s15 = ssub.s32 %s9, 2
    %s22 = sadd.s32 1, %s17
    %p23 = scmp.ge.s32.totalorder %s22, 1
    %s24 = scalar_select %p23, 0, %s22
    %s25 = sadd.s32 1, %s16
    %s26 = scalar_select %p23, %s25, %s16
    %p27 = scmp.ge.s32.totalorder %s26, 8
    %s28 = scalar_select %p27, 0, %s26
    %s29 = ssub.s32 %s16, %s28
    %p30 = scmp.eq.s32.totalorder %s29, 0
    %s32 = sadd.s32 %s31, 1
    %s33 = scalar_select %p30, %s31, %s32
    %p36 = pneg %p30
    %p37 = scmp.eq.s32.totalorder %s9, 7
    %p38 = por %p36, %p37
    %p39 = scmp.ne.s32.totalorder %s31, %s34
    %p40 = scmp.eq.s32.totalorder %s9, 0
    %p41 = por %p39, %p40
    %p42 = scmp.ne.s32.totalorder %s31, %s34
    %p43 = scmp.eq.s32.totalorder %s14, 7
    %p44 = por %p42, %p43
    %p45 = scmp.ne.s32.totalorder %s34, %s35
    %p46 = scmp.eq.s32.totalorder %s14, 0
    %p47 = por %p45, %p46
    %p48 = scmp.ne.s32.totalorder %s34, %s35
    %p49 = scmp.eq.s32.totalorder %s15, 7
    %p50 = por %p48, %p49
    %p52 = scmp.ne.s32.totalorder %s35, %s51
    %p53 = scmp.eq.s32.totalorder %s15, 0
    %p54 = por %p52, %p53
    %s55 = ssub.s32 %s17, %s24
    %p56 = scmp.eq.s32.totalorder %s55, 0
    %s58 = sadd.s32 %s57, 1
    %s59 = scalar_select %p56, %s57, %s58
    %p62 = pneg %p56
    %p63 = scmp.eq.s32.totalorder %s9, 7
    %p64 = por %p62, %p63
    %p65 = scmp.ne.s32.totalorder %s57, %s60
    %p66 = scmp.eq.s32.totalorder %s9, 0
    %p67 = por %p65, %p66
    %p68 = scmp.ne.s32.totalorder %s57, %s60
    %p69 = scmp.eq.s32.totalorder %s14, 7
    %p70 = por %p68, %p69
    %p71 = scmp.ne.s32.totalorder %s60, %s61
    %p72 = scmp.eq.s32.totalorder %s14, 0
    %p73 = por %p71, %p72
    %p74 = scmp.ne.s32.totalorder %s60, %s61
    %p75 = scmp.eq.s32.totalorder %s15, 7
    %p76 = por %p74, %p75
    %p78 = scmp.ne.s32.totalorder %s61, %s77
    %p79 = scmp.eq.s32.totalorder %s15, 0
    %p80 = por %p78, %p79
    %s81 = ssub.s32 %s17, %s24
    %p82 = scmp.eq.s32.totalorder %s81, 0
    %s84 = sadd.s32 %s83, 1
    %s85 = scalar_select %p82, %s83, %s84
    %p88 = pneg %p82
    %p89 = scmp.eq.s32.totalorder %s9, 7
    %p90 = por %p88, %p89
    %p91 = scmp.ne.s32.totalorder %s83, %s86
    %p92 = scmp.eq.s32.totalorder %s9, 0
    %p93 = por %p91, %p92
    %p94 = scmp.ne.s32.totalorder %s83, %s86
    %p95 = scmp.eq.s32.totalorder %s14, 7
    %p96 = por %p94, %p95
    %p97 = scmp.ne.s32.totalorder %s86, %s87
    %p98 = scmp.eq.s32.totalorder %s14, 0
    %p99 = por %p97, %p98
    %p100 = scmp.ne.s32.totalorder %s86, %s87
    %p101 = scmp.eq.s32.totalorder %s15, 7
    %p102 = por %p100, %p101
    %p104 = scmp.ne.s32.totalorder %s87, %s103
    %p105 = scmp.eq.s32.totalorder %s15, 0
    %p106 = por %p104, %p105
    %s107 = ssub.s32 %s16, %s28
    %s108 = ssub.s32 %s17, %s24
    %s109 = sor.u32 %s107, %s108
    %p110 = scmp.eq.s32.totalorder %s109, 0
    %s112 = sadd.s32 %s111, 1
    %s113 = scalar_select %p110, %s111, %s112
    %p116 = pneg %p110
    %p117 = scmp.eq.s32.totalorder %s9, 7
    %p118 = por %p116, %p117
    %p119 = scmp.ne.s32.totalorder %s111, %s114
    %p120 = scmp.eq.s32.totalorder %s9, 0
    %p121 = por %p119, %p120
    %p122 = scmp.ne.s32.totalorder %s111, %s114
    %p123 = scmp.eq.s32.totalorder %s14, 7
    %p124 = por %p122, %p123
    %p125 = scmp.ne.s32.totalorder %s114, %s115
    %p126 = scmp.eq.s32.totalorder %s14, 0
    %p127 = por %p125, %p126
    %p128 = scmp.ne.s32.totalorder %s114, %s115
    %p129 = scmp.eq.s32.totalorder %s15, 7
    %p130 = por %p128, %p129
    %p132 = scmp.ne.s32.totalorder %s115, %s131
    %p133 = scmp.eq.s32.totalorder %s15, 0
    %p134 = por %p132, %p133
    %p135 = scmp.le.s32.totalorder 1, %s9
    %p136 = scmp.lt.s32.totalorder %s9, 9
    %p137 = pnand %p135, %p136
    %p138 = pneg %p137
    // Predicated region
    $region9: #{resnet_forward.15} parent=5 // pred_check
      _
    $region10: #{resnet_forward.15} parent=5 // pred_check_branch
      %140 = sbr.rel (%p137) target = $region12
    $region11: #{resnet_forward.15} parent=5 // pred_region
      %s141 = ssub.s32 %s9, 1
      // Predicated region
      $region13: #{resnet_forward.15} parent=11 // pred_check
        %p142 = pneg %p73
      $region14: #{resnet_forward.15} parent=11 // pred_check_branch
        %144 = sbr.rel (%p142) target = $region16
      $region15: #{resnet_forward.15} parent=11 // pred_region
        %p145 = scmp.lt.s32.totalorder %s19, 0
        %s146 = scalar_select %p145, %s19, 0
        %s147 = smul.addr %s146, 4
        %s148 = scalar_lea.vmem %s1, %s147
      $region16: #{resnet_forward.15} parent=11 // pred_fallthru
        _
      // Predicated region
      $region17: #{resnet_forward.15} parent=11 // pred_check
        %p149 = pneg %p99
      $region18: #{resnet_forward.15} parent=11 // pred_check_branch
        %151 = sbr.rel (%p149) target = $region20
      $region19: #{resnet_forward.15} parent=11 // pred_region
        %p152 = scmp.lt.s32.totalorder %s19, 0
        %s153 = scalar_select %p152, %s19, 0
        %s154 = scalar_lea.vmem %s2, %s153
      $region20: #{resnet_forward.15} parent=11 // pred_fallthru
        _
    $region12: #{resnet_forward.15} parent=5 // pred_fallthru
      _
    %p155 = scmp.lt.s32.totalorder %s9, 8
    // Predicated region
    $region21: #{resnet_forward.15} parent=5 // pred_check
      %p156 = pneg %p155
    $region22: #{resnet_forward.15} parent=5 // pred_check_branch
      %158 = sbr.rel (%p156) target = $region24
    $region23: #{resnet_forward.15} parent=5 // pred_region
      // Predicated region
      $region25: #{resnet_forward.15} parent=23 // pred_check
        %p159 = pneg %p41
      $region26: #{resnet_forward.15} parent=23 // pred_check_branch
        %161 = sbr.rel (%p159) target = $region28
      $region27: #{resnet_forward.15} parent=23 // pred_region
        %s162 = smul.u32 16, %s16
        %p163 = scmp.lt.s32.totalorder %s162, 127
        %s164 = scalar_select %p163, %s162, 127
        %s165 = smul.addr %s164, 4
        %s166 = scalar_lea.vmem %s0, %s165
        %s167 = smul.u32 16, %s16
      $region28: #{resnet_forward.15} parent=23 // pred_fallthru
        _
    $region24: #{resnet_forward.15} parent=5 // pred_fallthru
      _
    %p168 = scmp.le.s32.totalorder 1, %s9
    %p169 = scmp.lt.s32.totalorder %s9, 9
    %p170 = pnand %p168, %p169
    %p171 = pneg %p170
    // Predicated region
    $region29: #{resnet_forward.15} parent=5 // pred_check
      _
    $region30: #{resnet_forward.15} parent=5 // pred_check_branch
      %173 = sbr.rel (%p170) target = $region32
    $region31: #{resnet_forward.15} parent=5 // pred_region
      %s174 = ssub.s32 %s9, 1
      %s175 = smul.u32 16, %s18
      %p176 = scmp.lt.s32.totalorder %s175, 127
      %s177 = scalar_select %p176, %s175, 127
      %s178 = smul.addr %s177, 4
      %s179 = scalar_lea.vmem %s0, %s178
      %p180 = pneg %p47
      %p181 = pneg %p44
      %p182 = scmp.lt.s32.totalorder %s19, 0
      %s183 = scalar_select %p182, %s19, 0
      %s184 = smul.addr %s183, 4
      %s185 = scalar_lea.vmem %s1, %s184
      %p186 = pneg %p73
      %p187 = pneg %p70
      %p188 = scmp.lt.s32.totalorder %s19, 0
      %s189 = scalar_select %p188, %s19, 0
      %s190 = scalar_lea.vmem %s2, %s189
      %p191 = pneg %p99
      %p192 = pneg %p96
      %p193 = pneg %p127
      %p194 = pneg %p124
      %s195 = smul.u32 16, %s18
      %p196 = scmp.lt.s32.totalorder %s195, 127
      %s197 = scalar_select %p196, %s195, 127
      %p198 = scmp.lt.s32.totalorder %s19, 0
      %s199 = scalar_select %p198, %s19, 0
      %s200 = sadd.s32 %s199, %s197
      %s201 = smul.addr %s200, 8
      %s202 = scalar_lea.vmem %s3, %s201
      %s203 = smul.u32 16, %s18
      %p204 = scmp.lt.s32.totalorder %s203, 127
      %s205 = scalar_select %p204, %s203, 127
      %s206 = smul.addr %s205, 4
      %s207 = scalar_lea.vmem %s0, %s206
      %s208 = smul.u32 16, %s18
      %p209 = scmp.lt.s32.totalorder %s19, 0
      %s210 = scalar_select %p209, %s19, 0
      %s211 = smul.addr %s210, 4
      %s212 = scalar_lea.vmem %s1, %s211
      %p213 = scmp.lt.s32.totalorder %s19, 0
      %s214 = scalar_select %p213, %s19, 0
      %s215 = scalar_lea.vmem %s2, %s214
      %s216 = smul.u32 16, %s18
      %p217 = scmp.lt.s32.totalorder %s216, 127
      %s218 = scalar_select %p217, %s216, 127
      %p219 = scmp.lt.s32.totalorder %s19, 0
      %s220 = scalar_select %p219, %s19, 0
      %s221 = sadd.s32 %s220, %s218
      %s222 = smul.addr %s221, 8
      %s223 = scalar_lea.vmem %s3, %s222
      %s224 = smul.u32 16, %s18
      %v225 = vld [vmem:[%s207] sm:$0xf]
      %v226 = vld [vmem:[%s207 + $0x4] sm:$0xf]
      %v227 = vld [vmem:[%s207 + $0x8] sm:$0xf]
      %v228 = vld [vmem:[%s207 + $0xc] sm:$0xf]
      %v229 = vld [vmem:[%s207 + $0x10] sm:$0xf]
      %v230 = vld [vmem:[%s207 + $0x14] sm:$0xf]
      %v231 = vld [vmem:[%s207 + $0x18] sm:$0xf]
      %v232 = vld [vmem:[%s207 + $0x1c] sm:$0xf]
      %v233 = vld [vmem:[%s207 + $0x20] sm:$0xf]
      %v234 = vld [vmem:[%s207 + $0x24] sm:$0xf]
      %v235 = vld [vmem:[%s207 + $0x28] sm:$0xf]
      %v236 = vld [vmem:[%s207 + $0x2c] sm:$0xf]
      %v237 = vld [vmem:[%s207 + $0x30] sm:$0xf]
      %v238 = vld [vmem:[%s207 + $0x34] sm:$0xf]
      %v239 = vld [vmem:[%s207 + $0x38] sm:$0xf]
      %v240 = vld [vmem:[%s207 + $0x3c] sm:$0xf]
      %v241 = vld [vmem:[%s212] sm:$0xf]
      %v242 = vld [vmem:[%s212 + $0x4] sm:$0xf]
      %v243 = vld [vmem:[%s212 + $0x8] sm:$0xf]
      %v244 = vld [vmem:[%s212 + $0xc] sm:$0xf]
      %v245 = vld [vmem:[%s212 + $0x10] sm:$0xf]
      %v246 = vld [vmem:[%s212 + $0x14] sm:$0xf]
      %v247 = vld [vmem:[%s212 + $0x18] sm:$0xf]
      %v248 = vld [vmem:[%s212 + $0x1c] sm:$0xf]
      %v249 = vld [vmem:[%s212 + $0x20] sm:$0xf]
      %v250 = vld [vmem:[%s212 + $0x24] sm:$0xf]
      %v251 = vld [vmem:[%s212 + $0x28] sm:$0xf]
      %v252 = vld [vmem:[%s212 + $0x2c] sm:$0xf]
      %v253 = vld [vmem:[%s212 + $0x30] sm:$0xf]
      %v254 = vld [vmem:[%s212 + $0x34] sm:$0xf]
      %v255 = vld [vmem:[%s212 + $0x38] sm:$0xf]
      %v256 = vld [vmem:[%s212 + $0x3c] sm:$0xf]
      %v257 = vld [vmem:[%s215] sm:$0x1]
      %v259 = vperm.slane %v257, 0
      %v277 = vunpack.c.l.b16 %v225
      %v278 = vunpack.c.l.b16 %v226
      %v279 = vunpack.c.l.b16 %v227
      %v280 = vunpack.c.l.b16 %v228
      %v281 = vunpack.c.l.b16 %v229
      %v282 = vunpack.c.l.b16 %v230
      %v283 = vunpack.c.l.b16 %v231
      %v284 = vunpack.c.l.b16 %v232
      %v285 = vunpack.c.l.b16 %v233
      %v286 = vunpack.c.l.b16 %v234
      %v287 = vunpack.c.l.b16 %v235
      %v288 = vunpack.c.l.b16 %v236
      %v289 = vunpack.c.l.b16 %v237
      %v290 = vunpack.c.l.b16 %v238
      %v291 = vunpack.c.l.b16 %v239
      %v292 = vunpack.c.l.b16 %v240
      %v293 = vpack.c.b16 %v278, %v277
      %v294 = vpack.c.b16 %v280, %v279
      %v295 = vpack.c.b16 %v282, %v281
      %v296 = vpack.c.b16 %v284, %v283
      %v297 = vpack.c.b16 %v286, %v285
      %v298 = vpack.c.b16 %v288, %v287
      %v299 = vpack.c.b16 %v290, %v289
      %v300 = vpack.c.b16 %v292, %v291
      %v325 = vunpack.c.l.b16 %v241
      %v326 = vunpack.c.l.b16 %v242
      %v327 = vunpack.c.l.b16 %v243
      %v328 = vunpack.c.l.b16 %v244
      %v329 = vunpack.c.l.b16 %v245
      %v330 = vunpack.c.l.b16 %v246
      %v331 = vunpack.c.l.b16 %v247
      %v332 = vunpack.c.l.b16 %v248
      %v333 = vunpack.c.l.b16 %v249
      %v334 = vunpack.c.l.b16 %v250
      %v335 = vunpack.c.l.b16 %v251
      %v336 = vunpack.c.l.b16 %v252
      %v337 = vunpack.c.l.b16 %v253
      %v338 = vunpack.c.l.b16 %v254
      %v339 = vunpack.c.l.b16 %v255
      %v340 = vunpack.c.l.b16 %v256
      %v341 = vpack.c.b16 %v326, %v325
      %v342 = vpack.c.b16 %v328, %v327
      %v343 = vpack.c.b16 %v330, %v329
      %v344 = vpack.c.b16 %v332, %v331
      %v345 = vpack.c.b16 %v334, %v333
      %v346 = vpack.c.b16 %v336, %v335
      %v347 = vpack.c.b16 %v338, %v337
      %v348 = vpack.c.b16 %v340, %v339
      %357 = vmatpush.bf16.msra.mxu0 %v348
      %358 = vmatpush.bf16.msra.mxu0 %v347
      %359 = vmatpush.bf16.msra.mxu0 %v346
      %360 = vmatpush.bf16.msra.mxu0 %v345
      %361 = vmatpush.bf16.msra.mxu0 %v344
      %362 = vmatpush.bf16.msra.mxu0 %v343
      %363 = vmatpush.bf16.msra.mxu0 %v342
      %364 = vmatpush.bf16.msra.mxu0 %v341
      %365 = vmatmul.bf16.gmra.mxu0 %v293
      %v366 = vpop.f32.mrf.mxu0
      %v367 = vadd.f32 %v259, %v366
      %v368 = vpop.f32.mrf.mxu0
      %v369 = vadd.f32 %v259, %v368
      %370 = vmatmul.bf16.gmra.mxu0 %v294
      %v371 = vpop.f32.mrf.mxu0
      %v372 = vadd.f32 %v259, %v371
      %v373 = vpop.f32.mrf.mxu0
      %v374 = vadd.f32 %v259, %v373
      %375 = vmatmul.bf16.gmra.mxu0 %v295
      %v376 = vpop.f32.mrf.mxu0
      %v377 = vadd.f32 %v259, %v376
      %v378 = vpop.f32.mrf.mxu0
      %v379 = vadd.f32 %v259, %v378
      %380 = vmatmul.bf16.gmra.mxu0 %v296
      %v381 = vpop.f32.mrf.mxu0
      %v382 = vadd.f32 %v259, %v381
      %v383 = vpop.f32.mrf.mxu0
      %v384 = vadd.f32 %v259, %v383
      %385 = vmatmul.bf16.gmra.mxu0 %v297
      %v386 = vpop.f32.mrf.mxu0
      %v387 = vadd.f32 %v259, %v386
      %v388 = vpop.f32.mrf.mxu0
      %v389 = vadd.f32 %v259, %v388
      %390 = vmatmul.bf16.gmra.mxu0 %v298
      %v391 = vpop.f32.mrf.mxu0
      %v392 = vadd.f32 %v259, %v391
      %v393 = vpop.f32.mrf.mxu0
      %v394 = vadd.f32 %v259, %v393
      %395 = vmatmul.bf16.gmra.mxu0 %v299
      %v396 = vpop.f32.mrf.mxu0
      %v397 = vadd.f32 %v259, %v396
      %v398 = vpop.f32.mrf.mxu0
      %v399 = vadd.f32 %v259, %v398
      %400 = vmatmul.bf16.gmra.mxu0 %v300
      %v401 = vpop.f32.mrf.mxu0
      %v402 = vadd.f32 %v259, %v401
      %v403 = vpop.f32.mrf.mxu0
      %v404 = vadd.f32 %v259, %v403
      %405 = vdwg.mxu0
      %406 = vst [vmem:[%s223] sm:$0xff] %v367
      %407 = vst [vmem:[%s223 + $0x8] sm:$0xff] %v369
      %408 = vst [vmem:[%s223 + $0x10] sm:$0xff] %v372
      %409 = vst [vmem:[%s223 + $0x18] sm:$0xff] %v374
      %410 = vst [vmem:[%s223 + $0x20] sm:$0xff] %v377
      %411 = vst [vmem:[%s223 + $0x28] sm:$0xff] %v379
      %412 = vst [vmem:[%s223 + $0x30] sm:$0xff] %v382
      %413 = vst [vmem:[%s223 + $0x38] sm:$0xff] %v384
      %414 = vst [vmem:[%s223 + $0x40] sm:$0xff] %v387
      %415 = vst [vmem:[%s223 + $0x48] sm:$0xff] %v389
      %416 = vst [vmem:[%s223 + $0x50] sm:$0xff] %v392
      %417 = vst [vmem:[%s223 + $0x58] sm:$0xff] %v394
      %418 = vst [vmem:[%s223 + $0x60] sm:$0xff] %v397
      %419 = vst [vmem:[%s223 + $0x68] sm:$0xff] %v399
      %420 = vst [vmem:[%s223 + $0x70] sm:$0xff] %v402
      %421 = vst [vmem:[%s223 + $0x78] sm:$0xff] %v404
      %s422 = smul.u32 16, %s18
      %p423 = scmp.lt.s32.totalorder %s422, 127
      %s424 = scalar_select %p423, %s422, 127
      %p425 = scmp.lt.s32.totalorder %s19, 0
      %s426 = scalar_select %p425, %s19, 0
      %s427 = sadd.s32 %s426, %s424
      %s428 = smul.addr %s427, 8
      %s429 = scalar_lea.vmem %s3, %s428
      // Predicated region
      $region33: #{resnet_forward.15} parent=31 // pred_check
        %p430 = pneg %p124
      $region34: #{resnet_forward.15} parent=31 // pred_check_branch
        %432 = sbr.rel (%p430) target = $region36
      $region35: #{resnet_forward.15} parent=31 // pred_region
        %s433 = smul.u32 16, %s18
      $region36: #{resnet_forward.15} parent=31 // pred_fallthru
        _
    $region32: #{resnet_forward.15} parent=5 // pred_fallthru
      _
    %p434 = scmp.le.s32.totalorder 2, %s9
    // Predicated region
    $region37: #{resnet_forward.15} parent=5 // pred_check
      %p435 = pneg %p434
    $region38: #{resnet_forward.15} parent=5 // pred_check_branch
      %437 = sbr.rel (%p435) target = $region40
    $region39: #{resnet_forward.15} parent=5 // pred_region
      %s438 = ssub.s32 %s9, 2
      // Predicated region
      $region41: #{resnet_forward.15} parent=39 // pred_check
        %p439 = pneg %p130
      $region42: #{resnet_forward.15} parent=39 // pred_check_branch
        %441 = sbr.rel (%p439) target = $region44
      $region43: #{resnet_forward.15} parent=39 // pred_region
        %s442 = smul.u32 16, %s20
        %p443 = scmp.lt.s32.totalorder %s442, 127
        %s444 = scalar_select %p443, %s442, 127
        %p445 = scmp.lt.s32.totalorder %s21, 0
        %s446 = scalar_select %p445, %s21, 0
        %s447 = sadd.s32 %s446, %s444
        %s448 = smul.addr %s447, 8
        %s449 = scalar_lea.vmem %s3, %s448
      $region44: #{resnet_forward.15} parent=39 // pred_fallthru
        _
    $region40: #{resnet_forward.15} parent=5 // pred_fallthru
      _
  $region6: #{resnet_forward.15} parent=0 // loop_footer
    %s13 = sadd.s32 1, %s9
  $region7: #{resnet_forward.15} parent=0 // loop_footer_branch
    %8 = sbr.rel target = $region3
  $region8: #{resnet_forward.15} parent=0 // loop_exit
    _

// kernel: resnet_forward.16
$region0: #{resnet_forward.16}
  #allocation0 [shape = 'u32[]', space=smem, size = 0x4, offset = 0x4, fixed_abs, tag = 'smem constant byte address 0x4 - core index']
  #allocation1 [shape = 'u32[72,128]{1,0:T(1,128)}', space=vmem, size = 0x9000, scoped, tag = 'internal scratch']
  %s0 = inlined_call_operand.vmem [shape: f32[2,512,64], index: 0, kind: input, shape index: {}]
  %s1 = inlined_call_operand.vmem [shape: f32[2,512,64], index: 1, kind: output, shape index: {}]
  %s2 = sld [smem:[#allocation0]]
  $region37: #{resnet_forward.16} parent=0
    _
  %s4 = ssub.s32 1, %s2
  %s5 = scalar_select 0, %s4, %s2
  loop: start=0, step=1, limit=4
  $region2: #{resnet_forward.16} parent=0 // loop_pre_header
    _
  $region3: #{resnet_forward.16} parent=0 // loop_header
    %s7 = sphi 0, %s11
    %p8 = scmp.ge.s32.totalorder %s7, 4
    %s17 = sphi 0, %s19
    %s20 = sphi 0, %s17
    %s21 = sphi 0, %s20
    %s37 = sphi 0, %s21
    %s43 = sphi 0, %s45
    %s46 = sphi 0, %s43
    %s47 = sphi 0, %s46
    %s63 = sphi 0, %s47
  $region4: #{resnet_forward.16} parent=0 // loop_header_branch
    %10 = sbr.rel (%p8) target = $region8
  $region5: #{resnet_forward.16} parent=0 // loop_body
    %s12 = ssub.s32 %s7, 1
    %s13 = ssub.s32 %s7, 2
    %s14 = sadd.s32 %s7, 1
    %s15 = ssub.s32 %s7, %s14
    %p16 = scmp.eq.s32.totalorder %s15, 0
    %s18 = sadd.s32 %s17, 1
    %s19 = scalar_select %p16, %s17, %s18
    %p22 = pneg %p16
    %p23 = scmp.eq.s32.totalorder %s7, 1
    %p24 = por %p22, %p23
    %p25 = scmp.ne.s32.totalorder %s17, %s20
    %p26 = scmp.eq.s32.totalorder %s7, 0
    %p27 = por %p25, %p26
    %p28 = scmp.ne.s32.totalorder %s17, %s20
    %p29 = scmp.eq.s32.totalorder %s12, 1
    %p30 = por %p28, %p29
    %p31 = scmp.ne.s32.totalorder %s20, %s21
    %p32 = scmp.eq.s32.totalorder %s12, 0
    %p33 = por %p31, %p32
    %p34 = scmp.ne.s32.totalorder %s20, %s21
    %p35 = scmp.eq.s32.totalorder %s13, 1
    %p36 = por %p34, %p35
    %p38 = scmp.ne.s32.totalorder %s21, %s37
    %p39 = scmp.eq.s32.totalorder %s13, 0
    %p40 = por %p38, %p39
    %s41 = ssub.s32 %s7, %s14
    %p42 = scmp.eq.s32.totalorder %s41, 0
    %s44 = sadd.s32 %s43, 1
    %s45 = scalar_select %p42, %s43, %s44
    %p48 = pneg %p42
    %p49 = scmp.eq.s32.totalorder %s7, 1
    %p50 = por %p48, %p49
    %p51 = scmp.ne.s32.totalorder %s43, %s46
    %p52 = scmp.eq.s32.totalorder %s7, 0
    %p53 = por %p51, %p52
    %p54 = scmp.ne.s32.totalorder %s43, %s46
    %p55 = scmp.eq.s32.totalorder %s12, 1
    %p56 = por %p54, %p55
    %p57 = scmp.ne.s32.totalorder %s46, %s47
    %p58 = scmp.eq.s32.totalorder %s12, 0
    %p59 = por %p57, %p58
    %p60 = scmp.ne.s32.totalorder %s46, %s47
    %p61 = scmp.eq.s32.totalorder %s13, 1
    %p62 = por %p60, %p61
    %p64 = scmp.ne.s32.totalorder %s47, %s63
    %p65 = scmp.eq.s32.totalorder %s13, 0
    %p66 = por %p64, %p65
    %p67 = scmp.le.s32.totalorder 1, %s7
    %p68 = scmp.lt.s32.totalorder %s7, 3
    %p69 = pnand %p67, %p68
    %p70 = pneg %p69
    // Predicated region
    $region9: #{resnet_forward.16} parent=5 // pred_check
      _
    $region10: #{resnet_forward.16} parent=5 // pred_check_branch
      %72 = sbr.rel (%p69) target = $region12
    $region11: #{resnet_forward.16} parent=5 // pred_region
      %s73 = ssub.s32 %s7, 1
    $region12: #{resnet_forward.16} parent=5 // pred_fallthru
      _
    %p74 = scmp.lt.s32.totalorder %s7, 2
    // Predicated region
    $region13: #{resnet_forward.16} parent=5 // pred_check
      %p75 = pneg %p74
    $region14: #{resnet_forward.16} parent=5 // pred_check_branch
      %77 = sbr.rel (%p75) target = $region16
    $region15: #{resnet_forward.16} parent=5 // pred_region
      // Predicated region
      $region17: #{resnet_forward.16} parent=15 // pred_check
        %p78 = pneg %p27
      $region18: #{resnet_forward.16} parent=15 // pred_check_branch
        %80 = sbr.rel (%p78) target = $region20
      $region19: #{resnet_forward.16} parent=15 // pred_region
        %p81 = scmp.lt.s32.totalorder %s7, 1
        %s82 = scalar_select %p81, %s7, 1
        %s83 = smul.addr %s82, 64
        %s84 = smul.addr %s83, 8
        %s85 = scalar_lea.vmem %s0, %s84
      $region20: #{resnet_forward.16} parent=15 // pred_fallthru
        _
    $region16: #{resnet_forward.16} parent=5 // pred_fallthru
      _
    %p86 = scmp.le.s32.totalorder 1, %s7
    %p87 = scmp.lt.s32.totalorder %s7, 3
    %p88 = pnand %p86, %p87
    %p89 = pneg %p88
    // Predicated region
    $region21: #{resnet_forward.16} parent=5 // pred_check
      _
    $region22: #{resnet_forward.16} parent=5 // pred_check_branch
      %91 = sbr.rel (%p88) target = $region24
    $region23: #{resnet_forward.16} parent=5 // pred_region
      %s92 = ssub.s32 %s7, 1
      %p93 = scmp.lt.s32.totalorder %s12, 1
      %s94 = scalar_select %p93, %s12, 1
      %s95 = smul.addr %s94, 64
      %s96 = smul.addr %s95, 8
      %s97 = scalar_lea.vmem %s0, %s96
      %p98 = pneg %p33
      %p99 = pneg %p30
      %p100 = pneg %p59
      %p101 = pneg %p56
      %p102 = scmp.lt.s32.totalorder %s12, 1
      %s103 = scalar_select %p102, %s12, 1
      %s104 = smul.addr %s103, 64
      %s105 = smul.addr %s104, 8
      %s106 = scalar_lea.vmem %s1, %s105
      %p107 = scmp.lt.s32.totalorder %s12, 1
      %s108 = scalar_select %p107, %s12, 1
      %s109 = smul.addr %s108, 64
      %s110 = smul.addr %s109, 8
      %s111 = scalar_lea.vmem %s0, %s110
      %p112 = scmp.lt.s32.totalorder %s12, 1
      %s113 = scalar_select %p112, %s12, 1
      %s114 = smul.addr %s113, 64
      %s115 = smul.addr %s114, 8
      %s116 = scalar_lea.vmem %s1, %s115
      %v117 = vld [vmem:[%s111] sm:$0xff]
      %v118 = vld [vmem:[%s111 + $0x8] sm:$0xff]
      %v119 = vld [vmem:[%s111 + $0x10] sm:$0xff]
      %v120 = vld [vmem:[%s111 + $0x18] sm:$0xff]
      %v121 = vld [vmem:[%s111 + $0x20] sm:$0xff]
      %v122 = vld [vmem:[%s111 + $0x28] sm:$0xff]
      %v123 = vld [vmem:[%s111 + $0x30] sm:$0xff]
      %v124 = vld [vmem:[%s111 + $0x38] sm:$0xff]
      %v125 = vld [vmem:[%s111 + $0x40] sm:$0xff]
      %v126 = vld [vmem:[%s111 + $0x48] sm:$0xff]
      %v127 = vld [vmem:[%s111 + $0x50] sm:$0xff]
      %v128 = vld [vmem:[%s111 + $0x58] sm:$0xff]
      %v129 = vld [vmem:[%s111 + $0x60] sm:$0xff]
      %v130 = vld [vmem:[%s111 + $0x68] sm:$0xff]
      %v131 = vld [vmem:[%s111 + $0x70] sm:$0xff]
      %v132 = vld [vmem:[%s111 + $0x78] sm:$0xff]
      %v133 = vld [vmem:[%s111 + $0x80] sm:$0xff]
      %v134 = vld [vmem:[%s111 + $0x88] sm:$0xff]
      %v135 = vld [vmem:[%s111 + $0x90] sm:$0xff]
      %v136 = vld [vmem:[%s111 + $0x98] sm:$0xff]
      %v137 = vld [vmem:[%s111 + $0xa0] sm:$0xff]
      %v138 = vld [vmem:[%s111 + $0xa8] sm:$0xff]
      %v139 = vld [vmem:[%s111 + $0xb0] sm:$0xff]
      %v140 = vld [vmem:[%s111 + $0xb8] sm:$0xff]
      %v141 = vld [vmem:[%s111 + $0xc0] sm:$0xff]
      %v142 = vld [vmem:[%s111 + $0xc8] sm:$0xff]
      %v143 = vld [vmem:[%s111 + $0xd0] sm:$0xff]
      %v144 = vld [vmem:[%s111 + $0xd8] sm:$0xff]
      %v145 = vld [vmem:[%s111 + $0xe0] sm:$0xff]
      %v146 = vld [vmem:[%s111 + $0xe8] sm:$0xff]
      %v147 = vld [vmem:[%s111 + $0xf0] sm:$0xff]
      %v148 = vld [vmem:[%s111 + $0xf8] sm:$0xff]
      %v149 = vld [vmem:[%s111 + $0x100] sm:$0xff]
      %v150 = vld [vmem:[%s111 + $0x108] sm:$0xff]
      %v151 = vld [vmem:[%s111 + $0x110] sm:$0xff]
      %v152 = vld [vmem:[%s111 + $0x118] sm:$0xff]
      %v153 = vld [vmem:[%s111 + $0x120] sm:$0xff]
      %v154 = vld [vmem:[%s111 + $0x128] sm:$0xff]
      %v155 = vld [vmem:[%s111 + $0x130] sm:$0xff]
      %v156 = vld [vmem:[%s111 + $0x138] sm:$0xff]
      %v157 = vld [vmem:[%s111 + $0x140] sm:$0xff]
      %v158 = vld [vmem:[%s111 + $0x148] sm:$0xff]
      %v159 = vld [vmem:[%s111 + $0x150] sm:$0xff]
      %v160 = vld [vmem:[%s111 + $0x158] sm:$0xff]
      %v161 = vld [vmem:[%s111 + $0x160] sm:$0xff]
      %v162 = vld [vmem:[%s111 + $0x168] sm:$0xff]
      %v163 = vld [vmem:[%s111 + $0x170] sm:$0xff]
      %v164 = vld [vmem:[%s111 + $0x178] sm:$0xff]
      %v165 = vld [vmem:[%s111 + $0x180] sm:$0xff]
      %v166 = vld [vmem:[%s111 + $0x188] sm:$0xff]
      %v167 = vld [vmem:[%s111 + $0x190] sm:$0xff]
      %v168 = vld [vmem:[%s111 + $0x198] sm:$0xff]
      %v169 = vld [vmem:[%s111 + $0x1a0] sm:$0xff]
      %v170 = vld [vmem:[%s111 + $0x1a8] sm:$0xff]
      %v171 = vld [vmem:[%s111 + $0x1b0] sm:$0xff]
      %v172 = vld [vmem:[%s111 + $0x1b8] sm:$0xff]
      %v173 = vld [vmem:[%s111 + $0x1c0] sm:$0xff]
      %v174 = vld [vmem:[%s111 + $0x1c8] sm:$0xff]
      %v175 = vld [vmem:[%s111 + $0x1d0] sm:$0xff]
      %v176 = vld [vmem:[%s111 + $0x1d8] sm:$0xff]
      %v177 = vld [vmem:[%s111 + $0x1e0] sm:$0xff]
      %v178 = vld [vmem:[%s111 + $0x1e8] sm:$0xff]
      %v179 = vld [vmem:[%s111 + $0x1f0] sm:$0xff]
      %v180 = vld [vmem:[%s111 + $0x1f8] sm:$0xff]
      %vm181 = vcmask 523264
      %v182 = vsel %vm181, %v117, 0.0
      %v183 = vsel %vm181, %v118, 0.0
      %v184 = vadd.f32 %v182, %v183
      %v185 = vsel %vm181, %v119, 0.0
      %v186 = vadd.f32 %v184, %v185
      %v187 = vsel %vm181, %v120, 0.0
      %v188 = vadd.f32 %v186, %v187
      %v189 = vsel %vm181, %v121, 0.0
      %v190 = vadd.f32 %v188, %v189
      %v191 = vsel %vm181, %v122, 0.0
      %v192 = vadd.f32 %v190, %v191
      %v193 = vsel %vm181, %v123, 0.0
      %v194 = vadd.f32 %v192, %v193
      %v195 = vsel %vm181, %v124, 0.0
      %v196 = vadd.f32 %v194, %v195
      %v197 = vsel %vm181, %v125, 0.0
      %v198 = vadd.f32 %v196, %v197
      %v199 = vsel %vm181, %v126, 0.0
      %v200 = vadd.f32 %v198, %v199
      %v201 = vsel %vm181, %v127, 0.0
      %v202 = vadd.f32 %v200, %v201
      %v203 = vsel %vm181, %v128, 0.0
      %v204 = vadd.f32 %v202, %v203
      %v205 = vsel %vm181, %v129, 0.0
      %v206 = vadd.f32 %v204, %v205
      %v207 = vsel %vm181, %v130, 0.0
      %v208 = vadd.f32 %v206, %v207
      %v209 = vsel %vm181, %v131, 0.0
      %v210 = vadd.f32 %v208, %v209
      %v211 = vsel %vm181, %v132, 0.0
      %v212 = vadd.f32 %v210, %v211
      %v213 = vsel %vm181, %v133, 0.0
      %v214 = vadd.f32 %v212, %v213
      %v215 = vsel %vm181, %v134, 0.0
      %v216 = vadd.f32 %v214, %v215
      %v217 = vsel %vm181, %v135, 0.0
      %v218 = vadd.f32 %v216, %v217
      %v219 = vsel %vm181, %v136, 0.0
      %v220 = vadd.f32 %v218, %v219
      %v221 = vsel %vm181, %v137, 0.0
      %v222 = vadd.f32 %v220, %v221
      %v223 = vsel %vm181, %v138, 0.0
      %v224 = vadd.f32 %v222, %v223
      %v225 = vsel %vm181, %v139, 0.0
      %v226 = vadd.f32 %v224, %v225
      %v227 = vsel %vm181, %v140, 0.0
      %v228 = vadd.f32 %v226, %v227
      %v229 = vsel %vm181, %v141, 0.0
      %v230 = vadd.f32 %v228, %v229
      %v231 = vsel %vm181, %v142, 0.0
      %v232 = vadd.f32 %v230, %v231
      %v233 = vsel %vm181, %v143, 0.0
      %v234 = vadd.f32 %v232, %v233
      %v235 = vsel %vm181, %v144, 0.0
      %v236 = vadd.f32 %v234, %v235
      %v237 = vsel %vm181, %v145, 0.0
      %v238 = vadd.f32 %v236, %v237
      %v239 = vsel %vm181, %v146, 0.0
      %v240 = vadd.f32 %v238, %v239
      %v241 = vsel %vm181, %v147, 0.0
      %v242 = vadd.f32 %v240, %v241
      %v243 = vsel %vm181, %v148, 0.0
      %v244 = vadd.f32 %v242, %v243
      %v245 = vsel %vm181, %v149, 0.0
      %v246 = vadd.f32 %v244, %v245
      %v247 = vsel %vm181, %v150, 0.0
      %v248 = vadd.f32 %v246, %v247
      %v249 = vsel %vm181, %v151, 0.0
      %v250 = vadd.f32 %v248, %v249
      %v251 = vsel %vm181, %v152, 0.0
      %v252 = vadd.f32 %v250, %v251
      %v253 = vsel %vm181, %v153, 0.0
      %v254 = vadd.f32 %v252, %v253
      %v255 = vsel %vm181, %v154, 0.0
      %v256 = vadd.f32 %v254, %v255
      %v257 = vsel %vm181, %v155, 0.0
      %v258 = vadd.f32 %v256, %v257
      %v259 = vsel %vm181, %v156, 0.0
      %v260 = vadd.f32 %v258, %v259
      %v261 = vsel %vm181, %v157, 0.0
      %v262 = vadd.f32 %v260, %v261
      %v263 = vsel %vm181, %v158, 0.0
      %v264 = vadd.f32 %v262, %v263
      %v265 = vsel %vm181, %v159, 0.0
      %v266 = vadd.f32 %v264, %v265
      %v267 = vsel %vm181, %v160, 0.0
      %v268 = vadd.f32 %v266, %v267
      %v269 = vsel %vm181, %v161, 0.0
      %v270 = vadd.f32 %v268, %v269
      %v271 = vsel %vm181, %v162, 0.0
      %v272 = vadd.f32 %v270, %v271
      %v273 = vsel %vm181, %v163, 0.0
      %v274 = vadd.f32 %v272, %v273
      %v275 = vsel %vm181, %v164, 0.0
      %v276 = vadd.f32 %v274, %v275
      %v277 = vsel %vm181, %v165, 0.0
      %v278 = vadd.f32 %v276, %v277
      %v279 = vsel %vm181, %v166, 0.0
      %v280 = vadd.f32 %v278, %v279
      %v281 = vsel %vm181, %v167, 0.0
      %v282 = vadd.f32 %v280, %v281
      %v283 = vsel %vm181, %v168, 0.0
      %v284 = vadd.f32 %v282, %v283
      %v285 = vsel %vm181, %v169, 0.0
      %v286 = vadd.f32 %v284, %v285
      %v287 = vsel %vm181, %v170, 0.0
      %v288 = vadd.f32 %v286, %v287
      %v289 = vsel %vm181, %v171, 0.0
      %v290 = vadd.f32 %v288, %v289
      %v291 = vsel %vm181, %v172, 0.0
      %v292 = vadd.f32 %v290, %v291
      %v293 = vsel %vm181, %v173, 0.0
      %v294 = vadd.f32 %v292, %v293
      %v295 = vsel %vm181, %v174, 0.0
      %v296 = vadd.f32 %v294, %v295
      %v297 = vsel %vm181, %v175, 0.0
      %v298 = vadd.f32 %v296, %v297
      %v299 = vsel %vm181, %v176, 0.0
      %v300 = vadd.f32 %v298, %v299
      %v301 = vsel %vm181, %v177, 0.0
      %v302 = vadd.f32 %v300, %v301
      %v303 = vsel %vm181, %v178, 0.0
      %v304 = vadd.f32 %v302, %v303
      %v305 = vsel %vm181, %v179, 0.0
      %v306 = vadd.f32 %v304, %v305
      %v307 = vsel %vm181, %v180, 0.0
      %v308 = vadd.f32 %v306, %v307
      %v309 = vrot.slane %v308, 4
      %v310 = vadd.f32 %v308, %v309
      %v311 = vrot.slane %v310, 2
      %v312 = vadd.f32 %v310, %v311
      %v313 = vrot.slane %v312, 1
      %v314 = vadd.f32 %v312, %v313
      %v315 = vrcp.pop 512.0
      %v316 = vmul.f32 512.0, %v315
      %v317 = vsub.f32 1.0, %v316
      %v318 = vmul.f32 %v315, %v317
      %v319 = vadd.f32 %v315, %v318
      %vm320 = vweird.f32 %v315
      %v321 = vsel %vm320, %v315, %v319
      %v322 = vmul.f32 %v314, %v321
      %v323 = vsub.f32 %v117, %v322
      %v324 = vsub.f32 %v118, %v322
      %v325 = vsub.f32 %v119, %v322
      %v326 = vsub.f32 %v120, %v322
      %v327 = vsub.f32 %v121, %v322
      %v328 = vsub.f32 %v122, %v322
      %v329 = vsub.f32 %v123, %v322
      %v330 = vsub.f32 %v124, %v322
      %v331 = vsub.f32 %v125, %v322
      %v332 = vsub.f32 %v126, %v322
      %v333 = vsub.f32 %v127, %v322
      %v334 = vsub.f32 %v128, %v322
      %v335 = vsub.f32 %v129, %v322
      %v336 = vsub.f32 %v130, %v322
      %v337 = vsub.f32 %v131, %v322
      %v338 = vsub.f32 %v132, %v322
      %v339 = vsub.f32 %v133, %v322
      %v340 = vsub.f32 %v134, %v322
      %v341 = vsub.f32 %v135, %v322
      %v342 = vsub.f32 %v136, %v322
      %v343 = vsub.f32 %v137, %v322
      %v344 = vsub.f32 %v138, %v322
      %v345 = vsub.f32 %v139, %v322
      %v346 = vsub.f32 %v140, %v322
      %v347 = vsub.f32 %v141, %v322
      %v348 = vsub.f32 %v142, %v322
      %v349 = vsub.f32 %v143, %v322
      %v350 = vsub.f32 %v144, %v322
      %v351 = vsub.f32 %v145, %v322
      %v352 = vsub.f32 %v146, %v322
      %v353 = vsub.f32 %v147, %v322
      %v354 = vsub.f32 %v148, %v322
      %v355 = vsub.f32 %v149, %v322
      %v356 = vsub.f32 %v150, %v322
      %v357 = vsub.f32 %v151, %v322
      %v358 = vsub.f32 %v152, %v322
      %v359 = vsub.f32 %v153, %v322
      %v360 = vsub.f32 %v154, %v322
      %v361 = vsub.f32 %v155, %v322
      %v362 = vsub.f32 %v156, %v322
      %v363 = vsub.f32 %v157, %v322
      %v364 = vsub.f32 %v158, %v322
      %v365 = vsub.f32 %v159, %v322
      %v366 = vsub.f32 %v160, %v322
      %v367 = vsub.f32 %v161, %v322
      %v368 = vsub.f32 %v162, %v322
      %v369 = vsub.f32 %v163, %v322
      %v370 = vsub.f32 %v164, %v322
      %v371 = vsub.f32 %v165, %v322
      %v372 = vsub.f32 %v166, %v322
      %v373 = vsub.f32 %v167, %v322
      %v374 = vsub.f32 %v168, %v322
      %v375 = vsub.f32 %v169, %v322
      %v376 = vsub.f32 %v170, %v322
      %v377 = vsub.f32 %v171, %v322
      %v378 = vsub.f32 %v172, %v322
      %v379 = vsub.f32 %v173, %v322
      %v380 = vsub.f32 %v174, %v322
      %v381 = vsub.f32 %v175, %v322
      %v382 = vsub.f32 %v176, %v322
      %v383 = vsub.f32 %v177, %v322
      %v384 = vsub.f32 %v178, %v322
      %v385 = vsub.f32 %v179, %v322
      %v386 = vsub.f32 %v180, %v322
      %v387 = vmul.f32 %v323, %v323
      %v388 = vmul.f32 %v324, %v324
      %v389 = vmul.f32 %v325, %v325
      %v390 = vmul.f32 %v326, %v326
      %v391 = vmul.f32 %v327, %v327
      %v392 = vmul.f32 %v328, %v328
      %v393 = vmul.f32 %v329, %v329
      %v394 = vmul.f32 %v330, %v330
      %v395 = vmul.f32 %v331, %v331
      %v396 = vmul.f32 %v332, %v332
      %v397 = vmul.f32 %v333, %v333
      %v398 = vmul.f32 %v334, %v334
      %v399 = vmul.f32 %v335, %v335
      %v400 = vmul.f32 %v336, %v336
      %v401 = vmul.f32 %v337, %v337
      %v402 = vmul.f32 %v338, %v338
      %v403 = vmul.f32 %v339, %v339
      %v404 = vmul.f32 %v340, %v340
      %v405 = vmul.f32 %v341, %v341
      %v406 = vmul.f32 %v342, %v342
      %v407 = vmul.f32 %v343, %v343
      %v408 = vmul.f32 %v344, %v344
      %v409 = vmul.f32 %v345, %v345
      %v410 = vmul.f32 %v346, %v346
      %v411 = vmul.f32 %v347, %v347
      %v412 = vmul.f32 %v348, %v348
      %v413 = vmul.f32 %v349, %v349
      %v414 = vmul.f32 %v350, %v350
      %v415 = vmul.f32 %v351, %v351
      %v416 = vmul.f32 %v352, %v352
      %v417 = vmul.f32 %v353, %v353
      %v418 = vmul.f32 %v354, %v354
      %v419 = vmul.f32 %v355, %v355
      %v420 = vmul.f32 %v356, %v356
      %v421 = vmul.f32 %v357, %v357
      %v422 = vmul.f32 %v358, %v358
      %v423 = vmul.f32 %v359, %v359
      %v424 = vmul.f32 %v360, %v360
      %v425 = vmul.f32 %v361, %v361
      %v426 = vmul.f32 %v362, %v362
      %v427 = vmul.f32 %v363, %v363
      %v428 = vmul.f32 %v364, %v364
      %v429 = vmul.f32 %v365, %v365
      %v430 = vmul.f32 %v366, %v366
      %v431 = vmul.f32 %v367, %v367
      %v432 = vmul.f32 %v368, %v368
      %v433 = vmul.f32 %v369, %v369
      %v434 = vmul.f32 %v370, %v370
      %v435 = vmul.f32 %v371, %v371
      %v436 = vmul.f32 %v372, %v372
      %v437 = vmul.f32 %v373, %v373
      %v438 = vmul.f32 %v374, %v374
      %v439 = vmul.f32 %v375, %v375
      %v440 = vmul.f32 %v376, %v376
      %v441 = vmul.f32 %v377, %v377
      %v442 = vmul.f32 %v378, %v378
      %v443 = vmul.f32 %v379, %v379
      %v444 = vmul.f32 %v380, %v380
      %v445 = vmul.f32 %v381, %v381
      %v446 = vmul.f32 %v382, %v382
      %v447 = vmul.f32 %v383, %v383
      %v448 = vmul.f32 %v384, %v384
      %v449 = vmul.f32 %v385, %v385
      %v450 = vmul.f32 %v386, %v386
      %v451 = vsel %vm181, %v387, 0.0
      %v452 = vsel %vm181, %v388, 0.0
      %v453 = vadd.f32 %v451, %v452
      %v454 = vsel %vm181, %v389, 0.0
      %v455 = vadd.f32 %v453, %v454
      %v456 = vsel %vm181, %v390, 0.0
      %v457 = vadd.f32 %v455, %v456
      %v458 = vsel %vm181, %v391, 0.0
      %v459 = vadd.f32 %v457, %v458
      %v460 = vsel %vm181, %v392, 0.0
      %v461 = vadd.f32 %v459, %v460
      %v462 = vsel %vm181, %v393, 0.0
      %v463 = vadd.f32 %v461, %v462
      %v464 = vsel %vm181, %v394, 0.0
      %v465 = vadd.f32 %v463, %v464
      %v466 = vsel %vm181, %v395, 0.0
      %v467 = vadd.f32 %v465, %v466
      %v468 = vsel %vm181, %v396, 0.0
      %v469 = vadd.f32 %v467, %v468
      %v470 = vsel %vm181, %v397, 0.0
      %v471 = vadd.f32 %v469, %v470
      %v472 = vsel %vm181, %v398, 0.0
      %v473 = vadd.f32 %v471, %v472
      %v474 = vsel %vm181, %v399, 0.0
      %v475 = vadd.f32 %v473, %v474
      %v476 = vsel %vm181, %v400, 0.0
      %v477 = vadd.f32 %v475, %v476
      %v478 = vsel %vm181, %v401, 0.0
      %v479 = vadd.f32 %v477, %v478
      %v480 = vsel %vm181, %v402, 0.0
      %v481 = vadd.f32 %v479, %v480
      %v482 = vsel %vm181, %v403, 0.0
      %v483 = vadd.f32 %v481, %v482
      %v484 = vsel %vm181, %v404, 0.0
      %v485 = vadd.f32 %v483, %v484
      %v486 = vsel %vm181, %v405, 0.0
      %v487 = vadd.f32 %v485, %v486
      %v488 = vsel %vm181, %v406, 0.0
      %v489 = vadd.f32 %v487, %v488
      %v490 = vsel %vm181, %v407, 0.0
      %v491 = vadd.f32 %v489, %v490
      %v492 = vsel %vm181, %v408, 0.0
      %v493 = vadd.f32 %v491, %v492
      %v494 = vsel %vm181, %v409, 0.0
      %v495 = vadd.f32 %v493, %v494
      %v496 = vsel %vm181, %v410, 0.0
      %v497 = vadd.f32 %v495, %v496
      %v498 = vsel %vm181, %v411, 0.0
      %v499 = vadd.f32 %v497, %v498
      %v500 = vsel %vm181, %v412, 0.0
      %v501 = vadd.f32 %v499, %v500
      %v502 = vsel %vm181, %v413, 0.0
      %v503 = vadd.f32 %v501, %v502
      %v504 = vsel %vm181, %v414, 0.0
      %v505 = vadd.f32 %v503, %v504
      %v506 = vsel %vm181, %v415, 0.0
      %v507 = vadd.f32 %v505, %v506
      %v508 = vsel %vm181, %v416, 0.0
      %v509 = vadd.f32 %v507, %v508
      %v510 = vsel %vm181, %v417, 0.0
      %v511 = vadd.f32 %v509, %v510
      %v512 = vsel %vm181, %v418, 0.0
      %v513 = vadd.f32 %v511, %v512
      %v514 = vsel %vm181, %v419, 0.0
      %v515 = vadd.f32 %v513, %v514
      %v516 = vsel %vm181, %v420, 0.0
      %v517 = vadd.f32 %v515, %v516
      %v518 = vsel %vm181, %v421, 0.0
      %v519 = vadd.f32 %v517, %v518
      %v520 = vsel %vm181, %v422, 0.0
      %v521 = vadd.f32 %v519, %v520
      %v522 = vsel %vm181, %v423, 0.0
      %v523 = vadd.f32 %v521, %v522
      %v524 = vsel %vm181, %v424, 0.0
      %v525 = vadd.f32 %v523, %v524
      %v526 = vsel %vm181, %v425, 0.0
      %v527 = vadd.f32 %v525, %v526
      %v528 = vsel %vm181, %v426, 0.0
      %v529 = vadd.f32 %v527, %v528
      %v530 = vsel %vm181, %v427, 0.0
      %v531 = vadd.f32 %v529, %v530
      %v532 = vsel %vm181, %v428, 0.0
      %v533 = vadd.f32 %v531, %v532
      %v534 = vsel %vm181, %v429, 0.0
      %v535 = vadd.f32 %v533, %v534
      %v536 = vsel %vm181, %v430, 0.0
      %v537 = vadd.f32 %v535, %v536
      %v538 = vsel %vm181, %v431, 0.0
      %v539 = vadd.f32 %v537, %v538
      %v540 = vsel %vm181, %v432, 0.0
      %v541 = vadd.f32 %v539, %v540
      %v542 = vsel %vm181, %v433, 0.0
      %v543 = vadd.f32 %v541, %v542
      %v544 = vsel %vm181, %v434, 0.0
      %v545 = vadd.f32 %v543, %v544
      %v546 = vsel %vm181, %v435, 0.0
      %v547 = vadd.f32 %v545, %v546
      %v548 = vsel %vm181, %v436, 0.0
      %v549 = vadd.f32 %v547, %v548
      %v550 = vsel %vm181, %v437, 0.0
      %v551 = vadd.f32 %v549, %v550
      %v552 = vsel %vm181, %v438, 0.0
      %v553 = vadd.f32 %v551, %v552
      %v554 = vsel %vm181, %v439, 0.0
      %v555 = vadd.f32 %v553, %v554
      %v556 = vsel %vm181, %v440, 0.0
      %v557 = vadd.f32 %v555, %v556
      %v558 = vsel %vm181, %v441, 0.0
      %v559 = vadd.f32 %v557, %v558
      %v560 = vsel %vm181, %v442, 0.0
      %v561 = vadd.f32 %v559, %v560
      %v562 = vsel %vm181, %v443, 0.0
      %v563 = vadd.f32 %v561, %v562
      %v564 = vsel %vm181, %v444, 0.0
      %v565 = vadd.f32 %v563, %v564
      %v566 = vsel %vm181, %v445, 0.0
      %v567 = vadd.f32 %v565, %v566
      %v568 = vsel %vm181, %v446, 0.0
      %v569 = vadd.f32 %v567, %v568
      %v570 = vsel %vm181, %v447, 0.0
      %v571 = vadd.f32 %v569, %v570
      %v572 = vsel %vm181, %v448, 0.0
      %v573 = vadd.f32 %v571, %v572
      %v574 = vsel %vm181, %v449, 0.0
      %v575 = vadd.f32 %v573, %v574
      %v576 = vsel %vm181, %v450, 0.0
      %v577 = vadd.f32 %v575, %v576
      %v578 = vrot.slane %v577, 4
      %v579 = vadd.f32 %v577, %v578
      %v580 = vrot.slane %v579, 2
      %v581 = vadd.f32 %v579, %v580
      %v582 = vrot.slane %v581, 1
      %v583 = vadd.f32 %v581, %v582
      %v584 = vmul.f32 %v583, %v321
      %v585 = vadd.f32 %v584, 1e-05
      %v586 = vrsqrt.pop %v585
      %v587 = vmul.f32 %v586, %v585
      %v588 = vmul.f32 %v587, %v586
      %v589 = vmul.f32 0.5, %v588
      %v590 = vsub.f32 1.5, %v589
      %v591 = vmul.f32 %v586, %v590
      %vm592 = vweird.f32 %v585
      %vm593 = vweird.f32 %v586
      %vm594 = vmor %vm592, %vm593
      %v595 = vsel %vm594, %v586, %v591
      %v596 = vmul.f32 %v323, %v595
      %v597 = vmul.f32 %v324, %v595
      %v598 = vmul.f32 %v325, %v595
      %v599 = vmul.f32 %v326, %v595
      %v600 = vmul.f32 %v327, %v595
      %v601 = vmul.f32 %v328, %v595
      %v602 = vmul.f32 %v329, %v595
      %v603 = vmul.f32 %v330, %v595
      %v604 = vmul.f32 %v331, %v595
      %v605 = vmul.f32 %v332, %v595
      %v606 = vmul.f32 %v333, %v595
      %v607 = vmul.f32 %v334, %v595
      %v608 = vmul.f32 %v335, %v595
      %v609 = vmul.f32 %v336, %v595
      %v610 = vmul.f32 %v337, %v595
      %v611 = vmul.f32 %v338, %v595
      %v612 = vmul.f32 %v339, %v595
      %v613 = vmul.f32 %v340, %v595
      %v614 = vmul.f32 %v341, %v595
      %v615 = vmul.f32 %v342, %v595
      %v616 = vmul.f32 %v343, %v595
      %v617 = vmul.f32 %v344, %v595
      %v618 = vmul.f32 %v345, %v595
      %v619 = vmul.f32 %v346, %v595
      %v620 = vmul.f32 %v347, %v595
      %v621 = vmul.f32 %v348, %v595
      %v622 = vmul.f32 %v349, %v595
      %v623 = vmul.f32 %v350, %v595
      %v624 = vmul.f32 %v351, %v595
      %v625 = vmul.f32 %v352, %v595
      %v626 = vmul.f32 %v353, %v595
      %v627 = vmul.f32 %v354, %v595
      %v628 = vmul.f32 %v355, %v595
      %v629 = vmul.f32 %v356, %v595
      %v630 = vmul.f32 %v357, %v595
      %v631 = vmul.f32 %v358, %v595
      %v632 = vmul.f32 %v359, %v595
      %v633 = vmul.f32 %v360, %v595
      %v634 = vmul.f32 %v361, %v595
      %v635 = vmul.f32 %v362, %v595
      %v636 = vmul.f32 %v363, %v595
      %v637 = vmul.f32 %v364, %v595
      %v638 = vmul.f32 %v365, %v595
      %v639 = vmul.f32 %v366, %v595
      %v640 = vmul.f32 %v367, %v595
      %v641 = vmul.f32 %v368, %v595
      %v642 = vmul.f32 %v369, %v595
      %v643 = vmul.f32 %v370, %v595
      %v644 = vmul.f32 %v371, %v595
      %v645 = vmul.f32 %v372, %v595
      %v646 = vmul.f32 %v373, %v595
      %v647 = vmul.f32 %v374, %v595
      %v648 = vmul.f32 %v375, %v595
      %v649 = vmul.f32 %v376, %v595
      %v650 = vmul.f32 %v377, %v595
      %v651 = vmul.f32 %v378, %v595
      %v652 = vmul.f32 %v379, %v595
      %v653 = vmul.f32 %v380, %v595
      %v654 = vmul.f32 %v381, %v595
      %v655 = vmul.f32 %v382, %v595
      %v656 = vmul.f32 %v383, %v595
      %v657 = vmul.f32 %v384, %v595
      %v658 = vmul.f32 %v385, %v595
      %v659 = vmul.f32 %v386, %v595
      %v660 = vmax.f32 %v596, 0.0
      %v661 = vmax.f32 %v597, 0.0
      %v662 = vmax.f32 %v598, 0.0
      %v663 = vmax.f32 %v599, 0.0
      %v664 = vmax.f32 %v600, 0.0
      %v665 = vmax.f32 %v601, 0.0
      %v666 = vmax.f32 %v602, 0.0
      %v667 = vmax.f32 %v603, 0.0
      %v668 = vmax.f32 %v604, 0.0
      %v669 = vmax.f32 %v605, 0.0
      %v670 = vmax.f32 %v606, 0.0
      %v671 = vmax.f32 %v607, 0.0
      %v672 = vmax.f32 %v608, 0.0
      %v673 = vmax.f32 %v609, 0.0
      %v674 = vmax.f32 %v610, 0.0
      %v675 = vmax.f32 %v611, 0.0
      %v676 = vmax.f32 %v612, 0.0
      %v677 = vmax.f32 %v613, 0.0
      %v678 = vmax.f32 %v614, 0.0
      %v679 = vmax.f32 %v615, 0.0
      %v680 = vmax.f32 %v616, 0.0
      %v681 = vmax.f32 %v617, 0.0
      %v682 = vmax.f32 %v618, 0.0
      %v683 = vmax.f32 %v619, 0.0
      %v684 = vmax.f32 %v620, 0.0
      %v685 = vmax.f32 %v621, 0.0
      %v686 = vmax.f32 %v622, 0.0
      %v687 = vmax.f32 %v623, 0.0
      %v688 = vmax.f32 %v624, 0.0
      %v689 = vmax.f32 %v625, 0.0
      %v690 = vmax.f32 %v626, 0.0
      %v691 = vmax.f32 %v627, 0.0
      %v692 = vmax.f32 %v628, 0.0
      %v693 = vmax.f32 %v629, 0.0
      %v694 = vmax.f32 %v630, 0.0
      %v695 = vmax.f32 %v631, 0.0
      %v696 = vmax.f32 %v632, 0.0
      %v697 = vmax.f32 %v633, 0.0
      %v698 = vmax.f32 %v634, 0.0
      %v699 = vmax.f32 %v635, 0.0
      %v700 = vmax.f32 %v636, 0.0
      %v701 = vmax.f32 %v637, 0.0
      %v702 = vmax.f32 %v638, 0.0
      %v703 = vmax.f32 %v639, 0.0
      %v704 = vmax.f32 %v640, 0.0
      %v705 = vmax.f32 %v641, 0.0
      %v706 = vmax.f32 %v642, 0.0
      %v707 = vmax.f32 %v643, 0.0
      %v708 = vmax.f32 %v644, 0.0
      %v709 = vmax.f32 %v645, 0.0
      %v710 = vmax.f32 %v646, 0.0
      %v711 = vmax.f32 %v647, 0.0
      %v712 = vmax.f32 %v648, 0.0
      %v713 = vmax.f32 %v649, 0.0
      %v714 = vmax.f32 %v650, 0.0
      %v715 = vmax.f32 %v651, 0.0
      %v716 = vmax.f32 %v652, 0.0
      %v717 = vmax.f32 %v653, 0.0
      %v718 = vmax.f32 %v654, 0.0
      %v719 = vmax.f32 %v655, 0.0
      %v720 = vmax.f32 %v656, 0.0
      %v721 = vmax.f32 %v657, 0.0
      %v722 = vmax.f32 %v658, 0.0
      %v723 = vmax.f32 %v659, 0.0
      %724 = vst.msk [vmem:[%s116] sm:$0xff] %vm181, %v660
      %725 = vst.msk [vmem:[%s116 + $0x8] sm:$0xff] %vm181, %v661
      %726 = vst.msk [vmem:[%s116 + $0x10] sm:$0xff] %vm181, %v662
      %727 = vst.msk [vmem:[%s116 + $0x18] sm:$0xff] %vm181, %v663
      %728 = vst.msk [vmem:[%s116 + $0x20] sm:$0xff] %vm181, %v664
      %729 = vst.msk [vmem:[%s116 + $0x28] sm:$0xff] %vm181, %v665
      %730 = vst.msk [vmem:[%s116 + $0x30] sm:$0xff] %vm181, %v666
      %731 = vst.msk [vmem:[%s116 + $0x38] sm:$0xff] %vm181, %v667
      %732 = vst.msk [vmem:[%s116 + $0x40] sm:$0xff] %vm181, %v668
      %733 = vst.msk [vmem:[%s116 + $0x48] sm:$0xff] %vm181, %v669
      %734 = vst.msk [vmem:[%s116 + $0x50] sm:$0xff] %vm181, %v670
      %735 = vst.msk [vmem:[%s116 + $0x58] sm:$0xff] %vm181, %v671
      %736 = vst.msk [vmem:[%s116 + $0x60] sm:$0xff] %vm181, %v672
      %737 = vst.msk [vmem:[%s116 + $0x68] sm:$0xff] %vm181, %v673
      %738 = vst.msk [vmem:[%s116 + $0x70] sm:$0xff] %vm181, %v674
      %739 = vst.msk [vmem:[%s116 + $0x78] sm:$0xff] %vm181, %v675
      %740 = vst.msk [vmem:[%s116 + $0x80] sm:$0xff] %vm181, %v676
      %741 = vst.msk [vmem:[%s116 + $0x88] sm:$0xff] %vm181, %v677
      %742 = vst.msk [vmem:[%s116 + $0x90] sm:$0xff] %vm181, %v678
      %743 = vst.msk [vmem:[%s116 + $0x98] sm:$0xff] %vm181, %v679
      %744 = vst.msk [vmem:[%s116 + $0xa0] sm:$0xff] %vm181, %v680
      %745 = vst.msk [vmem:[%s116 + $0xa8] sm:$0xff] %vm181, %v681
      %746 = vst.msk [vmem:[%s116 + $0xb0] sm:$0xff] %vm181, %v682
      %747 = vst.msk [vmem:[%s116 + $0xb8] sm:$0xff] %vm181, %v683
      %748 = vst.msk [vmem:[%s116 + $0xc0] sm:$0xff] %vm181, %v684
      %749 = vst.msk [vmem:[%s116 + $0xc8] sm:$0xff] %vm181, %v685
      %750 = vst.msk [vmem:[%s116 + $0xd0] sm:$0xff] %vm181, %v686
      %751 = vst.msk [vmem:[%s116 + $0xd8] sm:$0xff] %vm181, %v687
      %752 = vst.msk [vmem:[%s116 + $0xe0] sm:$0xff] %vm181, %v688
      %753 = vst.msk [vmem:[%s116 + $0xe8] sm:$0xff] %vm181, %v689
      %754 = vst.msk [vmem:[%s116 + $0xf0] sm:$0xff] %vm181, %v690
      %755 = vst.msk [vmem:[%s116 + $0xf8] sm:$0xff] %vm181, %v691
      %756 = vst.msk [vmem:[%s116 + $0x100] sm:$0xff] %vm181, %v692
      %757 = vst.msk [vmem:[%s116 + $0x108] sm:$0xff] %vm181, %v693
      %758 = vst.msk [vmem:[%s116 + $0x110] sm:$0xff] %vm181, %v694
      %759 = vst.msk [vmem:[%s116 + $0x118] sm:$0xff] %vm181, %v695
      %760 = vst.msk [vmem:[%s116 + $0x120] sm:$0xff] %vm181, %v696
      %761 = vst.msk [vmem:[%s116 + $0x128] sm:$0xff] %vm181, %v697
      %762 = vst.msk [vmem:[%s116 + $0x130] sm:$0xff] %vm181, %v698
      %763 = vst.msk [vmem:[%s116 + $0x138] sm:$0xff] %vm181, %v699
      %764 = vst.msk [vmem:[%s116 + $0x140] sm:$0xff] %vm181, %v700
      %765 = vst.msk [vmem:[%s116 + $0x148] sm:$0xff] %vm181, %v701
      %766 = vst.msk [vmem:[%s116 + $0x150] sm:$0xff] %vm181, %v702
      %767 = vst.msk [vmem:[%s116 + $0x158] sm:$0xff] %vm181, %v703
      %768 = vst.msk [vmem:[%s116 + $0x160] sm:$0xff] %vm181, %v704
      %769 = vst.msk [vmem:[%s116 + $0x168] sm:$0xff] %vm181, %v705
      %770 = vst.msk [vmem:[%s116 + $0x170] sm:$0xff] %vm181, %v706
      %771 = vst.msk [vmem:[%s116 + $0x178] sm:$0xff] %vm181, %v707
      %772 = vst.msk [vmem:[%s116 + $0x180] sm:$0xff] %vm181, %v708
      %773 = vst.msk [vmem:[%s116 + $0x188] sm:$0xff] %vm181, %v709
      %774 = vst.msk [vmem:[%s116 + $0x190] sm:$0xff] %vm181, %v710
      %775 = vst.msk [vmem:[%s116 + $0x198] sm:$0xff] %vm181, %v711
      %776 = vst.msk [vmem:[%s116 + $0x1a0] sm:$0xff] %vm181, %v712
      %777 = vst.msk [vmem:[%s116 + $0x1a8] sm:$0xff] %vm181, %v713
      %778 = vst.msk [vmem:[%s116 + $0x1b0] sm:$0xff] %vm181, %v714
      %779 = vst.msk [vmem:[%s116 + $0x1b8] sm:$0xff] %vm181, %v715
      %780 = vst.msk [vmem:[%s116 + $0x1c0] sm:$0xff] %vm181, %v716
      %781 = vst.msk [vmem:[%s116 + $0x1c8] sm:$0xff] %vm181, %v717
      %782 = vst.msk [vmem:[%s116 + $0x1d0] sm:$0xff] %vm181, %v718
      %783 = vst.msk [vmem:[%s116 + $0x1d8] sm:$0xff] %vm181, %v719
      %784 = vst.msk [vmem:[%s116 + $0x1e0] sm:$0xff] %vm181, %v720
      %785 = vst.msk [vmem:[%s116 + $0x1e8] sm:$0xff] %vm181, %v721
      %786 = vst.msk [vmem:[%s116 + $0x1f0] sm:$0xff] %vm181, %v722
      %787 = vst.msk [vmem:[%s116 + $0x1f8] sm:$0xff] %vm181, %v723
      %p788 = scmp.lt.s32.totalorder %s12, 1
      %s789 = scalar_select %p788, %s12, 1
      %s790 = smul.addr %s789, 64
      %s791 = smul.addr %s790, 8
      %s792 = scalar_lea.vmem %s1, %s791
      // Predicated region
      $region25: #{resnet_forward.16} parent=23 // pred_check
        %p793 = pneg %p56
      $region26: #{resnet_forward.16} parent=23 // pred_check_branch
        %795 = sbr.rel (%p793) target = $region28
      $region27: #{resnet_forward.16} parent=23 // pred_region
        _
      $region28: #{resnet_forward.16} parent=23 // pred_fallthru
        _
    $region24: #{resnet_forward.16} parent=5 // pred_fallthru
      _
    %p796 = scmp.le.s32.totalorder 2, %s7
    // Predicated region
    $region29: #{resnet_forward.16} parent=5 // pred_check
      %p797 = pneg %p796
    $region30: #{resnet_forward.16} parent=5 // pred_check_branch
      %799 = sbr.rel (%p797) target = $region32
    $region31: #{resnet_forward.16} parent=5 // pred_region
      %s800 = ssub.s32 %s7, 2
      // Predicated region
      $region33: #{resnet_forward.16} parent=31 // pred_check
        %p801 = pneg %p62
      $region34: #{resnet_forward.16} parent=31 // pred_check_branch
        %803 = sbr.rel (%p801) target = $region36
      $region35: #{resnet_forward.16} parent=31 // pred_region
        %p804 = scmp.lt.s32.totalorder %s13, 1
        %s805 = scalar_select %p804, %s13, 1
        %s806 = smul.addr %s805, 64
        %s807 = smul.addr %s806, 8
        %s808 = scalar_lea.vmem %s1, %s807
      $region36: #{resnet_forward.16} parent=31 // pred_fallthru
        _
    $region32: #{resnet_forward.16} parent=5 // pred_fallthru
      _
  $region6: #{resnet_forward.16} parent=0 // loop_footer
    %s11 = sadd.s32 1, %s7
  $region7: #{resnet_forward.16} parent=0 // loop_footer_branch
    %6 = sbr.rel target = $region3
  $region8: #{resnet_forward.16} parent=0 // loop_exit
    _

// kernel: resnet_forward.17
$region0: #{resnet_forward.17}
  #allocation0 [shape = 'u32[]', space=smem, size = 0x4, offset = 0x4, fixed_abs, tag = 'smem constant byte address 0x4 - core index']
  #allocation1 [shape = 'u32[72,128]{1,0:T(1,128)}', space=vmem, size = 0x9000, scoped, tag = 'internal scratch']
  %s0 = inlined_call_operand.vmem [shape: bf16[16,1792], index: 0, kind: input, shape index: {}]
  %s1 = inlined_call_operand.vmem [shape: bf16[1792,128], index: 1, kind: input, shape index: {}]
  %s2 = inlined_call_operand.vmem [shape: f32[1,128], index: 2, kind: input, shape index: {}]
  %s3 = inlined_call_operand.vmem [shape: f32[16,128], index: 3, kind: output, shape index: {}]
  %s4 = sld [smem:[#allocation0]]
  $region22: #{resnet_forward.17} parent=0
    _
  %s6 = ssub.s32 1, %s4
  %s7 = scalar_select 0, %s6, %s4
  // Predicated region
  $region2: #{resnet_forward.17} parent=0 // pred_check
    _
  $region3: #{resnet_forward.17} parent=0 // pred_check_branch
    %9 = sbr.rel (0) target = $region5
  $region4: #{resnet_forward.17} parent=0 // pred_region
    _
  $region5: #{resnet_forward.17} parent=0 // pred_fallthru
    _
  // Predicated region
  $region6: #{resnet_forward.17} parent=0 // pred_check
    _
  $region7: #{resnet_forward.17} parent=0 // pred_check_branch
    %11 = sbr.rel (0) target = $region9
  $region8: #{resnet_forward.17} parent=0 // pred_region
    _
  $region9: #{resnet_forward.17} parent=0 // pred_fallthru
    _
  // Predicated region
  $region10: #{resnet_forward.17} parent=0 // pred_check
    _
  $region11: #{resnet_forward.17} parent=0 // pred_check_branch
    %13 = sbr.rel (0) target = $region13
  $region12: #{resnet_forward.17} parent=0 // pred_region
    _
  $region13: #{resnet_forward.17} parent=0 // pred_fallthru
    _
  %v14 = vld [vmem:[%s0] sm:$0xff]
  %v15 = vld [vmem:[%s0 + $0x8] sm:$0xff]
  %v16 = vld [vmem:[%s0 + $0x10] sm:$0xff]
  %v17 = vld [vmem:[%s0 + $0x18] sm:$0xff]
  %v18 = vld [vmem:[%s0 + $0x20] sm:$0xff]
  %v19 = vld [vmem:[%s0 + $0x28] sm:$0xff]
  %v20 = vld [vmem:[%s0 + $0x30] sm:$0xff]
  %v21 = vld [vmem:[%s0 + $0x38] sm:$0xff]
  %v22 = vld [vmem:[%s0 + $0x40] sm:$0xff]
  %v23 = vld [vmem:[%s0 + $0x48] sm:$0xff]
  %v24 = vld [vmem:[%s0 + $0x50] sm:$0xff]
  %v25 = vld [vmem:[%s0 + $0x58] sm:$0xff]
  %v26 = vld [vmem:[%s0 + $0x60] sm:$0xff]
  %v27 = vld [vmem:[%s0 + $0x68] sm:$0xff]
  %v28 = vld [vmem:[%s1] sm:$0xf]
  %v29 = vld [vmem:[%s1 + $0x4] sm:$0xf]
  %v30 = vld [vmem:[%s1 + $0x8] sm:$0xf]
  %v31 = vld [vmem:[%s1 + $0xc] sm:$0xf]
  %v32 = vld [vmem:[%s1 + $0x10] sm:$0xf]
  %v33 = vld [vmem:[%s1 + $0x14] sm:$0xf]
  %v34 = vld [vmem:[%s1 + $0x18] sm:$0xf]
  %v35 = vld [vmem:[%s1 + $0x1c] sm:$0xf]
  %v36 = vld [vmem:[%s1 + $0x20] sm:$0xf]
  %v37 = vld [vmem:[%s1 + $0x24] sm:$0xf]
  %v38 = vld [vmem:[%s1 + $0x28] sm:$0xf]
  %v39 = vld [vmem:[%s1 + $0x2c] sm:$0xf]
  %v40 = vld [vmem:[%s1 + $0x30] sm:$0xf]
  %v41 = vld [vmem:[%s1 + $0x34] sm:$0xf]
  %v42 = vld [vmem:[%s1 + $0x38] sm:$0xf]
  %v43 = vld [vmem:[%s1 + $0x3c] sm:$0xf]
  %v44 = vld [vmem:[%s1 + $0x40] sm:$0xf]
  %v45 = vld [vmem:[%s1 + $0x44] sm:$0xf]
  %v46 = vld [vmem:[%s1 + $0x48] sm:$0xf]
  %v47 = vld [vmem:[%s1 + $0x4c] sm:$0xf]
  %v48 = vld [vmem:[%s1 + $0x50] sm:$0xf]
  %v49 = vld [vmem:[%s1 + $0x54] sm:$0xf]
  %v50 = vld [vmem:[%s1 + $0x58] sm:$0xf]
  %v51 = vld [vmem:[%s1 + $0x5c] sm:$0xf]
  %v52 = vld [vmem:[%s1 + $0x60] sm:$0xf]
  %v53 = vld [vmem:[%s1 + $0x64] sm:$0xf]
  %v54 = vld [vmem:[%s1 + $0x68] sm:$0xf]
  %v55 = vld [vmem:[%s1 + $0x6c] sm:$0xf]
  %v56 = vld [vmem:[%s1 + $0x70] sm:$0xf]
  %v57 = vld [vmem:[%s1 + $0x74] sm:$0xf]
  %v58 = vld [vmem:[%s1 + $0x78] sm:$0xf]
  %v59 = vld [vmem:[%s1 + $0x7c] sm:$0xf]
  %v60 = vld [vmem:[%s1 + $0x80] sm:$0xf]
  %v61 = vld [vmem:[%s1 + $0x84] sm:$0xf]
  %v62 = vld [vmem:[%s1 + $0x88] sm:$0xf]
  %v63 = vld [vmem:[%s1 + $0x8c] sm:$0xf]
  %v64 = vld [vmem:[%s1 + $0x90] sm:$0xf]
  %v65 = vld [vmem:[%s1 + $0x94] sm:$0xf]
  %v66 = vld [vmem:[%s1 + $0x98] sm:$0xf]
  %v67 = vld [vmem:[%s1 + $0x9c] sm:$0xf]
  %v68 = vld [vmem:[%s1 + $0xa0] sm:$0xf]
  %v69 = vld [vmem:[%s1 + $0xa4] sm:$0xf]
  %v70 = vld [vmem:[%s1 + $0xa8] sm:$0xf]
  %v71 = vld [vmem:[%s1 + $0xac] sm:$0xf]
  %v72 = vld [vmem:[%s1 + $0xb0] sm:$0xf]
  %v73 = vld [vmem:[%s1 + $0xb4] sm:$0xf]
  %v74 = vld [vmem:[%s1 + $0xb8] sm:$0xf]
  %v75 = vld [vmem:[%s1 + $0xbc] sm:$0xf]
  %v76 = vld [vmem:[%s1 + $0xc0] sm:$0xf]
  %v77 = vld [vmem:[%s1 + $0xc4] sm:$0xf]
  %v78 = vld [vmem:[%s1 + $0xc8] sm:$0xf]
  %v79 = vld [vmem:[%s1 + $0xcc] sm:$0xf]
  %v80 = vld [vmem:[%s1 + $0xd0] sm:$0xf]
  %v81 = vld [vmem:[%s1 + $0xd4] sm:$0xf]
  %v82 = vld [vmem:[%s1 + $0xd8] sm:$0xf]
  %v83 = vld [vmem:[%s1 + $0xdc] sm:$0xf]
  %v84 = vld [vmem:[%s1 + $0xe0] sm:$0xf]
  %v85 = vld [vmem:[%s1 + $0xe4] sm:$0xf]
  %v86 = vld [vmem:[%s1 + $0xe8] sm:$0xf]
  %v87 = vld [vmem:[%s1 + $0xec] sm:$0xf]
  %v88 = vld [vmem:[%s1 + $0xf0] sm:$0xf]
  %v89 = vld [vmem:[%s1 + $0xf4] sm:$0xf]
  %v90 = vld [vmem:[%s1 + $0xf8] sm:$0xf]
  %v91 = vld [vmem:[%s1 + $0xfc] sm:$0xf]
  %v92 = vld [vmem:[%s1 + $0x100] sm:$0xf]
  %v93 = vld [vmem:[%s1 + $0x104] sm:$0xf]
  %v94 = vld [vmem:[%s1 + $0x108] sm:$0xf]
  %v95 = vld [vmem:[%s1 + $0x10c] sm:$0xf]
  %v96 = vld [vmem:[%s1 + $0x110] sm:$0xf]
  %v97 = vld [vmem:[%s1 + $0x114] sm:$0xf]
  %v98 = vld [vmem:[%s1 + $0x118] sm:$0xf]
  %v99 = vld [vmem:[%s1 + $0x11c] sm:$0xf]
  %v100 = vld [vmem:[%s1 + $0x120] sm:$0xf]
  %v101 = vld [vmem:[%s1 + $0x124] sm:$0xf]
  %v102 = vld [vmem:[%s1 + $0x128] sm:$0xf]
  %v103 = vld [vmem:[%s1 + $0x12c] sm:$0xf]
  %v104 = vld [vmem:[%s1 + $0x130] sm:$0xf]
  %v105 = vld [vmem:[%s1 + $0x134] sm:$0xf]
  %v106 = vld [vmem:[%s1 + $0x138] sm:$0xf]
  %v107 = vld [vmem:[%s1 + $0x13c] sm:$0xf]
  %v108 = vld [vmem:[%s1 + $0x140] sm:$0xf]
  %v109 = vld [vmem:[%s1 + $0x144] sm:$0xf]
  %v110 = vld [vmem:[%s1 + $0x148] sm:$0xf]
  %v111 = vld [vmem:[%s1 + $0x14c] sm:$0xf]
  %v112 = vld [vmem:[%s1 + $0x150] sm:$0xf]
  %v113 = vld [vmem:[%s1 + $0x154] sm:$0xf]
  %v114 = vld [vmem:[%s1 + $0x158] sm:$0xf]
  %v115 = vld [vmem:[%s1 + $0x15c] sm:$0xf]
  %v116 = vld [vmem:[%s1 + $0x160] sm:$0xf]
  %v117 = vld [vmem:[%s1 + $0x164] sm:$0xf]
  %v118 = vld [vmem:[%s1 + $0x168] sm:$0xf]
  %v119 = vld [vmem:[%s1 + $0x16c] sm:$0xf]
  %v120 = vld [vmem:[%s1 + $0x170] sm:$0xf]
  %v121 = vld [vmem:[%s1 + $0x174] sm:$0xf]
  %v122 = vld [vmem:[%s1 + $0x178] sm:$0xf]
  %v123 = vld [vmem:[%s1 + $0x17c] sm:$0xf]
  %v124 = vld [vmem:[%s1 + $0x180] sm:$0xf]
  %v125 = vld [vmem:[%s1 + $0x184] sm:$0xf]
  %v126 = vld [vmem:[%s1 + $0x188] sm:$0xf]
  %v127 = vld [vmem:[%s1 + $0x18c] sm:$0xf]
  %v128 = vld [vmem:[%s1 + $0x190] sm:$0xf]
  %v129 = vld [vmem:[%s1 + $0x194] sm:$0xf]
  %v130 = vld [vmem:[%s1 + $0x198] sm:$0xf]
  %v131 = vld [vmem:[%s1 + $0x19c] sm:$0xf]
  %v132 = vld [vmem:[%s1 + $0x1a0] sm:$0xf]
  %v133 = vld [vmem:[%s1 + $0x1a4] sm:$0xf]
  %v134 = vld [vmem:[%s1 + $0x1a8] sm:$0xf]
  %v135 = vld [vmem:[%s1 + $0x1ac] sm:$0xf]
  %v136 = vld [vmem:[%s1 + $0x1b0] sm:$0xf]
  %v137 = vld [vmem:[%s1 + $0x1b4] sm:$0xf]
  %v138 = vld [vmem:[%s1 + $0x1b8] sm:$0xf]
  %v139 = vld [vmem:[%s1 + $0x1bc] sm:$0xf]
  %v140 = vld [vmem:[%s1 + $0x1c0] sm:$0xf]
  %v141 = vld [vmem:[%s1 + $0x1c4] sm:$0xf]
  %v142 = vld [vmem:[%s1 + $0x1c8] sm:$0xf]
  %v143 = vld [vmem:[%s1 + $0x1cc] sm:$0xf]
  %v144 = vld [vmem:[%s1 + $0x1d0] sm:$0xf]
  %v145 = vld [vmem:[%s1 + $0x1d4] sm:$0xf]
  %v146 = vld [vmem:[%s1 + $0x1d8] sm:$0xf]
  %v147 = vld [vmem:[%s1 + $0x1dc] sm:$0xf]
  %v148 = vld [vmem:[%s1 + $0x1e0] sm:$0xf]
  %v149 = vld [vmem:[%s1 + $0x1e4] sm:$0xf]
  %v150 = vld [vmem:[%s1 + $0x1e8] sm:$0xf]
  %v151 = vld [vmem:[%s1 + $0x1ec] sm:$0xf]
  %v152 = vld [vmem:[%s1 + $0x1f0] sm:$0xf]
  %v153 = vld [vmem:[%s1 + $0x1f4] sm:$0xf]
  %v154 = vld [vmem:[%s1 + $0x1f8] sm:$0xf]
  %v155 = vld [vmem:[%s1 + $0x1fc] sm:$0xf]
  %v156 = vld [vmem:[%s1 + $0x200] sm:$0xf]
  %v157 = vld [vmem:[%s1 + $0x204] sm:$0xf]
  %v158 = vld [vmem:[%s1 + $0x208] sm:$0xf]
  %v159 = vld [vmem:[%s1 + $0x20c] sm:$0xf]
  %v160 = vld [vmem:[%s1 + $0x210] sm:$0xf]
  %v161 = vld [vmem:[%s1 + $0x214] sm:$0xf]
  %v162 = vld [vmem:[%s1 + $0x218] sm:$0xf]
  %v163 = vld [vmem:[%s1 + $0x21c] sm:$0xf]
  %v164 = vld [vmem:[%s1 + $0x220] sm:$0xf]
  %v165 = vld [vmem:[%s1 + $0x224] sm:$0xf]
  %v166 = vld [vmem:[%s1 + $0x228] sm:$0xf]
  %v167 = vld [vmem:[%s1 + $0x22c] sm:$0xf]
  %v168 = vld [vmem:[%s1 + $0x230] sm:$0xf]
  %v169 = vld [vmem:[%s1 + $0x234] sm:$0xf]
  %v170 = vld [vmem:[%s1 + $0x238] sm:$0xf]
  %v171 = vld [vmem:[%s1 + $0x23c] sm:$0xf]
  %v172 = vld [vmem:[%s1 + $0x240] sm:$0xf]
  %v173 = vld [vmem:[%s1 + $0x244] sm:$0xf]
  %v174 = vld [vmem:[%s1 + $0x248] sm:$0xf]
  %v175 = vld [vmem:[%s1 + $0x24c] sm:$0xf]
  %v176 = vld [vmem:[%s1 + $0x250] sm:$0xf]
  %v177 = vld [vmem:[%s1 + $0x254] sm:$0xf]
  %v178 = vld [vmem:[%s1 + $0x258] sm:$0xf]
  %v179 = vld [vmem:[%s1 + $0x25c] sm:$0xf]
  %v180 = vld [vmem:[%s1 + $0x260] sm:$0xf]
  %v181 = vld [vmem:[%s1 + $0x264] sm:$0xf]
  %v182 = vld [vmem:[%s1 + $0x268] sm:$0xf]
  %v183 = vld [vmem:[%s1 + $0x26c] sm:$0xf]
  %v184 = vld [vmem:[%s1 + $0x270] sm:$0xf]
  %v185 = vld [vmem:[%s1 + $0x274] sm:$0xf]
  %v186 = vld [vmem:[%s1 + $0x278] sm:$0xf]
  %v187 = vld [vmem:[%s1 + $0x27c] sm:$0xf]
  %v188 = vld [vmem:[%s1 + $0x280] sm:$0xf]
  %v189 = vld [vmem:[%s1 + $0x284] sm:$0xf]
  %v190 = vld [vmem:[%s1 + $0x288] sm:$0xf]
  %v191 = vld [vmem:[%s1 + $0x28c] sm:$0xf]
  %v192 = vld [vmem:[%s1 + $0x290] sm:$0xf]
  %v193 = vld [vmem:[%s1 + $0x294] sm:$0xf]
  %v194 = vld [vmem:[%s1 + $0x298] sm:$0xf]
  %v195 = vld [vmem:[%s1 + $0x29c] sm:$0xf]
  %v196 = vld [vmem:[%s1 + $0x2a0] sm:$0xf]
  %v197 = vld [vmem:[%s1 + $0x2a4] sm:$0xf]
  %v198 = vld [vmem:[%s1 + $0x2a8] sm:$0xf]
  %v199 = vld [vmem:[%s1 + $0x2ac] sm:$0xf]
  %v200 = vld [vmem:[%s1 + $0x2b0] sm:$0xf]
  %v201 = vld [vmem:[%s1 + $0x2b4] sm:$0xf]
  %v202 = vld [vmem:[%s1 + $0x2b8] sm:$0xf]
  %v203 = vld [vmem:[%s1 + $0x2bc] sm:$0xf]
  %v204 = vld [vmem:[%s1 + $0x2c0] sm:$0xf]
  %v205 = vld [vmem:[%s1 + $0x2c4] sm:$0xf]
  %v206 = vld [vmem:[%s1 + $0x2c8] sm:$0xf]
  %v207 = vld [vmem:[%s1 + $0x2cc] sm:$0xf]
  %v208 = vld [vmem:[%s1 + $0x2d0] sm:$0xf]
  %v209 = vld [vmem:[%s1 + $0x2d4] sm:$0xf]
  %v210 = vld [vmem:[%s1 + $0x2d8] sm:$0xf]
  %v211 = vld [vmem:[%s1 + $0x2dc] sm:$0xf]
  %v212 = vld [vmem:[%s1 + $0x2e0] sm:$0xf]
  %v213 = vld [vmem:[%s1 + $0x2e4] sm:$0xf]
  %v214 = vld [vmem:[%s1 + $0x2e8] sm:$0xf]
  %v215 = vld [vmem:[%s1 + $0x2ec] sm:$0xf]
  %v216 = vld [vmem:[%s1 + $0x2f0] sm:$0xf]
  %v217 = vld [vmem:[%s1 + $0x2f4] sm:$0xf]
  %v218 = vld [vmem:[%s1 + $0x2f8] sm:$0xf]
  %v219 = vld [vmem:[%s1 + $0x2fc] sm:$0xf]
  %v220 = vld [vmem:[%s1 + $0x300] sm:$0xf]
  %v221 = vld [vmem:[%s1 + $0x304] sm:$0xf]
  %v222 = vld [vmem:[%s1 + $0x308] sm:$0xf]
  %v223 = vld [vmem:[%s1 + $0x30c] sm:$0xf]
  %v224 = vld [vmem:[%s1 + $0x310] sm:$0xf]
  %v225 = vld [vmem:[%s1 + $0x314] sm:$0xf]
  %v226 = vld [vmem:[%s1 + $0x318] sm:$0xf]
  %v227 = vld [vmem:[%s1 + $0x31c] sm:$0xf]
  %v228 = vld [vmem:[%s1 + $0x320] sm:$0xf]
  %v229 = vld [vmem:[%s1 + $0x324] sm:$0xf]
  %v230 = vld [vmem:[%s1 + $0x328] sm:$0xf]
  %v231 = vld [vmem:[%s1 + $0x32c] sm:$0xf]
  %v232 = vld [vmem:[%s1 + $0x330] sm:$0xf]
  %v233 = vld [vmem:[%s1 + $0x334] sm:$0xf]
  %v234 = vld [vmem:[%s1 + $0x338] sm:$0xf]
  %v235 = vld [vmem:[%s1 + $0x33c] sm:$0xf]
  %v236 = vld [vmem:[%s1 + $0x340] sm:$0xf]
  %v237 = vld [vmem:[%s1 + $0x344] sm:$0xf]
  %v238 = vld [vmem:[%s1 + $0x348] sm:$0xf]
  %v239 = vld [vmem:[%s1 + $0x34c] sm:$0xf]
  %v240 = vld [vmem:[%s1 + $0x350] sm:$0xf]
  %v241 = vld [vmem:[%s1 + $0x354] sm:$0xf]
  %v242 = vld [vmem:[%s1 + $0x358] sm:$0xf]
  %v243 = vld [vmem:[%s1 + $0x35c] sm:$0xf]
  %v244 = vld [vmem:[%s1 + $0x360] sm:$0xf]
  %v245 = vld [vmem:[%s1 + $0x364] sm:$0xf]
  %v246 = vld [vmem:[%s1 + $0x368] sm:$0xf]
  %v247 = vld [vmem:[%s1 + $0x36c] sm:$0xf]
  %v248 = vld [vmem:[%s1 + $0x370] sm:$0xf]
  %v249 = vld [vmem:[%s1 + $0x374] sm:$0xf]
  %v250 = vld [vmem:[%s1 + $0x378] sm:$0xf]
  %v251 = vld [vmem:[%s1 + $0x37c] sm:$0xf]
  %v252 = vld [vmem:[%s2] sm:$0x1]
  %v254 = vperm.slane %v252, 0
  %v270 = vunpack.c.l.b16 %v14
  %v271 = vunpack.c.h.b16 %v14
  %v272 = vunpack.c.l.b16 %v15
  %v273 = vunpack.c.h.b16 %v15
  %v274 = vunpack.c.l.b16 %v16
  %v275 = vunpack.c.h.b16 %v16
  %v276 = vunpack.c.l.b16 %v17
  %v277 = vunpack.c.h.b16 %v17
  %v278 = vunpack.c.l.b16 %v18
  %v279 = vunpack.c.h.b16 %v18
  %v280 = vunpack.c.l.b16 %v19
  %v281 = vunpack.c.h.b16 %v19
  %v282 = vunpack.c.l.b16 %v20
  %v283 = vunpack.c.h.b16 %v20
  %v284 = vunpack.c.l.b16 %v21
  %v285 = vunpack.c.h.b16 %v21
  %v286 = vunpack.c.l.b16 %v22
  %v287 = vunpack.c.h.b16 %v22
  %v288 = vunpack.c.l.b16 %v23
  %v289 = vunpack.c.h.b16 %v23
  %v290 = vunpack.c.l.b16 %v24
  %v291 = vunpack.c.h.b16 %v24
  %v292 = vunpack.c.l.b16 %v25
  %v293 = vunpack.c.h.b16 %v25
  %v294 = vunpack.c.l.b16 %v26
  %v295 = vunpack.c.h.b16 %v26
  %v296 = vunpack.c.l.b16 %v27
  %v297 = vunpack.c.h.b16 %v27
  %v298 = vpack.c.b16 %v284, %v270
  %v299 = vpack.c.b16 %v285, %v271
  %v300 = vpack.c.b16 %v286, %v272
  %v301 = vpack.c.b16 %v287, %v273
  %v302 = vpack.c.b16 %v288, %v274
  %v303 = vpack.c.b16 %v289, %v275
  %v304 = vpack.c.b16 %v290, %v276
  %v305 = vpack.c.b16 %v291, %v277
  %v306 = vpack.c.b16 %v292, %v278
  %v307 = vpack.c.b16 %v293, %v279
  %v308 = vpack.c.b16 %v294, %v280
  %v309 = vpack.c.b16 %v295, %v281
  %v310 = vpack.c.b16 %v296, %v282
  %v311 = vpack.c.b16 %v297, %v283
  %v550 = vunpack.c.l.b16 %v28
  %v551 = vunpack.c.l.b16 %v29
  %v552 = vunpack.c.l.b16 %v30
  %v553 = vunpack.c.l.b16 %v31
  %v554 = vunpack.c.l.b16 %v32
  %v555 = vunpack.c.l.b16 %v33
  %v556 = vunpack.c.l.b16 %v34
  %v557 = vunpack.c.l.b16 %v35
  %v558 = vunpack.c.l.b16 %v36
  %v559 = vunpack.c.l.b16 %v37
  %v560 = vunpack.c.l.b16 %v38
  %v561 = vunpack.c.l.b16 %v39
  %v562 = vunpack.c.l.b16 %v40
  %v563 = vunpack.c.l.b16 %v41
  %v564 = vunpack.c.l.b16 %v42
  %v565 = vunpack.c.l.b16 %v43
  %v566 = vunpack.c.l.b16 %v44
  %v567 = vunpack.c.l.b16 %v45
  %v568 = vunpack.c.l.b16 %v46
  %v569 = vunpack.c.l.b16 %v47
  %v570 = vunpack.c.l.b16 %v48
  %v571 = vunpack.c.l.b16 %v49
  %v572 = vunpack.c.l.b16 %v50
  %v573 = vunpack.c.l.b16 %v51
  %v574 = vunpack.c.l.b16 %v52
  %v575 = vunpack.c.l.b16 %v53
  %v576 = vunpack.c.l.b16 %v54
  %v577 = vunpack.c.l.b16 %v55
  %v578 = vunpack.c.l.b16 %v56
  %v579 = vunpack.c.l.b16 %v57
  %v580 = vunpack.c.l.b16 %v58
  %v581 = vunpack.c.l.b16 %v59
  %v582 = vunpack.c.l.b16 %v60
  %v583 = vunpack.c.l.b16 %v61
  %v584 = vunpack.c.l.b16 %v62
  %v585 = vunpack.c.l.b16 %v63
  %v586 = vunpack.c.l.b16 %v64
  %v587 = vunpack.c.l.b16 %v65
  %v588 = vunpack.c.l.b16 %v66
  %v589 = vunpack.c.l.b16 %v67
  %v590 = vunpack.c.l.b16 %v68
  %v591 = vunpack.c.l.b16 %v69
  %v592 = vunpack.c.l.b16 %v70
  %v593 = vunpack.c.l.b16 %v71
  %v594 = vunpack.c.l.b16 %v72
  %v595 = vunpack.c.l.b16 %v73
  %v596 = vunpack.c.l.b16 %v74
  %v597 = vunpack.c.l.b16 %v75
  %v598 = vunpack.c.l.b16 %v76
  %v599 = vunpack.c.l.b16 %v77
  %v600 = vunpack.c.l.b16 %v78
  %v601 = vunpack.c.l.b16 %v79
  %v602 = vunpack.c.l.b16 %v80
  %v603 = vunpack.c.l.b16 %v81
  %v604 = vunpack.c.l.b16 %v82
  %v605 = vunpack.c.l.b16 %v83
  %v606 = vunpack.c.l.b16 %v84
  %v607 = vunpack.c.l.b16 %v85
  %v608 = vunpack.c.l.b16 %v86
  %v609 = vunpack.c.l.b16 %v87
  %v610 = vunpack.c.l.b16 %v88
  %v611 = vunpack.c.l.b16 %v89
  %v612 = vunpack.c.l.b16 %v90
  %v613 = vunpack.c.l.b16 %v91
  %v614 = vunpack.c.l.b16 %v92
  %v615 = vunpack.c.l.b16 %v93
  %v616 = vunpack.c.l.b16 %v94
  %v617 = vunpack.c.l.b16 %v95
  %v618 = vunpack.c.l.b16 %v96
  %v619 = vunpack.c.l.b16 %v97
  %v620 = vunpack.c.l.b16 %v98
  %v621 = vunpack.c.l.b16 %v99
  %v622 = vunpack.c.l.b16 %v100
  %v623 = vunpack.c.l.b16 %v101
  %v624 = vunpack.c.l.b16 %v102
  %v625 = vunpack.c.l.b16 %v103
  %v626 = vunpack.c.l.b16 %v104
  %v627 = vunpack.c.l.b16 %v105
  %v628 = vunpack.c.l.b16 %v106
  %v629 = vunpack.c.l.b16 %v107
  %v630 = vunpack.c.l.b16 %v108
  %v631 = vunpack.c.l.b16 %v109
  %v632 = vunpack.c.l.b16 %v110
  %v633 = vunpack.c.l.b16 %v111
  %v634 = vunpack.c.l.b16 %v112
  %v635 = vunpack.c.l.b16 %v113
  %v636 = vunpack.c.l.b16 %v114
  %v637 = vunpack.c.l.b16 %v115
  %v638 = vunpack.c.l.b16 %v116
  %v639 = vunpack.c.l.b16 %v117
  %v640 = vunpack.c.l.b16 %v118
  %v641 = vunpack.c.l.b16 %v119
  %v642 = vunpack.c.l.b16 %v120
  %v643 = vunpack.c.l.b16 %v121
  %v644 = vunpack.c.l.b16 %v122
  %v645 = vunpack.c.l.b16 %v123
  %v646 = vunpack.c.l.b16 %v124
  %v647 = vunpack.c.l.b16 %v125
  %v648 = vunpack.c.l.b16 %v126
  %v649 = vunpack.c.l.b16 %v127
  %v650 = vunpack.c.l.b16 %v128
  %v651 = vunpack.c.l.b16 %v129
  %v652 = vunpack.c.l.b16 %v130
  %v653 = vunpack.c.l.b16 %v131
  %v654 = vunpack.c.l.b16 %v132
  %v655 = vunpack.c.l.b16 %v133
  %v656 = vunpack.c.l.b16 %v134
  %v657 = vunpack.c.l.b16 %v135
  %v658 = vunpack.c.l.b16 %v136
  %v659 = vunpack.c.l.b16 %v137
  %v660 = vunpack.c.l.b16 %v138
  %v661 = vunpack.c.l.b16 %v139
  %v662 = vunpack.c.l.b16 %v140
  %v663 = vunpack.c.l.b16 %v141
  %v664 = vunpack.c.l.b16 %v142
  %v665 = vunpack.c.l.b16 %v143
  %v666 = vunpack.c.l.b16 %v144
  %v667 = vunpack.c.l.b16 %v145
  %v668 = vunpack.c.l.b16 %v146
  %v669 = vunpack.c.l.b16 %v147
  %v670 = vunpack.c.l.b16 %v148
  %v671 = vunpack.c.l.b16 %v149
  %v672 = vunpack.c.l.b16 %v150
  %v673 = vunpack.c.l.b16 %v151
  %v674 = vunpack.c.l.b16 %v152
  %v675 = vunpack.c.l.b16 %v153
  %v676 = vunpack.c.l.b16 %v154
  %v677 = vunpack.c.l.b16 %v155
  %v678 = vunpack.c.l.b16 %v156
  %v679 = vunpack.c.l.b16 %v157
  %v680 = vunpack.c.l.b16 %v158
  %v681 = vunpack.c.l.b16 %v159
  %v682 = vunpack.c.l.b16 %v160
  %v683 = vunpack.c.l.b16 %v161
  %v684 = vunpack.c.l.b16 %v162
  %v685 = vunpack.c.l.b16 %v163
  %v686 = vunpack.c.l.b16 %v164
  %v687 = vunpack.c.l.b16 %v165
  %v688 = vunpack.c.l.b16 %v166
  %v689 = vunpack.c.l.b16 %v167
  %v690 = vunpack.c.l.b16 %v168
  %v691 = vunpack.c.l.b16 %v169
  %v692 = vunpack.c.l.b16 %v170
  %v693 = vunpack.c.l.b16 %v171
  %v694 = vunpack.c.l.b16 %v172
  %v695 = vunpack.c.l.b16 %v173
  %v696 = vunpack.c.l.b16 %v174
  %v697 = vunpack.c.l.b16 %v175
  %v698 = vunpack.c.l.b16 %v176
  %v699 = vunpack.c.l.b16 %v177
  %v700 = vunpack.c.l.b16 %v178
  %v701 = vunpack.c.l.b16 %v179
  %v702 = vunpack.c.l.b16 %v180
  %v703 = vunpack.c.l.b16 %v181
  %v704 = vunpack.c.l.b16 %v182
  %v705 = vunpack.c.l.b16 %v183
  %v706 = vunpack.c.l.b16 %v184
  %v707 = vunpack.c.l.b16 %v185
  %v708 = vunpack.c.l.b16 %v186
  %v709 = vunpack.c.l.b16 %v187
  %v710 = vunpack.c.l.b16 %v188
  %v711 = vunpack.c.l.b16 %v189
  %v712 = vunpack.c.l.b16 %v190
  %v713 = vunpack.c.l.b16 %v191
  %v714 = vunpack.c.l.b16 %v192
  %v715 = vunpack.c.l.b16 %v193
  %v716 = vunpack.c.l.b16 %v194
  %v717 = vunpack.c.l.b16 %v195
  %v718 = vunpack.c.l.b16 %v196
  %v719 = vunpack.c.l.b16 %v197
  %v720 = vunpack.c.l.b16 %v198
  %v721 = vunpack.c.l.b16 %v199
  %v722 = vunpack.c.l.b16 %v200
  %v723 = vunpack.c.l.b16 %v201
  %v724 = vunpack.c.l.b16 %v202
  %v725 = vunpack.c.l.b16 %v203
  %v726 = vunpack.c.l.b16 %v204
  %v727 = vunpack.c.l.b16 %v205
  %v728 = vunpack.c.l.b16 %v206
  %v729 = vunpack.c.l.b16 %v207
  %v730 = vunpack.c.l.b16 %v208
  %v731 = vunpack.c.l.b16 %v209
  %v732 = vunpack.c.l.b16 %v210
  %v733 = vunpack.c.l.b16 %v211
  %v734 = vunpack.c.l.b16 %v212
  %v735 = vunpack.c.l.b16 %v213
  %v736 = vunpack.c.l.b16 %v214
  %v737 = vunpack.c.l.b16 %v215
  %v738 = vunpack.c.l.b16 %v216
  %v739 = vunpack.c.l.b16 %v217
  %v740 = vunpack.c.l.b16 %v218
  %v741 = vunpack.c.l.b16 %v219
  %v742 = vunpack.c.l.b16 %v220
  %v743 = vunpack.c.l.b16 %v221
  %v744 = vunpack.c.l.b16 %v222
  %v745 = vunpack.c.l.b16 %v223
  %v746 = vunpack.c.l.b16 %v224
  %v747 = vunpack.c.l.b16 %v225
  %v748 = vunpack.c.l.b16 %v226
  %v749 = vunpack.c.l.b16 %v227
  %v750 = vunpack.c.l.b16 %v228
  %v751 = vunpack.c.l.b16 %v229
  %v752 = vunpack.c.l.b16 %v230
  %v753 = vunpack.c.l.b16 %v231
  %v754 = vunpack.c.l.b16 %v232
  %v755 = vunpack.c.l.b16 %v233
  %v756 = vunpack.c.l.b16 %v234
  %v757 = vunpack.c.l.b16 %v235
  %v758 = vunpack.c.l.b16 %v236
  %v759 = vunpack.c.l.b16 %v237
  %v760 = vunpack.c.l.b16 %v238
  %v761 = vunpack.c.l.b16 %v239
  %v762 = vunpack.c.l.b16 %v240
  %v763 = vunpack.c.l.b16 %v241
  %v764 = vunpack.c.l.b16 %v242
  %v765 = vunpack.c.l.b16 %v243
  %v766 = vunpack.c.l.b16 %v244
  %v767 = vunpack.c.l.b16 %v245
  %v768 = vunpack.c.l.b16 %v246
  %v769 = vunpack.c.l.b16 %v247
  %v770 = vunpack.c.l.b16 %v248
  %v771 = vunpack.c.l.b16 %v249
  %v772 = vunpack.c.l.b16 %v250
  %v773 = vunpack.c.l.b16 %v251
  %v774 = vpack.c.b16 %v551, %v550
  %v775 = vpack.c.b16 %v553, %v552
  %v776 = vpack.c.b16 %v555, %v554
  %v777 = vpack.c.b16 %v557, %v556
  %v778 = vpack.c.b16 %v559, %v558
  %v779 = vpack.c.b16 %v561, %v560
  %v780 = vpack.c.b16 %v563, %v562
  %v781 = vpack.c.b16 %v565, %v564
  %v782 = vpack.c.b16 %v567, %v566
  %v783 = vpack.c.b16 %v569, %v568
  %v784 = vpack.c.b16 %v571, %v570
  %v785 = vpack.c.b16 %v573, %v572
  %v786 = vpack.c.b16 %v575, %v574
  %v787 = vpack.c.b16 %v577, %v576
  %v788 = vpack.c.b16 %v579, %v578
  %v789 = vpack.c.b16 %v581, %v580
  %v790 = vpack.c.b16 %v583, %v582
  %v791 = vpack.c.b16 %v585, %v584
  %v792 = vpack.c.b16 %v587, %v586
  %v793 = vpack.c.b16 %v589, %v588
  %v794 = vpack.c.b16 %v591, %v590
  %v795 = vpack.c.b16 %v593, %v592
  %v796 = vpack.c.b16 %v595, %v594
  %v797 = vpack.c.b16 %v597, %v596
  %v798 = vpack.c.b16 %v599, %v598
  %v799 = vpack.c.b16 %v601, %v600
  %v800 = vpack.c.b16 %v603, %v602
  %v801 = vpack.c.b16 %v605, %v604
  %v802 = vpack.c.b16 %v607, %v606
  %v803 = vpack.c.b16 %v609, %v608
  %v804 = vpack.c.b16 %v611, %v610
  %v805 = vpack.c.b16 %v613, %v612
  %v806 = vpack.c.b16 %v615, %v614
  %v807 = vpack.c.b16 %v617, %v616
  %v808 = vpack.c.b16 %v619, %v618
  %v809 = vpack.c.b16 %v621, %v620
  %v810 = vpack.c.b16 %v623, %v622
  %v811 = vpack.c.b16 %v625, %v624
  %v812 = vpack.c.b16 %v627, %v626
  %v813 = vpack.c.b16 %v629, %v628
  %v814 = vpack.c.b16 %v631, %v630
  %v815 = vpack.c.b16 %v633, %v632
  %v816 = vpack.c.b16 %v635, %v634
  %v817 = vpack.c.b16 %v637, %v636
  %v818 = vpack.c.b16 %v639, %v638
  %v819 = vpack.c.b16 %v641, %v640
  %v820 = vpack.c.b16 %v643, %v642
  %v821 = vpack.c.b16 %v645, %v644
  %v822 = vpack.c.b16 %v647, %v646
  %v823 = vpack.c.b16 %v649, %v648
  %v824 = vpack.c.b16 %v651, %v650
  %v825 = vpack.c.b16 %v653, %v652
  %v826 = vpack.c.b16 %v655, %v654
  %v827 = vpack.c.b16 %v657, %v656
  %v828 = vpack.c.b16 %v659, %v658
  %v829 = vpack.c.b16 %v661, %v660
  %v830 = vpack.c.b16 %v663, %v662
  %v831 = vpack.c.b16 %v665, %v664
  %v832 = vpack.c.b16 %v667, %v666
  %v833 = vpack.c.b16 %v669, %v668
  %v834 = vpack.c.b16 %v671, %v670
  %v835 = vpack.c.b16 %v673, %v672
  %v836 = vpack.c.b16 %v675, %v674
  %v837 = vpack.c.b16 %v677, %v676
  %v838 = vpack.c.b16 %v679, %v678
  %v839 = vpack.c.b16 %v681, %v680
  %v840 = vpack.c.b16 %v683, %v682
  %v841 = vpack.c.b16 %v685, %v684
  %v842 = vpack.c.b16 %v687, %v686
  %v843 = vpack.c.b16 %v689, %v688
  %v844 = vpack.c.b16 %v691, %v690
  %v845 = vpack.c.b16 %v693, %v692
  %v846 = vpack.c.b16 %v695, %v694
  %v847 = vpack.c.b16 %v697, %v696
  %v848 = vpack.c.b16 %v699, %v698
  %v849 = vpack.c.b16 %v701, %v700
  %v850 = vpack.c.b16 %v703, %v702
  %v851 = vpack.c.b16 %v705, %v704
  %v852 = vpack.c.b16 %v707, %v706
  %v853 = vpack.c.b16 %v709, %v708
  %v854 = vpack.c.b16 %v711, %v710
  %v855 = vpack.c.b16 %v713, %v712
  %v856 = vpack.c.b16 %v715, %v714
  %v857 = vpack.c.b16 %v717, %v716
  %v858 = vpack.c.b16 %v719, %v718
  %v859 = vpack.c.b16 %v721, %v720
  %v860 = vpack.c.b16 %v723, %v722
  %v861 = vpack.c.b16 %v725, %v724
  %v862 = vpack.c.b16 %v727, %v726
  %v863 = vpack.c.b16 %v729, %v728
  %v864 = vpack.c.b16 %v731, %v730
  %v865 = vpack.c.b16 %v733, %v732
  %v866 = vpack.c.b16 %v735, %v734
  %v867 = vpack.c.b16 %v737, %v736
  %v868 = vpack.c.b16 %v739, %v738
  %v869 = vpack.c.b16 %v741, %v740
  %v870 = vpack.c.b16 %v743, %v742
  %v871 = vpack.c.b16 %v745, %v744
  %v872 = vpack.c.b16 %v747, %v746
  %v873 = vpack.c.b16 %v749, %v748
  %v874 = vpack.c.b16 %v751, %v750
  %v875 = vpack.c.b16 %v753, %v752
  %v876 = vpack.c.b16 %v755, %v754
  %v877 = vpack.c.b16 %v757, %v756
  %v878 = vpack.c.b16 %v759, %v758
  %v879 = vpack.c.b16 %v761, %v760
  %v880 = vpack.c.b16 %v763, %v762
  %v881 = vpack.c.b16 %v765, %v764
  %v882 = vpack.c.b16 %v767, %v766
  %v883 = vpack.c.b16 %v769, %v768
  %v884 = vpack.c.b16 %v771, %v770
  %v885 = vpack.c.b16 %v773, %v772
  %998 = vmatpush.bf16.msra.mxu0 %v781
  %999 = vmatpush.bf16.msra.mxu0 %v780
  %1000 = vmatpush.bf16.msra.mxu0 %v779
  %1001 = vmatpush.bf16.msra.mxu0 %v778
  %1002 = vmatpush.bf16.msra.mxu0 %v777
  %1003 = vmatpush.bf16.msra.mxu0 %v776
  %1004 = vmatpush.bf16.msra.mxu0 %v775
  %1005 = vmatpush.bf16.msra.mxu0 %v774
  %1006 = vmatmul.bf16.gmra.mxu0 %v298
  %v1007 = vpop.f32.mrf.mxu0
  %v1008 = vadd.f32 %v254, %v1007
  %v1009 = vpop.f32.mrf.mxu0
  %v1010 = vadd.f32 %v254, %v1009
  %1011 = vdwg.mxu0
  %1012 = vmatpush.bf16.msra.mxu0 %v789
  %1013 = vmatpush.bf16.msra.mxu0 %v788
  %1014 = vmatpush.bf16.msra.mxu0 %v787
  %1015 = vmatpush.bf16.msra.mxu0 %v786
  %1016 = vmatpush.bf16.msra.mxu0 %v785
  %1017 = vmatpush.bf16.msra.mxu0 %v784
  %1018 = vmatpush.bf16.msra.mxu0 %v783
  %1019 = vmatpush.bf16.msra.mxu0 %v782
  %1020 = vmatmul.bf16.gmra.mxu0 %v299
  %v1021 = vpop.f32.mrf.mxu0
  %v1022 = vadd.f32 %v1008, %v1021
  %v1023 = vpop.f32.mrf.mxu0
  %v1024 = vadd.f32 %v1010, %v1023
  %1025 = vdwg.mxu0
  %1026 = vmatpush.bf16.msra.mxu0 %v797
  %1027 = vmatpush.bf16.msra.mxu0 %v796
  %1028 = vmatpush.bf16.msra.mxu0 %v795
  %1029 = vmatpush.bf16.msra.mxu0 %v794
  %1030 = vmatpush.bf16.msra.mxu0 %v793
  %1031 = vmatpush.bf16.msra.mxu0 %v792
  %1032 = vmatpush.bf16.msra.mxu0 %v791
  %1033 = vmatpush.bf16.msra.mxu0 %v790
  %1034 = vmatmul.bf16.gmra.mxu0 %v300
  %v1035 = vpop.f32.mrf.mxu0
  %v1036 = vadd.f32 %v1022, %v1035
  %v1037 = vpop.f32.mrf.mxu0
  %v1038 = vadd.f32 %v1024, %v1037
  %1039 = vdwg.mxu0
  %1040 = vmatpush.bf16.msra.mxu0 %v805
  %1041 = vmatpush.bf16.msra.mxu0 %v804
  %1042 = vmatpush.bf16.msra.mxu0 %v803
  %1043 = vmatpush.bf16.msra.mxu0 %v802
  %1044 = vmatpush.bf16.msra.mxu0 %v801
  %1045 = vmatpush.bf16.msra.mxu0 %v800
  %1046 = vmatpush.bf16.msra.mxu0 %v799
  %1047 = vmatpush.bf16.msra.mxu0 %v798
  %1048 = vmatmul.bf16.gmra.mxu0 %v301
  %v1049 = vpop.f32.mrf.mxu0
  %v1050 = vadd.f32 %v1036, %v1049
  %v1051 = vpop.f32.mrf.mxu0
  %v1052 = vadd.f32 %v1038, %v1051
  %1053 = vdwg.mxu0
  %1054 = vmatpush.bf16.msra.mxu0 %v813
  %1055 = vmatpush.bf16.msra.mxu0 %v812
  %1056 = vmatpush.bf16.msra.mxu0 %v811
  %1057 = vmatpush.bf16.msra.mxu0 %v810
  %1058 = vmatpush.bf16.msra.mxu0 %v809
  %1059 = vmatpush.bf16.msra.mxu0 %v808
  %1060 = vmatpush.bf16.msra.mxu0 %v807
  %1061 = vmatpush.bf16.msra.mxu0 %v806
  %1062 = vmatmul.bf16.gmra.mxu0 %v302
  %v1063 = vpop.f32.mrf.mxu0
  %v1064 = vadd.f32 %v1050, %v1063
  %v1065 = vpop.f32.mrf.mxu0
  %v1066 = vadd.f32 %v1052, %v1065
  %1067 = vdwg.mxu0
  %1068 = vmatpush.bf16.msra.mxu0 %v821
  %1069 = vmatpush.bf16.msra.mxu0 %v820
  %1070 = vmatpush.bf16.msra.mxu0 %v819
  %1071 = vmatpush.bf16.msra.mxu0 %v818
  %1072 = vmatpush.bf16.msra.mxu0 %v817
  %1073 = vmatpush.bf16.msra.mxu0 %v816
  %1074 = vmatpush.bf16.msra.mxu0 %v815
  %1075 = vmatpush.bf16.msra.mxu0 %v814
  %1076 = vmatmul.bf16.gmra.mxu0 %v303
  %v1077 = vpop.f32.mrf.mxu0
  %v1078 = vadd.f32 %v1064, %v1077
  %v1079 = vpop.f32.mrf.mxu0
  %v1080 = vadd.f32 %v1066, %v1079
  %1081 = vdwg.mxu0
  %1082 = vmatpush.bf16.msra.mxu0 %v829
  %1083 = vmatpush.bf16.msra.mxu0 %v828
  %1084 = vmatpush.bf16.msra.mxu0 %v827
  %1085 = vmatpush.bf16.msra.mxu0 %v826
  %1086 = vmatpush.bf16.msra.mxu0 %v825
  %1087 = vmatpush.bf16.msra.mxu0 %v824
  %1088 = vmatpush.bf16.msra.mxu0 %v823
  %1089 = vmatpush.bf16.msra.mxu0 %v822
  %1090 = vmatmul.bf16.gmra.mxu0 %v304
  %v1091 = vpop.f32.mrf.mxu0
  %v1092 = vadd.f32 %v1078, %v1091
  %v1093 = vpop.f32.mrf.mxu0
  %v1094 = vadd.f32 %v1080, %v1093
  %1095 = vdwg.mxu0
  %1096 = vmatpush.bf16.msra.mxu0 %v837
  %1097 = vmatpush.bf16.msra.mxu0 %v836
  %1098 = vmatpush.bf16.msra.mxu0 %v835
  %1099 = vmatpush.bf16.msra.mxu0 %v834
  %1100 = vmatpush.bf16.msra.mxu0 %v833
  %1101 = vmatpush.bf16.msra.mxu0 %v832
  %1102 = vmatpush.bf16.msra.mxu0 %v831
  %1103 = vmatpush.bf16.msra.mxu0 %v830
  %1104 = vmatmul.bf16.gmra.mxu0 %v305
  %v1105 = vpop.f32.mrf.mxu0
  %v1106 = vadd.f32 %v1092, %v1105
  %v1107 = vpop.f32.mrf.mxu0
  %v1108 = vadd.f32 %v1094, %v1107
  %1109 = vdwg.mxu0
  %1110 = vmatpush.bf16.msra.mxu0 %v845
  %1111 = vmatpush.bf16.msra.mxu0 %v844
  %1112 = vmatpush.bf16.msra.mxu0 %v843
  %1113 = vmatpush.bf16.msra.mxu0 %v842
  %1114 = vmatpush.bf16.msra.mxu0 %v841
  %1115 = vmatpush.bf16.msra.mxu0 %v840
  %1116 = vmatpush.bf16.msra.mxu0 %v839
  %1117 = vmatpush.bf16.msra.mxu0 %v838
  %1118 = vmatmul.bf16.gmra.mxu0 %v306
  %v1119 = vpop.f32.mrf.mxu0
  %v1120 = vadd.f32 %v1106, %v1119
  %v1121 = vpop.f32.mrf.mxu0
  %v1122 = vadd.f32 %v1108, %v1121
  %1123 = vdwg.mxu0
  %1124 = vmatpush.bf16.msra.mxu0 %v853
  %1125 = vmatpush.bf16.msra.mxu0 %v852
  %1126 = vmatpush.bf16.msra.mxu0 %v851
  %1127 = vmatpush.bf16.msra.mxu0 %v850
  %1128 = vmatpush.bf16.msra.mxu0 %v849
  %1129 = vmatpush.bf16.msra.mxu0 %v848
  %1130 = vmatpush.bf16.msra.mxu0 %v847
  %1131 = vmatpush.bf16.msra.mxu0 %v846
  %1132 = vmatmul.bf16.gmra.mxu0 %v307
  %v1133 = vpop.f32.mrf.mxu0
  %v1134 = vadd.f32 %v1120, %v1133
  %v1135 = vpop.f32.mrf.mxu0
  %v1136 = vadd.f32 %v1122, %v1135
  %1137 = vdwg.mxu0
  %1138 = vmatpush.bf16.msra.mxu0 %v861
  %1139 = vmatpush.bf16.msra.mxu0 %v860
  %1140 = vmatpush.bf16.msra.mxu0 %v859
  %1141 = vmatpush.bf16.msra.mxu0 %v858
  %1142 = vmatpush.bf16.msra.mxu0 %v857
  %1143 = vmatpush.bf16.msra.mxu0 %v856
  %1144 = vmatpush.bf16.msra.mxu0 %v855
  %1145 = vmatpush.bf16.msra.mxu0 %v854
  %1146 = vmatmul.bf16.gmra.mxu0 %v308
  %v1147 = vpop.f32.mrf.mxu0
  %v1148 = vadd.f32 %v1134, %v1147
  %v1149 = vpop.f32.mrf.mxu0
  %v1150 = vadd.f32 %v1136, %v1149
  %1151 = vdwg.mxu0
  %1152 = vmatpush.bf16.msra.mxu0 %v869
  %1153 = vmatpush.bf16.msra.mxu0 %v868
  %1154 = vmatpush.bf16.msra.mxu0 %v867
  %1155 = vmatpush.bf16.msra.mxu0 %v866
  %1156 = vmatpush.bf16.msra.mxu0 %v865
  %1157 = vmatpush.bf16.msra.mxu0 %v864
  %1158 = vmatpush.bf16.msra.mxu0 %v863
  %1159 = vmatpush.bf16.msra.mxu0 %v862
  %1160 = vmatmul.bf16.gmra.mxu0 %v309
  %v1161 = vpop.f32.mrf.mxu0
  %v1162 = vadd.f32 %v1148, %v1161
  %v1163 = vpop.f32.mrf.mxu0
  %v1164 = vadd.f32 %v1150, %v1163
  %1165 = vdwg.mxu0
  %1166 = vmatpush.bf16.msra.mxu0 %v877
  %1167 = vmatpush.bf16.msra.mxu0 %v876
  %1168 = vmatpush.bf16.msra.mxu0 %v875
  %1169 = vmatpush.bf16.msra.mxu0 %v874
  %1170 = vmatpush.bf16.msra.mxu0 %v873
  %1171 = vmatpush.bf16.msra.mxu0 %v872
  %1172 = vmatpush.bf16.msra.mxu0 %v871
  %1173 = vmatpush.bf16.msra.mxu0 %v870
  %1174 = vmatmul.bf16.gmra.mxu0 %v310
  %v1175 = vpop.f32.mrf.mxu0
  %v1176 = vadd.f32 %v1162, %v1175
  %v1177 = vpop.f32.mrf.mxu0
  %v1178 = vadd.f32 %v1164, %v1177
  %1179 = vdwg.mxu0
  %1180 = vmatpush.bf16.msra.mxu0 %v885
  %1181 = vmatpush.bf16.msra.mxu0 %v884
  %1182 = vmatpush.bf16.msra.mxu0 %v883
  %1183 = vmatpush.bf16.msra.mxu0 %v882
  %1184 = vmatpush.bf16.msra.mxu0 %v881
  %1185 = vmatpush.bf16.msra.mxu0 %v880
  %1186 = vmatpush.bf16.msra.mxu0 %v879
  %1187 = vmatpush.bf16.msra.mxu0 %v878
  %1188 = vmatmul.bf16.gmra.mxu0 %v311
  %v1189 = vpop.f32.mrf.mxu0
  %v1190 = vadd.f32 %v1176, %v1189
  %v1191 = vpop.f32.mrf.mxu0
  %v1192 = vadd.f32 %v1178, %v1191
  %1193 = vdwg.mxu0
  %v1194 = vmax.f32 %v1190, 0.0
  %v1195 = vmax.f32 %v1192, 0.0
  %1196 = vst [vmem:[%s3] sm:$0xff] %v1194
  %1197 = vst [vmem:[%s3 + $0x8] sm:$0xff] %v1195
  // Predicated region
  $region14: #{resnet_forward.17} parent=0 // pred_check
    _
  $region15: #{resnet_forward.17} parent=0 // pred_check_branch
    %1199 = sbr.rel (0) target = $region17
  $region16: #{resnet_forward.17} parent=0 // pred_region
    _
  $region17: #{resnet_forward.17} parent=0 // pred_fallthru
    _
  // Predicated region
  $region18: #{resnet_forward.17} parent=0 // pred_check
    _
  $region19: #{resnet_forward.17} parent=0 // pred_check_branch
    %1201 = sbr.rel (0) target = $region21
  $region20: #{resnet_forward.17} parent=0 // pred_region
    _
  $region21: #{resnet_forward.17} parent=0 // pred_fallthru
    _

// kernel: resnet_forward.18
$region0: #{resnet_forward.18}
  #allocation0 [shape = 'u32[]', space=smem, size = 0x4, offset = 0x4, fixed_abs, tag = 'smem constant byte address 0x4 - core index']
  #allocation1 [shape = 'u32[72,128]{1,0:T(1,128)}', space=vmem, size = 0x9000, scoped, tag = 'internal scratch']
  %s0 = inlined_call_operand.vmem [shape: bf16[16,128], index: 0, kind: input, shape index: {}]
  %s1 = inlined_call_operand.vmem [shape: bf16[128,128], index: 1, kind: input, shape index: {}]
  %s2 = inlined_call_operand.vmem [shape: f32[1,128], index: 2, kind: input, shape index: {}]
  %s3 = inlined_call_operand.vmem [shape: f32[16,128], index: 3, kind: output, shape index: {}]
  %s4 = sld [smem:[#allocation0]]
  $region22: #{resnet_forward.18} parent=0
    _
  %s6 = ssub.s32 1, %s4
  %s7 = scalar_select 0, %s6, %s4
  // Predicated region
  $region2: #{resnet_forward.18} parent=0 // pred_check
    _
  $region3: #{resnet_forward.18} parent=0 // pred_check_branch
    %9 = sbr.rel (0) target = $region5
  $region4: #{resnet_forward.18} parent=0 // pred_region
    _
  $region5: #{resnet_forward.18} parent=0 // pred_fallthru
    _
  // Predicated region
  $region6: #{resnet_forward.18} parent=0 // pred_check
    _
  $region7: #{resnet_forward.18} parent=0 // pred_check_branch
    %11 = sbr.rel (0) target = $region9
  $region8: #{resnet_forward.18} parent=0 // pred_region
    _
  $region9: #{resnet_forward.18} parent=0 // pred_fallthru
    _
  // Predicated region
  $region10: #{resnet_forward.18} parent=0 // pred_check
    _
  $region11: #{resnet_forward.18} parent=0 // pred_check_branch
    %13 = sbr.rel (0) target = $region13
  $region12: #{resnet_forward.18} parent=0 // pred_region
    _
  $region13: #{resnet_forward.18} parent=0 // pred_fallthru
    _
  %v14 = vld [vmem:[%s0] sm:$0xf]
  %v15 = vld [vmem:[%s0 + $0x4] sm:$0xf]
  %v16 = vld [vmem:[%s1] sm:$0xf]
  %v17 = vld [vmem:[%s1 + $0x4] sm:$0xf]
  %v18 = vld [vmem:[%s1 + $0x8] sm:$0xf]
  %v19 = vld [vmem:[%s1 + $0xc] sm:$0xf]
  %v20 = vld [vmem:[%s1 + $0x10] sm:$0xf]
  %v21 = vld [vmem:[%s1 + $0x14] sm:$0xf]
  %v22 = vld [vmem:[%s1 + $0x18] sm:$0xf]
  %v23 = vld [vmem:[%s1 + $0x1c] sm:$0xf]
  %v24 = vld [vmem:[%s1 + $0x20] sm:$0xf]
  %v25 = vld [vmem:[%s1 + $0x24] sm:$0xf]
  %v26 = vld [vmem:[%s1 + $0x28] sm:$0xf]
  %v27 = vld [vmem:[%s1 + $0x2c] sm:$0xf]
  %v28 = vld [vmem:[%s1 + $0x30] sm:$0xf]
  %v29 = vld [vmem:[%s1 + $0x34] sm:$0xf]
  %v30 = vld [vmem:[%s1 + $0x38] sm:$0xf]
  %v31 = vld [vmem:[%s1 + $0x3c] sm:$0xf]
  %v32 = vld [vmem:[%s2] sm:$0x1]
  %v34 = vperm.slane %v32, 0
  %v38 = vunpack.c.l.b16 %v14
  %v39 = vunpack.c.l.b16 %v15
  %v40 = vpack.c.b16 %v39, %v38
  %v58 = vunpack.c.l.b16 %v16
  %v59 = vunpack.c.l.b16 %v17
  %v60 = vunpack.c.l.b16 %v18
  %v61 = vunpack.c.l.b16 %v19
  %v62 = vunpack.c.l.b16 %v20
  %v63 = vunpack.c.l.b16 %v21
  %v64 = vunpack.c.l.b16 %v22
  %v65 = vunpack.c.l.b16 %v23
  %v66 = vunpack.c.l.b16 %v24
  %v67 = vunpack.c.l.b16 %v25
  %v68 = vunpack.c.l.b16 %v26
  %v69 = vunpack.c.l.b16 %v27
  %v70 = vunpack.c.l.b16 %v28
  %v71 = vunpack.c.l.b16 %v29
  %v72 = vunpack.c.l.b16 %v30
  %v73 = vunpack.c.l.b16 %v31
  %v74 = vpack.c.b16 %v59, %v58
  %v75 = vpack.c.b16 %v61, %v60
  %v76 = vpack.c.b16 %v63, %v62
  %v77 = vpack.c.b16 %v65, %v64
  %v78 = vpack.c.b16 %v67, %v66
  %v79 = vpack.c.b16 %v69, %v68
  %v80 = vpack.c.b16 %v71, %v70
  %v81 = vpack.c.b16 %v73, %v72
  %90 = vmatpush.bf16.msra.mxu0 %v81
  %91 = vmatpush.bf16.msra.mxu0 %v80
  %92 = vmatpush.bf16.msra.mxu0 %v79
  %93 = vmatpush.bf16.msra.mxu0 %v78
  %94 = vmatpush.bf16.msra.mxu0 %v77
  %95 = vmatpush.bf16.msra.mxu0 %v76
  %96 = vmatpush.bf16.msra.mxu0 %v75
  %97 = vmatpush.bf16.msra.mxu0 %v74
  %98 = vmatmul.bf16.gmra.mxu0 %v40
  %v99 = vpop.f32.mrf.mxu0
  %v100 = vadd.f32 %v34, %v99
  %v101 = vpop.f32.mrf.mxu0
  %v102 = vadd.f32 %v34, %v101
  %103 = vdwg.mxu0
  %104 = vst [vmem:[%s3] sm:$0xff] %v100
  %105 = vst [vmem:[%s3 + $0x8] sm:$0xff] %v102
  // Predicated region
  $region14: #{resnet_forward.18} parent=0 // pred_check
    _
  $region15: #{resnet_forward.18} parent=0 // pred_check_branch
    %107 = sbr.rel (0) target = $region17
  $region16: #{resnet_forward.18} parent=0 // pred_region
    _
  $region17: #{resnet_forward.18} parent=0 // pred_fallthru
    _
  // Predicated region
  $region18: #{resnet_forward.18} parent=0 // pred_check
    _
  $region19: #{resnet_forward.18} parent=0 // pred_check_branch
    %109 = sbr.rel (0) target = $region21
  $region20: #{resnet_forward.18} parent=0 // pred_region
    _
  $region21: #{resnet_forward.18} parent=0 // pred_fallthru
    _

// kernel: resnet_forward.21
$region0: #{resnet_forward.21}
  #allocation0 [shape = 'u32[]', space=smem, size = 0x4, offset = 0x4, fixed_abs, tag = 'smem constant byte address 0x4 - core index']
  #allocation1 [shape = 'u32[72,128]{1,0:T(1,128)}', space=vmem, size = 0x9000, scoped, tag = 'internal scratch']
  %s0 = inlined_call_operand.vmem [shape: bf16[8,128], index: 0, kind: input, shape index: {}]
  %s1 = inlined_call_operand.vmem [shape: bf16[128,128], index: 1, kind: input, shape index: {}]
  %s2 = inlined_call_operand.vmem [shape: f32[1,128], index: 2, kind: input, shape index: {}]
  %s3 = inlined_call_operand.vmem [shape: f32[8,128], index: 3, kind: output, shape index: {}]
  %s4 = sld [smem:[#allocation0]]
  $region22: #{resnet_forward.21} parent=0
    _
  %s6 = ssub.s32 1, %s4
  %s7 = scalar_select 0, %s6, %s4
  // Predicated region
  $region2: #{resnet_forward.21} parent=0 // pred_check
    _
  $region3: #{resnet_forward.21} parent=0 // pred_check_branch
    %9 = sbr.rel (0) target = $region5
  $region4: #{resnet_forward.21} parent=0 // pred_region
    _
  $region5: #{resnet_forward.21} parent=0 // pred_fallthru
    _
  // Predicated region
  $region6: #{resnet_forward.21} parent=0 // pred_check
    _
  $region7: #{resnet_forward.21} parent=0 // pred_check_branch
    %11 = sbr.rel (0) target = $region9
  $region8: #{resnet_forward.21} parent=0 // pred_region
    _
  $region9: #{resnet_forward.21} parent=0 // pred_fallthru
    _
  // Predicated region
  $region10: #{resnet_forward.21} parent=0 // pred_check
    _
  $region11: #{resnet_forward.21} parent=0 // pred_check_branch
    %13 = sbr.rel (0) target = $region13
  $region12: #{resnet_forward.21} parent=0 // pred_region
    _
  $region13: #{resnet_forward.21} parent=0 // pred_fallthru
    _
  %v14 = vld [vmem:[%s0] sm:$0xf]
  %v15 = vld [vmem:[%s1] sm:$0xf]
  %v16 = vld [vmem:[%s1 + $0x4] sm:$0xf]
  %v17 = vld [vmem:[%s1 + $0x8] sm:$0xf]
  %v18 = vld [vmem:[%s1 + $0xc] sm:$0xf]
  %v19 = vld [vmem:[%s1 + $0x10] sm:$0xf]
  %v20 = vld [vmem:[%s1 + $0x14] sm:$0xf]
  %v21 = vld [vmem:[%s1 + $0x18] sm:$0xf]
  %v22 = vld [vmem:[%s1 + $0x1c] sm:$0xf]
  %v23 = vld [vmem:[%s1 + $0x20] sm:$0xf]
  %v24 = vld [vmem:[%s1 + $0x24] sm:$0xf]
  %v25 = vld [vmem:[%s1 + $0x28] sm:$0xf]
  %v26 = vld [vmem:[%s1 + $0x2c] sm:$0xf]
  %v27 = vld [vmem:[%s1 + $0x30] sm:$0xf]
  %v28 = vld [vmem:[%s1 + $0x34] sm:$0xf]
  %v29 = vld [vmem:[%s1 + $0x38] sm:$0xf]
  %v30 = vld [vmem:[%s1 + $0x3c] sm:$0xf]
  %v31 = vld [vmem:[%s2] sm:$0x1]
  %v33 = vperm.slane %v31, 0
  %v51 = vunpack.c.l.b16 %v15
  %v52 = vunpack.c.l.b16 %v16
  %v53 = vunpack.c.l.b16 %v17
  %v54 = vunpack.c.l.b16 %v18
  %v55 = vunpack.c.l.b16 %v19
  %v56 = vunpack.c.l.b16 %v20
  %v57 = vunpack.c.l.b16 %v21
  %v58 = vunpack.c.l.b16 %v22
  %v59 = vunpack.c.l.b16 %v23
  %v60 = vunpack.c.l.b16 %v24
  %v61 = vunpack.c.l.b16 %v25
  %v62 = vunpack.c.l.b16 %v26
  %v63 = vunpack.c.l.b16 %v27
  %v64 = vunpack.c.l.b16 %v28
  %v65 = vunpack.c.l.b16 %v29
  %v66 = vunpack.c.l.b16 %v30
  %v67 = vpack.c.b16 %v52, %v51
  %v68 = vpack.c.b16 %v54, %v53
  %v69 = vpack.c.b16 %v56, %v55
  %v70 = vpack.c.b16 %v58, %v57
  %v71 = vpack.c.b16 %v60, %v59
  %v72 = vpack.c.b16 %v62, %v61
  %v73 = vpack.c.b16 %v64, %v63
  %v74 = vpack.c.b16 %v66, %v65
  %83 = vmatpush.bf16.msra.mxu0 %v74
  %84 = vmatpush.bf16.msra.mxu0 %v73
  %85 = vmatpush.bf16.msra.mxu0 %v72
  %86 = vmatpush.bf16.msra.mxu0 %v71
  %87 = vmatpush.bf16.msra.mxu0 %v70
  %88 = vmatpush.bf16.msra.mxu0 %v69
  %89 = vmatpush.bf16.msra.mxu0 %v68
  %90 = vmatpush.bf16.msra.mxu0 %v67
  %91 = vmatmul.bf16.gmra.mxu0 %v14
  %v92 = vpop.f32.mrf.mxu0
  %v93 = vadd.f32 %v33, %v92
  %v94 = vpop.f32.mrf.mxu0
  %95 = vdwg.mxu0
  %96 = vst [vmem:[%s3] sm:$0xff] %v93
  // Predicated region
  $region14: #{resnet_forward.21} parent=0 // pred_check
    _
  $region15: #{resnet_forward.21} parent=0 // pred_check_branch
    %98 = sbr.rel (0) target = $region17
  $region16: #{resnet_forward.21} parent=0 // pred_region
    _
  $region17: #{resnet_forward.21} parent=0 // pred_fallthru
    _
  // Predicated region
  $region18: #{resnet_forward.21} parent=0 // pred_check
    _
  $region19: #{resnet_forward.21} parent=0 // pred_check_branch
    %100 = sbr.rel (0) target = $region21
  $region20: #{resnet_forward.21} parent=0 // pred_region
    _
  $region21: #{resnet_forward.21} parent=0 // pred_fallthru
    _

// kernel: resnet_forward.22
$region0: #{resnet_forward.22}
  #allocation0 [shape = 'u32[]', space=smem, size = 0x4, offset = 0x4, fixed_abs, tag = 'smem constant byte address 0x4 - core index']
  #allocation1 [shape = 'u32[72,128]{1,0:T(1,128)}', space=vmem, size = 0x9000, scoped, tag = 'internal scratch']
  %s0 = inlined_call_operand.vmem [shape: bf16[8,128], index: 0, kind: input, shape index: {}]
  %s1 = inlined_call_operand.vmem [shape: bf16[128,128], index: 1, kind: input, shape index: {}]
  %s2 = inlined_call_operand.vmem [shape: f32[1,128], index: 2, kind: input, shape index: {}]
  %s3 = inlined_call_operand.vmem [shape: f32[8,128], index: 3, kind: input, shape index: {}]
  %s4 = inlined_call_operand.vmem [shape: f32[8,128], index: 4, kind: output, shape index: {}]
  %s5 = sld [smem:[#allocation0]]
  $region26: #{resnet_forward.22} parent=0
    _
  %s7 = ssub.s32 1, %s5
  %s8 = scalar_select 0, %s7, %s5
  // Predicated region
  $region2: #{resnet_forward.22} parent=0 // pred_check
    _
  $region3: #{resnet_forward.22} parent=0 // pred_check_branch
    %10 = sbr.rel (0) target = $region5
  $region4: #{resnet_forward.22} parent=0 // pred_region
    _
  $region5: #{resnet_forward.22} parent=0 // pred_fallthru
    _
  // Predicated region
  $region6: #{resnet_forward.22} parent=0 // pred_check
    _
  $region7: #{resnet_forward.22} parent=0 // pred_check_branch
    %12 = sbr.rel (0) target = $region9
  $region8: #{resnet_forward.22} parent=0 // pred_region
    _
  $region9: #{resnet_forward.22} parent=0 // pred_fallthru
    _
  // Predicated region
  $region10: #{resnet_forward.22} parent=0 // pred_check
    _
  $region11: #{resnet_forward.22} parent=0 // pred_check_branch
    %14 = sbr.rel (0) target = $region13
  $region12: #{resnet_forward.22} parent=0 // pred_region
    _
  $region13: #{resnet_forward.22} parent=0 // pred_fallthru
    _
  // Predicated region
  $region14: #{resnet_forward.22} parent=0 // pred_check
    _
  $region15: #{resnet_forward.22} parent=0 // pred_check_branch
    %16 = sbr.rel (0) target = $region17
  $region16: #{resnet_forward.22} parent=0 // pred_region
    _
  $region17: #{resnet_forward.22} parent=0 // pred_fallthru
    _
  %v17 = vld [vmem:[%s0] sm:$0xf]
  %v18 = vld [vmem:[%s1] sm:$0xf]
  %v19 = vld [vmem:[%s1 + $0x4] sm:$0xf]
  %v20 = vld [vmem:[%s1 + $0x8] sm:$0xf]
  %v21 = vld [vmem:[%s1 + $0xc] sm:$0xf]
  %v22 = vld [vmem:[%s1 + $0x10] sm:$0xf]
  %v23 = vld [vmem:[%s1 + $0x14] sm:$0xf]
  %v24 = vld [vmem:[%s1 + $0x18] sm:$0xf]
  %v25 = vld [vmem:[%s1 + $0x1c] sm:$0xf]
  %v26 = vld [vmem:[%s1 + $0x20] sm:$0xf]
  %v27 = vld [vmem:[%s1 + $0x24] sm:$0xf]
  %v28 = vld [vmem:[%s1 + $0x28] sm:$0xf]
  %v29 = vld [vmem:[%s1 + $0x2c] sm:$0xf]
  %v30 = vld [vmem:[%s1 + $0x30] sm:$0xf]
  %v31 = vld [vmem:[%s1 + $0x34] sm:$0xf]
  %v32 = vld [vmem:[%s1 + $0x38] sm:$0xf]
  %v33 = vld [vmem:[%s1 + $0x3c] sm:$0xf]
  %v34 = vld [vmem:[%s2] sm:$0x1]
  %v36 = vperm.slane %v34, 0
  %v54 = vunpack.c.l.b16 %v18
  %v55 = vunpack.c.l.b16 %v19
  %v56 = vunpack.c.l.b16 %v20
  %v57 = vunpack.c.l.b16 %v21
  %v58 = vunpack.c.l.b16 %v22
  %v59 = vunpack.c.l.b16 %v23
  %v60 = vunpack.c.l.b16 %v24
  %v61 = vunpack.c.l.b16 %v25
  %v62 = vunpack.c.l.b16 %v26
  %v63 = vunpack.c.l.b16 %v27
  %v64 = vunpack.c.l.b16 %v28
  %v65 = vunpack.c.l.b16 %v29
  %v66 = vunpack.c.l.b16 %v30
  %v67 = vunpack.c.l.b16 %v31
  %v68 = vunpack.c.l.b16 %v32
  %v69 = vunpack.c.l.b16 %v33
  %v70 = vpack.c.b16 %v55, %v54
  %v71 = vpack.c.b16 %v57, %v56
  %v72 = vpack.c.b16 %v59, %v58
  %v73 = vpack.c.b16 %v61, %v60
  %v74 = vpack.c.b16 %v63, %v62
  %v75 = vpack.c.b16 %v65, %v64
  %v76 = vpack.c.b16 %v67, %v66
  %v77 = vpack.c.b16 %v69, %v68
  %86 = vmatpush.bf16.msra.mxu0 %v77
  %87 = vmatpush.bf16.msra.mxu0 %v76
  %88 = vmatpush.bf16.msra.mxu0 %v75
  %89 = vmatpush.bf16.msra.mxu0 %v74
  %90 = vmatpush.bf16.msra.mxu0 %v73
  %91 = vmatpush.bf16.msra.mxu0 %v72
  %92 = vmatpush.bf16.msra.mxu0 %v71
  %93 = vmatpush.bf16.msra.mxu0 %v70
  %94 = vmatmul.bf16.gmra.mxu0 %v17
  %v95 = vpop.f32.mrf.mxu0
  %v96 = vadd.f32 %v36, %v95
  %v97 = vpop.f32.mrf.mxu0
  %98 = vdwg.mxu0
  %v99 = vld [vmem:[%s3] sm:$0xff]
  %v100 = vadd.f32 %v96, %v99
  %v101 = vmax.f32 %v100, 0.0
  %102 = vst [vmem:[%s4] sm:$0xff] %v101
  // Predicated region
  $region18: #{resnet_forward.22} parent=0 // pred_check
    _
  $region19: #{resnet_forward.22} parent=0 // pred_check_branch
    %104 = sbr.rel (0) target = $region21
  $region20: #{resnet_forward.22} parent=0 // pred_region
    _
  $region21: #{resnet_forward.22} parent=0 // pred_fallthru
    _
  // Predicated region
  $region22: #{resnet_forward.22} parent=0 // pred_check
    _
  $region23: #{resnet_forward.22} parent=0 // pred_check_branch
    %106 = sbr.rel (0) target = $region25
  $region24: #{resnet_forward.22} parent=0 // pred_region
    _
  $region25: #{resnet_forward.22} parent=0 // pred_fallthru
    _

// kernel: resnet_forward.19
$region0: #{resnet_forward.19}
  #allocation0 [shape = 'u32[]', space=smem, size = 0x4, offset = 0x4, fixed_abs, tag = 'smem constant byte address 0x4 - core index']
  #allocation1 [shape = 'u32[72,128]{1,0:T(1,128)}', space=vmem, size = 0x9000, scoped, tag = 'internal scratch']
  %s0 = inlined_call_operand.vmem [shape: bf16[16,1792], index: 0, kind: input, shape index: {}]
  %s1 = inlined_call_operand.vmem [shape: bf16[1792,128], index: 1, kind: input, shape index: {}]
  %s2 = inlined_call_operand.vmem [shape: f32[1,128], index: 2, kind: input, shape index: {}]
  %s3 = inlined_call_operand.vmem [shape: f32[16,128], index: 3, kind: input, shape index: {}]
  %s4 = inlined_call_operand.vmem [shape: f32[16,128], index: 4, kind: output, shape index: {}]
  %s5 = sld [smem:[#allocation0]]
  $region26: #{resnet_forward.19} parent=0
    _
  %s7 = ssub.s32 1, %s5
  %s8 = scalar_select 0, %s7, %s5
  // Predicated region
  $region2: #{resnet_forward.19} parent=0 // pred_check
    _
  $region3: #{resnet_forward.19} parent=0 // pred_check_branch
    %10 = sbr.rel (0) target = $region5
  $region4: #{resnet_forward.19} parent=0 // pred_region
    _
  $region5: #{resnet_forward.19} parent=0 // pred_fallthru
    _
  // Predicated region
  $region6: #{resnet_forward.19} parent=0 // pred_check
    _
  $region7: #{resnet_forward.19} parent=0 // pred_check_branch
    %12 = sbr.rel (0) target = $region9
  $region8: #{resnet_forward.19} parent=0 // pred_region
    _
  $region9: #{resnet_forward.19} parent=0 // pred_fallthru
    _
  // Predicated region
  $region10: #{resnet_forward.19} parent=0 // pred_check
    _
  $region11: #{resnet_forward.19} parent=0 // pred_check_branch
    %14 = sbr.rel (0) target = $region13
  $region12: #{resnet_forward.19} parent=0 // pred_region
    _
  $region13: #{resnet_forward.19} parent=0 // pred_fallthru
    _
  // Predicated region
  $region14: #{resnet_forward.19} parent=0 // pred_check
    _
  $region15: #{resnet_forward.19} parent=0 // pred_check_branch
    %16 = sbr.rel (0) target = $region17
  $region16: #{resnet_forward.19} parent=0 // pred_region
    _
  $region17: #{resnet_forward.19} parent=0 // pred_fallthru
    _
  %v17 = vld [vmem:[%s0] sm:$0xff]
  %v18 = vld [vmem:[%s0 + $0x8] sm:$0xff]
  %v19 = vld [vmem:[%s0 + $0x10] sm:$0xff]
  %v20 = vld [vmem:[%s0 + $0x18] sm:$0xff]
  %v21 = vld [vmem:[%s0 + $0x20] sm:$0xff]
  %v22 = vld [vmem:[%s0 + $0x28] sm:$0xff]
  %v23 = vld [vmem:[%s0 + $0x30] sm:$0xff]
  %v24 = vld [vmem:[%s0 + $0x38] sm:$0xff]
  %v25 = vld [vmem:[%s0 + $0x40] sm:$0xff]
  %v26 = vld [vmem:[%s0 + $0x48] sm:$0xff]
  %v27 = vld [vmem:[%s0 + $0x50] sm:$0xff]
  %v28 = vld [vmem:[%s0 + $0x58] sm:$0xff]
  %v29 = vld [vmem:[%s0 + $0x60] sm:$0xff]
  %v30 = vld [vmem:[%s0 + $0x68] sm:$0xff]
  %v31 = vld [vmem:[%s1] sm:$0xf]
  %v32 = vld [vmem:[%s1 + $0x4] sm:$0xf]
  %v33 = vld [vmem:[%s1 + $0x8] sm:$0xf]
  %v34 = vld [vmem:[%s1 + $0xc] sm:$0xf]
  %v35 = vld [vmem:[%s1 + $0x10] sm:$0xf]
  %v36 = vld [vmem:[%s1 + $0x14] sm:$0xf]
  %v37 = vld [vmem:[%s1 + $0x18] sm:$0xf]
  %v38 = vld [vmem:[%s1 + $0x1c] sm:$0xf]
  %v39 = vld [vmem:[%s1 + $0x20] sm:$0xf]
  %v40 = vld [vmem:[%s1 + $0x24] sm:$0xf]
  %v41 = vld [vmem:[%s1 + $0x28] sm:$0xf]
  %v42 = vld [vmem:[%s1 + $0x2c] sm:$0xf]
  %v43 = vld [vmem:[%s1 + $0x30] sm:$0xf]
  %v44 = vld [vmem:[%s1 + $0x34] sm:$0xf]
  %v45 = vld [vmem:[%s1 + $0x38] sm:$0xf]
  %v46 = vld [vmem:[%s1 + $0x3c] sm:$0xf]
  %v47 = vld [vmem:[%s1 + $0x40] sm:$0xf]
  %v48 = vld [vmem:[%s1 + $0x44] sm:$0xf]
  %v49 = vld [vmem:[%s1 + $0x48] sm:$0xf]
  %v50 = vld [vmem:[%s1 + $0x4c] sm:$0xf]
  %v51 = vld [vmem:[%s1 + $0x50] sm:$0xf]
  %v52 = vld [vmem:[%s1 + $0x54] sm:$0xf]
  %v53 = vld [vmem:[%s1 + $0x58] sm:$0xf]
  %v54 = vld [vmem:[%s1 + $0x5c] sm:$0xf]
  %v55 = vld [vmem:[%s1 + $0x60] sm:$0xf]
  %v56 = vld [vmem:[%s1 + $0x64] sm:$0xf]
  %v57 = vld [vmem:[%s1 + $0x68] sm:$0xf]
  %v58 = vld [vmem:[%s1 + $0x6c] sm:$0xf]
  %v59 = vld [vmem:[%s1 + $0x70] sm:$0xf]
  %v60 = vld [vmem:[%s1 + $0x74] sm:$0xf]
  %v61 = vld [vmem:[%s1 + $0x78] sm:$0xf]
  %v62 = vld [vmem:[%s1 + $0x7c] sm:$0xf]
  %v63 = vld [vmem:[%s1 + $0x80] sm:$0xf]
  %v64 = vld [vmem:[%s1 + $0x84] sm:$0xf]
  %v65 = vld [vmem:[%s1 + $0x88] sm:$0xf]
  %v66 = vld [vmem:[%s1 + $0x8c] sm:$0xf]
  %v67 = vld [vmem:[%s1 + $0x90] sm:$0xf]
  %v68 = vld [vmem:[%s1 + $0x94] sm:$0xf]
  %v69 = vld [vmem:[%s1 + $0x98] sm:$0xf]
  %v70 = vld [vmem:[%s1 + $0x9c] sm:$0xf]
  %v71 = vld [vmem:[%s1 + $0xa0] sm:$0xf]
  %v72 = vld [vmem:[%s1 + $0xa4] sm:$0xf]
  %v73 = vld [vmem:[%s1 + $0xa8] sm:$0xf]
  %v74 = vld [vmem:[%s1 + $0xac] sm:$0xf]
  %v75 = vld [vmem:[%s1 + $0xb0] sm:$0xf]
  %v76 = vld [vmem:[%s1 + $0xb4] sm:$0xf]
  %v77 = vld [vmem:[%s1 + $0xb8] sm:$0xf]
  %v78 = vld [vmem:[%s1 + $0xbc] sm:$0xf]
  %v79 = vld [vmem:[%s1 + $0xc0] sm:$0xf]
  %v80 = vld [vmem:[%s1 + $0xc4] sm:$0xf]
  %v81 = vld [vmem:[%s1 + $0xc8] sm:$0xf]
  %v82 = vld [vmem:[%s1 + $0xcc] sm:$0xf]
  %v83 = vld [vmem:[%s1 + $0xd0] sm:$0xf]
  %v84 = vld [vmem:[%s1 + $0xd4] sm:$0xf]
  %v85 = vld [vmem:[%s1 + $0xd8] sm:$0xf]
  %v86 = vld [vmem:[%s1 + $0xdc] sm:$0xf]
  %v87 = vld [vmem:[%s1 + $0xe0] sm:$0xf]
  %v88 = vld [vmem:[%s1 + $0xe4] sm:$0xf]
  %v89 = vld [vmem:[%s1 + $0xe8] sm:$0xf]
  %v90 = vld [vmem:[%s1 + $0xec] sm:$0xf]
  %v91 = vld [vmem:[%s1 + $0xf0] sm:$0xf]
  %v92 = vld [vmem:[%s1 + $0xf4] sm:$0xf]
  %v93 = vld [vmem:[%s1 + $0xf8] sm:$0xf]
  %v94 = vld [vmem:[%s1 + $0xfc] sm:$0xf]
  %v95 = vld [vmem:[%s1 + $0x100] sm:$0xf]
  %v96 = vld [vmem:[%s1 + $0x104] sm:$0xf]
  %v97 = vld [vmem:[%s1 + $0x108] sm:$0xf]
  %v98 = vld [vmem:[%s1 + $0x10c] sm:$0xf]
  %v99 = vld [vmem:[%s1 + $0x110] sm:$0xf]
  %v100 = vld [vmem:[%s1 + $0x114] sm:$0xf]
  %v101 = vld [vmem:[%s1 + $0x118] sm:$0xf]
  %v102 = vld [vmem:[%s1 + $0x11c] sm:$0xf]
  %v103 = vld [vmem:[%s1 + $0x120] sm:$0xf]
  %v104 = vld [vmem:[%s1 + $0x124] sm:$0xf]
  %v105 = vld [vmem:[%s1 + $0x128] sm:$0xf]
  %v106 = vld [vmem:[%s1 + $0x12c] sm:$0xf]
  %v107 = vld [vmem:[%s1 + $0x130] sm:$0xf]
  %v108 = vld [vmem:[%s1 + $0x134] sm:$0xf]
  %v109 = vld [vmem:[%s1 + $0x138] sm:$0xf]
  %v110 = vld [vmem:[%s1 + $0x13c] sm:$0xf]
  %v111 = vld [vmem:[%s1 + $0x140] sm:$0xf]
  %v112 = vld [vmem:[%s1 + $0x144] sm:$0xf]
  %v113 = vld [vmem:[%s1 + $0x148] sm:$0xf]
  %v114 = vld [vmem:[%s1 + $0x14c] sm:$0xf]
  %v115 = vld [vmem:[%s1 + $0x150] sm:$0xf]
  %v116 = vld [vmem:[%s1 + $0x154] sm:$0xf]
  %v117 = vld [vmem:[%s1 + $0x158] sm:$0xf]
  %v118 = vld [vmem:[%s1 + $0x15c] sm:$0xf]
  %v119 = vld [vmem:[%s1 + $0x160] sm:$0xf]
  %v120 = vld [vmem:[%s1 + $0x164] sm:$0xf]
  %v121 = vld [vmem:[%s1 + $0x168] sm:$0xf]
  %v122 = vld [vmem:[%s1 + $0x16c] sm:$0xf]
  %v123 = vld [vmem:[%s1 + $0x170] sm:$0xf]
  %v124 = vld [vmem:[%s1 + $0x174] sm:$0xf]
  %v125 = vld [vmem:[%s1 + $0x178] sm:$0xf]
  %v126 = vld [vmem:[%s1 + $0x17c] sm:$0xf]
  %v127 = vld [vmem:[%s1 + $0x180] sm:$0xf]
  %v128 = vld [vmem:[%s1 + $0x184] sm:$0xf]
  %v129 = vld [vmem:[%s1 + $0x188] sm:$0xf]
  %v130 = vld [vmem:[%s1 + $0x18c] sm:$0xf]
  %v131 = vld [vmem:[%s1 + $0x190] sm:$0xf]
  %v132 = vld [vmem:[%s1 + $0x194] sm:$0xf]
  %v133 = vld [vmem:[%s1 + $0x198] sm:$0xf]
  %v134 = vld [vmem:[%s1 + $0x19c] sm:$0xf]
  %v135 = vld [vmem:[%s1 + $0x1a0] sm:$0xf]
  %v136 = vld [vmem:[%s1 + $0x1a4] sm:$0xf]
  %v137 = vld [vmem:[%s1 + $0x1a8] sm:$0xf]
  %v138 = vld [vmem:[%s1 + $0x1ac] sm:$0xf]
  %v139 = vld [vmem:[%s1 + $0x1b0] sm:$0xf]
  %v140 = vld [vmem:[%s1 + $0x1b4] sm:$0xf]
  %v141 = vld [vmem:[%s1 + $0x1b8] sm:$0xf]
  %v142 = vld [vmem:[%s1 + $0x1bc] sm:$0xf]
  %v143 = vld [vmem:[%s1 + $0x1c0] sm:$0xf]
  %v144 = vld [vmem:[%s1 + $0x1c4] sm:$0xf]
  %v145 = vld [vmem:[%s1 + $0x1c8] sm:$0xf]
  %v146 = vld [vmem:[%s1 + $0x1cc] sm:$0xf]
  %v147 = vld [vmem:[%s1 + $0x1d0] sm:$0xf]
  %v148 = vld [vmem:[%s1 + $0x1d4] sm:$0xf]
  %v149 = vld [vmem:[%s1 + $0x1d8] sm:$0xf]
  %v150 = vld [vmem:[%s1 + $0x1dc] sm:$0xf]
  %v151 = vld [vmem:[%s1 + $0x1e0] sm:$0xf]
  %v152 = vld [vmem:[%s1 + $0x1e4] sm:$0xf]
  %v153 = vld [vmem:[%s1 + $0x1e8] sm:$0xf]
  %v154 = vld [vmem:[%s1 + $0x1ec] sm:$0xf]
  %v155 = vld [vmem:[%s1 + $0x1f0] sm:$0xf]
  %v156 = vld [vmem:[%s1 + $0x1f4] sm:$0xf]
  %v157 = vld [vmem:[%s1 + $0x1f8] sm:$0xf]
  %v158 = vld [vmem:[%s1 + $0x1fc] sm:$0xf]
  %v159 = vld [vmem:[%s1 + $0x200] sm:$0xf]
  %v160 = vld [vmem:[%s1 + $0x204] sm:$0xf]
  %v161 = vld [vmem:[%s1 + $0x208] sm:$0xf]
  %v162 = vld [vmem:[%s1 + $0x20c] sm:$0xf]
  %v163 = vld [vmem:[%s1 + $0x210] sm:$0xf]
  %v164 = vld [vmem:[%s1 + $0x214] sm:$0xf]
  %v165 = vld [vmem:[%s1 + $0x218] sm:$0xf]
  %v166 = vld [vmem:[%s1 + $0x21c] sm:$0xf]
  %v167 = vld [vmem:[%s1 + $0x220] sm:$0xf]
  %v168 = vld [vmem:[%s1 + $0x224] sm:$0xf]
  %v169 = vld [vmem:[%s1 + $0x228] sm:$0xf]
  %v170 = vld [vmem:[%s1 + $0x22c] sm:$0xf]
  %v171 = vld [vmem:[%s1 + $0x230] sm:$0xf]
  %v172 = vld [vmem:[%s1 + $0x234] sm:$0xf]
  %v173 = vld [vmem:[%s1 + $0x238] sm:$0xf]
  %v174 = vld [vmem:[%s1 + $0x23c] sm:$0xf]
  %v175 = vld [vmem:[%s1 + $0x240] sm:$0xf]
  %v176 = vld [vmem:[%s1 + $0x244] sm:$0xf]
  %v177 = vld [vmem:[%s1 + $0x248] sm:$0xf]
  %v178 = vld [vmem:[%s1 + $0x24c] sm:$0xf]
  %v179 = vld [vmem:[%s1 + $0x250] sm:$0xf]
  %v180 = vld [vmem:[%s1 + $0x254] sm:$0xf]
  %v181 = vld [vmem:[%s1 + $0x258] sm:$0xf]
  %v182 = vld [vmem:[%s1 + $0x25c] sm:$0xf]
  %v183 = vld [vmem:[%s1 + $0x260] sm:$0xf]
  %v184 = vld [vmem:[%s1 + $0x264] sm:$0xf]
  %v185 = vld [vmem:[%s1 + $0x268] sm:$0xf]
  %v186 = vld [vmem:[%s1 + $0x26c] sm:$0xf]
  %v187 = vld [vmem:[%s1 + $0x270] sm:$0xf]
  %v188 = vld [vmem:[%s1 + $0x274] sm:$0xf]
  %v189 = vld [vmem:[%s1 + $0x278] sm:$0xf]
  %v190 = vld [vmem:[%s1 + $0x27c] sm:$0xf]
  %v191 = vld [vmem:[%s1 + $0x280] sm:$0xf]
  %v192 = vld [vmem:[%s1 + $0x284] sm:$0xf]
  %v193 = vld [vmem:[%s1 + $0x288] sm:$0xf]
  %v194 = vld [vmem:[%s1 + $0x28c] sm:$0xf]
  %v195 = vld [vmem:[%s1 + $0x290] sm:$0xf]
  %v196 = vld [vmem:[%s1 + $0x294] sm:$0xf]
  %v197 = vld [vmem:[%s1 + $0x298] sm:$0xf]
  %v198 = vld [vmem:[%s1 + $0x29c] sm:$0xf]
  %v199 = vld [vmem:[%s1 + $0x2a0] sm:$0xf]
  %v200 = vld [vmem:[%s1 + $0x2a4] sm:$0xf]
  %v201 = vld [vmem:[%s1 + $0x2a8] sm:$0xf]
  %v202 = vld [vmem:[%s1 + $0x2ac] sm:$0xf]
  %v203 = vld [vmem:[%s1 + $0x2b0] sm:$0xf]
  %v204 = vld [vmem:[%s1 + $0x2b4] sm:$0xf]
  %v205 = vld [vmem:[%s1 + $0x2b8] sm:$0xf]
  %v206 = vld [vmem:[%s1 + $0x2bc] sm:$0xf]
  %v207 = vld [vmem:[%s1 + $0x2c0] sm:$0xf]
  %v208 = vld [vmem:[%s1 + $0x2c4] sm:$0xf]
  %v209 = vld [vmem:[%s1 + $0x2c8] sm:$0xf]
  %v210 = vld [vmem:[%s1 + $0x2cc] sm:$0xf]
  %v211 = vld [vmem:[%s1 + $0x2d0] sm:$0xf]
  %v212 = vld [vmem:[%s1 + $0x2d4] sm:$0xf]
  %v213 = vld [vmem:[%s1 + $0x2d8] sm:$0xf]
  %v214 = vld [vmem:[%s1 + $0x2dc] sm:$0xf]
  %v215 = vld [vmem:[%s1 + $0x2e0] sm:$0xf]
  %v216 = vld [vmem:[%s1 + $0x2e4] sm:$0xf]
  %v217 = vld [vmem:[%s1 + $0x2e8] sm:$0xf]
  %v218 = vld [vmem:[%s1 + $0x2ec] sm:$0xf]
  %v219 = vld [vmem:[%s1 + $0x2f0] sm:$0xf]
  %v220 = vld [vmem:[%s1 + $0x2f4] sm:$0xf]
  %v221 = vld [vmem:[%s1 + $0x2f8] sm:$0xf]
  %v222 = vld [vmem:[%s1 + $0x2fc] sm:$0xf]
  %v223 = vld [vmem:[%s1 + $0x300] sm:$0xf]
  %v224 = vld [vmem:[%s1 + $0x304] sm:$0xf]
  %v225 = vld [vmem:[%s1 + $0x308] sm:$0xf]
  %v226 = vld [vmem:[%s1 + $0x30c] sm:$0xf]
  %v227 = vld [vmem:[%s1 + $0x310] sm:$0xf]
  %v228 = vld [vmem:[%s1 + $0x314] sm:$0xf]
  %v229 = vld [vmem:[%s1 + $0x318] sm:$0xf]
  %v230 = vld [vmem:[%s1 + $0x31c] sm:$0xf]
  %v231 = vld [vmem:[%s1 + $0x320] sm:$0xf]
  %v232 = vld [vmem:[%s1 + $0x324] sm:$0xf]
  %v233 = vld [vmem:[%s1 + $0x328] sm:$0xf]
  %v234 = vld [vmem:[%s1 + $0x32c] sm:$0xf]
  %v235 = vld [vmem:[%s1 + $0x330] sm:$0xf]
  %v236 = vld [vmem:[%s1 + $0x334] sm:$0xf]
  %v237 = vld [vmem:[%s1 + $0x338] sm:$0xf]
  %v238 = vld [vmem:[%s1 + $0x33c] sm:$0xf]
  %v239 = vld [vmem:[%s1 + $0x340] sm:$0xf]
  %v240 = vld [vmem:[%s1 + $0x344] sm:$0xf]
  %v241 = vld [vmem:[%s1 + $0x348] sm:$0xf]
  %v242 = vld [vmem:[%s1 + $0x34c] sm:$0xf]
  %v243 = vld [vmem:[%s1 + $0x350] sm:$0xf]
  %v244 = vld [vmem:[%s1 + $0x354] sm:$0xf]
  %v245 = vld [vmem:[%s1 + $0x358] sm:$0xf]
  %v246 = vld [vmem:[%s1 + $0x35c] sm:$0xf]
  %v247 = vld [vmem:[%s1 + $0x360] sm:$0xf]
  %v248 = vld [vmem:[%s1 + $0x364] sm:$0xf]
  %v249 = vld [vmem:[%s1 + $0x368] sm:$0xf]
  %v250 = vld [vmem:[%s1 + $0x36c] sm:$0xf]
  %v251 = vld [vmem:[%s1 + $0x370] sm:$0xf]
  %v252 = vld [vmem:[%s1 + $0x374] sm:$0xf]
  %v253 = vld [vmem:[%s1 + $0x378] sm:$0xf]
  %v254 = vld [vmem:[%s1 + $0x37c] sm:$0xf]
  %v255 = vld [vmem:[%s2] sm:$0x1]
  %v257 = vperm.slane %v255, 0
  %v273 = vunpack.c.l.b16 %v17
  %v274 = vunpack.c.h.b16 %v17
  %v275 = vunpack.c.l.b16 %v18
  %v276 = vunpack.c.h.b16 %v18
  %v277 = vunpack.c.l.b16 %v19
  %v278 = vunpack.c.h.b16 %v19
  %v279 = vunpack.c.l.b16 %v20
  %v280 = vunpack.c.h.b16 %v20
  %v281 = vunpack.c.l.b16 %v21
  %v282 = vunpack.c.h.b16 %v21
  %v283 = vunpack.c.l.b16 %v22
  %v284 = vunpack.c.h.b16 %v22
  %v285 = vunpack.c.l.b16 %v23
  %v286 = vunpack.c.h.b16 %v23
  %v287 = vunpack.c.l.b16 %v24
  %v288 = vunpack.c.h.b16 %v24
  %v289 = vunpack.c.l.b16 %v25
  %v290 = vunpack.c.h.b16 %v25
  %v291 = vunpack.c.l.b16 %v26
  %v292 = vunpack.c.h.b16 %v26
  %v293 = vunpack.c.l.b16 %v27
  %v294 = vunpack.c.h.b16 %v27
  %v295 = vunpack.c.l.b16 %v28
  %v296 = vunpack.c.h.b16 %v28
  %v297 = vunpack.c.l.b16 %v29
  %v298 = vunpack.c.h.b16 %v29
  %v299 = vunpack.c.l.b16 %v30
  %v300 = vunpack.c.h.b16 %v30
  %v301 = vpack.c.b16 %v287, %v273
  %v302 = vpack.c.b16 %v288, %v274
  %v303 = vpack.c.b16 %v289, %v275
  %v304 = vpack.c.b16 %v290, %v276
  %v305 = vpack.c.b16 %v291, %v277
  %v306 = vpack.c.b16 %v292, %v278
  %v307 = vpack.c.b16 %v293, %v279
  %v308 = vpack.c.b16 %v294, %v280
  %v309 = vpack.c.b16 %v295, %v281
  %v310 = vpack.c.b16 %v296, %v282
  %v311 = vpack.c.b16 %v297, %v283
  %v312 = vpack.c.b16 %v298, %v284
  %v313 = vpack.c.b16 %v299, %v285
  %v314 = vpack.c.b16 %v300, %v286
  %v553 = vunpack.c.l.b16 %v31
  %v554 = vunpack.c.l.b16 %v32
  %v555 = vunpack.c.l.b16 %v33
  %v556 = vunpack.c.l.b16 %v34
  %v557 = vunpack.c.l.b16 %v35
  %v558 = vunpack.c.l.b16 %v36
  %v559 = vunpack.c.l.b16 %v37
  %v560 = vunpack.c.l.b16 %v38
  %v561 = vunpack.c.l.b16 %v39
  %v562 = vunpack.c.l.b16 %v40
  %v563 = vunpack.c.l.b16 %v41
  %v564 = vunpack.c.l.b16 %v42
  %v565 = vunpack.c.l.b16 %v43
  %v566 = vunpack.c.l.b16 %v44
  %v567 = vunpack.c.l.b16 %v45
  %v568 = vunpack.c.l.b16 %v46
  %v569 = vunpack.c.l.b16 %v47
  %v570 = vunpack.c.l.b16 %v48
  %v571 = vunpack.c.l.b16 %v49
  %v572 = vunpack.c.l.b16 %v50
  %v573 = vunpack.c.l.b16 %v51
  %v574 = vunpack.c.l.b16 %v52
  %v575 = vunpack.c.l.b16 %v53
  %v576 = vunpack.c.l.b16 %v54
  %v577 = vunpack.c.l.b16 %v55
  %v578 = vunpack.c.l.b16 %v56
  %v579 = vunpack.c.l.b16 %v57
  %v580 = vunpack.c.l.b16 %v58
  %v581 = vunpack.c.l.b16 %v59
  %v582 = vunpack.c.l.b16 %v60
  %v583 = vunpack.c.l.b16 %v61
  %v584 = vunpack.c.l.b16 %v62
  %v585 = vunpack.c.l.b16 %v63
  %v586 = vunpack.c.l.b16 %v64
  %v587 = vunpack.c.l.b16 %v65
  %v588 = vunpack.c.l.b16 %v66
  %v589 = vunpack.c.l.b16 %v67
  %v590 = vunpack.c.l.b16 %v68
  %v591 = vunpack.c.l.b16 %v69
  %v592 = vunpack.c.l.b16 %v70
  %v593 = vunpack.c.l.b16 %v71
  %v594 = vunpack.c.l.b16 %v72
  %v595 = vunpack.c.l.b16 %v73
  %v596 = vunpack.c.l.b16 %v74
  %v597 = vunpack.c.l.b16 %v75
  %v598 = vunpack.c.l.b16 %v76
  %v599 = vunpack.c.l.b16 %v77
  %v600 = vunpack.c.l.b16 %v78
  %v601 = vunpack.c.l.b16 %v79
  %v602 = vunpack.c.l.b16 %v80
  %v603 = vunpack.c.l.b16 %v81
  %v604 = vunpack.c.l.b16 %v82
  %v605 = vunpack.c.l.b16 %v83
  %v606 = vunpack.c.l.b16 %v84
  %v607 = vunpack.c.l.b16 %v85
  %v608 = vunpack.c.l.b16 %v86
  %v609 = vunpack.c.l.b16 %v87
  %v610 = vunpack.c.l.b16 %v88
  %v611 = vunpack.c.l.b16 %v89
  %v612 = vunpack.c.l.b16 %v90
  %v613 = vunpack.c.l.b16 %v91
  %v614 = vunpack.c.l.b16 %v92
  %v615 = vunpack.c.l.b16 %v93
  %v616 = vunpack.c.l.b16 %v94
  %v617 = vunpack.c.l.b16 %v95
  %v618 = vunpack.c.l.b16 %v96
  %v619 = vunpack.c.l.b16 %v97
  %v620 = vunpack.c.l.b16 %v98
  %v621 = vunpack.c.l.b16 %v99
  %v622 = vunpack.c.l.b16 %v100
  %v623 = vunpack.c.l.b16 %v101
  %v624 = vunpack.c.l.b16 %v102
  %v625 = vunpack.c.l.b16 %v103
  %v626 = vunpack.c.l.b16 %v104
  %v627 = vunpack.c.l.b16 %v105
  %v628 = vunpack.c.l.b16 %v106
  %v629 = vunpack.c.l.b16 %v107
  %v630 = vunpack.c.l.b16 %v108
  %v631 = vunpack.c.l.b16 %v109
  %v632 = vunpack.c.l.b16 %v110
  %v633 = vunpack.c.l.b16 %v111
  %v634 = vunpack.c.l.b16 %v112
  %v635 = vunpack.c.l.b16 %v113
  %v636 = vunpack.c.l.b16 %v114
  %v637 = vunpack.c.l.b16 %v115
  %v638 = vunpack.c.l.b16 %v116
  %v639 = vunpack.c.l.b16 %v117
  %v640 = vunpack.c.l.b16 %v118
  %v641 = vunpack.c.l.b16 %v119
  %v642 = vunpack.c.l.b16 %v120
  %v643 = vunpack.c.l.b16 %v121
  %v644 = vunpack.c.l.b16 %v122
  %v645 = vunpack.c.l.b16 %v123
  %v646 = vunpack.c.l.b16 %v124
  %v647 = vunpack.c.l.b16 %v125
  %v648 = vunpack.c.l.b16 %v126
  %v649 = vunpack.c.l.b16 %v127
  %v650 = vunpack.c.l.b16 %v128
  %v651 = vunpack.c.l.b16 %v129
  %v652 = vunpack.c.l.b16 %v130
  %v653 = vunpack.c.l.b16 %v131
  %v654 = vunpack.c.l.b16 %v132
  %v655 = vunpack.c.l.b16 %v133
  %v656 = vunpack.c.l.b16 %v134
  %v657 = vunpack.c.l.b16 %v135
  %v658 = vunpack.c.l.b16 %v136
  %v659 = vunpack.c.l.b16 %v137
  %v660 = vunpack.c.l.b16 %v138
  %v661 = vunpack.c.l.b16 %v139
  %v662 = vunpack.c.l.b16 %v140
  %v663 = vunpack.c.l.b16 %v141
  %v664 = vunpack.c.l.b16 %v142
  %v665 = vunpack.c.l.b16 %v143
  %v666 = vunpack.c.l.b16 %v144
  %v667 = vunpack.c.l.b16 %v145
  %v668 = vunpack.c.l.b16 %v146
  %v669 = vunpack.c.l.b16 %v147
  %v670 = vunpack.c.l.b16 %v148
  %v671 = vunpack.c.l.b16 %v149
  %v672 = vunpack.c.l.b16 %v150
  %v673 = vunpack.c.l.b16 %v151
  %v674 = vunpack.c.l.b16 %v152
  %v675 = vunpack.c.l.b16 %v153
  %v676 = vunpack.c.l.b16 %v154
  %v677 = vunpack.c.l.b16 %v155
  %v678 = vunpack.c.l.b16 %v156
  %v679 = vunpack.c.l.b16 %v157
  %v680 = vunpack.c.l.b16 %v158
  %v681 = vunpack.c.l.b16 %v159
  %v682 = vunpack.c.l.b16 %v160
  %v683 = vunpack.c.l.b16 %v161
  %v684 = vunpack.c.l.b16 %v162
  %v685 = vunpack.c.l.b16 %v163
  %v686 = vunpack.c.l.b16 %v164
  %v687 = vunpack.c.l.b16 %v165
  %v688 = vunpack.c.l.b16 %v166
  %v689 = vunpack.c.l.b16 %v167
  %v690 = vunpack.c.l.b16 %v168
  %v691 = vunpack.c.l.b16 %v169
  %v692 = vunpack.c.l.b16 %v170
  %v693 = vunpack.c.l.b16 %v171
  %v694 = vunpack.c.l.b16 %v172
  %v695 = vunpack.c.l.b16 %v173
  %v696 = vunpack.c.l.b16 %v174
  %v697 = vunpack.c.l.b16 %v175
  %v698 = vunpack.c.l.b16 %v176
  %v699 = vunpack.c.l.b16 %v177
  %v700 = vunpack.c.l.b16 %v178
  %v701 = vunpack.c.l.b16 %v179
  %v702 = vunpack.c.l.b16 %v180
  %v703 = vunpack.c.l.b16 %v181
  %v704 = vunpack.c.l.b16 %v182
  %v705 = vunpack.c.l.b16 %v183
  %v706 = vunpack.c.l.b16 %v184
  %v707 = vunpack.c.l.b16 %v185
  %v708 = vunpack.c.l.b16 %v186
  %v709 = vunpack.c.l.b16 %v187
  %v710 = vunpack.c.l.b16 %v188
  %v711 = vunpack.c.l.b16 %v189
  %v712 = vunpack.c.l.b16 %v190
  %v713 = vunpack.c.l.b16 %v191
  %v714 = vunpack.c.l.b16 %v192
  %v715 = vunpack.c.l.b16 %v193
  %v716 = vunpack.c.l.b16 %v194
  %v717 = vunpack.c.l.b16 %v195
  %v718 = vunpack.c.l.b16 %v196
  %v719 = vunpack.c.l.b16 %v197
  %v720 = vunpack.c.l.b16 %v198
  %v721 = vunpack.c.l.b16 %v199
  %v722 = vunpack.c.l.b16 %v200
  %v723 = vunpack.c.l.b16 %v201
  %v724 = vunpack.c.l.b16 %v202
  %v725 = vunpack.c.l.b16 %v203
  %v726 = vunpack.c.l.b16 %v204
  %v727 = vunpack.c.l.b16 %v205
  %v728 = vunpack.c.l.b16 %v206
  %v729 = vunpack.c.l.b16 %v207
  %v730 = vunpack.c.l.b16 %v208
  %v731 = vunpack.c.l.b16 %v209
  %v732 = vunpack.c.l.b16 %v210
  %v733 = vunpack.c.l.b16 %v211
  %v734 = vunpack.c.l.b16 %v212
  %v735 = vunpack.c.l.b16 %v213
  %v736 = vunpack.c.l.b16 %v214
  %v737 = vunpack.c.l.b16 %v215
  %v738 = vunpack.c.l.b16 %v216
  %v739 = vunpack.c.l.b16 %v217
  %v740 = vunpack.c.l.b16 %v218
  %v741 = vunpack.c.l.b16 %v219
  %v742 = vunpack.c.l.b16 %v220
  %v743 = vunpack.c.l.b16 %v221
  %v744 = vunpack.c.l.b16 %v222
  %v745 = vunpack.c.l.b16 %v223
  %v746 = vunpack.c.l.b16 %v224
  %v747 = vunpack.c.l.b16 %v225
  %v748 = vunpack.c.l.b16 %v226
  %v749 = vunpack.c.l.b16 %v227
  %v750 = vunpack.c.l.b16 %v228
  %v751 = vunpack.c.l.b16 %v229
  %v752 = vunpack.c.l.b16 %v230
  %v753 = vunpack.c.l.b16 %v231
  %v754 = vunpack.c.l.b16 %v232
  %v755 = vunpack.c.l.b16 %v233
  %v756 = vunpack.c.l.b16 %v234
  %v757 = vunpack.c.l.b16 %v235
  %v758 = vunpack.c.l.b16 %v236
  %v759 = vunpack.c.l.b16 %v237
  %v760 = vunpack.c.l.b16 %v238
  %v761 = vunpack.c.l.b16 %v239
  %v762 = vunpack.c.l.b16 %v240
  %v763 = vunpack.c.l.b16 %v241
  %v764 = vunpack.c.l.b16 %v242
  %v765 = vunpack.c.l.b16 %v243
  %v766 = vunpack.c.l.b16 %v244
  %v767 = vunpack.c.l.b16 %v245
  %v768 = vunpack.c.l.b16 %v246
  %v769 = vunpack.c.l.b16 %v247
  %v770 = vunpack.c.l.b16 %v248
  %v771 = vunpack.c.l.b16 %v249
  %v772 = vunpack.c.l.b16 %v250
  %v773 = vunpack.c.l.b16 %v251
  %v774 = vunpack.c.l.b16 %v252
  %v775 = vunpack.c.l.b16 %v253
  %v776 = vunpack.c.l.b16 %v254
  %v777 = vpack.c.b16 %v554, %v553
  %v778 = vpack.c.b16 %v556, %v555
  %v779 = vpack.c.b16 %v558, %v557
  %v780 = vpack.c.b16 %v560, %v559
  %v781 = vpack.c.b16 %v562, %v561
  %v782 = vpack.c.b16 %v564, %v563
  %v783 = vpack.c.b16 %v566, %v565
  %v784 = vpack.c.b16 %v568, %v567
  %v785 = vpack.c.b16 %v570, %v569
  %v786 = vpack.c.b16 %v572, %v571
  %v787 = vpack.c.b16 %v574, %v573
  %v788 = vpack.c.b16 %v576, %v575
  %v789 = vpack.c.b16 %v578, %v577
  %v790 = vpack.c.b16 %v580, %v579
  %v791 = vpack.c.b16 %v582, %v581
  %v792 = vpack.c.b16 %v584, %v583
  %v793 = vpack.c.b16 %v586, %v585
  %v794 = vpack.c.b16 %v588, %v587
  %v795 = vpack.c.b16 %v590, %v589
  %v796 = vpack.c.b16 %v592, %v591
  %v797 = vpack.c.b16 %v594, %v593
  %v798 = vpack.c.b16 %v596, %v595
  %v799 = vpack.c.b16 %v598, %v597
  %v800 = vpack.c.b16 %v600, %v599
  %v801 = vpack.c.b16 %v602, %v601
  %v802 = vpack.c.b16 %v604, %v603
  %v803 = vpack.c.b16 %v606, %v605
  %v804 = vpack.c.b16 %v608, %v607
  %v805 = vpack.c.b16 %v610, %v609
  %v806 = vpack.c.b16 %v612, %v611
  %v807 = vpack.c.b16 %v614, %v613
  %v808 = vpack.c.b16 %v616, %v615
  %v809 = vpack.c.b16 %v618, %v617
  %v810 = vpack.c.b16 %v620, %v619
  %v811 = vpack.c.b16 %v622, %v621
  %v812 = vpack.c.b16 %v624, %v623
  %v813 = vpack.c.b16 %v626, %v625
  %v814 = vpack.c.b16 %v628, %v627
  %v815 = vpack.c.b16 %v630, %v629
  %v816 = vpack.c.b16 %v632, %v631
  %v817 = vpack.c.b16 %v634, %v633
  %v818 = vpack.c.b16 %v636, %v635
  %v819 = vpack.c.b16 %v638, %v637
  %v820 = vpack.c.b16 %v640, %v639
  %v821 = vpack.c.b16 %v642, %v641
  %v822 = vpack.c.b16 %v644, %v643
  %v823 = vpack.c.b16 %v646, %v645
  %v824 = vpack.c.b16 %v648, %v647
  %v825 = vpack.c.b16 %v650, %v649
  %v826 = vpack.c.b16 %v652, %v651
  %v827 = vpack.c.b16 %v654, %v653
  %v828 = vpack.c.b16 %v656, %v655
  %v829 = vpack.c.b16 %v658, %v657
  %v830 = vpack.c.b16 %v660, %v659
  %v831 = vpack.c.b16 %v662, %v661
  %v832 = vpack.c.b16 %v664, %v663
  %v833 = vpack.c.b16 %v666, %v665
  %v834 = vpack.c.b16 %v668, %v667
  %v835 = vpack.c.b16 %v670, %v669
  %v836 = vpack.c.b16 %v672, %v671
  %v837 = vpack.c.b16 %v674, %v673
  %v838 = vpack.c.b16 %v676, %v675
  %v839 = vpack.c.b16 %v678, %v677
  %v840 = vpack.c.b16 %v680, %v679
  %v841 = vpack.c.b16 %v682, %v681
  %v842 = vpack.c.b16 %v684, %v683
  %v843 = vpack.c.b16 %v686, %v685
  %v844 = vpack.c.b16 %v688, %v687
  %v845 = vpack.c.b16 %v690, %v689
  %v846 = vpack.c.b16 %v692, %v691
  %v847 = vpack.c.b16 %v694, %v693
  %v848 = vpack.c.b16 %v696, %v695
  %v849 = vpack.c.b16 %v698, %v697
  %v850 = vpack.c.b16 %v700, %v699
  %v851 = vpack.c.b16 %v702, %v701
  %v852 = vpack.c.b16 %v704, %v703
  %v853 = vpack.c.b16 %v706, %v705
  %v854 = vpack.c.b16 %v708, %v707
  %v855 = vpack.c.b16 %v710, %v709
  %v856 = vpack.c.b16 %v712, %v711
  %v857 = vpack.c.b16 %v714, %v713
  %v858 = vpack.c.b16 %v716, %v715
  %v859 = vpack.c.b16 %v718, %v717
  %v860 = vpack.c.b16 %v720, %v719
  %v861 = vpack.c.b16 %v722, %v721
  %v862 = vpack.c.b16 %v724, %v723
  %v863 = vpack.c.b16 %v726, %v725
  %v864 = vpack.c.b16 %v728, %v727
  %v865 = vpack.c.b16 %v730, %v729
  %v866 = vpack.c.b16 %v732, %v731
  %v867 = vpack.c.b16 %v734, %v733
  %v868 = vpack.c.b16 %v736, %v735
  %v869 = vpack.c.b16 %v738, %v737
  %v870 = vpack.c.b16 %v740, %v739
  %v871 = vpack.c.b16 %v742, %v741
  %v872 = vpack.c.b16 %v744, %v743
  %v873 = vpack.c.b16 %v746, %v745
  %v874 = vpack.c.b16 %v748, %v747
  %v875 = vpack.c.b16 %v750, %v749
  %v876 = vpack.c.b16 %v752, %v751
  %v877 = vpack.c.b16 %v754, %v753
  %v878 = vpack.c.b16 %v756, %v755
  %v879 = vpack.c.b16 %v758, %v757
  %v880 = vpack.c.b16 %v760, %v759
  %v881 = vpack.c.b16 %v762, %v761
  %v882 = vpack.c.b16 %v764, %v763
  %v883 = vpack.c.b16 %v766, %v765
  %v884 = vpack.c.b16 %v768, %v767
  %v885 = vpack.c.b16 %v770, %v769
  %v886 = vpack.c.b16 %v772, %v771
  %v887 = vpack.c.b16 %v774, %v773
  %v888 = vpack.c.b16 %v776, %v775
  %1001 = vmatpush.bf16.msra.mxu0 %v784
  %1002 = vmatpush.bf16.msra.mxu0 %v783
  %1003 = vmatpush.bf16.msra.mxu0 %v782
  %1004 = vmatpush.bf16.msra.mxu0 %v781
  %1005 = vmatpush.bf16.msra.mxu0 %v780
  %1006 = vmatpush.bf16.msra.mxu0 %v779
  %1007 = vmatpush.bf16.msra.mxu0 %v778
  %1008 = vmatpush.bf16.msra.mxu0 %v777
  %1009 = vmatmul.bf16.gmra.mxu0 %v301
  %v1010 = vpop.f32.mrf.mxu0
  %v1011 = vadd.f32 %v257, %v1010
  %v1012 = vpop.f32.mrf.mxu0
  %v1013 = vadd.f32 %v257, %v1012
  %1014 = vdwg.mxu0
  %1015 = vmatpush.bf16.msra.mxu0 %v792
  %1016 = vmatpush.bf16.msra.mxu0 %v791
  %1017 = vmatpush.bf16.msra.mxu0 %v790
  %1018 = vmatpush.bf16.msra.mxu0 %v789
  %1019 = vmatpush.bf16.msra.mxu0 %v788
  %1020 = vmatpush.bf16.msra.mxu0 %v787
  %1021 = vmatpush.bf16.msra.mxu0 %v786
  %1022 = vmatpush.bf16.msra.mxu0 %v785
  %1023 = vmatmul.bf16.gmra.mxu0 %v302
  %v1024 = vpop.f32.mrf.mxu0
  %v1025 = vadd.f32 %v1011, %v1024
  %v1026 = vpop.f32.mrf.mxu0
  %v1027 = vadd.f32 %v1013, %v1026
  %1028 = vdwg.mxu0
  %1029 = vmatpush.bf16.msra.mxu0 %v800
  %1030 = vmatpush.bf16.msra.mxu0 %v799
  %1031 = vmatpush.bf16.msra.mxu0 %v798
  %1032 = vmatpush.bf16.msra.mxu0 %v797
  %1033 = vmatpush.bf16.msra.mxu0 %v796
  %1034 = vmatpush.bf16.msra.mxu0 %v795
  %1035 = vmatpush.bf16.msra.mxu0 %v794
  %1036 = vmatpush.bf16.msra.mxu0 %v793
  %1037 = vmatmul.bf16.gmra.mxu0 %v303
  %v1038 = vpop.f32.mrf.mxu0
  %v1039 = vadd.f32 %v1025, %v1038
  %v1040 = vpop.f32.mrf.mxu0
  %v1041 = vadd.f32 %v1027, %v1040
  %1042 = vdwg.mxu0
  %1043 = vmatpush.bf16.msra.mxu0 %v808
  %1044 = vmatpush.bf16.msra.mxu0 %v807
  %1045 = vmatpush.bf16.msra.mxu0 %v806
  %1046 = vmatpush.bf16.msra.mxu0 %v805
  %1047 = vmatpush.bf16.msra.mxu0 %v804
  %1048 = vmatpush.bf16.msra.mxu0 %v803
  %1049 = vmatpush.bf16.msra.mxu0 %v802
  %1050 = vmatpush.bf16.msra.mxu0 %v801
  %1051 = vmatmul.bf16.gmra.mxu0 %v304
  %v1052 = vpop.f32.mrf.mxu0
  %v1053 = vadd.f32 %v1039, %v1052
  %v1054 = vpop.f32.mrf.mxu0
  %v1055 = vadd.f32 %v1041, %v1054
  %1056 = vdwg.mxu0
  %1057 = vmatpush.bf16.msra.mxu0 %v816
  %1058 = vmatpush.bf16.msra.mxu0 %v815
  %1059 = vmatpush.bf16.msra.mxu0 %v814
  %1060 = vmatpush.bf16.msra.mxu0 %v813
  %1061 = vmatpush.bf16.msra.mxu0 %v812
  %1062 = vmatpush.bf16.msra.mxu0 %v811
  %1063 = vmatpush.bf16.msra.mxu0 %v810
  %1064 = vmatpush.bf16.msra.mxu0 %v809
  %1065 = vmatmul.bf16.gmra.mxu0 %v305
  %v1066 = vpop.f32.mrf.mxu0
  %v1067 = vadd.f32 %v1053, %v1066
  %v1068 = vpop.f32.mrf.mxu0
  %v1069 = vadd.f32 %v1055, %v1068
  %1070 = vdwg.mxu0
  %1071 = vmatpush.bf16.msra.mxu0 %v824
  %1072 = vmatpush.bf16.msra.mxu0 %v823
  %1073 = vmatpush.bf16.msra.mxu0 %v822
  %1074 = vmatpush.bf16.msra.mxu0 %v821
  %1075 = vmatpush.bf16.msra.mxu0 %v820
  %1076 = vmatpush.bf16.msra.mxu0 %v819
  %1077 = vmatpush.bf16.msra.mxu0 %v818
  %1078 = vmatpush.bf16.msra.mxu0 %v817
  %1079 = vmatmul.bf16.gmra.mxu0 %v306
  %v1080 = vpop.f32.mrf.mxu0
  %v1081 = vadd.f32 %v1067, %v1080
  %v1082 = vpop.f32.mrf.mxu0
  %v1083 = vadd.f32 %v1069, %v1082
  %1084 = vdwg.mxu0
  %1085 = vmatpush.bf16.msra.mxu0 %v832
  %1086 = vmatpush.bf16.msra.mxu0 %v831
  %1087 = vmatpush.bf16.msra.mxu0 %v830
  %1088 = vmatpush.bf16.msra.mxu0 %v829
  %1089 = vmatpush.bf16.msra.mxu0 %v828
  %1090 = vmatpush.bf16.msra.mxu0 %v827
  %1091 = vmatpush.bf16.msra.mxu0 %v826
  %1092 = vmatpush.bf16.msra.mxu0 %v825
  %1093 = vmatmul.bf16.gmra.mxu0 %v307
  %v1094 = vpop.f32.mrf.mxu0
  %v1095 = vadd.f32 %v1081, %v1094
  %v1096 = vpop.f32.mrf.mxu0
  %v1097 = vadd.f32 %v1083, %v1096
  %1098 = vdwg.mxu0
  %1099 = vmatpush.bf16.msra.mxu0 %v840
  %1100 = vmatpush.bf16.msra.mxu0 %v839
  %1101 = vmatpush.bf16.msra.mxu0 %v838
  %1102 = vmatpush.bf16.msra.mxu0 %v837
  %1103 = vmatpush.bf16.msra.mxu0 %v836
  %1104 = vmatpush.bf16.msra.mxu0 %v835
  %1105 = vmatpush.bf16.msra.mxu0 %v834
  %1106 = vmatpush.bf16.msra.mxu0 %v833
  %1107 = vmatmul.bf16.gmra.mxu0 %v308
  %v1108 = vpop.f32.mrf.mxu0
  %v1109 = vadd.f32 %v1095, %v1108
  %v1110 = vpop.f32.mrf.mxu0
  %v1111 = vadd.f32 %v1097, %v1110
  %1112 = vdwg.mxu0
  %1113 = vmatpush.bf16.msra.mxu0 %v848
  %1114 = vmatpush.bf16.msra.mxu0 %v847
  %1115 = vmatpush.bf16.msra.mxu0 %v846
  %1116 = vmatpush.bf16.msra.mxu0 %v845
  %1117 = vmatpush.bf16.msra.mxu0 %v844
  %1118 = vmatpush.bf16.msra.mxu0 %v843
  %1119 = vmatpush.bf16.msra.mxu0 %v842
  %1120 = vmatpush.bf16.msra.mxu0 %v841
  %1121 = vmatmul.bf16.gmra.mxu0 %v309
  %v1122 = vpop.f32.mrf.mxu0
  %v1123 = vadd.f32 %v1109, %v1122
  %v1124 = vpop.f32.mrf.mxu0
  %v1125 = vadd.f32 %v1111, %v1124
  %1126 = vdwg.mxu0
  %1127 = vmatpush.bf16.msra.mxu0 %v856
  %1128 = vmatpush.bf16.msra.mxu0 %v855
  %1129 = vmatpush.bf16.msra.mxu0 %v854
  %1130 = vmatpush.bf16.msra.mxu0 %v853
  %1131 = vmatpush.bf16.msra.mxu0 %v852
  %1132 = vmatpush.bf16.msra.mxu0 %v851
  %1133 = vmatpush.bf16.msra.mxu0 %v850
  %1134 = vmatpush.bf16.msra.mxu0 %v849
  %1135 = vmatmul.bf16.gmra.mxu0 %v310
  %v1136 = vpop.f32.mrf.mxu0
  %v1137 = vadd.f32 %v1123, %v1136
  %v1138 = vpop.f32.mrf.mxu0
  %v1139 = vadd.f32 %v1125, %v1138
  %1140 = vdwg.mxu0
  %1141 = vmatpush.bf16.msra.mxu0 %v864
  %1142 = vmatpush.bf16.msra.mxu0 %v863
  %1143 = vmatpush.bf16.msra.mxu0 %v862
  %1144 = vmatpush.bf16.msra.mxu0 %v861
  %1145 = vmatpush.bf16.msra.mxu0 %v860
  %1146 = vmatpush.bf16.msra.mxu0 %v859
  %1147 = vmatpush.bf16.msra.mxu0 %v858
  %1148 = vmatpush.bf16.msra.mxu0 %v857
  %1149 = vmatmul.bf16.gmra.mxu0 %v311
  %v1150 = vpop.f32.mrf.mxu0
  %v1151 = vadd.f32 %v1137, %v1150
  %v1152 = vpop.f32.mrf.mxu0
  %v1153 = vadd.f32 %v1139, %v1152
  %1154 = vdwg.mxu0
  %1155 = vmatpush.bf16.msra.mxu0 %v872
  %1156 = vmatpush.bf16.msra.mxu0 %v871
  %1157 = vmatpush.bf16.msra.mxu0 %v870
  %1158 = vmatpush.bf16.msra.mxu0 %v869
  %1159 = vmatpush.bf16.msra.mxu0 %v868
  %1160 = vmatpush.bf16.msra.mxu0 %v867
  %1161 = vmatpush.bf16.msra.mxu0 %v866
  %1162 = vmatpush.bf16.msra.mxu0 %v865
  %1163 = vmatmul.bf16.gmra.mxu0 %v312
  %v1164 = vpop.f32.mrf.mxu0
  %v1165 = vadd.f32 %v1151, %v1164
  %v1166 = vpop.f32.mrf.mxu0
  %v1167 = vadd.f32 %v1153, %v1166
  %1168 = vdwg.mxu0
  %1169 = vmatpush.bf16.msra.mxu0 %v880
  %1170 = vmatpush.bf16.msra.mxu0 %v879
  %1171 = vmatpush.bf16.msra.mxu0 %v878
  %1172 = vmatpush.bf16.msra.mxu0 %v877
  %1173 = vmatpush.bf16.msra.mxu0 %v876
  %1174 = vmatpush.bf16.msra.mxu0 %v875
  %1175 = vmatpush.bf16.msra.mxu0 %v874
  %1176 = vmatpush.bf16.msra.mxu0 %v873
  %1177 = vmatmul.bf16.gmra.mxu0 %v313
  %v1178 = vpop.f32.mrf.mxu0
  %v1179 = vadd.f32 %v1165, %v1178
  %v1180 = vpop.f32.mrf.mxu0
  %v1181 = vadd.f32 %v1167, %v1180
  %1182 = vdwg.mxu0
  %1183 = vmatpush.bf16.msra.mxu0 %v888
  %1184 = vmatpush.bf16.msra.mxu0 %v887
  %1185 = vmatpush.bf16.msra.mxu0 %v886
  %1186 = vmatpush.bf16.msra.mxu0 %v885
  %1187 = vmatpush.bf16.msra.mxu0 %v884
  %1188 = vmatpush.bf16.msra.mxu0 %v883
  %1189 = vmatpush.bf16.msra.mxu0 %v882
  %1190 = vmatpush.bf16.msra.mxu0 %v881
  %1191 = vmatmul.bf16.gmra.mxu0 %v314
  %v1192 = vpop.f32.mrf.mxu0
  %v1193 = vadd.f32 %v1179, %v1192
  %v1194 = vpop.f32.mrf.mxu0
  %v1195 = vadd.f32 %v1181, %v1194
  %1196 = vdwg.mxu0
  %v1197 = vld [vmem:[%s3] sm:$0xff]
  %v1198 = vld [vmem:[%s3 + $0x8] sm:$0xff]
  %v1199 = vadd.f32 %v1193, %v1197
  %v1200 = vadd.f32 %v1195, %v1198
  %v1201 = vmax.f32 %v1199, 0.0
  %v1202 = vmax.f32 %v1200, 0.0
  %1203 = vst [vmem:[%s4] sm:$0xff] %v1201
  %1204 = vst [vmem:[%s4 + $0x8] sm:$0xff] %v1202
  // Predicated region
  $region18: #{resnet_forward.19} parent=0 // pred_check
    _
  $region19: #{resnet_forward.19} parent=0 // pred_check_branch
    %1206 = sbr.rel (0) target = $region21
  $region20: #{resnet_forward.19} parent=0 // pred_region
    _
  $region21: #{resnet_forward.19} parent=0 // pred_fallthru
    _
  // Predicated region
  $region22: #{resnet_forward.19} parent=0 // pred_check
    _
  $region23: #{resnet_forward.19} parent=0 // pred_check_branch
    %1208 = sbr.rel (0) target = $region25
  $region24: #{resnet_forward.19} parent=0 // pred_region
    _
  $region25: #{resnet_forward.19} parent=0 // pred_fallthru
    _

// kernel: resnet_forward.20
$region0: #{resnet_forward.20}
  #allocation0 [shape = 'u32[]', space=smem, size = 0x4, offset = 0x4, fixed_abs, tag = 'smem constant byte address 0x4 - core index']
  #allocation1 [shape = 'u32[72,128]{1,0:T(1,128)}', space=vmem, size = 0x9000, scoped, tag = 'internal scratch']
  %s0 = inlined_call_operand.vmem [shape: bf16[8,1792], index: 0, kind: input, shape index: {}]
  %s1 = inlined_call_operand.vmem [shape: bf16[1792,128], index: 1, kind: input, shape index: {}]
  %s2 = inlined_call_operand.vmem [shape: f32[1,128], index: 2, kind: input, shape index: {}]
  %s3 = inlined_call_operand.vmem [shape: f32[8,128], index: 3, kind: output, shape index: {}]
  %s4 = sld [smem:[#allocation0]]
  $region22: #{resnet_forward.20} parent=0
    _
  %s6 = ssub.s32 1, %s4
  %s7 = scalar_select 0, %s6, %s4
  // Predicated region
  $region2: #{resnet_forward.20} parent=0 // pred_check
    _
  $region3: #{resnet_forward.20} parent=0 // pred_check_branch
    %9 = sbr.rel (0) target = $region5
  $region4: #{resnet_forward.20} parent=0 // pred_region
    _
  $region5: #{resnet_forward.20} parent=0 // pred_fallthru
    _
  // Predicated region
  $region6: #{resnet_forward.20} parent=0 // pred_check
    _
  $region7: #{resnet_forward.20} parent=0 // pred_check_branch
    %11 = sbr.rel (0) target = $region9
  $region8: #{resnet_forward.20} parent=0 // pred_region
    _
  $region9: #{resnet_forward.20} parent=0 // pred_fallthru
    _
  // Predicated region
  $region10: #{resnet_forward.20} parent=0 // pred_check
    _
  $region11: #{resnet_forward.20} parent=0 // pred_check_branch
    %13 = sbr.rel (0) target = $region13
  $region12: #{resnet_forward.20} parent=0 // pred_region
    _
  $region13: #{resnet_forward.20} parent=0 // pred_fallthru
    _
  %v14 = vld [vmem:[%s0] sm:$0xff]
  %v15 = vld [vmem:[%s0 + $0x8] sm:$0xff]
  %v16 = vld [vmem:[%s0 + $0x10] sm:$0xff]
  %v17 = vld [vmem:[%s0 + $0x18] sm:$0xff]
  %v18 = vld [vmem:[%s0 + $0x20] sm:$0xff]
  %v19 = vld [vmem:[%s0 + $0x28] sm:$0xff]
  %v20 = vld [vmem:[%s0 + $0x30] sm:$0xff]
  %v21 = vld [vmem:[%s1] sm:$0xf]
  %v22 = vld [vmem:[%s1 + $0x4] sm:$0xf]
  %v23 = vld [vmem:[%s1 + $0x8] sm:$0xf]
  %v24 = vld [vmem:[%s1 + $0xc] sm:$0xf]
  %v25 = vld [vmem:[%s1 + $0x10] sm:$0xf]
  %v26 = vld [vmem:[%s1 + $0x14] sm:$0xf]
  %v27 = vld [vmem:[%s1 + $0x18] sm:$0xf]
  %v28 = vld [vmem:[%s1 + $0x1c] sm:$0xf]
  %v29 = vld [vmem:[%s1 + $0x20] sm:$0xf]
  %v30 = vld [vmem:[%s1 + $0x24] sm:$0xf]
  %v31 = vld [vmem:[%s1 + $0x28] sm:$0xf]
  %v32 = vld [vmem:[%s1 + $0x2c] sm:$0xf]
  %v33 = vld [vmem:[%s1 + $0x30] sm:$0xf]
  %v34 = vld [vmem:[%s1 + $0x34] sm:$0xf]
  %v35 = vld [vmem:[%s1 + $0x38] sm:$0xf]
  %v36 = vld [vmem:[%s1 + $0x3c] sm:$0xf]
  %v37 = vld [vmem:[%s1 + $0x40] sm:$0xf]
  %v38 = vld [vmem:[%s1 + $0x44] sm:$0xf]
  %v39 = vld [vmem:[%s1 + $0x48] sm:$0xf]
  %v40 = vld [vmem:[%s1 + $0x4c] sm:$0xf]
  %v41 = vld [vmem:[%s1 + $0x50] sm:$0xf]
  %v42 = vld [vmem:[%s1 + $0x54] sm:$0xf]
  %v43 = vld [vmem:[%s1 + $0x58] sm:$0xf]
  %v44 = vld [vmem:[%s1 + $0x5c] sm:$0xf]
  %v45 = vld [vmem:[%s1 + $0x60] sm:$0xf]
  %v46 = vld [vmem:[%s1 + $0x64] sm:$0xf]
  %v47 = vld [vmem:[%s1 + $0x68] sm:$0xf]
  %v48 = vld [vmem:[%s1 + $0x6c] sm:$0xf]
  %v49 = vld [vmem:[%s1 + $0x70] sm:$0xf]
  %v50 = vld [vmem:[%s1 + $0x74] sm:$0xf]
  %v51 = vld [vmem:[%s1 + $0x78] sm:$0xf]
  %v52 = vld [vmem:[%s1 + $0x7c] sm:$0xf]
  %v53 = vld [vmem:[%s1 + $0x80] sm:$0xf]
  %v54 = vld [vmem:[%s1 + $0x84] sm:$0xf]
  %v55 = vld [vmem:[%s1 + $0x88] sm:$0xf]
  %v56 = vld [vmem:[%s1 + $0x8c] sm:$0xf]
  %v57 = vld [vmem:[%s1 + $0x90] sm:$0xf]
  %v58 = vld [vmem:[%s1 + $0x94] sm:$0xf]
  %v59 = vld [vmem:[%s1 + $0x98] sm:$0xf]
  %v60 = vld [vmem:[%s1 + $0x9c] sm:$0xf]
  %v61 = vld [vmem:[%s1 + $0xa0] sm:$0xf]
  %v62 = vld [vmem:[%s1 + $0xa4] sm:$0xf]
  %v63 = vld [vmem:[%s1 + $0xa8] sm:$0xf]
  %v64 = vld [vmem:[%s1 + $0xac] sm:$0xf]
  %v65 = vld [vmem:[%s1 + $0xb0] sm:$0xf]
  %v66 = vld [vmem:[%s1 + $0xb4] sm:$0xf]
  %v67 = vld [vmem:[%s1 + $0xb8] sm:$0xf]
  %v68 = vld [vmem:[%s1 + $0xbc] sm:$0xf]
  %v69 = vld [vmem:[%s1 + $0xc0] sm:$0xf]
  %v70 = vld [vmem:[%s1 + $0xc4] sm:$0xf]
  %v71 = vld [vmem:[%s1 + $0xc8] sm:$0xf]
  %v72 = vld [vmem:[%s1 + $0xcc] sm:$0xf]
  %v73 = vld [vmem:[%s1 + $0xd0] sm:$0xf]
  %v74 = vld [vmem:[%s1 + $0xd4] sm:$0xf]
  %v75 = vld [vmem:[%s1 + $0xd8] sm:$0xf]
  %v76 = vld [vmem:[%s1 + $0xdc] sm:$0xf]
  %v77 = vld [vmem:[%s1 + $0xe0] sm:$0xf]
  %v78 = vld [vmem:[%s1 + $0xe4] sm:$0xf]
  %v79 = vld [vmem:[%s1 + $0xe8] sm:$0xf]
  %v80 = vld [vmem:[%s1 + $0xec] sm:$0xf]
  %v81 = vld [vmem:[%s1 + $0xf0] sm:$0xf]
  %v82 = vld [vmem:[%s1 + $0xf4] sm:$0xf]
  %v83 = vld [vmem:[%s1 + $0xf8] sm:$0xf]
  %v84 = vld [vmem:[%s1 + $0xfc] sm:$0xf]
  %v85 = vld [vmem:[%s1 + $0x100] sm:$0xf]
  %v86 = vld [vmem:[%s1 + $0x104] sm:$0xf]
  %v87 = vld [vmem:[%s1 + $0x108] sm:$0xf]
  %v88 = vld [vmem:[%s1 + $0x10c] sm:$0xf]
  %v89 = vld [vmem:[%s1 + $0x110] sm:$0xf]
  %v90 = vld [vmem:[%s1 + $0x114] sm:$0xf]
  %v91 = vld [vmem:[%s1 + $0x118] sm:$0xf]
  %v92 = vld [vmem:[%s1 + $0x11c] sm:$0xf]
  %v93 = vld [vmem:[%s1 + $0x120] sm:$0xf]
  %v94 = vld [vmem:[%s1 + $0x124] sm:$0xf]
  %v95 = vld [vmem:[%s1 + $0x128] sm:$0xf]
  %v96 = vld [vmem:[%s1 + $0x12c] sm:$0xf]
  %v97 = vld [vmem:[%s1 + $0x130] sm:$0xf]
  %v98 = vld [vmem:[%s1 + $0x134] sm:$0xf]
  %v99 = vld [vmem:[%s1 + $0x138] sm:$0xf]
  %v100 = vld [vmem:[%s1 + $0x13c] sm:$0xf]
  %v101 = vld [vmem:[%s1 + $0x140] sm:$0xf]
  %v102 = vld [vmem:[%s1 + $0x144] sm:$0xf]
  %v103 = vld [vmem:[%s1 + $0x148] sm:$0xf]
  %v104 = vld [vmem:[%s1 + $0x14c] sm:$0xf]
  %v105 = vld [vmem:[%s1 + $0x150] sm:$0xf]
  %v106 = vld [vmem:[%s1 + $0x154] sm:$0xf]
  %v107 = vld [vmem:[%s1 + $0x158] sm:$0xf]
  %v108 = vld [vmem:[%s1 + $0x15c] sm:$0xf]
  %v109 = vld [vmem:[%s1 + $0x160] sm:$0xf]
  %v110 = vld [vmem:[%s1 + $0x164] sm:$0xf]
  %v111 = vld [vmem:[%s1 + $0x168] sm:$0xf]
  %v112 = vld [vmem:[%s1 + $0x16c] sm:$0xf]
  %v113 = vld [vmem:[%s1 + $0x170] sm:$0xf]
  %v114 = vld [vmem:[%s1 + $0x174] sm:$0xf]
  %v115 = vld [vmem:[%s1 + $0x178] sm:$0xf]
  %v116 = vld [vmem:[%s1 + $0x17c] sm:$0xf]
  %v117 = vld [vmem:[%s1 + $0x180] sm:$0xf]
  %v118 = vld [vmem:[%s1 + $0x184] sm:$0xf]
  %v119 = vld [vmem:[%s1 + $0x188] sm:$0xf]
  %v120 = vld [vmem:[%s1 + $0x18c] sm:$0xf]
  %v121 = vld [vmem:[%s1 + $0x190] sm:$0xf]
  %v122 = vld [vmem:[%s1 + $0x194] sm:$0xf]
  %v123 = vld [vmem:[%s1 + $0x198] sm:$0xf]
  %v124 = vld [vmem:[%s1 + $0x19c] sm:$0xf]
  %v125 = vld [vmem:[%s1 + $0x1a0] sm:$0xf]
  %v126 = vld [vmem:[%s1 + $0x1a4] sm:$0xf]
  %v127 = vld [vmem:[%s1 + $0x1a8] sm:$0xf]
  %v128 = vld [vmem:[%s1 + $0x1ac] sm:$0xf]
  %v129 = vld [vmem:[%s1 + $0x1b0] sm:$0xf]
  %v130 = vld [vmem:[%s1 + $0x1b4] sm:$0xf]
  %v131 = vld [vmem:[%s1 + $0x1b8] sm:$0xf]
  %v132 = vld [vmem:[%s1 + $0x1bc] sm:$0xf]
  %v133 = vld [vmem:[%s1 + $0x1c0] sm:$0xf]
  %v134 = vld [vmem:[%s1 + $0x1c4] sm:$0xf]
  %v135 = vld [vmem:[%s1 + $0x1c8] sm:$0xf]
  %v136 = vld [vmem:[%s1 + $0x1cc] sm:$0xf]
  %v137 = vld [vmem:[%s1 + $0x1d0] sm:$0xf]
  %v138 = vld [vmem:[%s1 + $0x1d4] sm:$0xf]
  %v139 = vld [vmem:[%s1 + $0x1d8] sm:$0xf]
  %v140 = vld [vmem:[%s1 + $0x1dc] sm:$0xf]
  %v141 = vld [vmem:[%s1 + $0x1e0] sm:$0xf]
  %v142 = vld [vmem:[%s1 + $0x1e4] sm:$0xf]
  %v143 = vld [vmem:[%s1 + $0x1e8] sm:$0xf]
  %v144 = vld [vmem:[%s1 + $0x1ec] sm:$0xf]
  %v145 = vld [vmem:[%s1 + $0x1f0] sm:$0xf]
  %v146 = vld [vmem:[%s1 + $0x1f4] sm:$0xf]
  %v147 = vld [vmem:[%s1 + $0x1f8] sm:$0xf]
  %v148 = vld [vmem:[%s1 + $0x1fc] sm:$0xf]
  %v149 = vld [vmem:[%s1 + $0x200] sm:$0xf]
  %v150 = vld [vmem:[%s1 + $0x204] sm:$0xf]
  %v151 = vld [vmem:[%s1 + $0x208] sm:$0xf]
  %v152 = vld [vmem:[%s1 + $0x20c] sm:$0xf]
  %v153 = vld [vmem:[%s1 + $0x210] sm:$0xf]
  %v154 = vld [vmem:[%s1 + $0x214] sm:$0xf]
  %v155 = vld [vmem:[%s1 + $0x218] sm:$0xf]
  %v156 = vld [vmem:[%s1 + $0x21c] sm:$0xf]
  %v157 = vld [vmem:[%s1 + $0x220] sm:$0xf]
  %v158 = vld [vmem:[%s1 + $0x224] sm:$0xf]
  %v159 = vld [vmem:[%s1 + $0x228] sm:$0xf]
  %v160 = vld [vmem:[%s1 + $0x22c] sm:$0xf]
  %v161 = vld [vmem:[%s1 + $0x230] sm:$0xf]
  %v162 = vld [vmem:[%s1 + $0x234] sm:$0xf]
  %v163 = vld [vmem:[%s1 + $0x238] sm:$0xf]
  %v164 = vld [vmem:[%s1 + $0x23c] sm:$0xf]
  %v165 = vld [vmem:[%s1 + $0x240] sm:$0xf]
  %v166 = vld [vmem:[%s1 + $0x244] sm:$0xf]
  %v167 = vld [vmem:[%s1 + $0x248] sm:$0xf]
  %v168 = vld [vmem:[%s1 + $0x24c] sm:$0xf]
  %v169 = vld [vmem:[%s1 + $0x250] sm:$0xf]
  %v170 = vld [vmem:[%s1 + $0x254] sm:$0xf]
  %v171 = vld [vmem:[%s1 + $0x258] sm:$0xf]
  %v172 = vld [vmem:[%s1 + $0x25c] sm:$0xf]
  %v173 = vld [vmem:[%s1 + $0x260] sm:$0xf]
  %v174 = vld [vmem:[%s1 + $0x264] sm:$0xf]
  %v175 = vld [vmem:[%s1 + $0x268] sm:$0xf]
  %v176 = vld [vmem:[%s1 + $0x26c] sm:$0xf]
  %v177 = vld [vmem:[%s1 + $0x270] sm:$0xf]
  %v178 = vld [vmem:[%s1 + $0x274] sm:$0xf]
  %v179 = vld [vmem:[%s1 + $0x278] sm:$0xf]
  %v180 = vld [vmem:[%s1 + $0x27c] sm:$0xf]
  %v181 = vld [vmem:[%s1 + $0x280] sm:$0xf]
  %v182 = vld [vmem:[%s1 + $0x284] sm:$0xf]
  %v183 = vld [vmem:[%s1 + $0x288] sm:$0xf]
  %v184 = vld [vmem:[%s1 + $0x28c] sm:$0xf]
  %v185 = vld [vmem:[%s1 + $0x290] sm:$0xf]
  %v186 = vld [vmem:[%s1 + $0x294] sm:$0xf]
  %v187 = vld [vmem:[%s1 + $0x298] sm:$0xf]
  %v188 = vld [vmem:[%s1 + $0x29c] sm:$0xf]
  %v189 = vld [vmem:[%s1 + $0x2a0] sm:$0xf]
  %v190 = vld [vmem:[%s1 + $0x2a4] sm:$0xf]
  %v191 = vld [vmem:[%s1 + $0x2a8] sm:$0xf]
  %v192 = vld [vmem:[%s1 + $0x2ac] sm:$0xf]
  %v193 = vld [vmem:[%s1 + $0x2b0] sm:$0xf]
  %v194 = vld [vmem:[%s1 + $0x2b4] sm:$0xf]
  %v195 = vld [vmem:[%s1 + $0x2b8] sm:$0xf]
  %v196 = vld [vmem:[%s1 + $0x2bc] sm:$0xf]
  %v197 = vld [vmem:[%s1 + $0x2c0] sm:$0xf]
  %v198 = vld [vmem:[%s1 + $0x2c4] sm:$0xf]
  %v199 = vld [vmem:[%s1 + $0x2c8] sm:$0xf]
  %v200 = vld [vmem:[%s1 + $0x2cc] sm:$0xf]
  %v201 = vld [vmem:[%s1 + $0x2d0] sm:$0xf]
  %v202 = vld [vmem:[%s1 + $0x2d4] sm:$0xf]
  %v203 = vld [vmem:[%s1 + $0x2d8] sm:$0xf]
  %v204 = vld [vmem:[%s1 + $0x2dc] sm:$0xf]
  %v205 = vld [vmem:[%s1 + $0x2e0] sm:$0xf]
  %v206 = vld [vmem:[%s1 + $0x2e4] sm:$0xf]
  %v207 = vld [vmem:[%s1 + $0x2e8] sm:$0xf]
  %v208 = vld [vmem:[%s1 + $0x2ec] sm:$0xf]
  %v209 = vld [vmem:[%s1 + $0x2f0] sm:$0xf]
  %v210 = vld [vmem:[%s1 + $0x2f4] sm:$0xf]
  %v211 = vld [vmem:[%s1 + $0x2f8] sm:$0xf]
  %v212 = vld [vmem:[%s1 + $0x2fc] sm:$0xf]
  %v213 = vld [vmem:[%s1 + $0x300] sm:$0xf]
  %v214 = vld [vmem:[%s1 + $0x304] sm:$0xf]
  %v215 = vld [vmem:[%s1 + $0x308] sm:$0xf]
  %v216 = vld [vmem:[%s1 + $0x30c] sm:$0xf]
  %v217 = vld [vmem:[%s1 + $0x310] sm:$0xf]
  %v218 = vld [vmem:[%s1 + $0x314] sm:$0xf]
  %v219 = vld [vmem:[%s1 + $0x318] sm:$0xf]
  %v220 = vld [vmem:[%s1 + $0x31c] sm:$0xf]
  %v221 = vld [vmem:[%s1 + $0x320] sm:$0xf]
  %v222 = vld [vmem:[%s1 + $0x324] sm:$0xf]
  %v223 = vld [vmem:[%s1 + $0x328] sm:$0xf]
  %v224 = vld [vmem:[%s1 + $0x32c] sm:$0xf]
  %v225 = vld [vmem:[%s1 + $0x330] sm:$0xf]
  %v226 = vld [vmem:[%s1 + $0x334] sm:$0xf]
  %v227 = vld [vmem:[%s1 + $0x338] sm:$0xf]
  %v228 = vld [vmem:[%s1 + $0x33c] sm:$0xf]
  %v229 = vld [vmem:[%s1 + $0x340] sm:$0xf]
  %v230 = vld [vmem:[%s1 + $0x344] sm:$0xf]
  %v231 = vld [vmem:[%s1 + $0x348] sm:$0xf]
  %v232 = vld [vmem:[%s1 + $0x34c] sm:$0xf]
  %v233 = vld [vmem:[%s1 + $0x350] sm:$0xf]
  %v234 = vld [vmem:[%s1 + $0x354] sm:$0xf]
  %v235 = vld [vmem:[%s1 + $0x358] sm:$0xf]
  %v236 = vld [vmem:[%s1 + $0x35c] sm:$0xf]
  %v237 = vld [vmem:[%s1 + $0x360] sm:$0xf]
  %v238 = vld [vmem:[%s1 + $0x364] sm:$0xf]
  %v239 = vld [vmem:[%s1 + $0x368] sm:$0xf]
  %v240 = vld [vmem:[%s1 + $0x36c] sm:$0xf]
  %v241 = vld [vmem:[%s1 + $0x370] sm:$0xf]
  %v242 = vld [vmem:[%s1 + $0x374] sm:$0xf]
  %v243 = vld [vmem:[%s1 + $0x378] sm:$0xf]
  %v244 = vld [vmem:[%s1 + $0x37c] sm:$0xf]
  %v245 = vld [vmem:[%s2] sm:$0x1]
  %v247 = vperm.slane %v245, 0
  %v256 = vunpack.c.l.b16 %v14
  %v257 = vunpack.c.h.b16 %v14
  %v258 = vunpack.c.l.b16 %v15
  %v259 = vunpack.c.h.b16 %v15
  %v260 = vunpack.c.l.b16 %v16
  %v261 = vunpack.c.h.b16 %v16
  %v262 = vunpack.c.l.b16 %v17
  %v263 = vunpack.c.h.b16 %v17
  %v264 = vunpack.c.l.b16 %v18
  %v265 = vunpack.c.h.b16 %v18
  %v266 = vunpack.c.l.b16 %v19
  %v267 = vunpack.c.h.b16 %v19
  %v268 = vunpack.c.l.b16 %v20
  %v269 = vunpack.c.h.b16 %v20
  %v270 = vpack.c.b16 %v256, %v256
  %v271 = vpack.c.b16 %v257, %v257
  %v272 = vpack.c.b16 %v258, %v258
  %v273 = vpack.c.b16 %v259, %v259
  %v274 = vpack.c.b16 %v260, %v260
  %v275 = vpack.c.b16 %v261, %v261
  %v276 = vpack.c.b16 %v262, %v262
  %v277 = vpack.c.b16 %v263, %v263
  %v278 = vpack.c.b16 %v264, %v264
  %v279 = vpack.c.b16 %v265, %v265
  %v280 = vpack.c.b16 %v266, %v266
  %v281 = vpack.c.b16 %v267, %v267
  %v282 = vpack.c.b16 %v268, %v268
  %v283 = vpack.c.b16 %v269, %v269
  %v522 = vunpack.c.l.b16 %v21
  %v523 = vunpack.c.l.b16 %v22
  %v524 = vunpack.c.l.b16 %v23
  %v525 = vunpack.c.l.b16 %v24
  %v526 = vunpack.c.l.b16 %v25
  %v527 = vunpack.c.l.b16 %v26
  %v528 = vunpack.c.l.b16 %v27
  %v529 = vunpack.c.l.b16 %v28
  %v530 = vunpack.c.l.b16 %v29
  %v531 = vunpack.c.l.b16 %v30
  %v532 = vunpack.c.l.b16 %v31
  %v533 = vunpack.c.l.b16 %v32
  %v534 = vunpack.c.l.b16 %v33
  %v535 = vunpack.c.l.b16 %v34
  %v536 = vunpack.c.l.b16 %v35
  %v537 = vunpack.c.l.b16 %v36
  %v538 = vunpack.c.l.b16 %v37
  %v539 = vunpack.c.l.b16 %v38
  %v540 = vunpack.c.l.b16 %v39
  %v541 = vunpack.c.l.b16 %v40
  %v542 = vunpack.c.l.b16 %v41
  %v543 = vunpack.c.l.b16 %v42
  %v544 = vunpack.c.l.b16 %v43
  %v545 = vunpack.c.l.b16 %v44
  %v546 = vunpack.c.l.b16 %v45
  %v547 = vunpack.c.l.b16 %v46
  %v548 = vunpack.c.l.b16 %v47
  %v549 = vunpack.c.l.b16 %v48
  %v550 = vunpack.c.l.b16 %v49
  %v551 = vunpack.c.l.b16 %v50
  %v552 = vunpack.c.l.b16 %v51
  %v553 = vunpack.c.l.b16 %v52
  %v554 = vunpack.c.l.b16 %v53
  %v555 = vunpack.c.l.b16 %v54
  %v556 = vunpack.c.l.b16 %v55
  %v557 = vunpack.c.l.b16 %v56
  %v558 = vunpack.c.l.b16 %v57
  %v559 = vunpack.c.l.b16 %v58
  %v560 = vunpack.c.l.b16 %v59
  %v561 = vunpack.c.l.b16 %v60
  %v562 = vunpack.c.l.b16 %v61
  %v563 = vunpack.c.l.b16 %v62
  %v564 = vunpack.c.l.b16 %v63
  %v565 = vunpack.c.l.b16 %v64
  %v566 = vunpack.c.l.b16 %v65
  %v567 = vunpack.c.l.b16 %v66
  %v568 = vunpack.c.l.b16 %v67
  %v569 = vunpack.c.l.b16 %v68
  %v570 = vunpack.c.l.b16 %v69
  %v571 = vunpack.c.l.b16 %v70
  %v572 = vunpack.c.l.b16 %v71
  %v573 = vunpack.c.l.b16 %v72
  %v574 = vunpack.c.l.b16 %v73
  %v575 = vunpack.c.l.b16 %v74
  %v576 = vunpack.c.l.b16 %v75
  %v577 = vunpack.c.l.b16 %v76
  %v578 = vunpack.c.l.b16 %v77
  %v579 = vunpack.c.l.b16 %v78
  %v580 = vunpack.c.l.b16 %v79
  %v581 = vunpack.c.l.b16 %v80
  %v582 = vunpack.c.l.b16 %v81
  %v583 = vunpack.c.l.b16 %v82
  %v584 = vunpack.c.l.b16 %v83
  %v585 = vunpack.c.l.b16 %v84
  %v586 = vunpack.c.l.b16 %v85
  %v587 = vunpack.c.l.b16 %v86
  %v588 = vunpack.c.l.b16 %v87
  %v589 = vunpack.c.l.b16 %v88
  %v590 = vunpack.c.l.b16 %v89
  %v591 = vunpack.c.l.b16 %v90
  %v592 = vunpack.c.l.b16 %v91
  %v593 = vunpack.c.l.b16 %v92
  %v594 = vunpack.c.l.b16 %v93
  %v595 = vunpack.c.l.b16 %v94
  %v596 = vunpack.c.l.b16 %v95
  %v597 = vunpack.c.l.b16 %v96
  %v598 = vunpack.c.l.b16 %v97
  %v599 = vunpack.c.l.b16 %v98
  %v600 = vunpack.c.l.b16 %v99
  %v601 = vunpack.c.l.b16 %v100
  %v602 = vunpack.c.l.b16 %v101
  %v603 = vunpack.c.l.b16 %v102
  %v604 = vunpack.c.l.b16 %v103
  %v605 = vunpack.c.l.b16 %v104
  %v606 = vunpack.c.l.b16 %v105
  %v607 = vunpack.c.l.b16 %v106
  %v608 = vunpack.c.l.b16 %v107
  %v609 = vunpack.c.l.b16 %v108
  %v610 = vunpack.c.l.b16 %v109
  %v611 = vunpack.c.l.b16 %v110
  %v612 = vunpack.c.l.b16 %v111
  %v613 = vunpack.c.l.b16 %v112
  %v614 = vunpack.c.l.b16 %v113
  %v615 = vunpack.c.l.b16 %v114
  %v616 = vunpack.c.l.b16 %v115
  %v617 = vunpack.c.l.b16 %v116
  %v618 = vunpack.c.l.b16 %v117
  %v619 = vunpack.c.l.b16 %v118
  %v620 = vunpack.c.l.b16 %v119
  %v621 = vunpack.c.l.b16 %v120
  %v622 = vunpack.c.l.b16 %v121
  %v623 = vunpack.c.l.b16 %v122
  %v624 = vunpack.c.l.b16 %v123
  %v625 = vunpack.c.l.b16 %v124
  %v626 = vunpack.c.l.b16 %v125
  %v627 = vunpack.c.l.b16 %v126
  %v628 = vunpack.c.l.b16 %v127
  %v629 = vunpack.c.l.b16 %v128
  %v630 = vunpack.c.l.b16 %v129
  %v631 = vunpack.c.l.b16 %v130
  %v632 = vunpack.c.l.b16 %v131
  %v633 = vunpack.c.l.b16 %v132
  %v634 = vunpack.c.l.b16 %v133
  %v635 = vunpack.c.l.b16 %v134
  %v636 = vunpack.c.l.b16 %v135
  %v637 = vunpack.c.l.b16 %v136
  %v638 = vunpack.c.l.b16 %v137
  %v639 = vunpack.c.l.b16 %v138
  %v640 = vunpack.c.l.b16 %v139
  %v641 = vunpack.c.l.b16 %v140
  %v642 = vunpack.c.l.b16 %v141
  %v643 = vunpack.c.l.b16 %v142
  %v644 = vunpack.c.l.b16 %v143
  %v645 = vunpack.c.l.b16 %v144
  %v646 = vunpack.c.l.b16 %v145
  %v647 = vunpack.c.l.b16 %v146
  %v648 = vunpack.c.l.b16 %v147
  %v649 = vunpack.c.l.b16 %v148
  %v650 = vunpack.c.l.b16 %v149
  %v651 = vunpack.c.l.b16 %v150
  %v652 = vunpack.c.l.b16 %v151
  %v653 = vunpack.c.l.b16 %v152
  %v654 = vunpack.c.l.b16 %v153
  %v655 = vunpack.c.l.b16 %v154
  %v656 = vunpack.c.l.b16 %v155
  %v657 = vunpack.c.l.b16 %v156
  %v658 = vunpack.c.l.b16 %v157
  %v659 = vunpack.c.l.b16 %v158
  %v660 = vunpack.c.l.b16 %v159
  %v661 = vunpack.c.l.b16 %v160
  %v662 = vunpack.c.l.b16 %v161
  %v663 = vunpack.c.l.b16 %v162
  %v664 = vunpack.c.l.b16 %v163
  %v665 = vunpack.c.l.b16 %v164
  %v666 = vunpack.c.l.b16 %v165
  %v667 = vunpack.c.l.b16 %v166
  %v668 = vunpack.c.l.b16 %v167
  %v669 = vunpack.c.l.b16 %v168
  %v670 = vunpack.c.l.b16 %v169
  %v671 = vunpack.c.l.b16 %v170
  %v672 = vunpack.c.l.b16 %v171
  %v673 = vunpack.c.l.b16 %v172
  %v674 = vunpack.c.l.b16 %v173
  %v675 = vunpack.c.l.b16 %v174
  %v676 = vunpack.c.l.b16 %v175
  %v677 = vunpack.c.l.b16 %v176
  %v678 = vunpack.c.l.b16 %v177
  %v679 = vunpack.c.l.b16 %v178
  %v680 = vunpack.c.l.b16 %v179
  %v681 = vunpack.c.l.b16 %v180
  %v682 = vunpack.c.l.b16 %v181
  %v683 = vunpack.c.l.b16 %v182
  %v684 = vunpack.c.l.b16 %v183
  %v685 = vunpack.c.l.b16 %v184
  %v686 = vunpack.c.l.b16 %v185
  %v687 = vunpack.c.l.b16 %v186
  %v688 = vunpack.c.l.b16 %v187
  %v689 = vunpack.c.l.b16 %v188
  %v690 = vunpack.c.l.b16 %v189
  %v691 = vunpack.c.l.b16 %v190
  %v692 = vunpack.c.l.b16 %v191
  %v693 = vunpack.c.l.b16 %v192
  %v694 = vunpack.c.l.b16 %v193
  %v695 = vunpack.c.l.b16 %v194
  %v696 = vunpack.c.l.b16 %v195
  %v697 = vunpack.c.l.b16 %v196
  %v698 = vunpack.c.l.b16 %v197
  %v699 = vunpack.c.l.b16 %v198
  %v700 = vunpack.c.l.b16 %v199
  %v701 = vunpack.c.l.b16 %v200
  %v702 = vunpack.c.l.b16 %v201
  %v703 = vunpack.c.l.b16 %v202
  %v704 = vunpack.c.l.b16 %v203
  %v705 = vunpack.c.l.b16 %v204
  %v706 = vunpack.c.l.b16 %v205
  %v707 = vunpack.c.l.b16 %v206
  %v708 = vunpack.c.l.b16 %v207
  %v709 = vunpack.c.l.b16 %v208
  %v710 = vunpack.c.l.b16 %v209
  %v711 = vunpack.c.l.b16 %v210
  %v712 = vunpack.c.l.b16 %v211
  %v713 = vunpack.c.l.b16 %v212
  %v714 = vunpack.c.l.b16 %v213
  %v715 = vunpack.c.l.b16 %v214
  %v716 = vunpack.c.l.b16 %v215
  %v717 = vunpack.c.l.b16 %v216
  %v718 = vunpack.c.l.b16 %v217
  %v719 = vunpack.c.l.b16 %v218
  %v720 = vunpack.c.l.b16 %v219
  %v721 = vunpack.c.l.b16 %v220
  %v722 = vunpack.c.l.b16 %v221
  %v723 = vunpack.c.l.b16 %v222
  %v724 = vunpack.c.l.b16 %v223
  %v725 = vunpack.c.l.b16 %v224
  %v726 = vunpack.c.l.b16 %v225
  %v727 = vunpack.c.l.b16 %v226
  %v728 = vunpack.c.l.b16 %v227
  %v729 = vunpack.c.l.b16 %v228
  %v730 = vunpack.c.l.b16 %v229
  %v731 = vunpack.c.l.b16 %v230
  %v732 = vunpack.c.l.b16 %v231
  %v733 = vunpack.c.l.b16 %v232
  %v734 = vunpack.c.l.b16 %v233
  %v735 = vunpack.c.l.b16 %v234
  %v736 = vunpack.c.l.b16 %v235
  %v737 = vunpack.c.l.b16 %v236
  %v738 = vunpack.c.l.b16 %v237
  %v739 = vunpack.c.l.b16 %v238
  %v740 = vunpack.c.l.b16 %v239
  %v741 = vunpack.c.l.b16 %v240
  %v742 = vunpack.c.l.b16 %v241
  %v743 = vunpack.c.l.b16 %v242
  %v744 = vunpack.c.l.b16 %v243
  %v745 = vunpack.c.l.b16 %v244
  %v746 = vpack.c.b16 %v523, %v522
  %v747 = vpack.c.b16 %v525, %v524
  %v748 = vpack.c.b16 %v527, %v526
  %v749 = vpack.c.b16 %v529, %v528
  %v750 = vpack.c.b16 %v531, %v530
  %v751 = vpack.c.b16 %v533, %v532
  %v752 = vpack.c.b16 %v535, %v534
  %v753 = vpack.c.b16 %v537, %v536
  %v754 = vpack.c.b16 %v539, %v538
  %v755 = vpack.c.b16 %v541, %v540
  %v756 = vpack.c.b16 %v543, %v542
  %v757 = vpack.c.b16 %v545, %v544
  %v758 = vpack.c.b16 %v547, %v546
  %v759 = vpack.c.b16 %v549, %v548
  %v760 = vpack.c.b16 %v551, %v550
  %v761 = vpack.c.b16 %v553, %v552
  %v762 = vpack.c.b16 %v555, %v554
  %v763 = vpack.c.b16 %v557, %v556
  %v764 = vpack.c.b16 %v559, %v558
  %v765 = vpack.c.b16 %v561, %v560
  %v766 = vpack.c.b16 %v563, %v562
  %v767 = vpack.c.b16 %v565, %v564
  %v768 = vpack.c.b16 %v567, %v566
  %v769 = vpack.c.b16 %v569, %v568
  %v770 = vpack.c.b16 %v571, %v570
  %v771 = vpack.c.b16 %v573, %v572
  %v772 = vpack.c.b16 %v575, %v574
  %v773 = vpack.c.b16 %v577, %v576
  %v774 = vpack.c.b16 %v579, %v578
  %v775 = vpack.c.b16 %v581, %v580
  %v776 = vpack.c.b16 %v583, %v582
  %v777 = vpack.c.b16 %v585, %v584
  %v778 = vpack.c.b16 %v587, %v586
  %v779 = vpack.c.b16 %v589, %v588
  %v780 = vpack.c.b16 %v591, %v590
  %v781 = vpack.c.b16 %v593, %v592
  %v782 = vpack.c.b16 %v595, %v594
  %v783 = vpack.c.b16 %v597, %v596
  %v784 = vpack.c.b16 %v599, %v598
  %v785 = vpack.c.b16 %v601, %v600
  %v786 = vpack.c.b16 %v603, %v602
  %v787 = vpack.c.b16 %v605, %v604
  %v788 = vpack.c.b16 %v607, %v606
  %v789 = vpack.c.b16 %v609, %v608
  %v790 = vpack.c.b16 %v611, %v610
  %v791 = vpack.c.b16 %v613, %v612
  %v792 = vpack.c.b16 %v615, %v614
  %v793 = vpack.c.b16 %v617, %v616
  %v794 = vpack.c.b16 %v619, %v618
  %v795 = vpack.c.b16 %v621, %v620
  %v796 = vpack.c.b16 %v623, %v622
  %v797 = vpack.c.b16 %v625, %v624
  %v798 = vpack.c.b16 %v627, %v626
  %v799 = vpack.c.b16 %v629, %v628
  %v800 = vpack.c.b16 %v631, %v630
  %v801 = vpack.c.b16 %v633, %v632
  %v802 = vpack.c.b16 %v635, %v634
  %v803 = vpack.c.b16 %v637, %v636
  %v804 = vpack.c.b16 %v639, %v638
  %v805 = vpack.c.b16 %v641, %v640
  %v806 = vpack.c.b16 %v643, %v642
  %v807 = vpack.c.b16 %v645, %v644
  %v808 = vpack.c.b16 %v647, %v646
  %v809 = vpack.c.b16 %v649, %v648
  %v810 = vpack.c.b16 %v651, %v650
  %v811 = vpack.c.b16 %v653, %v652
  %v812 = vpack.c.b16 %v655, %v654
  %v813 = vpack.c.b16 %v657, %v656
  %v814 = vpack.c.b16 %v659, %v658
  %v815 = vpack.c.b16 %v661, %v660
  %v816 = vpack.c.b16 %v663, %v662
  %v817 = vpack.c.b16 %v665, %v664
  %v818 = vpack.c.b16 %v667, %v666
  %v819 = vpack.c.b16 %v669, %v668
  %v820 = vpack.c.b16 %v671, %v670
  %v821 = vpack.c.b16 %v673, %v672
  %v822 = vpack.c.b16 %v675, %v674
  %v823 = vpack.c.b16 %v677, %v676
  %v824 = vpack.c.b16 %v679, %v678
  %v825 = vpack.c.b16 %v681, %v680
  %v826 = vpack.c.b16 %v683, %v682
  %v827 = vpack.c.b16 %v685, %v684
  %v828 = vpack.c.b16 %v687, %v686
  %v829 = vpack.c.b16 %v689, %v688
  %v830 = vpack.c.b16 %v691, %v690
  %v831 = vpack.c.b16 %v693, %v692
  %v832 = vpack.c.b16 %v695, %v694
  %v833 = vpack.c.b16 %v697, %v696
  %v834 = vpack.c.b16 %v699, %v698
  %v835 = vpack.c.b16 %v701, %v700
  %v836 = vpack.c.b16 %v703, %v702
  %v837 = vpack.c.b16 %v705, %v704
  %v838 = vpack.c.b16 %v707, %v706
  %v839 = vpack.c.b16 %v709, %v708
  %v840 = vpack.c.b16 %v711, %v710
  %v841 = vpack.c.b16 %v713, %v712
  %v842 = vpack.c.b16 %v715, %v714
  %v843 = vpack.c.b16 %v717, %v716
  %v844 = vpack.c.b16 %v719, %v718
  %v845 = vpack.c.b16 %v721, %v720
  %v846 = vpack.c.b16 %v723, %v722
  %v847 = vpack.c.b16 %v725, %v724
  %v848 = vpack.c.b16 %v727, %v726
  %v849 = vpack.c.b16 %v729, %v728
  %v850 = vpack.c.b16 %v731, %v730
  %v851 = vpack.c.b16 %v733, %v732
  %v852 = vpack.c.b16 %v735, %v734
  %v853 = vpack.c.b16 %v737, %v736
  %v854 = vpack.c.b16 %v739, %v738
  %v855 = vpack.c.b16 %v741, %v740
  %v856 = vpack.c.b16 %v743, %v742
  %v857 = vpack.c.b16 %v745, %v744
  %970 = vmatpush.bf16.msra.mxu0 %v753
  %971 = vmatpush.bf16.msra.mxu0 %v752
  %972 = vmatpush.bf16.msra.mxu0 %v751
  %973 = vmatpush.bf16.msra.mxu0 %v750
  %974 = vmatpush.bf16.msra.mxu0 %v749
  %975 = vmatpush.bf16.msra.mxu0 %v748
  %976 = vmatpush.bf16.msra.mxu0 %v747
  %977 = vmatpush.bf16.msra.mxu0 %v746
  %978 = vmatmul.bf16.gmra.mxu0 %v270
  %v979 = vpop.f32.mrf.mxu0
  %v980 = vadd.f32 %v247, %v979
  %v981 = vpop.f32.mrf.mxu0
  %982 = vdwg.mxu0
  %983 = vmatpush.bf16.msra.mxu0 %v761
  %984 = vmatpush.bf16.msra.mxu0 %v760
  %985 = vmatpush.bf16.msra.mxu0 %v759
  %986 = vmatpush.bf16.msra.mxu0 %v758
  %987 = vmatpush.bf16.msra.mxu0 %v757
  %988 = vmatpush.bf16.msra.mxu0 %v756
  %989 = vmatpush.bf16.msra.mxu0 %v755
  %990 = vmatpush.bf16.msra.mxu0 %v754
  %991 = vmatmul.bf16.gmra.mxu0 %v271
  %v992 = vpop.f32.mrf.mxu0
  %v993 = vadd.f32 %v980, %v992
  %v994 = vpop.f32.mrf.mxu0
  %995 = vdwg.mxu0
  %996 = vmatpush.bf16.msra.mxu0 %v769
  %997 = vmatpush.bf16.msra.mxu0 %v768
  %998 = vmatpush.bf16.msra.mxu0 %v767
  %999 = vmatpush.bf16.msra.mxu0 %v766
  %1000 = vmatpush.bf16.msra.mxu0 %v765
  %1001 = vmatpush.bf16.msra.mxu0 %v764
  %1002 = vmatpush.bf16.msra.mxu0 %v763
  %1003 = vmatpush.bf16.msra.mxu0 %v762
  %1004 = vmatmul.bf16.gmra.mxu0 %v272
  %v1005 = vpop.f32.mrf.mxu0
  %v1006 = vadd.f32 %v993, %v1005
  %v1007 = vpop.f32.mrf.mxu0
  %1008 = vdwg.mxu0
  %1009 = vmatpush.bf16.msra.mxu0 %v777
  %1010 = vmatpush.bf16.msra.mxu0 %v776
  %1011 = vmatpush.bf16.msra.mxu0 %v775
  %1012 = vmatpush.bf16.msra.mxu0 %v774
  %1013 = vmatpush.bf16.msra.mxu0 %v773
  %1014 = vmatpush.bf16.msra.mxu0 %v772
  %1015 = vmatpush.bf16.msra.mxu0 %v771
  %1016 = vmatpush.bf16.msra.mxu0 %v770
  %1017 = vmatmul.bf16.gmra.mxu0 %v273
  %v1018 = vpop.f32.mrf.mxu0
  %v1019 = vadd.f32 %v1006, %v1018
  %v1020 = vpop.f32.mrf.mxu0
  %1021 = vdwg.mxu0
  %1022 = vmatpush.bf16.msra.mxu0 %v785
  %1023 = vmatpush.bf16.msra.mxu0 %v784
  %1024 = vmatpush.bf16.msra.mxu0 %v783
  %1025 = vmatpush.bf16.msra.mxu0 %v782
  %1026 = vmatpush.bf16.msra.mxu0 %v781
  %1027 = vmatpush.bf16.msra.mxu0 %v780
  %1028 = vmatpush.bf16.msra.mxu0 %v779
  %1029 = vmatpush.bf16.msra.mxu0 %v778
  %1030 = vmatmul.bf16.gmra.mxu0 %v274
  %v1031 = vpop.f32.mrf.mxu0
  %v1032 = vadd.f32 %v1019, %v1031
  %v1033 = vpop.f32.mrf.mxu0
  %1034 = vdwg.mxu0
  %1035 = vmatpush.bf16.msra.mxu0 %v793
  %1036 = vmatpush.bf16.msra.mxu0 %v792
  %1037 = vmatpush.bf16.msra.mxu0 %v791
  %1038 = vmatpush.bf16.msra.mxu0 %v790
  %1039 = vmatpush.bf16.msra.mxu0 %v789
  %1040 = vmatpush.bf16.msra.mxu0 %v788
  %1041 = vmatpush.bf16.msra.mxu0 %v787
  %1042 = vmatpush.bf16.msra.mxu0 %v786
  %1043 = vmatmul.bf16.gmra.mxu0 %v275
  %v1044 = vpop.f32.mrf.mxu0
  %v1045 = vadd.f32 %v1032, %v1044
  %v1046 = vpop.f32.mrf.mxu0
  %1047 = vdwg.mxu0
  %1048 = vmatpush.bf16.msra.mxu0 %v801
  %1049 = vmatpush.bf16.msra.mxu0 %v800
  %1050 = vmatpush.bf16.msra.mxu0 %v799
  %1051 = vmatpush.bf16.msra.mxu0 %v798
  %1052 = vmatpush.bf16.msra.mxu0 %v797
  %1053 = vmatpush.bf16.msra.mxu0 %v796
  %1054 = vmatpush.bf16.msra.mxu0 %v795
  %1055 = vmatpush.bf16.msra.mxu0 %v794
  %1056 = vmatmul.bf16.gmra.mxu0 %v276
  %v1057 = vpop.f32.mrf.mxu0
  %v1058 = vadd.f32 %v1045, %v1057
  %v1059 = vpop.f32.mrf.mxu0
  %1060 = vdwg.mxu0
  %1061 = vmatpush.bf16.msra.mxu0 %v809
  %1062 = vmatpush.bf16.msra.mxu0 %v808
  %1063 = vmatpush.bf16.msra.mxu0 %v807
  %1064 = vmatpush.bf16.msra.mxu0 %v806
  %1065 = vmatpush.bf16.msra.mxu0 %v805
  %1066 = vmatpush.bf16.msra.mxu0 %v804
  %1067 = vmatpush.bf16.msra.mxu0 %v803
  %1068 = vmatpush.bf16.msra.mxu0 %v802
  %1069 = vmatmul.bf16.gmra.mxu0 %v277
  %v1070 = vpop.f32.mrf.mxu0
  %v1071 = vadd.f32 %v1058, %v1070
  %v1072 = vpop.f32.mrf.mxu0
  %1073 = vdwg.mxu0
  %1074 = vmatpush.bf16.msra.mxu0 %v817
  %1075 = vmatpush.bf16.msra.mxu0 %v816
  %1076 = vmatpush.bf16.msra.mxu0 %v815
  %1077 = vmatpush.bf16.msra.mxu0 %v814
  %1078 = vmatpush.bf16.msra.mxu0 %v813
  %1079 = vmatpush.bf16.msra.mxu0 %v812
  %1080 = vmatpush.bf16.msra.mxu0 %v811
  %1081 = vmatpush.bf16.msra.mxu0 %v810
  %1082 = vmatmul.bf16.gmra.mxu0 %v278
  %v1083 = vpop.f32.mrf.mxu0
  %v1084 = vadd.f32 %v1071, %v1083
  %v1085 = vpop.f32.mrf.mxu0
  %1086 = vdwg.mxu0
  %1087 = vmatpush.bf16.msra.mxu0 %v825
  %1088 = vmatpush.bf16.msra.mxu0 %v824
  %1089 = vmatpush.bf16.msra.mxu0 %v823
  %1090 = vmatpush.bf16.msra.mxu0 %v822
  %1091 = vmatpush.bf16.msra.mxu0 %v821
  %1092 = vmatpush.bf16.msra.mxu0 %v820
  %1093 = vmatpush.bf16.msra.mxu0 %v819
  %1094 = vmatpush.bf16.msra.mxu0 %v818
  %1095 = vmatmul.bf16.gmra.mxu0 %v279
  %v1096 = vpop.f32.mrf.mxu0
  %v1097 = vadd.f32 %v1084, %v1096
  %v1098 = vpop.f32.mrf.mxu0
  %1099 = vdwg.mxu0
  %1100 = vmatpush.bf16.msra.mxu0 %v833
  %1101 = vmatpush.bf16.msra.mxu0 %v832
  %1102 = vmatpush.bf16.msra.mxu0 %v831
  %1103 = vmatpush.bf16.msra.mxu0 %v830
  %1104 = vmatpush.bf16.msra.mxu0 %v829
  %1105 = vmatpush.bf16.msra.mxu0 %v828
  %1106 = vmatpush.bf16.msra.mxu0 %v827
  %1107 = vmatpush.bf16.msra.mxu0 %v826
  %1108 = vmatmul.bf16.gmra.mxu0 %v280
  %v1109 = vpop.f32.mrf.mxu0
  %v1110 = vadd.f32 %v1097, %v1109
  %v1111 = vpop.f32.mrf.mxu0
  %1112 = vdwg.mxu0
  %1113 = vmatpush.bf16.msra.mxu0 %v841
  %1114 = vmatpush.bf16.msra.mxu0 %v840
  %1115 = vmatpush.bf16.msra.mxu0 %v839
  %1116 = vmatpush.bf16.msra.mxu0 %v838
  %1117 = vmatpush.bf16.msra.mxu0 %v837
  %1118 = vmatpush.bf16.msra.mxu0 %v836
  %1119 = vmatpush.bf16.msra.mxu0 %v835
  %1120 = vmatpush.bf16.msra.mxu0 %v834
  %1121 = vmatmul.bf16.gmra.mxu0 %v281
  %v1122 = vpop.f32.mrf.mxu0
  %v1123 = vadd.f32 %v1110, %v1122
  %v1124 = vpop.f32.mrf.mxu0
  %1125 = vdwg.mxu0
  %1126 = vmatpush.bf16.msra.mxu0 %v849
  %1127 = vmatpush.bf16.msra.mxu0 %v848
  %1128 = vmatpush.bf16.msra.mxu0 %v847
  %1129 = vmatpush.bf16.msra.mxu0 %v846
  %1130 = vmatpush.bf16.msra.mxu0 %v845
  %1131 = vmatpush.bf16.msra.mxu0 %v844
  %1132 = vmatpush.bf16.msra.mxu0 %v843
  %1133 = vmatpush.bf16.msra.mxu0 %v842
  %1134 = vmatmul.bf16.gmra.mxu0 %v282
  %v1135 = vpop.f32.mrf.mxu0
  %v1136 = vadd.f32 %v1123, %v1135
  %v1137 = vpop.f32.mrf.mxu0
  %1138 = vdwg.mxu0
  %1139 = vmatpush.bf16.msra.mxu0 %v857
  %1140 = vmatpush.bf16.msra.mxu0 %v856
  %1141 = vmatpush.bf16.msra.mxu0 %v855
  %1142 = vmatpush.bf16.msra.mxu0 %v854
  %1143 = vmatpush.bf16.msra.mxu0 %v853
  %1144 = vmatpush.bf16.msra.mxu0 %v852
  %1145 = vmatpush.bf16.msra.mxu0 %v851
  %1146 = vmatpush.bf16.msra.mxu0 %v850
  %1147 = vmatmul.bf16.gmra.mxu0 %v283
  %v1148 = vpop.f32.mrf.mxu0
  %v1149 = vadd.f32 %v1136, %v1148
  %v1150 = vpop.f32.mrf.mxu0
  %1151 = vdwg.mxu0
  %v1152 = vmax.f32 %v1149, 0.0
  %1153 = vst [vmem:[%s3] sm:$0xff] %v1152
  // Predicated region
  $region14: #{resnet_forward.20} parent=0 // pred_check
    _
  $region15: #{resnet_forward.20} parent=0 // pred_check_branch
    %1155 = sbr.rel (0) target = $region17
  $region16: #{resnet_forward.20} parent=0 // pred_region
    _
  $region17: #{resnet_forward.20} parent=0 // pred_fallthru
    _
  // Predicated region
  $region18: #{resnet_forward.20} parent=0 // pred_check
    _
  $region19: #{resnet_forward.20} parent=0 // pred_check_branch
    %1157 = sbr.rel (0) target = $region21
  $region20: #{resnet_forward.20} parent=0 // pred_region
    _
  $region21: #{resnet_forward.20} parent=0 // pred_fallthru
    _

// kernel: resnet_forward.23
$region0: #{resnet_forward.23}
  #allocation0 [shape = 'u32[]', space=smem, size = 0x4, offset = 0x4, fixed_abs, tag = 'smem constant byte address 0x4 - core index']
  #allocation1 [shape = 'u32[72,128]{1,0:T(1,128)}', space=vmem, size = 0x9000, scoped, tag = 'internal scratch']
  %s0 = inlined_call_operand.vmem [shape: bf16[8,128], index: 0, kind: input, shape index: {}]
  %s1 = inlined_call_operand.vmem [shape: bf16[128,256], index: 1, kind: input, shape index: {}]
  %s2 = inlined_call_operand.vmem [shape: f32[1,256], index: 2, kind: input, shape index: {}]
  %s3 = inlined_call_operand.vmem [shape: f32[8,256], index: 3, kind: output, shape index: {}]
  %s4 = sld [smem:[#allocation0]]
  $region22: #{resnet_forward.23} parent=0
    _
  %s6 = ssub.s32 1, %s4
  %s7 = scalar_select 0, %s6, %s4
  // Predicated region
  $region2: #{resnet_forward.23} parent=0 // pred_check
    _
  $region3: #{resnet_forward.23} parent=0 // pred_check_branch
    %9 = sbr.rel (0) target = $region5
  $region4: #{resnet_forward.23} parent=0 // pred_region
    _
  $region5: #{resnet_forward.23} parent=0 // pred_fallthru
    _
  // Predicated region
  $region6: #{resnet_forward.23} parent=0 // pred_check
    _
  $region7: #{resnet_forward.23} parent=0 // pred_check_branch
    %11 = sbr.rel (0) target = $region9
  $region8: #{resnet_forward.23} parent=0 // pred_region
    _
  $region9: #{resnet_forward.23} parent=0 // pred_fallthru
    _
  // Predicated region
  $region10: #{resnet_forward.23} parent=0 // pred_check
    _
  $region11: #{resnet_forward.23} parent=0 // pred_check_branch
    %13 = sbr.rel (0) target = $region13
  $region12: #{resnet_forward.23} parent=0 // pred_region
    _
  $region13: #{resnet_forward.23} parent=0 // pred_fallthru
    _
  %v14 = vld [vmem:[%s0] sm:$0xf]
  %v15 = vld [vmem:[%s1] sm:$0xff]
  %v16 = vld [vmem:[%s1 + $0x8] sm:$0xff]
  %v17 = vld [vmem:[%s1 + $0x10] sm:$0xff]
  %v18 = vld [vmem:[%s1 + $0x18] sm:$0xff]
  %v19 = vld [vmem:[%s1 + $0x20] sm:$0xff]
  %v20 = vld [vmem:[%s1 + $0x28] sm:$0xff]
  %v21 = vld [vmem:[%s1 + $0x30] sm:$0xff]
  %v22 = vld [vmem:[%s1 + $0x38] sm:$0xff]
  %v23 = vld [vmem:[%s1 + $0x40] sm:$0xff]
  %v24 = vld [vmem:[%s1 + $0x48] sm:$0xff]
  %v25 = vld [vmem:[%s1 + $0x50] sm:$0xff]
  %v26 = vld [vmem:[%s1 + $0x58] sm:$0xff]
  %v27 = vld [vmem:[%s1 + $0x60] sm:$0xff]
  %v28 = vld [vmem:[%s1 + $0x68] sm:$0xff]
  %v29 = vld [vmem:[%s1 + $0x70] sm:$0xff]
  %v30 = vld [vmem:[%s1 + $0x78] sm:$0xff]
  %v31 = vld [vmem:[%s2] sm:$0x3]
  %v33 = vperm.slane %v31, 0
  %v34 = vperm.slane %v31, 1
  %v53 = vunpack.c.l.b16 %v15
  %v54 = vunpack.c.h.b16 %v15
  %v55 = vunpack.c.l.b16 %v16
  %v56 = vunpack.c.h.b16 %v16
  %v57 = vunpack.c.l.b16 %v17
  %v58 = vunpack.c.h.b16 %v17
  %v59 = vunpack.c.l.b16 %v18
  %v60 = vunpack.c.h.b16 %v18
  %v61 = vunpack.c.l.b16 %v19
  %v62 = vunpack.c.h.b16 %v19
  %v63 = vunpack.c.l.b16 %v20
  %v64 = vunpack.c.h.b16 %v20
  %v65 = vunpack.c.l.b16 %v21
  %v66 = vunpack.c.h.b16 %v21
  %v67 = vunpack.c.l.b16 %v22
  %v68 = vunpack.c.h.b16 %v22
  %v69 = vunpack.c.l.b16 %v23
  %v70 = vunpack.c.h.b16 %v23
  %v71 = vunpack.c.l.b16 %v24
  %v72 = vunpack.c.h.b16 %v24
  %v73 = vunpack.c.l.b16 %v25
  %v74 = vunpack.c.h.b16 %v25
  %v75 = vunpack.c.l.b16 %v26
  %v76 = vunpack.c.h.b16 %v26
  %v77 = vunpack.c.l.b16 %v27
  %v78 = vunpack.c.h.b16 %v27
  %v79 = vunpack.c.l.b16 %v28
  %v80 = vunpack.c.h.b16 %v28
  %v81 = vunpack.c.l.b16 %v29
  %v82 = vunpack.c.h.b16 %v29
  %v83 = vunpack.c.l.b16 %v30
  %v84 = vunpack.c.h.b16 %v30
  %v85 = vpack.c.b16 %v55, %v53
  %v86 = vpack.c.b16 %v56, %v54
  %v87 = vpack.c.b16 %v59, %v57
  %v88 = vpack.c.b16 %v60, %v58
  %v89 = vpack.c.b16 %v63, %v61
  %v90 = vpack.c.b16 %v64, %v62
  %v91 = vpack.c.b16 %v67, %v65
  %v92 = vpack.c.b16 %v68, %v66
  %v93 = vpack.c.b16 %v71, %v69
  %v94 = vpack.c.b16 %v72, %v70
  %v95 = vpack.c.b16 %v75, %v73
  %v96 = vpack.c.b16 %v76, %v74
  %v97 = vpack.c.b16 %v79, %v77
  %v98 = vpack.c.b16 %v80, %v78
  %v99 = vpack.c.b16 %v83, %v81
  %v100 = vpack.c.b16 %v84, %v82
  %117 = vmatpush.bf16.msra.mxu0 %v99
  %118 = vmatpush.bf16.msra.mxu0 %v97
  %119 = vmatpush.bf16.msra.mxu0 %v95
  %120 = vmatpush.bf16.msra.mxu0 %v93
  %121 = vmatpush.bf16.msra.mxu0 %v91
  %122 = vmatpush.bf16.msra.mxu0 %v89
  %123 = vmatpush.bf16.msra.mxu0 %v87
  %124 = vmatpush.bf16.msra.mxu0 %v85
  %125 = vmatmul.bf16.gmra.mxu0 %v14
  %v126 = vpop.f32.mrf.mxu0
  %v127 = vadd.f32 %v33, %v126
  %v128 = vpop.f32.mrf.mxu0
  %129 = vdwg.mxu0
  %130 = vmatpush.bf16.msra.mxu0 %v100
  %131 = vmatpush.bf16.msra.mxu0 %v98
  %132 = vmatpush.bf16.msra.mxu0 %v96
  %133 = vmatpush.bf16.msra.mxu0 %v94
  %134 = vmatpush.bf16.msra.mxu0 %v92
  %135 = vmatpush.bf16.msra.mxu0 %v90
  %136 = vmatpush.bf16.msra.mxu0 %v88
  %137 = vmatpush.bf16.msra.mxu0 %v86
  %138 = vmatmul.bf16.gmra.mxu0 %v14
  %v139 = vpop.f32.mrf.mxu0
  %v140 = vadd.f32 %v34, %v139
  %v141 = vpop.f32.mrf.mxu0
  %142 = vdwg.mxu0
  %v143 = vmax.f32 %v127, 0.0
  %v144 = vmax.f32 %v140, 0.0
  %145 = vst [vmem:[%s3] sm:$0xff] %v143
  %146 = vst [vmem:[%s3 + $0x8] sm:$0xff] %v144
  // Predicated region
  $region14: #{resnet_forward.23} parent=0 // pred_check
    _
  $region15: #{resnet_forward.23} parent=0 // pred_check_branch
    %148 = sbr.rel (0) target = $region17
  $region16: #{resnet_forward.23} parent=0 // pred_region
    _
  $region17: #{resnet_forward.23} parent=0 // pred_fallthru
    _
  // Predicated region
  $region18: #{resnet_forward.23} parent=0 // pred_check
    _
  $region19: #{resnet_forward.23} parent=0 // pred_check_branch
    %150 = sbr.rel (0) target = $region21
  $region20: #{resnet_forward.23} parent=0 // pred_region
    _
  $region21: #{resnet_forward.23} parent=0 // pred_fallthru
    _

// kernel: resnet_forward.24
$region0: #{resnet_forward.24}
  #allocation0 [shape = 'u32[]', space=smem, size = 0x4, offset = 0x4, fixed_abs, tag = 'smem constant byte address 0x4 - core index']
  #allocation1 [shape = 'u32[72,128]{1,0:T(1,128)}', space=vmem, size = 0x9000, scoped, tag = 'internal scratch']
  %s0 = inlined_call_operand.vmem [shape: bf16[8,128], index: 0, kind: input, shape index: {}]
  %s1 = inlined_call_operand.vmem [shape: bf16[128,256], index: 1, kind: input, shape index: {}]
  %s2 = inlined_call_operand.vmem [shape: f32[1,256], index: 2, kind: input, shape index: {}]
  %s3 = inlined_call_operand.vmem [shape: f32[8,256], index: 3, kind: output, shape index: {}]
  %s4 = sld [smem:[#allocation0]]
  $region22: #{resnet_forward.24} parent=0
    _
  %s6 = ssub.s32 1, %s4
  %s7 = scalar_select 0, %s6, %s4
  // Predicated region
  $region2: #{resnet_forward.24} parent=0 // pred_check
    _
  $region3: #{resnet_forward.24} parent=0 // pred_check_branch
    %9 = sbr.rel (0) target = $region5
  $region4: #{resnet_forward.24} parent=0 // pred_region
    _
  $region5: #{resnet_forward.24} parent=0 // pred_fallthru
    _
  // Predicated region
  $region6: #{resnet_forward.24} parent=0 // pred_check
    _
  $region7: #{resnet_forward.24} parent=0 // pred_check_branch
    %11 = sbr.rel (0) target = $region9
  $region8: #{resnet_forward.24} parent=0 // pred_region
    _
  $region9: #{resnet_forward.24} parent=0 // pred_fallthru
    _
  // Predicated region
  $region10: #{resnet_forward.24} parent=0 // pred_check
    _
  $region11: #{resnet_forward.24} parent=0 // pred_check_branch
    %13 = sbr.rel (0) target = $region13
  $region12: #{resnet_forward.24} parent=0 // pred_region
    _
  $region13: #{resnet_forward.24} parent=0 // pred_fallthru
    _
  %v14 = vld [vmem:[%s0] sm:$0xf]
  %v15 = vld [vmem:[%s1] sm:$0xff]
  %v16 = vld [vmem:[%s1 + $0x8] sm:$0xff]
  %v17 = vld [vmem:[%s1 + $0x10] sm:$0xff]
  %v18 = vld [vmem:[%s1 + $0x18] sm:$0xff]
  %v19 = vld [vmem:[%s1 + $0x20] sm:$0xff]
  %v20 = vld [vmem:[%s1 + $0x28] sm:$0xff]
  %v21 = vld [vmem:[%s1 + $0x30] sm:$0xff]
  %v22 = vld [vmem:[%s1 + $0x38] sm:$0xff]
  %v23 = vld [vmem:[%s1 + $0x40] sm:$0xff]
  %v24 = vld [vmem:[%s1 + $0x48] sm:$0xff]
  %v25 = vld [vmem:[%s1 + $0x50] sm:$0xff]
  %v26 = vld [vmem:[%s1 + $0x58] sm:$0xff]
  %v27 = vld [vmem:[%s1 + $0x60] sm:$0xff]
  %v28 = vld [vmem:[%s1 + $0x68] sm:$0xff]
  %v29 = vld [vmem:[%s1 + $0x70] sm:$0xff]
  %v30 = vld [vmem:[%s1 + $0x78] sm:$0xff]
  %v31 = vld [vmem:[%s2] sm:$0x3]
  %v33 = vperm.slane %v31, 0
  %v34 = vperm.slane %v31, 1
  %v53 = vunpack.c.l.b16 %v15
  %v54 = vunpack.c.h.b16 %v15
  %v55 = vunpack.c.l.b16 %v16
  %v56 = vunpack.c.h.b16 %v16
  %v57 = vunpack.c.l.b16 %v17
  %v58 = vunpack.c.h.b16 %v17
  %v59 = vunpack.c.l.b16 %v18
  %v60 = vunpack.c.h.b16 %v18
  %v61 = vunpack.c.l.b16 %v19
  %v62 = vunpack.c.h.b16 %v19
  %v63 = vunpack.c.l.b16 %v20
  %v64 = vunpack.c.h.b16 %v20
  %v65 = vunpack.c.l.b16 %v21
  %v66 = vunpack.c.h.b16 %v21
  %v67 = vunpack.c.l.b16 %v22
  %v68 = vunpack.c.h.b16 %v22
  %v69 = vunpack.c.l.b16 %v23
  %v70 = vunpack.c.h.b16 %v23
  %v71 = vunpack.c.l.b16 %v24
  %v72 = vunpack.c.h.b16 %v24
  %v73 = vunpack.c.l.b16 %v25
  %v74 = vunpack.c.h.b16 %v25
  %v75 = vunpack.c.l.b16 %v26
  %v76 = vunpack.c.h.b16 %v26
  %v77 = vunpack.c.l.b16 %v27
  %v78 = vunpack.c.h.b16 %v27
  %v79 = vunpack.c.l.b16 %v28
  %v80 = vunpack.c.h.b16 %v28
  %v81 = vunpack.c.l.b16 %v29
  %v82 = vunpack.c.h.b16 %v29
  %v83 = vunpack.c.l.b16 %v30
  %v84 = vunpack.c.h.b16 %v30
  %v85 = vpack.c.b16 %v55, %v53
  %v86 = vpack.c.b16 %v56, %v54
  %v87 = vpack.c.b16 %v59, %v57
  %v88 = vpack.c.b16 %v60, %v58
  %v89 = vpack.c.b16 %v63, %v61
  %v90 = vpack.c.b16 %v64, %v62
  %v91 = vpack.c.b16 %v67, %v65
  %v92 = vpack.c.b16 %v68, %v66
  %v93 = vpack.c.b16 %v71, %v69
  %v94 = vpack.c.b16 %v72, %v70
  %v95 = vpack.c.b16 %v75, %v73
  %v96 = vpack.c.b16 %v76, %v74
  %v97 = vpack.c.b16 %v79, %v77
  %v98 = vpack.c.b16 %v80, %v78
  %v99 = vpack.c.b16 %v83, %v81
  %v100 = vpack.c.b16 %v84, %v82
  %117 = vmatpush.bf16.msra.mxu0 %v99
  %118 = vmatpush.bf16.msra.mxu0 %v97
  %119 = vmatpush.bf16.msra.mxu0 %v95
  %120 = vmatpush.bf16.msra.mxu0 %v93
  %121 = vmatpush.bf16.msra.mxu0 %v91
  %122 = vmatpush.bf16.msra.mxu0 %v89
  %123 = vmatpush.bf16.msra.mxu0 %v87
  %124 = vmatpush.bf16.msra.mxu0 %v85
  %125 = vmatmul.bf16.gmra.mxu0 %v14
  %v126 = vpop.f32.mrf.mxu0
  %v127 = vadd.f32 %v33, %v126
  %v128 = vpop.f32.mrf.mxu0
  %129 = vdwg.mxu0
  %130 = vmatpush.bf16.msra.mxu0 %v100
  %131 = vmatpush.bf16.msra.mxu0 %v98
  %132 = vmatpush.bf16.msra.mxu0 %v96
  %133 = vmatpush.bf16.msra.mxu0 %v94
  %134 = vmatpush.bf16.msra.mxu0 %v92
  %135 = vmatpush.bf16.msra.mxu0 %v90
  %136 = vmatpush.bf16.msra.mxu0 %v88
  %137 = vmatpush.bf16.msra.mxu0 %v86
  %138 = vmatmul.bf16.gmra.mxu0 %v14
  %v139 = vpop.f32.mrf.mxu0
  %v140 = vadd.f32 %v34, %v139
  %v141 = vpop.f32.mrf.mxu0
  %142 = vdwg.mxu0
  %143 = vst [vmem:[%s3] sm:$0xff] %v127
  %144 = vst [vmem:[%s3 + $0x8] sm:$0xff] %v140
  // Predicated region
  $region14: #{resnet_forward.24} parent=0 // pred_check
    _
  $region15: #{resnet_forward.24} parent=0 // pred_check_branch
    %146 = sbr.rel (0) target = $region17
  $region16: #{resnet_forward.24} parent=0 // pred_region
    _
  $region17: #{resnet_forward.24} parent=0 // pred_fallthru
    _
  // Predicated region
  $region18: #{resnet_forward.24} parent=0 // pred_check
    _
  $region19: #{resnet_forward.24} parent=0 // pred_check_branch
    %148 = sbr.rel (0) target = $region21
  $region20: #{resnet_forward.24} parent=0 // pred_region
    _
  $region21: #{resnet_forward.24} parent=0 // pred_fallthru
    _

// kernel: resnet_forward.26
$region0: #{resnet_forward.26}
  #allocation0 [shape = 'u32[]', space=smem, size = 0x4, offset = 0x4, fixed_abs, tag = 'smem constant byte address 0x4 - core index']
  #allocation1 [shape = 'u32[72,128]{1,0:T(1,128)}', space=vmem, size = 0x9000, scoped, tag = 'internal scratch']
  %s0 = inlined_call_operand.vmem [shape: bf16[8,256], index: 0, kind: input, shape index: {}]
  %s1 = inlined_call_operand.vmem [shape: bf16[256,512], index: 1, kind: input, shape index: {}]
  %s2 = inlined_call_operand.vmem [shape: f32[1,512], index: 2, kind: input, shape index: {}]
  %s3 = inlined_call_operand.vmem [shape: f32[8,512], index: 3, kind: output, shape index: {}]
  %s4 = sld [smem:[#allocation0]]
  $region83: #{resnet_forward.26} parent=0
    _
  %s6 = ssub.s32 1, %s4
  %s7 = scalar_select 0, %s6, %s4
  $region1: #{resnet_forward.26} parent=0
    #allocation2 [shape = 'u8[262144]{0}', space=vmem, size = 0x40000, scoped, tag = 'input window, operand 1']
    loop: start=0, step=1, limit=4
    $region2: #{resnet_forward.26} parent=1 // loop_pre_header
      _
    $region3: #{resnet_forward.26} parent=1 // loop_header
      %s9 = sphi 0, %s13
      %p10 = scmp.ge.s32.totalorder %s9, 4
      %s16 = sphi 0, %s28
      %s17 = sphi 0, %s24
      %s18 = sphi 0, %s16
      %s19 = sphi 0, %s17
      %s20 = sphi 0, %s18
      %s21 = sphi 0, %s19
      %s31 = sphi 0, %s33
      %s34 = sphi 0, %s31
      %s35 = sphi 0, %s34
      %s51 = sphi 0, %s35
      %s57 = sphi 0, %s59
      %s60 = sphi 0, %s57
      %s61 = sphi 0, %s60
      %s77 = sphi 0, %s61
      %s83 = sphi 0, %s85
      %s86 = sphi 0, %s83
      %s87 = sphi 0, %s86
      %s103 = sphi 0, %s87
      %s111 = sphi 0, %s113
      %s114 = sphi 0, %s111
      %s115 = sphi 0, %s114
      %s131 = sphi 0, %s115
    $region4: #{resnet_forward.26} parent=1 // loop_header_branch
      %12 = sbr.rel (%p10) target = $region8
    $region5: #{resnet_forward.26} parent=1 // loop_body
      %s14 = ssub.s32 %s9, 1
      %s15 = ssub.s32 %s9, 2
      %s22 = sadd.s32 1, %s17
      %p23 = scmp.ge.s32.totalorder %s22, 2
      %s24 = scalar_select %p23, 0, %s22
      %s25 = sadd.s32 1, %s16
      %s26 = scalar_select %p23, %s25, %s16
      %p27 = scmp.ge.s32.totalorder %s26, 1
      %s28 = scalar_select %p27, 0, %s26
      %s29 = ssub.s32 %s16, %s28
      %p30 = scmp.eq.s32.totalorder %s29, 0
      %s32 = sadd.s32 %s31, 1
      %s33 = scalar_select %p30, %s31, %s32
      %p36 = pneg %p30
      %p37 = scmp.eq.s32.totalorder %s9, 1
      %p38 = por %p36, %p37
      %p39 = scmp.ne.s32.totalorder %s31, %s34
      %p40 = scmp.eq.s32.totalorder %s9, 0
      %p41 = por %p39, %p40
      %p42 = scmp.ne.s32.totalorder %s31, %s34
      %p43 = scmp.eq.s32.totalorder %s14, 1
      %p44 = por %p42, %p43
      %p45 = scmp.ne.s32.totalorder %s34, %s35
      %p46 = scmp.eq.s32.totalorder %s14, 0
      %p47 = por %p45, %p46
      %p48 = scmp.ne.s32.totalorder %s34, %s35
      %p49 = scmp.eq.s32.totalorder %s15, 1
      %p50 = por %p48, %p49
      %p52 = scmp.ne.s32.totalorder %s35, %s51
      %p53 = scmp.eq.s32.totalorder %s15, 0
      %p54 = por %p52, %p53
      %s55 = ssub.s32 %s17, %s24
      %p56 = scmp.eq.s32.totalorder %s55, 0
      %s58 = sadd.s32 %s57, 1
      %s59 = scalar_select %p56, %s57, %s58
      %p62 = pneg %p56
      %p63 = scmp.eq.s32.totalorder %s9, 1
      %p64 = por %p62, %p63
      %p65 = scmp.ne.s32.totalorder %s57, %s60
      %p66 = scmp.eq.s32.totalorder %s9, 0
      %p67 = por %p65, %p66
      %p68 = scmp.ne.s32.totalorder %s57, %s60
      %p69 = scmp.eq.s32.totalorder %s14, 1
      %p70 = por %p68, %p69
      %p71 = scmp.ne.s32.totalorder %s60, %s61
      %p72 = scmp.eq.s32.totalorder %s14, 0
      %p73 = por %p71, %p72
      %p74 = scmp.ne.s32.totalorder %s60, %s61
      %p75 = scmp.eq.s32.totalorder %s15, 1
      %p76 = por %p74, %p75
      %p78 = scmp.ne.s32.totalorder %s61, %s77
      %p79 = scmp.eq.s32.totalorder %s15, 0
      %p80 = por %p78, %p79
      %s81 = ssub.s32 %s17, %s24
      %p82 = scmp.eq.s32.totalorder %s81, 0
      %s84 = sadd.s32 %s83, 1
      %s85 = scalar_select %p82, %s83, %s84
      %p88 = pneg %p82
      %p89 = scmp.eq.s32.totalorder %s9, 1
      %p90 = por %p88, %p89
      %p91 = scmp.ne.s32.totalorder %s83, %s86
      %p92 = scmp.eq.s32.totalorder %s9, 0
      %p93 = por %p91, %p92
      %p94 = scmp.ne.s32.totalorder %s83, %s86
      %p95 = scmp.eq.s32.totalorder %s14, 1
      %p96 = por %p94, %p95
      %p97 = scmp.ne.s32.totalorder %s86, %s87
      %p98 = scmp.eq.s32.totalorder %s14, 0
      %p99 = por %p97, %p98
      %p100 = scmp.ne.s32.totalorder %s86, %s87
      %p101 = scmp.eq.s32.totalorder %s15, 1
      %p102 = por %p100, %p101
      %p104 = scmp.ne.s32.totalorder %s87, %s103
      %p105 = scmp.eq.s32.totalorder %s15, 0
      %p106 = por %p104, %p105
      %s107 = ssub.s32 %s16, %s28
      %s108 = ssub.s32 %s17, %s24
      %s109 = sor.u32 %s107, %s108
      %p110 = scmp.eq.s32.totalorder %s109, 0
      %s112 = sadd.s32 %s111, 1
      %s113 = scalar_select %p110, %s111, %s112
      %p116 = pneg %p110
      %p117 = scmp.eq.s32.totalorder %s9, 1
      %p118 = por %p116, %p117
      %p119 = scmp.ne.s32.totalorder %s111, %s114
      %p120 = scmp.eq.s32.totalorder %s9, 0
      %p121 = por %p119, %p120
      %p122 = scmp.ne.s32.totalorder %s111, %s114
      %p123 = scmp.eq.s32.totalorder %s14, 1
      %p124 = por %p122, %p123
      %p125 = scmp.ne.s32.totalorder %s114, %s115
      %p126 = scmp.eq.s32.totalorder %s14, 0
      %p127 = por %p125, %p126
      %p128 = scmp.ne.s32.totalorder %s114, %s115
      %p129 = scmp.eq.s32.totalorder %s15, 1
      %p130 = por %p128, %p129
      %p132 = scmp.ne.s32.totalorder %s115, %s131
      %p133 = scmp.eq.s32.totalorder %s15, 0
      %p134 = por %p132, %p133
      %p135 = scmp.le.s32.totalorder 1, %s9
      %p136 = scmp.lt.s32.totalorder %s9, 3
      %p137 = pnand %p135, %p136
      %p138 = pneg %p137
      // Predicated region
      $region9: #{resnet_forward.26} parent=5 // pred_check
        _
      $region10: #{resnet_forward.26} parent=5 // pred_check_branch
        %140 = sbr.rel (%p137) target = $region12
      $region11: #{resnet_forward.26} parent=5 // pred_region
        %s141 = ssub.s32 %s9, 1
        // Predicated region
        $region13: #{resnet_forward.26} parent=11 // pred_check
          %p142 = pneg %p47
        $region14: #{resnet_forward.26} parent=11 // pred_check_branch
          %144 = sbr.rel (%p142) target = $region16
        $region15: #{resnet_forward.26} parent=11 // pred_region
          %p145 = scmp.lt.s32.totalorder %s18, 0
          %s146 = scalar_select %p145, %s18, 0
          %s147 = smul.addr %s146, 2
          %s148 = smul.addr %s147, 4
          %s149 = scalar_lea.vmem %s0, %s148
        $region16: #{resnet_forward.26} parent=11 // pred_fallthru
          _
      $region12: #{resnet_forward.26} parent=5 // pred_fallthru
        _
      %p150 = scmp.lt.s32.totalorder %s9, 2
      // Predicated region
      $region17: #{resnet_forward.26} parent=5 // pred_check
        %p151 = pneg %p150
      $region18: #{resnet_forward.26} parent=5 // pred_check_branch
        %153 = sbr.rel (%p151) target = $region20
      $region19: #{resnet_forward.26} parent=5 // pred_region
        // Predicated region
        $region21: #{resnet_forward.26} parent=19 // pred_check
          %p154 = pneg %p67
        $region22: #{resnet_forward.26} parent=19 // pred_check_branch
          %156 = sbr.rel (%p154) target = $region24
        $region23: #{resnet_forward.26} parent=19 // pred_region
          %s157 = sand.u32 %s57, 1
          %s158 = sand.u32 %s57, 1
          %s159 = smul.addr %s158, 256
          %s160 = scalar_lea.vmem [#allocation2], %s159
          %s161 = smul.u32 2, %s17
          %s162 = smul.addr %s161, 4
          %s163 = scalar_lea.vmem %s1, %s162
          // Predicated region
          $region25: #{resnet_forward.26} parent=23 // pred_check
            _
          $region26: #{resnet_forward.26} parent=23 // pred_check_branch
            %165 = sbr.rel (0) target = $region28
          $region27: #{resnet_forward.26} parent=23 // pred_region
            // Predicated region
            $region29: #{resnet_forward.26} parent=27 // pred_check
              _
            $region30: #{resnet_forward.26} parent=27 // pred_check_branch
              %167 = sbr.rel (0) target = $region32
            $region31: #{resnet_forward.26} parent=27 // pred_region
              // Predicated region
              $region44: #{resnet_forward.26} parent=31 // pred_check
                _
              $region45: #{resnet_forward.26} parent=31 // pred_check_branch
                %245 = sbr.rel (0) target = $region47
              $region46: #{resnet_forward.26} parent=31 // pred_region
                loop: start=0, step=1, limit=1
                $region48: #{resnet_forward.26} parent=46 // loop_pre_header
                  _
                $region49: #{resnet_forward.26} parent=46 // loop_header
                  %s247 = sphi 0, %s251
                  %p248 = scmp.ge.s32.totalorder %s247, 1
                  %s252 = sphi %s163, %s163
                  %s253 = sphi %s160, %s160
                $region50: #{resnet_forward.26} parent=46 // loop_header_branch
                  %250 = sbr.rel (%p248) target = $region54
                $region51: #{resnet_forward.26} parent=46 // loop_body
                  %v254 = vld [vmem:[%s252] sm:$0xff]
                  %255 = vst [vmem:[%s253] sm:$0xff] %v254
                  %v256 = vld [vmem:[%s252 + $0x10] sm:$0xff]
                  %257 = vst [vmem:[%s253 + $0x8] sm:$0xff] %v256
                  %v258 = vld [vmem:[%s252 + $0x20] sm:$0xff]
                  %259 = vst [vmem:[%s253 + $0x10] sm:$0xff] %v258
                  %v260 = vld [vmem:[%s252 + $0x30] sm:$0xff]
                  %261 = vst [vmem:[%s253 + $0x18] sm:$0xff] %v260
                  %v262 = vld [vmem:[%s252 + $0x40] sm:$0xff]
                  %263 = vst [vmem:[%s253 + $0x20] sm:$0xff] %v262
                  %v264 = vld [vmem:[%s252 + $0x50] sm:$0xff]
                  %265 = vst [vmem:[%s253 + $0x28] sm:$0xff] %v264
                  %v266 = vld [vmem:[%s252 + $0x60] sm:$0xff]
                  %267 = vst [vmem:[%s253 + $0x30] sm:$0xff] %v266
                  %v268 = vld [vmem:[%s252 + $0x70] sm:$0xff]
                  %269 = vst [vmem:[%s253 + $0x38] sm:$0xff] %v268
                  %v270 = vld [vmem:[%s252 + $0x80] sm:$0xff]
                  %271 = vst [vmem:[%s253 + $0x40] sm:$0xff] %v270
                  %v272 = vld [vmem:[%s252 + $0x90] sm:$0xff]
                  %273 = vst [vmem:[%s253 + $0x48] sm:$0xff] %v272
                  %v274 = vld [vmem:[%s252 + $0xa0] sm:$0xff]
                  %275 = vst [vmem:[%s253 + $0x50] sm:$0xff] %v274
                  %v276 = vld [vmem:[%s252 + $0xb0] sm:$0xff]
                  %277 = vst [vmem:[%s253 + $0x58] sm:$0xff] %v276
                  %v278 = vld [vmem:[%s252 + $0xc0] sm:$0xff]
                  %279 = vst [vmem:[%s253 + $0x60] sm:$0xff] %v278
                  %v280 = vld [vmem:[%s252 + $0xd0] sm:$0xff]
                  %281 = vst [vmem:[%s253 + $0x68] sm:$0xff] %v280
                  %v282 = vld [vmem:[%s252 + $0xe0] sm:$0xff]
                  %283 = vst [vmem:[%s253 + $0x70] sm:$0xff] %v282
                  %v284 = vld [vmem:[%s252 + $0xf0] sm:$0xff]
                  %285 = vst [vmem:[%s253 + $0x78] sm:$0xff] %v284
                  %v286 = vld [vmem:[%s252 + $0x100] sm:$0xff]
                  %287 = vst [vmem:[%s253 + $0x80] sm:$0xff] %v286
                  %v288 = vld [vmem:[%s252 + $0x110] sm:$0xff]
                  %289 = vst [vmem:[%s253 + $0x88] sm:$0xff] %v288
                  %v290 = vld [vmem:[%s252 + $0x120] sm:$0xff]
                  %291 = vst [vmem:[%s253 + $0x90] sm:$0xff] %v290
                  %v292 = vld [vmem:[%s252 + $0x130] sm:$0xff]
                  %293 = vst [vmem:[%s253 + $0x98] sm:$0xff] %v292
                  %v294 = vld [vmem:[%s252 + $0x140] sm:$0xff]
                  %295 = vst [vmem:[%s253 + $0xa0] sm:$0xff] %v294
                  %v296 = vld [vmem:[%s252 + $0x150] sm:$0xff]
                  %297 = vst [vmem:[%s253 + $0xa8] sm:$0xff] %v296
                  %v298 = vld [vmem:[%s252 + $0x160] sm:$0xff]
                  %299 = vst [vmem:[%s253 + $0xb0] sm:$0xff] %v298
                  %v300 = vld [vmem:[%s252 + $0x170] sm:$0xff]
                  %301 = vst [vmem:[%s253 + $0xb8] sm:$0xff] %v300
                  %v302 = vld [vmem:[%s252 + $0x180] sm:$0xff]
                  %303 = vst [vmem:[%s253 + $0xc0] sm:$0xff] %v302
                  %v304 = vld [vmem:[%s252 + $0x190] sm:$0xff]
                  %305 = vst [vmem:[%s253 + $0xc8] sm:$0xff] %v304
                  %v306 = vld [vmem:[%s252 + $0x1a0] sm:$0xff]
                  %307 = vst [vmem:[%s253 + $0xd0] sm:$0xff] %v306
                  %v308 = vld [vmem:[%s252 + $0x1b0] sm:$0xff]
                  %309 = vst [vmem:[%s253 + $0xd8] sm:$0xff] %v308
                  %v310 = vld [vmem:[%s252 + $0x1c0] sm:$0xff]
                  %311 = vst [vmem:[%s253 + $0xe0] sm:$0xff] %v310
                  %v312 = vld [vmem:[%s252 + $0x1d0] sm:$0xff]
                  %313 = vst [vmem:[%s253 + $0xe8] sm:$0xff] %v312
                  %v314 = vld [vmem:[%s252 + $0x1e0] sm:$0xff]
                  %315 = vst [vmem:[%s253 + $0xf0] sm:$0xff] %v314
                  %v316 = vld [vmem:[%s252 + $0x1f0] sm:$0xff]
                  %317 = vst [vmem:[%s253 + $0xf8] sm:$0xff] %v316
                $region52: #{resnet_forward.26} parent=46 // loop_footer
                  %s251 = sadd.s32 1, %s247
                $region53: #{resnet_forward.26} parent=46 // loop_footer_branch
                  %246 = sbr.rel target = $region49
                $region54: #{resnet_forward.26} parent=46 // loop_exit
                  _
              $region47: #{resnet_forward.26} parent=31 // pred_fallthru
                _
              // Predicated region
              $region55: #{resnet_forward.26} parent=31 // pred_check
                _
              $region56: #{resnet_forward.26} parent=31 // pred_check_branch
                %319 = sbr.rel target = $region58
              $region57: #{resnet_forward.26} parent=31 // pred_region
                _
              $region58: #{resnet_forward.26} parent=31 // pred_fallthru
                _
            $region32: #{resnet_forward.26} parent=27 // pred_fallthru
              _
            // Predicated region
            $region33: #{resnet_forward.26} parent=27 // pred_check
              _
            $region34: #{resnet_forward.26} parent=27 // pred_check_branch
              %169 = sbr.rel target = $region36
            $region35: #{resnet_forward.26} parent=27 // pred_region
              %s171 = ssub.s32 256, 1
              loop: start=0, step=1, limit=1
              $region37: #{resnet_forward.26} parent=35 // loop_pre_header
                _
              $region38: #{resnet_forward.26} parent=35 // loop_header
                %s173 = sphi 0, %s177
                %p174 = scmp.ge.s32.totalorder %s173, 1
                %s178 = sphi %s163, %s163
                %s179 = sphi %s160, %s160
              $region39: #{resnet_forward.26} parent=35 // loop_header_branch
                %176 = sbr.rel (%p174) target = $region43
              $region40: #{resnet_forward.26} parent=35 // loop_body
                %v180 = vld [vmem:[%s178] sm:%s171]
                %181 = vst [vmem:[%s179] sm:%s171] %v180
                %v182 = vld [vmem:[%s178 + $0x10] sm:%s171]
                %183 = vst [vmem:[%s179 + $0x8] sm:%s171] %v182
                %v184 = vld [vmem:[%s178 + $0x20] sm:%s171]
                %185 = vst [vmem:[%s179 + $0x10] sm:%s171] %v184
                %v186 = vld [vmem:[%s178 + $0x30] sm:%s171]
                %187 = vst [vmem:[%s179 + $0x18] sm:%s171] %v186
                %v188 = vld [vmem:[%s178 + $0x40] sm:%s171]
                %189 = vst [vmem:[%s179 + $0x20] sm:%s171] %v188
                %v190 = vld [vmem:[%s178 + $0x50] sm:%s171]
                %191 = vst [vmem:[%s179 + $0x28] sm:%s171] %v190
                %v192 = vld [vmem:[%s178 + $0x60] sm:%s171]
                %193 = vst [vmem:[%s179 + $0x30] sm:%s171] %v192
                %v194 = vld [vmem:[%s178 + $0x70] sm:%s171]
                %195 = vst [vmem:[%s179 + $0x38] sm:%s171] %v194
                %v196 = vld [vmem:[%s178 + $0x80] sm:%s171]
                %197 = vst [vmem:[%s179 + $0x40] sm:%s171] %v196
                %v198 = vld [vmem:[%s178 + $0x90] sm:%s171]
                %199 = vst [vmem:[%s179 + $0x48] sm:%s171] %v198
                %v200 = vld [vmem:[%s178 + $0xa0] sm:%s171]
                %201 = vst [vmem:[%s179 + $0x50] sm:%s171] %v200
                %v202 = vld [vmem:[%s178 + $0xb0] sm:%s171]
                %203 = vst [vmem:[%s179 + $0x58] sm:%s171] %v202
                %v204 = vld [vmem:[%s178 + $0xc0] sm:%s171]
                %205 = vst [vmem:[%s179 + $0x60] sm:%s171] %v204
                %v206 = vld [vmem:[%s178 + $0xd0] sm:%s171]
                %207 = vst [vmem:[%s179 + $0x68] sm:%s171] %v206
                %v208 = vld [vmem:[%s178 + $0xe0] sm:%s171]
                %209 = vst [vmem:[%s179 + $0x70] sm:%s171] %v208
                %v210 = vld [vmem:[%s178 + $0xf0] sm:%s171]
                %211 = vst [vmem:[%s179 + $0x78] sm:%s171] %v210
                %v212 = vld [vmem:[%s178 + $0x100] sm:%s171]
                %213 = vst [vmem:[%s179 + $0x80] sm:%s171] %v212
                %v214 = vld [vmem:[%s178 + $0x110] sm:%s171]
                %215 = vst [vmem:[%s179 + $0x88] sm:%s171] %v214
                %v216 = vld [vmem:[%s178 + $0x120] sm:%s171]
                %217 = vst [vmem:[%s179 + $0x90] sm:%s171] %v216
                %v218 = vld [vmem:[%s178 + $0x130] sm:%s171]
                %219 = vst [vmem:[%s179 + $0x98] sm:%s171] %v218
                %v220 = vld [vmem:[%s178 + $0x140] sm:%s171]
                %221 = vst [vmem:[%s179 + $0xa0] sm:%s171] %v220
                %v222 = vld [vmem:[%s178 + $0x150] sm:%s171]
                %223 = vst [vmem:[%s179 + $0xa8] sm:%s171] %v222
                %v224 = vld [vmem:[%s178 + $0x160] sm:%s171]
                %225 = vst [vmem:[%s179 + $0xb0] sm:%s171] %v224
                %v226 = vld [vmem:[%s178 + $0x170] sm:%s171]
                %227 = vst [vmem:[%s179 + $0xb8] sm:%s171] %v226
                %v228 = vld [vmem:[%s178 + $0x180] sm:%s171]
                %229 = vst [vmem:[%s179 + $0xc0] sm:%s171] %v228
                %v230 = vld [vmem:[%s178 + $0x190] sm:%s171]
                %231 = vst [vmem:[%s179 + $0xc8] sm:%s171] %v230
                %v232 = vld [vmem:[%s178 + $0x1a0] sm:%s171]
                %233 = vst [vmem:[%s179 + $0xd0] sm:%s171] %v232
                %v234 = vld [vmem:[%s178 + $0x1b0] sm:%s171]
                %235 = vst [vmem:[%s179 + $0xd8] sm:%s171] %v234
                %v236 = vld [vmem:[%s178 + $0x1c0] sm:%s171]
                %237 = vst [vmem:[%s179 + $0xe0] sm:%s171] %v236
                %v238 = vld [vmem:[%s178 + $0x1d0] sm:%s171]
                %239 = vst [vmem:[%s179 + $0xe8] sm:%s171] %v238
                %v240 = vld [vmem:[%s178 + $0x1e0] sm:%s171]
                %241 = vst [vmem:[%s179 + $0xf0] sm:%s171] %v240
                %v242 = vld [vmem:[%s178 + $0x1f0] sm:%s171]
                %243 = vst [vmem:[%s179 + $0xf8] sm:%s171] %v242
              $region41: #{resnet_forward.26} parent=35 // loop_footer
                %s177 = sadd.s32 1, %s173
              $region42: #{resnet_forward.26} parent=35 // loop_footer_branch
                %172 = sbr.rel target = $region38
              $region43: #{resnet_forward.26} parent=35 // loop_exit
                _
            $region36: #{resnet_forward.26} parent=27 // pred_fallthru
              _
          $region28: #{resnet_forward.26} parent=23 // pred_fallthru
            _
          %320 = vnop
        $region24: #{resnet_forward.26} parent=19 // pred_fallthru
          _
        // Predicated region
        $region59: #{resnet_forward.26} parent=19 // pred_check
          %p321 = pneg %p93
        $region60: #{resnet_forward.26} parent=19 // pred_check_branch
          %323 = sbr.rel (%p321) target = $region62
        $region61: #{resnet_forward.26} parent=19 // pred_region
          %s324 = smul.u32 2, %s17
          %p325 = scmp.lt.s32.totalorder %s324, 3
          %s326 = scalar_select %p325, %s324, 3
          %s327 = scalar_lea.vmem %s2, %s326
          %s328 = smul.u32 2, %s17
        $region62: #{resnet_forward.26} parent=19 // pred_fallthru
          _
      $region20: #{resnet_forward.26} parent=5 // pred_fallthru
        _
      %p329 = scmp.le.s32.totalorder 1, %s9
      %p330 = scmp.lt.s32.totalorder %s9, 3
      %p331 = pnand %p329, %p330
      %p332 = pneg %p331
      // Predicated region
      $region63: #{resnet_forward.26} parent=5 // pred_check
        _
      $region64: #{resnet_forward.26} parent=5 // pred_check_branch
        %334 = sbr.rel (%p331) target = $region66
      $region65: #{resnet_forward.26} parent=5 // pred_region
        %s335 = ssub.s32 %s9, 1
        %s336 = sand.u32 %s60, 1
        %s337 = sand.u32 %s60, 1
        %s338 = smul.addr %s337, 256
        %s339 = scalar_lea.vmem [#allocation2], %s338
        // Predicated region
        $region67: #{resnet_forward.26} parent=65 // pred_check
          %p340 = pneg %p73
        $region68: #{resnet_forward.26} parent=65 // pred_check_branch
          %342 = sbr.rel (%p340) target = $region70
        $region69: #{resnet_forward.26} parent=65 // pred_region
          _
        $region70: #{resnet_forward.26} parent=65 // pred_fallthru
          _
        %p343 = scmp.lt.s32.totalorder %s18, 0
        %s344 = scalar_select %p343, %s18, 0
        %s345 = smul.addr %s344, 2
        %s346 = smul.addr %s345, 4
        %s347 = scalar_lea.vmem %s0, %s346
        %p348 = pneg %p47
        %p349 = pneg %p44
        %s350 = sand.u32 %s60, 1
        %s351 = sand.u32 %s60, 1
        %s352 = smul.addr %s351, 256
        %s353 = scalar_lea.vmem [#allocation2], %s352
        %p354 = pneg %p73
        %p355 = pneg %p70
        %s356 = smul.u32 2, %s19
        %p357 = scmp.lt.s32.totalorder %s356, 3
        %s358 = scalar_select %p357, %s356, 3
        %s359 = scalar_lea.vmem %s2, %s358
        %p360 = pneg %p99
        %p361 = pneg %p96
        %p362 = pneg %p127
        %p363 = pneg %p124
        %s364 = smul.u32 2, %s19
        %p365 = scmp.lt.s32.totalorder %s18, 0
        %s366 = scalar_select %p365, %s18, 0
        %p367 = scmp.lt.s32.totalorder %s364, 3
        %s368 = scalar_select %p367, %s364, 3
        %s369 = smul.addr %s366, 4
        %s370 = sadd.s32 %s368, %s369
        %s371 = smul.addr %s370, 8
        %s372 = scalar_lea.vmem %s3, %s371
        %p373 = scmp.lt.s32.totalorder %s18, 0
        %s374 = scalar_select %p373, %s18, 0
        %s375 = smul.addr %s374, 2
        %s376 = smul.addr %s375, 4
        %s377 = scalar_lea.vmem %s0, %s376
        %s378 = smul.u32 2, %s19
        %s379 = smul.u32 2, %s19
        %p380 = scmp.lt.s32.totalorder %s379, 3
        %s381 = scalar_select %p380, %s379, 3
        %s382 = scalar_lea.vmem %s2, %s381
        %s383 = smul.u32 2, %s19
        %s384 = smul.u32 2, %s19
        %p385 = scmp.lt.s32.totalorder %s18, 0
        %s386 = scalar_select %p385, %s18, 0
        %p387 = scmp.lt.s32.totalorder %s384, 3
        %s388 = scalar_select %p387, %s384, 3
        %s389 = smul.addr %s386, 4
        %s390 = sadd.s32 %s388, %s389
        %s391 = smul.addr %s390, 8
        %s392 = scalar_lea.vmem %s3, %s391
        %s393 = smul.u32 2, %s19
        %v394 = vld [vmem:[%s377] sm:$0xff]
        %v395 = vld [vmem:[%s339] sm:$0xff]
        %v396 = vld [vmem:[%s339 + $0x8] sm:$0xff]
        %v397 = vld [vmem:[%s339 + $0x10] sm:$0xff]
        %v398 = vld [vmem:[%s339 + $0x18] sm:$0xff]
        %v399 = vld [vmem:[%s339 + $0x20] sm:$0xff]
        %v400 = vld [vmem:[%s339 + $0x28] sm:$0xff]
        %v401 = vld [vmem:[%s339 + $0x30] sm:$0xff]
        %v402 = vld [vmem:[%s339 + $0x38] sm:$0xff]
        %v403 = vld [vmem:[%s339 + $0x40] sm:$0xff]
        %v404 = vld [vmem:[%s339 + $0x48] sm:$0xff]
        %v405 = vld [vmem:[%s339 + $0x50] sm:$0xff]
        %v406 = vld [vmem:[%s339 + $0x58] sm:$0xff]
        %v407 = vld [vmem:[%s339 + $0x60] sm:$0xff]
        %v408 = vld [vmem:[%s339 + $0x68] sm:$0xff]
        %v409 = vld [vmem:[%s339 + $0x70] sm:$0xff]
        %v410 = vld [vmem:[%s339 + $0x78] sm:$0xff]
        %v411 = vld [vmem:[%s339 + $0x80] sm:$0xff]
        %v412 = vld [vmem:[%s339 + $0x88] sm:$0xff]
        %v413 = vld [vmem:[%s339 + $0x90] sm:$0xff]
        %v414 = vld [vmem:[%s339 + $0x98] sm:$0xff]
        %v415 = vld [vmem:[%s339 + $0xa0] sm:$0xff]
        %v416 = vld [vmem:[%s339 + $0xa8] sm:$0xff]
        %v417 = vld [vmem:[%s339 + $0xb0] sm:$0xff]
        %v418 = vld [vmem:[%s339 + $0xb8] sm:$0xff]
        %v419 = vld [vmem:[%s339 + $0xc0] sm:$0xff]
        %v420 = vld [vmem:[%s339 + $0xc8] sm:$0xff]
        %v421 = vld [vmem:[%s339 + $0xd0] sm:$0xff]
        %v422 = vld [vmem:[%s339 + $0xd8] sm:$0xff]
        %v423 = vld [vmem:[%s339 + $0xe0] sm:$0xff]
        %v424 = vld [vmem:[%s339 + $0xe8] sm:$0xff]
        %v425 = vld [vmem:[%s339 + $0xf0] sm:$0xff]
        %v426 = vld [vmem:[%s339 + $0xf8] sm:$0xff]
        %v427 = vld [vmem:[%s382] sm:$0x3]
        %v429 = vperm.slane %v427, 0
        %v430 = vperm.slane %v427, 1
        %v434 = vunpack.c.l.b16 %v394
        %v435 = vunpack.c.h.b16 %v394
        %v436 = vpack.c.b16 %v434, %v434
        %v437 = vpack.c.b16 %v435, %v435
        %v472 = vunpack.c.l.b16 %v395
        %v473 = vunpack.c.h.b16 %v395
        %v474 = vunpack.c.l.b16 %v396
        %v475 = vunpack.c.h.b16 %v396
        %v476 = vunpack.c.l.b16 %v397
        %v477 = vunpack.c.h.b16 %v397
        %v478 = vunpack.c.l.b16 %v398
        %v479 = vunpack.c.h.b16 %v398
        %v480 = vunpack.c.l.b16 %v399
        %v481 = vunpack.c.h.b16 %v399
        %v482 = vunpack.c.l.b16 %v400
        %v483 = vunpack.c.h.b16 %v400
        %v484 = vunpack.c.l.b16 %v401
        %v485 = vunpack.c.h.b16 %v401
        %v486 = vunpack.c.l.b16 %v402
        %v487 = vunpack.c.h.b16 %v402
        %v488 = vunpack.c.l.b16 %v403
        %v489 = vunpack.c.h.b16 %v403
        %v490 = vunpack.c.l.b16 %v404
        %v491 = vunpack.c.h.b16 %v404
        %v492 = vunpack.c.l.b16 %v405
        %v493 = vunpack.c.h.b16 %v405
        %v494 = vunpack.c.l.b16 %v406
        %v495 = vunpack.c.h.b16 %v406
        %v496 = vunpack.c.l.b16 %v407
        %v497 = vunpack.c.h.b16 %v407
        %v498 = vunpack.c.l.b16 %v408
        %v499 = vunpack.c.h.b16 %v408
        %v500 = vunpack.c.l.b16 %v409
        %v501 = vunpack.c.h.b16 %v409
        %v502 = vunpack.c.l.b16 %v410
        %v503 = vunpack.c.h.b16 %v410
        %v504 = vunpack.c.l.b16 %v411
        %v505 = vunpack.c.h.b16 %v411
        %v506 = vunpack.c.l.b16 %v412
        %v507 = vunpack.c.h.b16 %v412
        %v508 = vunpack.c.l.b16 %v413
        %v509 = vunpack.c.h.b16 %v413
        %v510 = vunpack.c.l.b16 %v414
        %v511 = vunpack.c.h.b16 %v414
        %v512 = vunpack.c.l.b16 %v415
        %v513 = vunpack.c.h.b16 %v415
        %v514 = vunpack.c.l.b16 %v416
        %v515 = vunpack.c.h.b16 %v416
        %v516 = vunpack.c.l.b16 %v417
        %v517 = vunpack.c.h.b16 %v417
        %v518 = vunpack.c.l.b16 %v418
        %v519 = vunpack.c.h.b16 %v418
        %v520 = vunpack.c.l.b16 %v419
        %v521 = vunpack.c.h.b16 %v419
        %v522 = vunpack.c.l.b16 %v420
        %v523 = vunpack.c.h.b16 %v420
        %v524 = vunpack.c.l.b16 %v421
        %v525 = vunpack.c.h.b16 %v421
        %v526 = vunpack.c.l.b16 %v422
        %v527 = vunpack.c.h.b16 %v422
        %v528 = vunpack.c.l.b16 %v423
        %v529 = vunpack.c.h.b16 %v423
        %v530 = vunpack.c.l.b16 %v424
        %v531 = vunpack.c.h.b16 %v424
        %v532 = vunpack.c.l.b16 %v425
        %v533 = vunpack.c.h.b16 %v425
        %v534 = vunpack.c.l.b16 %v426
        %v535 = vunpack.c.h.b16 %v426
        %v536 = vpack.c.b16 %v474, %v472
        %v537 = vpack.c.b16 %v475, %v473
        %v538 = vpack.c.b16 %v478, %v476
        %v539 = vpack.c.b16 %v479, %v477
        %v540 = vpack.c.b16 %v482, %v480
        %v541 = vpack.c.b16 %v483, %v481
        %v542 = vpack.c.b16 %v486, %v484
        %v543 = vpack.c.b16 %v487, %v485
        %v544 = vpack.c.b16 %v490, %v488
        %v545 = vpack.c.b16 %v491, %v489
        %v546 = vpack.c.b16 %v494, %v492
        %v547 = vpack.c.b16 %v495, %v493
        %v548 = vpack.c.b16 %v498, %v496
        %v549 = vpack.c.b16 %v499, %v497
        %v550 = vpack.c.b16 %v502, %v500
        %v551 = vpack.c.b16 %v503, %v501
        %v552 = vpack.c.b16 %v506, %v504
        %v553 = vpack.c.b16 %v507, %v505
        %v554 = vpack.c.b16 %v510, %v508
        %v555 = vpack.c.b16 %v511, %v509
        %v556 = vpack.c.b16 %v514, %v512
        %v557 = vpack.c.b16 %v515, %v513
        %v558 = vpack.c.b16 %v518, %v516
        %v559 = vpack.c.b16 %v519, %v517
        %v560 = vpack.c.b16 %v522, %v520
        %v561 = vpack.c.b16 %v523, %v521
        %v562 = vpack.c.b16 %v526, %v524
        %v563 = vpack.c.b16 %v527, %v525
        %v564 = vpack.c.b16 %v530, %v528
        %v565 = vpack.c.b16 %v531, %v529
        %v566 = vpack.c.b16 %v534, %v532
        %v567 = vpack.c.b16 %v535, %v533
        %600 = vmatpush.bf16.msra.mxu0 %v550
        %601 = vmatpush.bf16.msra.mxu0 %v548
        %602 = vmatpush.bf16.msra.mxu0 %v546
        %603 = vmatpush.bf16.msra.mxu0 %v544
        %604 = vmatpush.bf16.msra.mxu0 %v542
        %605 = vmatpush.bf16.msra.mxu0 %v540
        %606 = vmatpush.bf16.msra.mxu0 %v538
        %607 = vmatpush.bf16.msra.mxu0 %v536
        %608 = vmatmul.bf16.gmra.mxu0 %v436
        %v609 = vpop.f32.mrf.mxu0
        %v610 = vadd.f32 %v429, %v609
        %v611 = vpop.f32.mrf.mxu0
        %612 = vdwg.mxu0
        %613 = vmatpush.bf16.msra.mxu0 %v566
        %614 = vmatpush.bf16.msra.mxu0 %v564
        %615 = vmatpush.bf16.msra.mxu0 %v562
        %616 = vmatpush.bf16.msra.mxu0 %v560
        %617 = vmatpush.bf16.msra.mxu0 %v558
        %618 = vmatpush.bf16.msra.mxu0 %v556
        %619 = vmatpush.bf16.msra.mxu0 %v554
        %620 = vmatpush.bf16.msra.mxu0 %v552
        %621 = vmatmul.bf16.gmra.mxu0 %v437
        %v622 = vpop.f32.mrf.mxu0
        %v623 = vadd.f32 %v610, %v622
        %v624 = vpop.f32.mrf.mxu0
        %625 = vdwg.mxu0
        %626 = vmatpush.bf16.msra.mxu0 %v551
        %627 = vmatpush.bf16.msra.mxu0 %v549
        %628 = vmatpush.bf16.msra.mxu0 %v547
        %629 = vmatpush.bf16.msra.mxu0 %v545
        %630 = vmatpush.bf16.msra.mxu0 %v543
        %631 = vmatpush.bf16.msra.mxu0 %v541
        %632 = vmatpush.bf16.msra.mxu0 %v539
        %633 = vmatpush.bf16.msra.mxu0 %v537
        %634 = vmatmul.bf16.gmra.mxu0 %v436
        %v635 = vpop.f32.mrf.mxu0
        %v636 = vadd.f32 %v430, %v635
        %v637 = vpop.f32.mrf.mxu0
        %638 = vdwg.mxu0
        %639 = vmatpush.bf16.msra.mxu0 %v567
        %640 = vmatpush.bf16.msra.mxu0 %v565
        %641 = vmatpush.bf16.msra.mxu0 %v563
        %642 = vmatpush.bf16.msra.mxu0 %v561
        %643 = vmatpush.bf16.msra.mxu0 %v559
        %644 = vmatpush.bf16.msra.mxu0 %v557
        %645 = vmatpush.bf16.msra.mxu0 %v555
        %646 = vmatpush.bf16.msra.mxu0 %v553
        %647 = vmatmul.bf16.gmra.mxu0 %v437
        %v648 = vpop.f32.mrf.mxu0
        %v649 = vadd.f32 %v636, %v648
        %v650 = vpop.f32.mrf.mxu0
        %651 = vdwg.mxu0
        %v652 = vmax.f32 %v623, 0.0
        %v653 = vmax.f32 %v649, 0.0
        %654 = vst [vmem:[%s392] sm:$0xff] %v652
        %655 = vst [vmem:[%s392 + $0x8] sm:$0xff] %v653
        %s656 = smul.u32 2, %s19
        %p657 = scmp.lt.s32.totalorder %s18, 0
        %s658 = scalar_select %p657, %s18, 0
        %p659 = scmp.lt.s32.totalorder %s656, 3
        %s660 = scalar_select %p659, %s656, 3
        %s661 = smul.addr %s658, 4
        %s662 = sadd.s32 %s660, %s661
        %s663 = smul.addr %s662, 8
        %s664 = scalar_lea.vmem %s3, %s663
        // Predicated region
        $region71: #{resnet_forward.26} parent=65 // pred_check
          %p665 = pneg %p124
        $region72: #{resnet_forward.26} parent=65 // pred_check_branch
          %667 = sbr.rel (%p665) target = $region74
        $region73: #{resnet_forward.26} parent=65 // pred_region
          %s668 = smul.u32 2, %s19
        $region74: #{resnet_forward.26} parent=65 // pred_fallthru
          _
      $region66: #{resnet_forward.26} parent=5 // pred_fallthru
        _
      %p669 = scmp.le.s32.totalorder 2, %s9
      // Predicated region
      $region75: #{resnet_forward.26} parent=5 // pred_check
        %p670 = pneg %p669
      $region76: #{resnet_forward.26} parent=5 // pred_check_branch
        %672 = sbr.rel (%p670) target = $region78
      $region77: #{resnet_forward.26} parent=5 // pred_region
        %s673 = ssub.s32 %s9, 2
        // Predicated region
        $region79: #{resnet_forward.26} parent=77 // pred_check
          %p674 = pneg %p130
        $region80: #{resnet_forward.26} parent=77 // pred_check_branch
          %676 = sbr.rel (%p674) target = $region82
        $region81: #{resnet_forward.26} parent=77 // pred_region
          %s677 = smul.u32 2, %s21
          %p678 = scmp.lt.s32.totalorder %s20, 0
          %s679 = scalar_select %p678, %s20, 0
          %p680 = scmp.lt.s32.totalorder %s677, 3
          %s681 = scalar_select %p680, %s677, 3
          %s682 = smul.addr %s679, 4
          %s683 = sadd.s32 %s681, %s682
          %s684 = smul.addr %s683, 8
          %s685 = scalar_lea.vmem %s3, %s684
        $region82: #{resnet_forward.26} parent=77 // pred_fallthru
          _
      $region78: #{resnet_forward.26} parent=5 // pred_fallthru
        _
    $region6: #{resnet_forward.26} parent=1 // loop_footer
      %s13 = sadd.s32 1, %s9
    $region7: #{resnet_forward.26} parent=1 // loop_footer_branch
      %8 = sbr.rel target = $region3
    $region8: #{resnet_forward.26} parent=1 // loop_exit
      _

// kernel: resnet_forward.25
$region0: #{resnet_forward.25}
  #allocation0 [shape = 'u32[]', space=smem, size = 0x4, offset = 0x4, fixed_abs, tag = 'smem constant byte address 0x4 - core index']
  #allocation1 [shape = 'u32[72,128]{1,0:T(1,128)}', space=vmem, size = 0x9000, scoped, tag = 'internal scratch']
  %s0 = inlined_call_operand.vmem [shape: bf16[8,256], index: 0, kind: input, shape index: {}]
  %s1 = inlined_call_operand.vmem [shape: bf16[256,256], index: 1, kind: input, shape index: {}]
  %s2 = inlined_call_operand.vmem [shape: f32[1,256], index: 2, kind: input, shape index: {}]
  %s3 = inlined_call_operand.vmem [shape: f32[8,256], index: 3, kind: input, shape index: {}]
  %s4 = inlined_call_operand.vmem [shape: f32[8,256], index: 4, kind: output, shape index: {}]
  %s5 = sld [smem:[#allocation0]]
  $region26: #{resnet_forward.25} parent=0
    _
  %s7 = ssub.s32 1, %s5
  %s8 = scalar_select 0, %s7, %s5
  // Predicated region
  $region2: #{resnet_forward.25} parent=0 // pred_check
    _
  $region3: #{resnet_forward.25} parent=0 // pred_check_branch
    %10 = sbr.rel (0) target = $region5
  $region4: #{resnet_forward.25} parent=0 // pred_region
    _
  $region5: #{resnet_forward.25} parent=0 // pred_fallthru
    _
  // Predicated region
  $region6: #{resnet_forward.25} parent=0 // pred_check
    _
  $region7: #{resnet_forward.25} parent=0 // pred_check_branch
    %12 = sbr.rel (0) target = $region9
  $region8: #{resnet_forward.25} parent=0 // pred_region
    _
  $region9: #{resnet_forward.25} parent=0 // pred_fallthru
    _
  // Predicated region
  $region10: #{resnet_forward.25} parent=0 // pred_check
    _
  $region11: #{resnet_forward.25} parent=0 // pred_check_branch
    %14 = sbr.rel (0) target = $region13
  $region12: #{resnet_forward.25} parent=0 // pred_region
    _
  $region13: #{resnet_forward.25} parent=0 // pred_fallthru
    _
  // Predicated region
  $region14: #{resnet_forward.25} parent=0 // pred_check
    _
  $region15: #{resnet_forward.25} parent=0 // pred_check_branch
    %16 = sbr.rel (0) target = $region17
  $region16: #{resnet_forward.25} parent=0 // pred_region
    _
  $region17: #{resnet_forward.25} parent=0 // pred_fallthru
    _
  %v17 = vld [vmem:[%s0] sm:$0xff]
  %v18 = vld [vmem:[%s1] sm:$0xff]
  %v19 = vld [vmem:[%s1 + $0x8] sm:$0xff]
  %v20 = vld [vmem:[%s1 + $0x10] sm:$0xff]
  %v21 = vld [vmem:[%s1 + $0x18] sm:$0xff]
  %v22 = vld [vmem:[%s1 + $0x20] sm:$0xff]
  %v23 = vld [vmem:[%s1 + $0x28] sm:$0xff]
  %v24 = vld [vmem:[%s1 + $0x30] sm:$0xff]
  %v25 = vld [vmem:[%s1 + $0x38] sm:$0xff]
  %v26 = vld [vmem:[%s1 + $0x40] sm:$0xff]
  %v27 = vld [vmem:[%s1 + $0x48] sm:$0xff]
  %v28 = vld [vmem:[%s1 + $0x50] sm:$0xff]
  %v29 = vld [vmem:[%s1 + $0x58] sm:$0xff]
  %v30 = vld [vmem:[%s1 + $0x60] sm:$0xff]
  %v31 = vld [vmem:[%s1 + $0x68] sm:$0xff]
  %v32 = vld [vmem:[%s1 + $0x70] sm:$0xff]
  %v33 = vld [vmem:[%s1 + $0x78] sm:$0xff]
  %v34 = vld [vmem:[%s1 + $0x80] sm:$0xff]
  %v35 = vld [vmem:[%s1 + $0x88] sm:$0xff]
  %v36 = vld [vmem:[%s1 + $0x90] sm:$0xff]
  %v37 = vld [vmem:[%s1 + $0x98] sm:$0xff]
  %v38 = vld [vmem:[%s1 + $0xa0] sm:$0xff]
  %v39 = vld [vmem:[%s1 + $0xa8] sm:$0xff]
  %v40 = vld [vmem:[%s1 + $0xb0] sm:$0xff]
  %v41 = vld [vmem:[%s1 + $0xb8] sm:$0xff]
  %v42 = vld [vmem:[%s1 + $0xc0] sm:$0xff]
  %v43 = vld [vmem:[%s1 + $0xc8] sm:$0xff]
  %v44 = vld [vmem:[%s1 + $0xd0] sm:$0xff]
  %v45 = vld [vmem:[%s1 + $0xd8] sm:$0xff]
  %v46 = vld [vmem:[%s1 + $0xe0] sm:$0xff]
  %v47 = vld [vmem:[%s1 + $0xe8] sm:$0xff]
  %v48 = vld [vmem:[%s1 + $0xf0] sm:$0xff]
  %v49 = vld [vmem:[%s1 + $0xf8] sm:$0xff]
  %v50 = vld [vmem:[%s2] sm:$0x3]
  %v52 = vperm.slane %v50, 0
  %v53 = vperm.slane %v50, 1
  %v57 = vunpack.c.l.b16 %v17
  %v58 = vunpack.c.h.b16 %v17
  %v59 = vpack.c.b16 %v57, %v57
  %v60 = vpack.c.b16 %v58, %v58
  %v95 = vunpack.c.l.b16 %v18
  %v96 = vunpack.c.h.b16 %v18
  %v97 = vunpack.c.l.b16 %v19
  %v98 = vunpack.c.h.b16 %v19
  %v99 = vunpack.c.l.b16 %v20
  %v100 = vunpack.c.h.b16 %v20
  %v101 = vunpack.c.l.b16 %v21
  %v102 = vunpack.c.h.b16 %v21
  %v103 = vunpack.c.l.b16 %v22
  %v104 = vunpack.c.h.b16 %v22
  %v105 = vunpack.c.l.b16 %v23
  %v106 = vunpack.c.h.b16 %v23
  %v107 = vunpack.c.l.b16 %v24
  %v108 = vunpack.c.h.b16 %v24
  %v109 = vunpack.c.l.b16 %v25
  %v110 = vunpack.c.h.b16 %v25
  %v111 = vunpack.c.l.b16 %v26
  %v112 = vunpack.c.h.b16 %v26
  %v113 = vunpack.c.l.b16 %v27
  %v114 = vunpack.c.h.b16 %v27
  %v115 = vunpack.c.l.b16 %v28
  %v116 = vunpack.c.h.b16 %v28
  %v117 = vunpack.c.l.b16 %v29
  %v118 = vunpack.c.h.b16 %v29
  %v119 = vunpack.c.l.b16 %v30
  %v120 = vunpack.c.h.b16 %v30
  %v121 = vunpack.c.l.b16 %v31
  %v122 = vunpack.c.h.b16 %v31
  %v123 = vunpack.c.l.b16 %v32
  %v124 = vunpack.c.h.b16 %v32
  %v125 = vunpack.c.l.b16 %v33
  %v126 = vunpack.c.h.b16 %v33
  %v127 = vunpack.c.l.b16 %v34
  %v128 = vunpack.c.h.b16 %v34
  %v129 = vunpack.c.l.b16 %v35
  %v130 = vunpack.c.h.b16 %v35
  %v131 = vunpack.c.l.b16 %v36
  %v132 = vunpack.c.h.b16 %v36
  %v133 = vunpack.c.l.b16 %v37
  %v134 = vunpack.c.h.b16 %v37
  %v135 = vunpack.c.l.b16 %v38
  %v136 = vunpack.c.h.b16 %v38
  %v137 = vunpack.c.l.b16 %v39
  %v138 = vunpack.c.h.b16 %v39
  %v139 = vunpack.c.l.b16 %v40
  %v140 = vunpack.c.h.b16 %v40
  %v141 = vunpack.c.l.b16 %v41
  %v142 = vunpack.c.h.b16 %v41
  %v143 = vunpack.c.l.b16 %v42
  %v144 = vunpack.c.h.b16 %v42
  %v145 = vunpack.c.l.b16 %v43
  %v146 = vunpack.c.h.b16 %v43
  %v147 = vunpack.c.l.b16 %v44
  %v148 = vunpack.c.h.b16 %v44
  %v149 = vunpack.c.l.b16 %v45
  %v150 = vunpack.c.h.b16 %v45
  %v151 = vunpack.c.l.b16 %v46
  %v152 = vunpack.c.h.b16 %v46
  %v153 = vunpack.c.l.b16 %v47
  %v154 = vunpack.c.h.b16 %v47
  %v155 = vunpack.c.l.b16 %v48
  %v156 = vunpack.c.h.b16 %v48
  %v157 = vunpack.c.l.b16 %v49
  %v158 = vunpack.c.h.b16 %v49
  %v159 = vpack.c.b16 %v97, %v95
  %v160 = vpack.c.b16 %v98, %v96
  %v161 = vpack.c.b16 %v101, %v99
  %v162 = vpack.c.b16 %v102, %v100
  %v163 = vpack.c.b16 %v105, %v103
  %v164 = vpack.c.b16 %v106, %v104
  %v165 = vpack.c.b16 %v109, %v107
  %v166 = vpack.c.b16 %v110, %v108
  %v167 = vpack.c.b16 %v113, %v111
  %v168 = vpack.c.b16 %v114, %v112
  %v169 = vpack.c.b16 %v117, %v115
  %v170 = vpack.c.b16 %v118, %v116
  %v171 = vpack.c.b16 %v121, %v119
  %v172 = vpack.c.b16 %v122, %v120
  %v173 = vpack.c.b16 %v125, %v123
  %v174 = vpack.c.b16 %v126, %v124
  %v175 = vpack.c.b16 %v129, %v127
  %v176 = vpack.c.b16 %v130, %v128
  %v177 = vpack.c.b16 %v133, %v131
  %v178 = vpack.c.b16 %v134, %v132
  %v179 = vpack.c.b16 %v137, %v135
  %v180 = vpack.c.b16 %v138, %v136
  %v181 = vpack.c.b16 %v141, %v139
  %v182 = vpack.c.b16 %v142, %v140
  %v183 = vpack.c.b16 %v145, %v143
  %v184 = vpack.c.b16 %v146, %v144
  %v185 = vpack.c.b16 %v149, %v147
  %v186 = vpack.c.b16 %v150, %v148
  %v187 = vpack.c.b16 %v153, %v151
  %v188 = vpack.c.b16 %v154, %v152
  %v189 = vpack.c.b16 %v157, %v155
  %v190 = vpack.c.b16 %v158, %v156
  %223 = vmatpush.bf16.msra.mxu0 %v173
  %224 = vmatpush.bf16.msra.mxu0 %v171
  %225 = vmatpush.bf16.msra.mxu0 %v169
  %226 = vmatpush.bf16.msra.mxu0 %v167
  %227 = vmatpush.bf16.msra.mxu0 %v165
  %228 = vmatpush.bf16.msra.mxu0 %v163
  %229 = vmatpush.bf16.msra.mxu0 %v161
  %230 = vmatpush.bf16.msra.mxu0 %v159
  %231 = vmatmul.bf16.gmra.mxu0 %v59
  %v232 = vpop.f32.mrf.mxu0
  %v233 = vadd.f32 %v52, %v232
  %v234 = vpop.f32.mrf.mxu0
  %235 = vdwg.mxu0
  %236 = vmatpush.bf16.msra.mxu0 %v189
  %237 = vmatpush.bf16.msra.mxu0 %v187
  %238 = vmatpush.bf16.msra.mxu0 %v185
  %239 = vmatpush.bf16.msra.mxu0 %v183
  %240 = vmatpush.bf16.msra.mxu0 %v181
  %241 = vmatpush.bf16.msra.mxu0 %v179
  %242 = vmatpush.bf16.msra.mxu0 %v177
  %243 = vmatpush.bf16.msra.mxu0 %v175
  %244 = vmatmul.bf16.gmra.mxu0 %v60
  %v245 = vpop.f32.mrf.mxu0
  %v246 = vadd.f32 %v233, %v245
  %v247 = vpop.f32.mrf.mxu0
  %248 = vdwg.mxu0
  %249 = vmatpush.bf16.msra.mxu0 %v174
  %250 = vmatpush.bf16.msra.mxu0 %v172
  %251 = vmatpush.bf16.msra.mxu0 %v170
  %252 = vmatpush.bf16.msra.mxu0 %v168
  %253 = vmatpush.bf16.msra.mxu0 %v166
  %254 = vmatpush.bf16.msra.mxu0 %v164
  %255 = vmatpush.bf16.msra.mxu0 %v162
  %256 = vmatpush.bf16.msra.mxu0 %v160
  %257 = vmatmul.bf16.gmra.mxu0 %v59
  %v258 = vpop.f32.mrf.mxu0
  %v259 = vadd.f32 %v53, %v258
  %v260 = vpop.f32.mrf.mxu0
  %261 = vdwg.mxu0
  %262 = vmatpush.bf16.msra.mxu0 %v190
  %263 = vmatpush.bf16.msra.mxu0 %v188
  %264 = vmatpush.bf16.msra.mxu0 %v186
  %265 = vmatpush.bf16.msra.mxu0 %v184
  %266 = vmatpush.bf16.msra.mxu0 %v182
  %267 = vmatpush.bf16.msra.mxu0 %v180
  %268 = vmatpush.bf16.msra.mxu0 %v178
  %269 = vmatpush.bf16.msra.mxu0 %v176
  %270 = vmatmul.bf16.gmra.mxu0 %v60
  %v271 = vpop.f32.mrf.mxu0
  %v272 = vadd.f32 %v259, %v271
  %v273 = vpop.f32.mrf.mxu0
  %274 = vdwg.mxu0
  %v275 = vld [vmem:[%s3] sm:$0xff]
  %v276 = vld [vmem:[%s3 + $0x8] sm:$0xff]
  %v277 = vadd.f32 %v246, %v275
  %v278 = vadd.f32 %v272, %v276
  %v279 = vmax.f32 %v277, 0.0
  %v280 = vmax.f32 %v278, 0.0
  %281 = vst [vmem:[%s4] sm:$0xff] %v279
  %282 = vst [vmem:[%s4 + $0x8] sm:$0xff] %v280
  // Predicated region
  $region18: #{resnet_forward.25} parent=0 // pred_check
    _
  $region19: #{resnet_forward.25} parent=0 // pred_check_branch
    %284 = sbr.rel (0) target = $region21
  $region20: #{resnet_forward.25} parent=0 // pred_region
    _
  $region21: #{resnet_forward.25} parent=0 // pred_fallthru
    _
  // Predicated region
  $region22: #{resnet_forward.25} parent=0 // pred_check
    _
  $region23: #{resnet_forward.25} parent=0 // pred_check_branch
    %286 = sbr.rel (0) target = $region25
  $region24: #{resnet_forward.25} parent=0 // pred_region
    _
  $region25: #{resnet_forward.25} parent=0 // pred_fallthru
    _

// kernel: resnet_forward.27
$region0: #{resnet_forward.27}
  #allocation0 [shape = 'u32[]', space=smem, size = 0x4, offset = 0x4, fixed_abs, tag = 'smem constant byte address 0x4 - core index']
  #allocation1 [shape = 'u32[72,128]{1,0:T(1,128)}', space=vmem, size = 0x9000, scoped, tag = 'internal scratch']
  %s0 = inlined_call_operand.vmem [shape: bf16[8,256], index: 0, kind: input, shape index: {}]
  %s1 = inlined_call_operand.vmem [shape: bf16[256,512], index: 1, kind: input, shape index: {}]
  %s2 = inlined_call_operand.vmem [shape: f32[1,512], index: 2, kind: input, shape index: {}]
  %s3 = inlined_call_operand.vmem [shape: f32[8,512], index: 3, kind: output, shape index: {}]
  %s4 = sld [smem:[#allocation0]]
  $region83: #{resnet_forward.27} parent=0
    _
  %s6 = ssub.s32 1, %s4
  %s7 = scalar_select 0, %s6, %s4
  $region1: #{resnet_forward.27} parent=0
    #allocation2 [shape = 'u8[262144]{0}', space=vmem, size = 0x40000, scoped, tag = 'input window, operand 1']
    loop: start=0, step=1, limit=4
    $region2: #{resnet_forward.27} parent=1 // loop_pre_header
      _
    $region3: #{resnet_forward.27} parent=1 // loop_header
      %s9 = sphi 0, %s13
      %p10 = scmp.ge.s32.totalorder %s9, 4
      %s16 = sphi 0, %s28
      %s17 = sphi 0, %s24
      %s18 = sphi 0, %s16
      %s19 = sphi 0, %s17
      %s20 = sphi 0, %s18
      %s21 = sphi 0, %s19
      %s31 = sphi 0, %s33
      %s34 = sphi 0, %s31
      %s35 = sphi 0, %s34
      %s51 = sphi 0, %s35
      %s57 = sphi 0, %s59
      %s60 = sphi 0, %s57
      %s61 = sphi 0, %s60
      %s77 = sphi 0, %s61
      %s83 = sphi 0, %s85
      %s86 = sphi 0, %s83
      %s87 = sphi 0, %s86
      %s103 = sphi 0, %s87
      %s111 = sphi 0, %s113
      %s114 = sphi 0, %s111
      %s115 = sphi 0, %s114
      %s131 = sphi 0, %s115
    $region4: #{resnet_forward.27} parent=1 // loop_header_branch
      %12 = sbr.rel (%p10) target = $region8
    $region5: #{resnet_forward.27} parent=1 // loop_body
      %s14 = ssub.s32 %s9, 1
      %s15 = ssub.s32 %s9, 2
      %s22 = sadd.s32 1, %s17
      %p23 = scmp.ge.s32.totalorder %s22, 2
      %s24 = scalar_select %p23, 0, %s22
      %s25 = sadd.s32 1, %s16
      %s26 = scalar_select %p23, %s25, %s16
      %p27 = scmp.ge.s32.totalorder %s26, 1
      %s28 = scalar_select %p27, 0, %s26
      %s29 = ssub.s32 %s16, %s28
      %p30 = scmp.eq.s32.totalorder %s29, 0
      %s32 = sadd.s32 %s31, 1
      %s33 = scalar_select %p30, %s31, %s32
      %p36 = pneg %p30
      %p37 = scmp.eq.s32.totalorder %s9, 1
      %p38 = por %p36, %p37
      %p39 = scmp.ne.s32.totalorder %s31, %s34
      %p40 = scmp.eq.s32.totalorder %s9, 0
      %p41 = por %p39, %p40
      %p42 = scmp.ne.s32.totalorder %s31, %s34
      %p43 = scmp.eq.s32.totalorder %s14, 1
      %p44 = por %p42, %p43
      %p45 = scmp.ne.s32.totalorder %s34, %s35
      %p46 = scmp.eq.s32.totalorder %s14, 0
      %p47 = por %p45, %p46
      %p48 = scmp.ne.s32.totalorder %s34, %s35
      %p49 = scmp.eq.s32.totalorder %s15, 1
      %p50 = por %p48, %p49
      %p52 = scmp.ne.s32.totalorder %s35, %s51
      %p53 = scmp.eq.s32.totalorder %s15, 0
      %p54 = por %p52, %p53
      %s55 = ssub.s32 %s17, %s24
      %p56 = scmp.eq.s32.totalorder %s55, 0
      %s58 = sadd.s32 %s57, 1
      %s59 = scalar_select %p56, %s57, %s58
      %p62 = pneg %p56
      %p63 = scmp.eq.s32.totalorder %s9, 1
      %p64 = por %p62, %p63
      %p65 = scmp.ne.s32.totalorder %s57, %s60
      %p66 = scmp.eq.s32.totalorder %s9, 0
      %p67 = por %p65, %p66
      %p68 = scmp.ne.s32.totalorder %s57, %s60
      %p69 = scmp.eq.s32.totalorder %s14, 1
      %p70 = por %p68, %p69
      %p71 = scmp.ne.s32.totalorder %s60, %s61
      %p72 = scmp.eq.s32.totalorder %s14, 0
      %p73 = por %p71, %p72
      %p74 = scmp.ne.s32.totalorder %s60, %s61
      %p75 = scmp.eq.s32.totalorder %s15, 1
      %p76 = por %p74, %p75
      %p78 = scmp.ne.s32.totalorder %s61, %s77
      %p79 = scmp.eq.s32.totalorder %s15, 0
      %p80 = por %p78, %p79
      %s81 = ssub.s32 %s17, %s24
      %p82 = scmp.eq.s32.totalorder %s81, 0
      %s84 = sadd.s32 %s83, 1
      %s85 = scalar_select %p82, %s83, %s84
      %p88 = pneg %p82
      %p89 = scmp.eq.s32.totalorder %s9, 1
      %p90 = por %p88, %p89
      %p91 = scmp.ne.s32.totalorder %s83, %s86
      %p92 = scmp.eq.s32.totalorder %s9, 0
      %p93 = por %p91, %p92
      %p94 = scmp.ne.s32.totalorder %s83, %s86
      %p95 = scmp.eq.s32.totalorder %s14, 1
      %p96 = por %p94, %p95
      %p97 = scmp.ne.s32.totalorder %s86, %s87
      %p98 = scmp.eq.s32.totalorder %s14, 0
      %p99 = por %p97, %p98
      %p100 = scmp.ne.s32.totalorder %s86, %s87
      %p101 = scmp.eq.s32.totalorder %s15, 1
      %p102 = por %p100, %p101
      %p104 = scmp.ne.s32.totalorder %s87, %s103
      %p105 = scmp.eq.s32.totalorder %s15, 0
      %p106 = por %p104, %p105
      %s107 = ssub.s32 %s16, %s28
      %s108 = ssub.s32 %s17, %s24
      %s109 = sor.u32 %s107, %s108
      %p110 = scmp.eq.s32.totalorder %s109, 0
      %s112 = sadd.s32 %s111, 1
      %s113 = scalar_select %p110, %s111, %s112
      %p116 = pneg %p110
      %p117 = scmp.eq.s32.totalorder %s9, 1
      %p118 = por %p116, %p117
      %p119 = scmp.ne.s32.totalorder %s111, %s114
      %p120 = scmp.eq.s32.totalorder %s9, 0
      %p121 = por %p119, %p120
      %p122 = scmp.ne.s32.totalorder %s111, %s114
      %p123 = scmp.eq.s32.totalorder %s14, 1
      %p124 = por %p122, %p123
      %p125 = scmp.ne.s32.totalorder %s114, %s115
      %p126 = scmp.eq.s32.totalorder %s14, 0
      %p127 = por %p125, %p126
      %p128 = scmp.ne.s32.totalorder %s114, %s115
      %p129 = scmp.eq.s32.totalorder %s15, 1
      %p130 = por %p128, %p129
      %p132 = scmp.ne.s32.totalorder %s115, %s131
      %p133 = scmp.eq.s32.totalorder %s15, 0
      %p134 = por %p132, %p133
      %p135 = scmp.le.s32.totalorder 1, %s9
      %p136 = scmp.lt.s32.totalorder %s9, 3
      %p137 = pnand %p135, %p136
      %p138 = pneg %p137
      // Predicated region
      $region9: #{resnet_forward.27} parent=5 // pred_check
        _
      $region10: #{resnet_forward.27} parent=5 // pred_check_branch
        %140 = sbr.rel (%p137) target = $region12
      $region11: #{resnet_forward.27} parent=5 // pred_region
        %s141 = ssub.s32 %s9, 1
        // Predicated region
        $region13: #{resnet_forward.27} parent=11 // pred_check
          %p142 = pneg %p47
        $region14: #{resnet_forward.27} parent=11 // pred_check_branch
          %144 = sbr.rel (%p142) target = $region16
        $region15: #{resnet_forward.27} parent=11 // pred_region
          %p145 = scmp.lt.s32.totalorder %s18, 0
          %s146 = scalar_select %p145, %s18, 0
          %s147 = smul.addr %s146, 2
          %s148 = smul.addr %s147, 4
          %s149 = scalar_lea.vmem %s0, %s148
        $region16: #{resnet_forward.27} parent=11 // pred_fallthru
          _
      $region12: #{resnet_forward.27} parent=5 // pred_fallthru
        _
      %p150 = scmp.lt.s32.totalorder %s9, 2
      // Predicated region
      $region17: #{resnet_forward.27} parent=5 // pred_check
        %p151 = pneg %p150
      $region18: #{resnet_forward.27} parent=5 // pred_check_branch
        %153 = sbr.rel (%p151) target = $region20
      $region19: #{resnet_forward.27} parent=5 // pred_region
        // Predicated region
        $region21: #{resnet_forward.27} parent=19 // pred_check
          %p154 = pneg %p67
        $region22: #{resnet_forward.27} parent=19 // pred_check_branch
          %156 = sbr.rel (%p154) target = $region24
        $region23: #{resnet_forward.27} parent=19 // pred_region
          %s157 = sand.u32 %s57, 1
          %s158 = sand.u32 %s57, 1
          %s159 = smul.addr %s158, 256
          %s160 = scalar_lea.vmem [#allocation2], %s159
          %s161 = smul.u32 2, %s17
          %s162 = smul.addr %s161, 4
          %s163 = scalar_lea.vmem %s1, %s162
          // Predicated region
          $region25: #{resnet_forward.27} parent=23 // pred_check
            _
          $region26: #{resnet_forward.27} parent=23 // pred_check_branch
            %165 = sbr.rel (0) target = $region28
          $region27: #{resnet_forward.27} parent=23 // pred_region
            // Predicated region
            $region29: #{resnet_forward.27} parent=27 // pred_check
              _
            $region30: #{resnet_forward.27} parent=27 // pred_check_branch
              %167 = sbr.rel (0) target = $region32
            $region31: #{resnet_forward.27} parent=27 // pred_region
              // Predicated region
              $region44: #{resnet_forward.27} parent=31 // pred_check
                _
              $region45: #{resnet_forward.27} parent=31 // pred_check_branch
                %245 = sbr.rel (0) target = $region47
              $region46: #{resnet_forward.27} parent=31 // pred_region
                loop: start=0, step=1, limit=1
                $region48: #{resnet_forward.27} parent=46 // loop_pre_header
                  _
                $region49: #{resnet_forward.27} parent=46 // loop_header
                  %s247 = sphi 0, %s251
                  %p248 = scmp.ge.s32.totalorder %s247, 1
                  %s252 = sphi %s163, %s163
                  %s253 = sphi %s160, %s160
                $region50: #{resnet_forward.27} parent=46 // loop_header_branch
                  %250 = sbr.rel (%p248) target = $region54
                $region51: #{resnet_forward.27} parent=46 // loop_body
                  %v254 = vld [vmem:[%s252] sm:$0xff]
                  %255 = vst [vmem:[%s253] sm:$0xff] %v254
                  %v256 = vld [vmem:[%s252 + $0x10] sm:$0xff]
                  %257 = vst [vmem:[%s253 + $0x8] sm:$0xff] %v256
                  %v258 = vld [vmem:[%s252 + $0x20] sm:$0xff]
                  %259 = vst [vmem:[%s253 + $0x10] sm:$0xff] %v258
                  %v260 = vld [vmem:[%s252 + $0x30] sm:$0xff]
                  %261 = vst [vmem:[%s253 + $0x18] sm:$0xff] %v260
                  %v262 = vld [vmem:[%s252 + $0x40] sm:$0xff]
                  %263 = vst [vmem:[%s253 + $0x20] sm:$0xff] %v262
                  %v264 = vld [vmem:[%s252 + $0x50] sm:$0xff]
                  %265 = vst [vmem:[%s253 + $0x28] sm:$0xff] %v264
                  %v266 = vld [vmem:[%s252 + $0x60] sm:$0xff]
                  %267 = vst [vmem:[%s253 + $0x30] sm:$0xff] %v266
                  %v268 = vld [vmem:[%s252 + $0x70] sm:$0xff]
                  %269 = vst [vmem:[%s253 + $0x38] sm:$0xff] %v268
                  %v270 = vld [vmem:[%s252 + $0x80] sm:$0xff]
                  %271 = vst [vmem:[%s253 + $0x40] sm:$0xff] %v270
                  %v272 = vld [vmem:[%s252 + $0x90] sm:$0xff]
                  %273 = vst [vmem:[%s253 + $0x48] sm:$0xff] %v272
                  %v274 = vld [vmem:[%s252 + $0xa0] sm:$0xff]
                  %275 = vst [vmem:[%s253 + $0x50] sm:$0xff] %v274
                  %v276 = vld [vmem:[%s252 + $0xb0] sm:$0xff]
                  %277 = vst [vmem:[%s253 + $0x58] sm:$0xff] %v276
                  %v278 = vld [vmem:[%s252 + $0xc0] sm:$0xff]
                  %279 = vst [vmem:[%s253 + $0x60] sm:$0xff] %v278
                  %v280 = vld [vmem:[%s252 + $0xd0] sm:$0xff]
                  %281 = vst [vmem:[%s253 + $0x68] sm:$0xff] %v280
                  %v282 = vld [vmem:[%s252 + $0xe0] sm:$0xff]
                  %283 = vst [vmem:[%s253 + $0x70] sm:$0xff] %v282
                  %v284 = vld [vmem:[%s252 + $0xf0] sm:$0xff]
                  %285 = vst [vmem:[%s253 + $0x78] sm:$0xff] %v284
                  %v286 = vld [vmem:[%s252 + $0x100] sm:$0xff]
                  %287 = vst [vmem:[%s253 + $0x80] sm:$0xff] %v286
                  %v288 = vld [vmem:[%s252 + $0x110] sm:$0xff]
                  %289 = vst [vmem:[%s253 + $0x88] sm:$0xff] %v288
                  %v290 = vld [vmem:[%s252 + $0x120] sm:$0xff]
                  %291 = vst [vmem:[%s253 + $0x90] sm:$0xff] %v290
                  %v292 = vld [vmem:[%s252 + $0x130] sm:$0xff]
                  %293 = vst [vmem:[%s253 + $0x98] sm:$0xff] %v292
                  %v294 = vld [vmem:[%s252 + $0x140] sm:$0xff]
                  %295 = vst [vmem:[%s253 + $0xa0] sm:$0xff] %v294
                  %v296 = vld [vmem:[%s252 + $0x150] sm:$0xff]
                  %297 = vst [vmem:[%s253 + $0xa8] sm:$0xff] %v296
                  %v298 = vld [vmem:[%s252 + $0x160] sm:$0xff]
                  %299 = vst [vmem:[%s253 + $0xb0] sm:$0xff] %v298
                  %v300 = vld [vmem:[%s252 + $0x170] sm:$0xff]
                  %301 = vst [vmem:[%s253 + $0xb8] sm:$0xff] %v300
                  %v302 = vld [vmem:[%s252 + $0x180] sm:$0xff]
                  %303 = vst [vmem:[%s253 + $0xc0] sm:$0xff] %v302
                  %v304 = vld [vmem:[%s252 + $0x190] sm:$0xff]
                  %305 = vst [vmem:[%s253 + $0xc8] sm:$0xff] %v304
                  %v306 = vld [vmem:[%s252 + $0x1a0] sm:$0xff]
                  %307 = vst [vmem:[%s253 + $0xd0] sm:$0xff] %v306
                  %v308 = vld [vmem:[%s252 + $0x1b0] sm:$0xff]
                  %309 = vst [vmem:[%s253 + $0xd8] sm:$0xff] %v308
                  %v310 = vld [vmem:[%s252 + $0x1c0] sm:$0xff]
                  %311 = vst [vmem:[%s253 + $0xe0] sm:$0xff] %v310
                  %v312 = vld [vmem:[%s252 + $0x1d0] sm:$0xff]
                  %313 = vst [vmem:[%s253 + $0xe8] sm:$0xff] %v312
                  %v314 = vld [vmem:[%s252 + $0x1e0] sm:$0xff]
                  %315 = vst [vmem:[%s253 + $0xf0] sm:$0xff] %v314
                  %v316 = vld [vmem:[%s252 + $0x1f0] sm:$0xff]
                  %317 = vst [vmem:[%s253 + $0xf8] sm:$0xff] %v316
                $region52: #{resnet_forward.27} parent=46 // loop_footer
                  %s251 = sadd.s32 1, %s247
                $region53: #{resnet_forward.27} parent=46 // loop_footer_branch
                  %246 = sbr.rel target = $region49
                $region54: #{resnet_forward.27} parent=46 // loop_exit
                  _
              $region47: #{resnet_forward.27} parent=31 // pred_fallthru
                _
              // Predicated region
              $region55: #{resnet_forward.27} parent=31 // pred_check
                _
              $region56: #{resnet_forward.27} parent=31 // pred_check_branch
                %319 = sbr.rel target = $region58
              $region57: #{resnet_forward.27} parent=31 // pred_region
                _
              $region58: #{resnet_forward.27} parent=31 // pred_fallthru
                _
            $region32: #{resnet_forward.27} parent=27 // pred_fallthru
              _
            // Predicated region
            $region33: #{resnet_forward.27} parent=27 // pred_check
              _
            $region34: #{resnet_forward.27} parent=27 // pred_check_branch
              %169 = sbr.rel target = $region36
            $region35: #{resnet_forward.27} parent=27 // pred_region
              %s171 = ssub.s32 256, 1
              loop: start=0, step=1, limit=1
              $region37: #{resnet_forward.27} parent=35 // loop_pre_header
                _
              $region38: #{resnet_forward.27} parent=35 // loop_header
                %s173 = sphi 0, %s177
                %p174 = scmp.ge.s32.totalorder %s173, 1
                %s178 = sphi %s163, %s163
                %s179 = sphi %s160, %s160
              $region39: #{resnet_forward.27} parent=35 // loop_header_branch
                %176 = sbr.rel (%p174) target = $region43
              $region40: #{resnet_forward.27} parent=35 // loop_body
                %v180 = vld [vmem:[%s178] sm:%s171]
                %181 = vst [vmem:[%s179] sm:%s171] %v180
                %v182 = vld [vmem:[%s178 + $0x10] sm:%s171]
                %183 = vst [vmem:[%s179 + $0x8] sm:%s171] %v182
                %v184 = vld [vmem:[%s178 + $0x20] sm:%s171]
                %185 = vst [vmem:[%s179 + $0x10] sm:%s171] %v184
                %v186 = vld [vmem:[%s178 + $0x30] sm:%s171]
                %187 = vst [vmem:[%s179 + $0x18] sm:%s171] %v186
                %v188 = vld [vmem:[%s178 + $0x40] sm:%s171]
                %189 = vst [vmem:[%s179 + $0x20] sm:%s171] %v188
                %v190 = vld [vmem:[%s178 + $0x50] sm:%s171]
                %191 = vst [vmem:[%s179 + $0x28] sm:%s171] %v190
                %v192 = vld [vmem:[%s178 + $0x60] sm:%s171]
                %193 = vst [vmem:[%s179 + $0x30] sm:%s171] %v192
                %v194 = vld [vmem:[%s178 + $0x70] sm:%s171]
                %195 = vst [vmem:[%s179 + $0x38] sm:%s171] %v194
                %v196 = vld [vmem:[%s178 + $0x80] sm:%s171]
                %197 = vst [vmem:[%s179 + $0x40] sm:%s171] %v196
                %v198 = vld [vmem:[%s178 + $0x90] sm:%s171]
                %199 = vst [vmem:[%s179 + $0x48] sm:%s171] %v198
                %v200 = vld [vmem:[%s178 + $0xa0] sm:%s171]
                %201 = vst [vmem:[%s179 + $0x50] sm:%s171] %v200
                %v202 = vld [vmem:[%s178 + $0xb0] sm:%s171]
                %203 = vst [vmem:[%s179 + $0x58] sm:%s171] %v202
                %v204 = vld [vmem:[%s178 + $0xc0] sm:%s171]
                %205 = vst [vmem:[%s179 + $0x60] sm:%s171] %v204
                %v206 = vld [vmem:[%s178 + $0xd0] sm:%s171]
                %207 = vst [vmem:[%s179 + $0x68] sm:%s171] %v206
                %v208 = vld [vmem:[%s178 + $0xe0] sm:%s171]
                %209 = vst [vmem:[%s179 + $0x70] sm:%s171] %v208
                %v210 = vld [vmem:[%s178 + $0xf0] sm:%s171]
                %211 = vst [vmem:[%s179 + $0x78] sm:%s171] %v210
                %v212 = vld [vmem:[%s178 + $0x100] sm:%s171]
                %213 = vst [vmem:[%s179 + $0x80] sm:%s171] %v212
                %v214 = vld [vmem:[%s178 + $0x110] sm:%s171]
                %215 = vst [vmem:[%s179 + $0x88] sm:%s171] %v214
                %v216 = vld [vmem:[%s178 + $0x120] sm:%s171]
                %217 = vst [vmem:[%s179 + $0x90] sm:%s171] %v216
                %v218 = vld [vmem:[%s178 + $0x130] sm:%s171]
                %219 = vst [vmem:[%s179 + $0x98] sm:%s171] %v218
                %v220 = vld [vmem:[%s178 + $0x140] sm:%s171]
                %221 = vst [vmem:[%s179 + $0xa0] sm:%s171] %v220
                %v222 = vld [vmem:[%s178 + $0x150] sm:%s171]
                %223 = vst [vmem:[%s179 + $0xa8] sm:%s171] %v222
                %v224 = vld [vmem:[%s178 + $0x160] sm:%s171]
                %225 = vst [vmem:[%s179 + $0xb0] sm:%s171] %v224
                %v226 = vld [vmem:[%s178 + $0x170] sm:%s171]
                %227 = vst [vmem:[%s179 + $0xb8] sm:%s171] %v226
                %v228 = vld [vmem:[%s178 + $0x180] sm:%s171]
                %229 = vst [vmem:[%s179 + $0xc0] sm:%s171] %v228
                %v230 = vld [vmem:[%s178 + $0x190] sm:%s171]
                %231 = vst [vmem:[%s179 + $0xc8] sm:%s171] %v230
                %v232 = vld [vmem:[%s178 + $0x1a0] sm:%s171]
                %233 = vst [vmem:[%s179 + $0xd0] sm:%s171] %v232
                %v234 = vld [vmem:[%s178 + $0x1b0] sm:%s171]
                %235 = vst [vmem:[%s179 + $0xd8] sm:%s171] %v234
                %v236 = vld [vmem:[%s178 + $0x1c0] sm:%s171]
                %237 = vst [vmem:[%s179 + $0xe0] sm:%s171] %v236
                %v238 = vld [vmem:[%s178 + $0x1d0] sm:%s171]
                %239 = vst [vmem:[%s179 + $0xe8] sm:%s171] %v238
                %v240 = vld [vmem:[%s178 + $0x1e0] sm:%s171]
                %241 = vst [vmem:[%s179 + $0xf0] sm:%s171] %v240
                %v242 = vld [vmem:[%s178 + $0x1f0] sm:%s171]
                %243 = vst [vmem:[%s179 + $0xf8] sm:%s171] %v242
              $region41: #{resnet_forward.27} parent=35 // loop_footer
                %s177 = sadd.s32 1, %s173
              $region42: #{resnet_forward.27} parent=35 // loop_footer_branch
                %172 = sbr.rel target = $region38
              $region43: #{resnet_forward.27} parent=35 // loop_exit
                _
            $region36: #{resnet_forward.27} parent=27 // pred_fallthru
              _
          $region28: #{resnet_forward.27} parent=23 // pred_fallthru
            _
          %320 = vnop
        $region24: #{resnet_forward.27} parent=19 // pred_fallthru
          _
        // Predicated region
        $region59: #{resnet_forward.27} parent=19 // pred_check
          %p321 = pneg %p93
        $region60: #{resnet_forward.27} parent=19 // pred_check_branch
          %323 = sbr.rel (%p321) target = $region62
        $region61: #{resnet_forward.27} parent=19 // pred_region
          %s324 = smul.u32 2, %s17
          %p325 = scmp.lt.s32.totalorder %s324, 3
          %s326 = scalar_select %p325, %s324, 3
          %s327 = scalar_lea.vmem %s2, %s326
          %s328 = smul.u32 2, %s17
        $region62: #{resnet_forward.27} parent=19 // pred_fallthru
          _
      $region20: #{resnet_forward.27} parent=5 // pred_fallthru
        _
      %p329 = scmp.le.s32.totalorder 1, %s9
      %p330 = scmp.lt.s32.totalorder %s9, 3
      %p331 = pnand %p329, %p330
      %p332 = pneg %p331
      // Predicated region
      $region63: #{resnet_forward.27} parent=5 // pred_check
        _
      $region64: #{resnet_forward.27} parent=5 // pred_check_branch
        %334 = sbr.rel (%p331) target = $region66
      $region65: #{resnet_forward.27} parent=5 // pred_region
        %s335 = ssub.s32 %s9, 1
        %s336 = sand.u32 %s60, 1
        %s337 = sand.u32 %s60, 1
        %s338 = smul.addr %s337, 256
        %s339 = scalar_lea.vmem [#allocation2], %s338
        // Predicated region
        $region67: #{resnet_forward.27} parent=65 // pred_check
          %p340 = pneg %p73
        $region68: #{resnet_forward.27} parent=65 // pred_check_branch
          %342 = sbr.rel (%p340) target = $region70
        $region69: #{resnet_forward.27} parent=65 // pred_region
          _
        $region70: #{resnet_forward.27} parent=65 // pred_fallthru
          _
        %p343 = scmp.lt.s32.totalorder %s18, 0
        %s344 = scalar_select %p343, %s18, 0
        %s345 = smul.addr %s344, 2
        %s346 = smul.addr %s345, 4
        %s347 = scalar_lea.vmem %s0, %s346
        %p348 = pneg %p47
        %p349 = pneg %p44
        %s350 = sand.u32 %s60, 1
        %s351 = sand.u32 %s60, 1
        %s352 = smul.addr %s351, 256
        %s353 = scalar_lea.vmem [#allocation2], %s352
        %p354 = pneg %p73
        %p355 = pneg %p70
        %s356 = smul.u32 2, %s19
        %p357 = scmp.lt.s32.totalorder %s356, 3
        %s358 = scalar_select %p357, %s356, 3
        %s359 = scalar_lea.vmem %s2, %s358
        %p360 = pneg %p99
        %p361 = pneg %p96
        %p362 = pneg %p127
        %p363 = pneg %p124
        %s364 = smul.u32 2, %s19
        %p365 = scmp.lt.s32.totalorder %s18, 0
        %s366 = scalar_select %p365, %s18, 0
        %p367 = scmp.lt.s32.totalorder %s364, 3
        %s368 = scalar_select %p367, %s364, 3
        %s369 = smul.addr %s366, 4
        %s370 = sadd.s32 %s368, %s369
        %s371 = smul.addr %s370, 8
        %s372 = scalar_lea.vmem %s3, %s371
        %p373 = scmp.lt.s32.totalorder %s18, 0
        %s374 = scalar_select %p373, %s18, 0
        %s375 = smul.addr %s374, 2
        %s376 = smul.addr %s375, 4
        %s377 = scalar_lea.vmem %s0, %s376
        %s378 = smul.u32 2, %s19
        %s379 = smul.u32 2, %s19
        %p380 = scmp.lt.s32.totalorder %s379, 3
        %s381 = scalar_select %p380, %s379, 3
        %s382 = scalar_lea.vmem %s2, %s381
        %s383 = smul.u32 2, %s19
        %s384 = smul.u32 2, %s19
        %p385 = scmp.lt.s32.totalorder %s18, 0
        %s386 = scalar_select %p385, %s18, 0
        %p387 = scmp.lt.s32.totalorder %s384, 3
        %s388 = scalar_select %p387, %s384, 3
        %s389 = smul.addr %s386, 4
        %s390 = sadd.s32 %s388, %s389
        %s391 = smul.addr %s390, 8
        %s392 = scalar_lea.vmem %s3, %s391
        %s393 = smul.u32 2, %s19
        %v394 = vld [vmem:[%s377] sm:$0xff]
        %v395 = vld [vmem:[%s339] sm:$0xff]
        %v396 = vld [vmem:[%s339 + $0x8] sm:$0xff]
        %v397 = vld [vmem:[%s339 + $0x10] sm:$0xff]
        %v398 = vld [vmem:[%s339 + $0x18] sm:$0xff]
        %v399 = vld [vmem:[%s339 + $0x20] sm:$0xff]
        %v400 = vld [vmem:[%s339 + $0x28] sm:$0xff]
        %v401 = vld [vmem:[%s339 + $0x30] sm:$0xff]
        %v402 = vld [vmem:[%s339 + $0x38] sm:$0xff]
        %v403 = vld [vmem:[%s339 + $0x40] sm:$0xff]
        %v404 = vld [vmem:[%s339 + $0x48] sm:$0xff]
        %v405 = vld [vmem:[%s339 + $0x50] sm:$0xff]
        %v406 = vld [vmem:[%s339 + $0x58] sm:$0xff]
        %v407 = vld [vmem:[%s339 + $0x60] sm:$0xff]
        %v408 = vld [vmem:[%s339 + $0x68] sm:$0xff]
        %v409 = vld [vmem:[%s339 + $0x70] sm:$0xff]
        %v410 = vld [vmem:[%s339 + $0x78] sm:$0xff]
        %v411 = vld [vmem:[%s339 + $0x80] sm:$0xff]
        %v412 = vld [vmem:[%s339 + $0x88] sm:$0xff]
        %v413 = vld [vmem:[%s339 + $0x90] sm:$0xff]
        %v414 = vld [vmem:[%s339 + $0x98] sm:$0xff]
        %v415 = vld [vmem:[%s339 + $0xa0] sm:$0xff]
        %v416 = vld [vmem:[%s339 + $0xa8] sm:$0xff]
        %v417 = vld [vmem:[%s339 + $0xb0] sm:$0xff]
        %v418 = vld [vmem:[%s339 + $0xb8] sm:$0xff]
        %v419 = vld [vmem:[%s339 + $0xc0] sm:$0xff]
        %v420 = vld [vmem:[%s339 + $0xc8] sm:$0xff]
        %v421 = vld [vmem:[%s339 + $0xd0] sm:$0xff]
        %v422 = vld [vmem:[%s339 + $0xd8] sm:$0xff]
        %v423 = vld [vmem:[%s339 + $0xe0] sm:$0xff]
        %v424 = vld [vmem:[%s339 + $0xe8] sm:$0xff]
        %v425 = vld [vmem:[%s339 + $0xf0] sm:$0xff]
        %v426 = vld [vmem:[%s339 + $0xf8] sm:$0xff]
        %v427 = vld [vmem:[%s382] sm:$0x3]
        %v429 = vperm.slane %v427, 0
        %v430 = vperm.slane %v427, 1
        %v434 = vunpack.c.l.b16 %v394
        %v435 = vunpack.c.h.b16 %v394
        %v436 = vpack.c.b16 %v434, %v434
        %v437 = vpack.c.b16 %v435, %v435
        %v472 = vunpack.c.l.b16 %v395
        %v473 = vunpack.c.h.b16 %v395
        %v474 = vunpack.c.l.b16 %v396
        %v475 = vunpack.c.h.b16 %v396
        %v476 = vunpack.c.l.b16 %v397
        %v477 = vunpack.c.h.b16 %v397
        %v478 = vunpack.c.l.b16 %v398
        %v479 = vunpack.c.h.b16 %v398
        %v480 = vunpack.c.l.b16 %v399
        %v481 = vunpack.c.h.b16 %v399
        %v482 = vunpack.c.l.b16 %v400
        %v483 = vunpack.c.h.b16 %v400
        %v484 = vunpack.c.l.b16 %v401
        %v485 = vunpack.c.h.b16 %v401
        %v486 = vunpack.c.l.b16 %v402
        %v487 = vunpack.c.h.b16 %v402
        %v488 = vunpack.c.l.b16 %v403
        %v489 = vunpack.c.h.b16 %v403
        %v490 = vunpack.c.l.b16 %v404
        %v491 = vunpack.c.h.b16 %v404
        %v492 = vunpack.c.l.b16 %v405
        %v493 = vunpack.c.h.b16 %v405
        %v494 = vunpack.c.l.b16 %v406
        %v495 = vunpack.c.h.b16 %v406
        %v496 = vunpack.c.l.b16 %v407
        %v497 = vunpack.c.h.b16 %v407
        %v498 = vunpack.c.l.b16 %v408
        %v499 = vunpack.c.h.b16 %v408
        %v500 = vunpack.c.l.b16 %v409
        %v501 = vunpack.c.h.b16 %v409
        %v502 = vunpack.c.l.b16 %v410
        %v503 = vunpack.c.h.b16 %v410
        %v504 = vunpack.c.l.b16 %v411
        %v505 = vunpack.c.h.b16 %v411
        %v506 = vunpack.c.l.b16 %v412
        %v507 = vunpack.c.h.b16 %v412
        %v508 = vunpack.c.l.b16 %v413
        %v509 = vunpack.c.h.b16 %v413
        %v510 = vunpack.c.l.b16 %v414
        %v511 = vunpack.c.h.b16 %v414
        %v512 = vunpack.c.l.b16 %v415
        %v513 = vunpack.c.h.b16 %v415
        %v514 = vunpack.c.l.b16 %v416
        %v515 = vunpack.c.h.b16 %v416
        %v516 = vunpack.c.l.b16 %v417
        %v517 = vunpack.c.h.b16 %v417
        %v518 = vunpack.c.l.b16 %v418
        %v519 = vunpack.c.h.b16 %v418
        %v520 = vunpack.c.l.b16 %v419
        %v521 = vunpack.c.h.b16 %v419
        %v522 = vunpack.c.l.b16 %v420
        %v523 = vunpack.c.h.b16 %v420
        %v524 = vunpack.c.l.b16 %v421
        %v525 = vunpack.c.h.b16 %v421
        %v526 = vunpack.c.l.b16 %v422
        %v527 = vunpack.c.h.b16 %v422
        %v528 = vunpack.c.l.b16 %v423
        %v529 = vunpack.c.h.b16 %v423
        %v530 = vunpack.c.l.b16 %v424
        %v531 = vunpack.c.h.b16 %v424
        %v532 = vunpack.c.l.b16 %v425
        %v533 = vunpack.c.h.b16 %v425
        %v534 = vunpack.c.l.b16 %v426
        %v535 = vunpack.c.h.b16 %v426
        %v536 = vpack.c.b16 %v474, %v472
        %v537 = vpack.c.b16 %v475, %v473
        %v538 = vpack.c.b16 %v478, %v476
        %v539 = vpack.c.b16 %v479, %v477
        %v540 = vpack.c.b16 %v482, %v480
        %v541 = vpack.c.b16 %v483, %v481
        %v542 = vpack.c.b16 %v486, %v484
        %v543 = vpack.c.b16 %v487, %v485
        %v544 = vpack.c.b16 %v490, %v488
        %v545 = vpack.c.b16 %v491, %v489
        %v546 = vpack.c.b16 %v494, %v492
        %v547 = vpack.c.b16 %v495, %v493
        %v548 = vpack.c.b16 %v498, %v496
        %v549 = vpack.c.b16 %v499, %v497
        %v550 = vpack.c.b16 %v502, %v500
        %v551 = vpack.c.b16 %v503, %v501
        %v552 = vpack.c.b16 %v506, %v504
        %v553 = vpack.c.b16 %v507, %v505
        %v554 = vpack.c.b16 %v510, %v508
        %v555 = vpack.c.b16 %v511, %v509
        %v556 = vpack.c.b16 %v514, %v512
        %v557 = vpack.c.b16 %v515, %v513
        %v558 = vpack.c.b16 %v518, %v516
        %v559 = vpack.c.b16 %v519, %v517
        %v560 = vpack.c.b16 %v522, %v520
        %v561 = vpack.c.b16 %v523, %v521
        %v562 = vpack.c.b16 %v526, %v524
        %v563 = vpack.c.b16 %v527, %v525
        %v564 = vpack.c.b16 %v530, %v528
        %v565 = vpack.c.b16 %v531, %v529
        %v566 = vpack.c.b16 %v534, %v532
        %v567 = vpack.c.b16 %v535, %v533
        %600 = vmatpush.bf16.msra.mxu0 %v550
        %601 = vmatpush.bf16.msra.mxu0 %v548
        %602 = vmatpush.bf16.msra.mxu0 %v546
        %603 = vmatpush.bf16.msra.mxu0 %v544
        %604 = vmatpush.bf16.msra.mxu0 %v542
        %605 = vmatpush.bf16.msra.mxu0 %v540
        %606 = vmatpush.bf16.msra.mxu0 %v538
        %607 = vmatpush.bf16.msra.mxu0 %v536
        %608 = vmatmul.bf16.gmra.mxu0 %v436
        %v609 = vpop.f32.mrf.mxu0
        %v610 = vadd.f32 %v429, %v609
        %v611 = vpop.f32.mrf.mxu0
        %612 = vdwg.mxu0
        %613 = vmatpush.bf16.msra.mxu0 %v566
        %614 = vmatpush.bf16.msra.mxu0 %v564
        %615 = vmatpush.bf16.msra.mxu0 %v562
        %616 = vmatpush.bf16.msra.mxu0 %v560
        %617 = vmatpush.bf16.msra.mxu0 %v558
        %618 = vmatpush.bf16.msra.mxu0 %v556
        %619 = vmatpush.bf16.msra.mxu0 %v554
        %620 = vmatpush.bf16.msra.mxu0 %v552
        %621 = vmatmul.bf16.gmra.mxu0 %v437
        %v622 = vpop.f32.mrf.mxu0
        %v623 = vadd.f32 %v610, %v622
        %v624 = vpop.f32.mrf.mxu0
        %625 = vdwg.mxu0
        %626 = vmatpush.bf16.msra.mxu0 %v551
        %627 = vmatpush.bf16.msra.mxu0 %v549
        %628 = vmatpush.bf16.msra.mxu0 %v547
        %629 = vmatpush.bf16.msra.mxu0 %v545
        %630 = vmatpush.bf16.msra.mxu0 %v543
        %631 = vmatpush.bf16.msra.mxu0 %v541
        %632 = vmatpush.bf16.msra.mxu0 %v539
        %633 = vmatpush.bf16.msra.mxu0 %v537
        %634 = vmatmul.bf16.gmra.mxu0 %v436
        %v635 = vpop.f32.mrf.mxu0
        %v636 = vadd.f32 %v430, %v635
        %v637 = vpop.f32.mrf.mxu0
        %638 = vdwg.mxu0
        %639 = vmatpush.bf16.msra.mxu0 %v567
        %640 = vmatpush.bf16.msra.mxu0 %v565
        %641 = vmatpush.bf16.msra.mxu0 %v563
        %642 = vmatpush.bf16.msra.mxu0 %v561
        %643 = vmatpush.bf16.msra.mxu0 %v559
        %644 = vmatpush.bf16.msra.mxu0 %v557
        %645 = vmatpush.bf16.msra.mxu0 %v555
        %646 = vmatpush.bf16.msra.mxu0 %v553
        %647 = vmatmul.bf16.gmra.mxu0 %v437
        %v648 = vpop.f32.mrf.mxu0
        %v649 = vadd.f32 %v636, %v648
        %v650 = vpop.f32.mrf.mxu0
        %651 = vdwg.mxu0
        %652 = vst [vmem:[%s392] sm:$0xff] %v623
        %653 = vst [vmem:[%s392 + $0x8] sm:$0xff] %v649
        %s654 = smul.u32 2, %s19
        %p655 = scmp.lt.s32.totalorder %s18, 0
        %s656 = scalar_select %p655, %s18, 0
        %p657 = scmp.lt.s32.totalorder %s654, 3
        %s658 = scalar_select %p657, %s654, 3
        %s659 = smul.addr %s656, 4
        %s660 = sadd.s32 %s658, %s659
        %s661 = smul.addr %s660, 8
        %s662 = scalar_lea.vmem %s3, %s661
        // Predicated region
        $region71: #{resnet_forward.27} parent=65 // pred_check
          %p663 = pneg %p124
        $region72: #{resnet_forward.27} parent=65 // pred_check_branch
          %665 = sbr.rel (%p663) target = $region74
        $region73: #{resnet_forward.27} parent=65 // pred_region
          %s666 = smul.u32 2, %s19
        $region74: #{resnet_forward.27} parent=65 // pred_fallthru
          _
      $region66: #{resnet_forward.27} parent=5 // pred_fallthru
        _
      %p667 = scmp.le.s32.totalorder 2, %s9
      // Predicated region
      $region75: #{resnet_forward.27} parent=5 // pred_check
        %p668 = pneg %p667
      $region76: #{resnet_forward.27} parent=5 // pred_check_branch
        %670 = sbr.rel (%p668) target = $region78
      $region77: #{resnet_forward.27} parent=5 // pred_region
        %s671 = ssub.s32 %s9, 2
        // Predicated region
        $region79: #{resnet_forward.27} parent=77 // pred_check
          %p672 = pneg %p130
        $region80: #{resnet_forward.27} parent=77 // pred_check_branch
          %674 = sbr.rel (%p672) target = $region82
        $region81: #{resnet_forward.27} parent=77 // pred_region
          %s675 = smul.u32 2, %s21
          %p676 = scmp.lt.s32.totalorder %s20, 0
          %s677 = scalar_select %p676, %s20, 0
          %p678 = scmp.lt.s32.totalorder %s675, 3
          %s679 = scalar_select %p678, %s675, 3
          %s680 = smul.addr %s677, 4
          %s681 = sadd.s32 %s679, %s680
          %s682 = smul.addr %s681, 8
          %s683 = scalar_lea.vmem %s3, %s682
        $region82: #{resnet_forward.27} parent=77 // pred_fallthru
          _
      $region78: #{resnet_forward.27} parent=5 // pred_fallthru
        _
    $region6: #{resnet_forward.27} parent=1 // loop_footer
      %s13 = sadd.s32 1, %s9
    $region7: #{resnet_forward.27} parent=1 // loop_footer_branch
      %8 = sbr.rel target = $region3
    $region8: #{resnet_forward.27} parent=1 // loop_exit
      _

// kernel: resnet_forward.28
$region0: #{resnet_forward.28}
  #allocation0 [shape = 'u32[]', space=smem, size = 0x4, offset = 0x4, fixed_abs, tag = 'smem constant byte address 0x4 - core index']
  #allocation1 [shape = 'u32[72,128]{1,0:T(1,128)}', space=vmem, size = 0x9000, scoped, tag = 'internal scratch']
  %s0 = inlined_call_operand.vmem [shape: bf16[8,512], index: 0, kind: input, shape index: {}]
  %s1 = inlined_call_operand.vmem [shape: bf16[512,512], index: 1, kind: input, shape index: {}]
  %s2 = inlined_call_operand.vmem [shape: f32[1,512], index: 2, kind: input, shape index: {}]
  %s3 = inlined_call_operand.vmem [shape: f32[8,512], index: 3, kind: input, shape index: {}]
  %s4 = inlined_call_operand.vmem [shape: f32[8,512], index: 4, kind: output, shape index: {}]
  %s5 = sld [smem:[#allocation0]]
  $region87: #{resnet_forward.28} parent=0
    _
  %s7 = ssub.s32 1, %s5
  %s8 = scalar_select 0, %s7, %s5
  $region1: #{resnet_forward.28} parent=0
    #allocation2 [shape = 'u8[524288]{0}', space=vmem, size = 0x80000, scoped, tag = 'input window, operand 1']
    loop: start=0, step=1, limit=4
    $region2: #{resnet_forward.28} parent=1 // loop_pre_header
      _
    $region3: #{resnet_forward.28} parent=1 // loop_header
      %s10 = sphi 0, %s14
      %p11 = scmp.ge.s32.totalorder %s10, 4
      %s17 = sphi 0, %s29
      %s18 = sphi 0, %s25
      %s19 = sphi 0, %s17
      %s20 = sphi 0, %s18
      %s21 = sphi 0, %s19
      %s22 = sphi 0, %s20
      %s32 = sphi 0, %s34
      %s35 = sphi 0, %s32
      %s36 = sphi 0, %s35
      %s52 = sphi 0, %s36
      %s58 = sphi 0, %s60
      %s61 = sphi 0, %s58
      %s62 = sphi 0, %s61
      %s78 = sphi 0, %s62
      %s84 = sphi 0, %s86
      %s87 = sphi 0, %s84
      %s88 = sphi 0, %s87
      %s104 = sphi 0, %s88
      %s112 = sphi 0, %s114
      %s115 = sphi 0, %s112
      %s116 = sphi 0, %s115
      %s132 = sphi 0, %s116
      %s140 = sphi 0, %s142
      %s143 = sphi 0, %s140
      %s144 = sphi 0, %s143
      %s160 = sphi 0, %s144
    $region4: #{resnet_forward.28} parent=1 // loop_header_branch
      %13 = sbr.rel (%p11) target = $region8
    $region5: #{resnet_forward.28} parent=1 // loop_body
      %s15 = ssub.s32 %s10, 1
      %s16 = ssub.s32 %s10, 2
      %s23 = sadd.s32 1, %s18
      %p24 = scmp.ge.s32.totalorder %s23, 2
      %s25 = scalar_select %p24, 0, %s23
      %s26 = sadd.s32 1, %s17
      %s27 = scalar_select %p24, %s26, %s17
      %p28 = scmp.ge.s32.totalorder %s27, 1
      %s29 = scalar_select %p28, 0, %s27
      %s30 = ssub.s32 %s17, %s29
      %p31 = scmp.eq.s32.totalorder %s30, 0
      %s33 = sadd.s32 %s32, 1
      %s34 = scalar_select %p31, %s32, %s33
      %p37 = pneg %p31
      %p38 = scmp.eq.s32.totalorder %s10, 1
      %p39 = por %p37, %p38
      %p40 = scmp.ne.s32.totalorder %s32, %s35
      %p41 = scmp.eq.s32.totalorder %s10, 0
      %p42 = por %p40, %p41
      %p43 = scmp.ne.s32.totalorder %s32, %s35
      %p44 = scmp.eq.s32.totalorder %s15, 1
      %p45 = por %p43, %p44
      %p46 = scmp.ne.s32.totalorder %s35, %s36
      %p47 = scmp.eq.s32.totalorder %s15, 0
      %p48 = por %p46, %p47
      %p49 = scmp.ne.s32.totalorder %s35, %s36
      %p50 = scmp.eq.s32.totalorder %s16, 1
      %p51 = por %p49, %p50
      %p53 = scmp.ne.s32.totalorder %s36, %s52
      %p54 = scmp.eq.s32.totalorder %s16, 0
      %p55 = por %p53, %p54
      %s56 = ssub.s32 %s18, %s25
      %p57 = scmp.eq.s32.totalorder %s56, 0
      %s59 = sadd.s32 %s58, 1
      %s60 = scalar_select %p57, %s58, %s59
      %p63 = pneg %p57
      %p64 = scmp.eq.s32.totalorder %s10, 1
      %p65 = por %p63, %p64
      %p66 = scmp.ne.s32.totalorder %s58, %s61
      %p67 = scmp.eq.s32.totalorder %s10, 0
      %p68 = por %p66, %p67
      %p69 = scmp.ne.s32.totalorder %s58, %s61
      %p70 = scmp.eq.s32.totalorder %s15, 1
      %p71 = por %p69, %p70
      %p72 = scmp.ne.s32.totalorder %s61, %s62
      %p73 = scmp.eq.s32.totalorder %s15, 0
      %p74 = por %p72, %p73
      %p75 = scmp.ne.s32.totalorder %s61, %s62
      %p76 = scmp.eq.s32.totalorder %s16, 1
      %p77 = por %p75, %p76
      %p79 = scmp.ne.s32.totalorder %s62, %s78
      %p80 = scmp.eq.s32.totalorder %s16, 0
      %p81 = por %p79, %p80
      %s82 = ssub.s32 %s18, %s25
      %p83 = scmp.eq.s32.totalorder %s82, 0
      %s85 = sadd.s32 %s84, 1
      %s86 = scalar_select %p83, %s84, %s85
      %p89 = pneg %p83
      %p90 = scmp.eq.s32.totalorder %s10, 1
      %p91 = por %p89, %p90
      %p92 = scmp.ne.s32.totalorder %s84, %s87
      %p93 = scmp.eq.s32.totalorder %s10, 0
      %p94 = por %p92, %p93
      %p95 = scmp.ne.s32.totalorder %s84, %s87
      %p96 = scmp.eq.s32.totalorder %s15, 1
      %p97 = por %p95, %p96
      %p98 = scmp.ne.s32.totalorder %s87, %s88
      %p99 = scmp.eq.s32.totalorder %s15, 0
      %p100 = por %p98, %p99
      %p101 = scmp.ne.s32.totalorder %s87, %s88
      %p102 = scmp.eq.s32.totalorder %s16, 1
      %p103 = por %p101, %p102
      %p105 = scmp.ne.s32.totalorder %s88, %s104
      %p106 = scmp.eq.s32.totalorder %s16, 0
      %p107 = por %p105, %p106
      %s108 = ssub.s32 %s17, %s29
      %s109 = ssub.s32 %s18, %s25
      %s110 = sor.u32 %s108, %s109
      %p111 = scmp.eq.s32.totalorder %s110, 0
      %s113 = sadd.s32 %s112, 1
      %s114 = scalar_select %p111, %s112, %s113
      %p117 = pneg %p111
      %p118 = scmp.eq.s32.totalorder %s10, 1
      %p119 = por %p117, %p118
      %p120 = scmp.ne.s32.totalorder %s112, %s115
      %p121 = scmp.eq.s32.totalorder %s10, 0
      %p122 = por %p120, %p121
      %p123 = scmp.ne.s32.totalorder %s112, %s115
      %p124 = scmp.eq.s32.totalorder %s15, 1
      %p125 = por %p123, %p124
      %p126 = scmp.ne.s32.totalorder %s115, %s116
      %p127 = scmp.eq.s32.totalorder %s15, 0
      %p128 = por %p126, %p127
      %p129 = scmp.ne.s32.totalorder %s115, %s116
      %p130 = scmp.eq.s32.totalorder %s16, 1
      %p131 = por %p129, %p130
      %p133 = scmp.ne.s32.totalorder %s116, %s132
      %p134 = scmp.eq.s32.totalorder %s16, 0
      %p135 = por %p133, %p134
      %s136 = ssub.s32 %s17, %s29
      %s137 = ssub.s32 %s18, %s25
      %s138 = sor.u32 %s136, %s137
      %p139 = scmp.eq.s32.totalorder %s138, 0
      %s141 = sadd.s32 %s140, 1
      %s142 = scalar_select %p139, %s140, %s141
      %p145 = pneg %p139
      %p146 = scmp.eq.s32.totalorder %s10, 1
      %p147 = por %p145, %p146
      %p148 = scmp.ne.s32.totalorder %s140, %s143
      %p149 = scmp.eq.s32.totalorder %s10, 0
      %p150 = por %p148, %p149
      %p151 = scmp.ne.s32.totalorder %s140, %s143
      %p152 = scmp.eq.s32.totalorder %s15, 1
      %p153 = por %p151, %p152
      %p154 = scmp.ne.s32.totalorder %s143, %s144
      %p155 = scmp.eq.s32.totalorder %s15, 0
      %p156 = por %p154, %p155
      %p157 = scmp.ne.s32.totalorder %s143, %s144
      %p158 = scmp.eq.s32.totalorder %s16, 1
      %p159 = por %p157, %p158
      %p161 = scmp.ne.s32.totalorder %s144, %s160
      %p162 = scmp.eq.s32.totalorder %s16, 0
      %p163 = por %p161, %p162
      %p164 = scmp.le.s32.totalorder 1, %s10
      %p165 = scmp.lt.s32.totalorder %s10, 3
      %p166 = pnand %p164, %p165
      %p167 = pneg %p166
      // Predicated region
      $region9: #{resnet_forward.28} parent=5 // pred_check
        _
      $region10: #{resnet_forward.28} parent=5 // pred_check_branch
        %169 = sbr.rel (%p166) target = $region12
      $region11: #{resnet_forward.28} parent=5 // pred_region
        %s170 = ssub.s32 %s10, 1
        // Predicated region
        $region13: #{resnet_forward.28} parent=11 // pred_check
          %p171 = pneg %p48
        $region14: #{resnet_forward.28} parent=11 // pred_check_branch
          %173 = sbr.rel (%p171) target = $region16
        $region15: #{resnet_forward.28} parent=11 // pred_region
          %p174 = scmp.lt.s32.totalorder %s19, 0
          %s175 = scalar_select %p174, %s19, 0
          %s176 = smul.addr %s175, 4
          %s177 = smul.addr %s176, 4
          %s178 = scalar_lea.vmem %s0, %s177
        $region16: #{resnet_forward.28} parent=11 // pred_fallthru
          _
      $region12: #{resnet_forward.28} parent=5 // pred_fallthru
        _
      %p179 = scmp.lt.s32.totalorder %s10, 2
      // Predicated region
      $region17: #{resnet_forward.28} parent=5 // pred_check
        %p180 = pneg %p179
      $region18: #{resnet_forward.28} parent=5 // pred_check_branch
        %182 = sbr.rel (%p180) target = $region20
      $region19: #{resnet_forward.28} parent=5 // pred_region
        // Predicated region
        $region21: #{resnet_forward.28} parent=19 // pred_check
          %p183 = pneg %p68
        $region22: #{resnet_forward.28} parent=19 // pred_check_branch
          %185 = sbr.rel (%p183) target = $region24
        $region23: #{resnet_forward.28} parent=19 // pred_region
          %s186 = sand.u32 %s58, 1
          %s187 = sand.u32 %s58, 1
          %s188 = smul.addr %s187, 512
          %s189 = scalar_lea.vmem [#allocation2], %s188
          %s190 = smul.u32 2, %s18
          %s191 = smul.addr %s190, 4
          %s192 = scalar_lea.vmem %s1, %s191
          // Predicated region
          $region25: #{resnet_forward.28} parent=23 // pred_check
            _
          $region26: #{resnet_forward.28} parent=23 // pred_check_branch
            %194 = sbr.rel (0) target = $region28
          $region27: #{resnet_forward.28} parent=23 // pred_region
            // Predicated region
            $region29: #{resnet_forward.28} parent=27 // pred_check
              _
            $region30: #{resnet_forward.28} parent=27 // pred_check_branch
              %196 = sbr.rel (0) target = $region32
            $region31: #{resnet_forward.28} parent=27 // pred_region
              // Predicated region
              $region44: #{resnet_forward.28} parent=31 // pred_check
                _
              $region45: #{resnet_forward.28} parent=31 // pred_check_branch
                %338 = sbr.rel (0) target = $region47
              $region46: #{resnet_forward.28} parent=31 // pred_region
                loop: start=0, step=1, limit=1
                $region48: #{resnet_forward.28} parent=46 // loop_pre_header
                  _
                $region49: #{resnet_forward.28} parent=46 // loop_header
                  %s340 = sphi 0, %s344
                  %p341 = scmp.ge.s32.totalorder %s340, 1
                  %s345 = sphi %s192, %s192
                  %s346 = sphi %s189, %s189
                $region50: #{resnet_forward.28} parent=46 // loop_header_branch
                  %343 = sbr.rel (%p341) target = $region54
                $region51: #{resnet_forward.28} parent=46 // loop_body
                  %v347 = vld [vmem:[%s345] sm:$0xff]
                  %348 = vst [vmem:[%s346] sm:$0xff] %v347
                  %v349 = vld [vmem:[%s345 + $0x10] sm:$0xff]
                  %350 = vst [vmem:[%s346 + $0x8] sm:$0xff] %v349
                  %v351 = vld [vmem:[%s345 + $0x20] sm:$0xff]
                  %352 = vst [vmem:[%s346 + $0x10] sm:$0xff] %v351
                  %v353 = vld [vmem:[%s345 + $0x30] sm:$0xff]
                  %354 = vst [vmem:[%s346 + $0x18] sm:$0xff] %v353
                  %v355 = vld [vmem:[%s345 + $0x40] sm:$0xff]
                  %356 = vst [vmem:[%s346 + $0x20] sm:$0xff] %v355
                  %v357 = vld [vmem:[%s345 + $0x50] sm:$0xff]
                  %358 = vst [vmem:[%s346 + $0x28] sm:$0xff] %v357
                  %v359 = vld [vmem:[%s345 + $0x60] sm:$0xff]
                  %360 = vst [vmem:[%s346 + $0x30] sm:$0xff] %v359
                  %v361 = vld [vmem:[%s345 + $0x70] sm:$0xff]
                  %362 = vst [vmem:[%s346 + $0x38] sm:$0xff] %v361
                  %v363 = vld [vmem:[%s345 + $0x80] sm:$0xff]
                  %364 = vst [vmem:[%s346 + $0x40] sm:$0xff] %v363
                  %v365 = vld [vmem:[%s345 + $0x90] sm:$0xff]
                  %366 = vst [vmem:[%s346 + $0x48] sm:$0xff] %v365
                  %v367 = vld [vmem:[%s345 + $0xa0] sm:$0xff]
                  %368 = vst [vmem:[%s346 + $0x50] sm:$0xff] %v367
                  %v369 = vld [vmem:[%s345 + $0xb0] sm:$0xff]
                  %370 = vst [vmem:[%s346 + $0x58] sm:$0xff] %v369
                  %v371 = vld [vmem:[%s345 + $0xc0] sm:$0xff]
                  %372 = vst [vmem:[%s346 + $0x60] sm:$0xff] %v371
                  %v373 = vld [vmem:[%s345 + $0xd0] sm:$0xff]
                  %374 = vst [vmem:[%s346 + $0x68] sm:$0xff] %v373
                  %v375 = vld [vmem:[%s345 + $0xe0] sm:$0xff]
                  %376 = vst [vmem:[%s346 + $0x70] sm:$0xff] %v375
                  %v377 = vld [vmem:[%s345 + $0xf0] sm:$0xff]
                  %378 = vst [vmem:[%s346 + $0x78] sm:$0xff] %v377
                  %v379 = vld [vmem:[%s345 + $0x100] sm:$0xff]
                  %380 = vst [vmem:[%s346 + $0x80] sm:$0xff] %v379
                  %v381 = vld [vmem:[%s345 + $0x110] sm:$0xff]
                  %382 = vst [vmem:[%s346 + $0x88] sm:$0xff] %v381
                  %v383 = vld [vmem:[%s345 + $0x120] sm:$0xff]
                  %384 = vst [vmem:[%s346 + $0x90] sm:$0xff] %v383
                  %v385 = vld [vmem:[%s345 + $0x130] sm:$0xff]
                  %386 = vst [vmem:[%s346 + $0x98] sm:$0xff] %v385
                  %v387 = vld [vmem:[%s345 + $0x140] sm:$0xff]
                  %388 = vst [vmem:[%s346 + $0xa0] sm:$0xff] %v387
                  %v389 = vld [vmem:[%s345 + $0x150] sm:$0xff]
                  %390 = vst [vmem:[%s346 + $0xa8] sm:$0xff] %v389
                  %v391 = vld [vmem:[%s345 + $0x160] sm:$0xff]
                  %392 = vst [vmem:[%s346 + $0xb0] sm:$0xff] %v391
                  %v393 = vld [vmem:[%s345 + $0x170] sm:$0xff]
                  %394 = vst [vmem:[%s346 + $0xb8] sm:$0xff] %v393
                  %v395 = vld [vmem:[%s345 + $0x180] sm:$0xff]
                  %396 = vst [vmem:[%s346 + $0xc0] sm:$0xff] %v395
                  %v397 = vld [vmem:[%s345 + $0x190] sm:$0xff]
                  %398 = vst [vmem:[%s346 + $0xc8] sm:$0xff] %v397
                  %v399 = vld [vmem:[%s345 + $0x1a0] sm:$0xff]
                  %400 = vst [vmem:[%s346 + $0xd0] sm:$0xff] %v399
                  %v401 = vld [vmem:[%s345 + $0x1b0] sm:$0xff]
                  %402 = vst [vmem:[%s346 + $0xd8] sm:$0xff] %v401
                  %v403 = vld [vmem:[%s345 + $0x1c0] sm:$0xff]
                  %404 = vst [vmem:[%s346 + $0xe0] sm:$0xff] %v403
                  %v405 = vld [vmem:[%s345 + $0x1d0] sm:$0xff]
                  %406 = vst [vmem:[%s346 + $0xe8] sm:$0xff] %v405
                  %v407 = vld [vmem:[%s345 + $0x1e0] sm:$0xff]
                  %408 = vst [vmem:[%s346 + $0xf0] sm:$0xff] %v407
                  %v409 = vld [vmem:[%s345 + $0x1f0] sm:$0xff]
                  %410 = vst [vmem:[%s346 + $0xf8] sm:$0xff] %v409
                  %v411 = vld [vmem:[%s345 + $0x200] sm:$0xff]
                  %412 = vst [vmem:[%s346 + $0x100] sm:$0xff] %v411
                  %v413 = vld [vmem:[%s345 + $0x210] sm:$0xff]
                  %414 = vst [vmem:[%s346 + $0x108] sm:$0xff] %v413
                  %v415 = vld [vmem:[%s345 + $0x220] sm:$0xff]
                  %416 = vst [vmem:[%s346 + $0x110] sm:$0xff] %v415
                  %v417 = vld [vmem:[%s345 + $0x230] sm:$0xff]
                  %418 = vst [vmem:[%s346 + $0x118] sm:$0xff] %v417
                  %v419 = vld [vmem:[%s345 + $0x240] sm:$0xff]
                  %420 = vst [vmem:[%s346 + $0x120] sm:$0xff] %v419
                  %v421 = vld [vmem:[%s345 + $0x250] sm:$0xff]
                  %422 = vst [vmem:[%s346 + $0x128] sm:$0xff] %v421
                  %v423 = vld [vmem:[%s345 + $0x260] sm:$0xff]
                  %424 = vst [vmem:[%s346 + $0x130] sm:$0xff] %v423
                  %v425 = vld [vmem:[%s345 + $0x270] sm:$0xff]
                  %426 = vst [vmem:[%s346 + $0x138] sm:$0xff] %v425
                  %v427 = vld [vmem:[%s345 + $0x280] sm:$0xff]
                  %428 = vst [vmem:[%s346 + $0x140] sm:$0xff] %v427
                  %v429 = vld [vmem:[%s345 + $0x290] sm:$0xff]
                  %430 = vst [vmem:[%s346 + $0x148] sm:$0xff] %v429
                  %v431 = vld [vmem:[%s345 + $0x2a0] sm:$0xff]
                  %432 = vst [vmem:[%s346 + $0x150] sm:$0xff] %v431
                  %v433 = vld [vmem:[%s345 + $0x2b0] sm:$0xff]
                  %434 = vst [vmem:[%s346 + $0x158] sm:$0xff] %v433
                  %v435 = vld [vmem:[%s345 + $0x2c0] sm:$0xff]
                  %436 = vst [vmem:[%s346 + $0x160] sm:$0xff] %v435
                  %v437 = vld [vmem:[%s345 + $0x2d0] sm:$0xff]
                  %438 = vst [vmem:[%s346 + $0x168] sm:$0xff] %v437
                  %v439 = vld [vmem:[%s345 + $0x2e0] sm:$0xff]
                  %440 = vst [vmem:[%s346 + $0x170] sm:$0xff] %v439
                  %v441 = vld [vmem:[%s345 + $0x2f0] sm:$0xff]
                  %442 = vst [vmem:[%s346 + $0x178] sm:$0xff] %v441
                  %v443 = vld [vmem:[%s345 + $0x300] sm:$0xff]
                  %444 = vst [vmem:[%s346 + $0x180] sm:$0xff] %v443
                  %v445 = vld [vmem:[%s345 + $0x310] sm:$0xff]
                  %446 = vst [vmem:[%s346 + $0x188] sm:$0xff] %v445
                  %v447 = vld [vmem:[%s345 + $0x320] sm:$0xff]
                  %448 = vst [vmem:[%s346 + $0x190] sm:$0xff] %v447
                  %v449 = vld [vmem:[%s345 + $0x330] sm:$0xff]
                  %450 = vst [vmem:[%s346 + $0x198] sm:$0xff] %v449
                  %v451 = vld [vmem:[%s345 + $0x340] sm:$0xff]
                  %452 = vst [vmem:[%s346 + $0x1a0] sm:$0xff] %v451
                  %v453 = vld [vmem:[%s345 + $0x350] sm:$0xff]
                  %454 = vst [vmem:[%s346 + $0x1a8] sm:$0xff] %v453
                  %v455 = vld [vmem:[%s345 + $0x360] sm:$0xff]
                  %456 = vst [vmem:[%s346 + $0x1b0] sm:$0xff] %v455
                  %v457 = vld [vmem:[%s345 + $0x370] sm:$0xff]
                  %458 = vst [vmem:[%s346 + $0x1b8] sm:$0xff] %v457
                  %v459 = vld [vmem:[%s345 + $0x380] sm:$0xff]
                  %460 = vst [vmem:[%s346 + $0x1c0] sm:$0xff] %v459
                  %v461 = vld [vmem:[%s345 + $0x390] sm:$0xff]
                  %462 = vst [vmem:[%s346 + $0x1c8] sm:$0xff] %v461
                  %v463 = vld [vmem:[%s345 + $0x3a0] sm:$0xff]
                  %464 = vst [vmem:[%s346 + $0x1d0] sm:$0xff] %v463
                  %v465 = vld [vmem:[%s345 + $0x3b0] sm:$0xff]
                  %466 = vst [vmem:[%s346 + $0x1d8] sm:$0xff] %v465
                  %v467 = vld [vmem:[%s345 + $0x3c0] sm:$0xff]
                  %468 = vst [vmem:[%s346 + $0x1e0] sm:$0xff] %v467
                  %v469 = vld [vmem:[%s345 + $0x3d0] sm:$0xff]
                  %470 = vst [vmem:[%s346 + $0x1e8] sm:$0xff] %v469
                  %v471 = vld [vmem:[%s345 + $0x3e0] sm:$0xff]
                  %472 = vst [vmem:[%s346 + $0x1f0] sm:$0xff] %v471
                  %v473 = vld [vmem:[%s345 + $0x3f0] sm:$0xff]
                  %474 = vst [vmem:[%s346 + $0x1f8] sm:$0xff] %v473
                $region52: #{resnet_forward.28} parent=46 // loop_footer
                  %s344 = sadd.s32 1, %s340
                $region53: #{resnet_forward.28} parent=46 // loop_footer_branch
                  %339 = sbr.rel target = $region49
                $region54: #{resnet_forward.28} parent=46 // loop_exit
                  _
              $region47: #{resnet_forward.28} parent=31 // pred_fallthru
                _
              // Predicated region
              $region55: #{resnet_forward.28} parent=31 // pred_check
                _
              $region56: #{resnet_forward.28} parent=31 // pred_check_branch
                %476 = sbr.rel target = $region58
              $region57: #{resnet_forward.28} parent=31 // pred_region
                _
              $region58: #{resnet_forward.28} parent=31 // pred_fallthru
                _
            $region32: #{resnet_forward.28} parent=27 // pred_fallthru
              _
            // Predicated region
            $region33: #{resnet_forward.28} parent=27 // pred_check
              _
            $region34: #{resnet_forward.28} parent=27 // pred_check_branch
              %198 = sbr.rel target = $region36
            $region35: #{resnet_forward.28} parent=27 // pred_region
              %s200 = ssub.s32 256, 1
              loop: start=0, step=1, limit=1
              $region37: #{resnet_forward.28} parent=35 // loop_pre_header
                _
              $region38: #{resnet_forward.28} parent=35 // loop_header
                %s202 = sphi 0, %s206
                %p203 = scmp.ge.s32.totalorder %s202, 1
                %s207 = sphi %s192, %s192
                %s208 = sphi %s189, %s189
              $region39: #{resnet_forward.28} parent=35 // loop_header_branch
                %205 = sbr.rel (%p203) target = $region43
              $region40: #{resnet_forward.28} parent=35 // loop_body
                %v209 = vld [vmem:[%s207] sm:%s200]
                %210 = vst [vmem:[%s208] sm:%s200] %v209
                %v211 = vld [vmem:[%s207 + $0x10] sm:%s200]
                %212 = vst [vmem:[%s208 + $0x8] sm:%s200] %v211
                %v213 = vld [vmem:[%s207 + $0x20] sm:%s200]
                %214 = vst [vmem:[%s208 + $0x10] sm:%s200] %v213
                %v215 = vld [vmem:[%s207 + $0x30] sm:%s200]
                %216 = vst [vmem:[%s208 + $0x18] sm:%s200] %v215
                %v217 = vld [vmem:[%s207 + $0x40] sm:%s200]
                %218 = vst [vmem:[%s208 + $0x20] sm:%s200] %v217
                %v219 = vld [vmem:[%s207 + $0x50] sm:%s200]
                %220 = vst [vmem:[%s208 + $0x28] sm:%s200] %v219
                %v221 = vld [vmem:[%s207 + $0x60] sm:%s200]
                %222 = vst [vmem:[%s208 + $0x30] sm:%s200] %v221
                %v223 = vld [vmem:[%s207 + $0x70] sm:%s200]
                %224 = vst [vmem:[%s208 + $0x38] sm:%s200] %v223
                %v225 = vld [vmem:[%s207 + $0x80] sm:%s200]
                %226 = vst [vmem:[%s208 + $0x40] sm:%s200] %v225
                %v227 = vld [vmem:[%s207 + $0x90] sm:%s200]
                %228 = vst [vmem:[%s208 + $0x48] sm:%s200] %v227
                %v229 = vld [vmem:[%s207 + $0xa0] sm:%s200]
                %230 = vst [vmem:[%s208 + $0x50] sm:%s200] %v229
                %v231 = vld [vmem:[%s207 + $0xb0] sm:%s200]
                %232 = vst [vmem:[%s208 + $0x58] sm:%s200] %v231
                %v233 = vld [vmem:[%s207 + $0xc0] sm:%s200]
                %234 = vst [vmem:[%s208 + $0x60] sm:%s200] %v233
                %v235 = vld [vmem:[%s207 + $0xd0] sm:%s200]
                %236 = vst [vmem:[%s208 + $0x68] sm:%s200] %v235
                %v237 = vld [vmem:[%s207 + $0xe0] sm:%s200]
                %238 = vst [vmem:[%s208 + $0x70] sm:%s200] %v237
                %v239 = vld [vmem:[%s207 + $0xf0] sm:%s200]
                %240 = vst [vmem:[%s208 + $0x78] sm:%s200] %v239
                %v241 = vld [vmem:[%s207 + $0x100] sm:%s200]
                %242 = vst [vmem:[%s208 + $0x80] sm:%s200] %v241
                %v243 = vld [vmem:[%s207 + $0x110] sm:%s200]
                %244 = vst [vmem:[%s208 + $0x88] sm:%s200] %v243
                %v245 = vld [vmem:[%s207 + $0x120] sm:%s200]
                %246 = vst [vmem:[%s208 + $0x90] sm:%s200] %v245
                %v247 = vld [vmem:[%s207 + $0x130] sm:%s200]
                %248 = vst [vmem:[%s208 + $0x98] sm:%s200] %v247
                %v249 = vld [vmem:[%s207 + $0x140] sm:%s200]
                %250 = vst [vmem:[%s208 + $0xa0] sm:%s200] %v249
                %v251 = vld [vmem:[%s207 + $0x150] sm:%s200]
                %252 = vst [vmem:[%s208 + $0xa8] sm:%s200] %v251
                %v253 = vld [vmem:[%s207 + $0x160] sm:%s200]
                %254 = vst [vmem:[%s208 + $0xb0] sm:%s200] %v253
                %v255 = vld [vmem:[%s207 + $0x170] sm:%s200]
                %256 = vst [vmem:[%s208 + $0xb8] sm:%s200] %v255
                %v257 = vld [vmem:[%s207 + $0x180] sm:%s200]
                %258 = vst [vmem:[%s208 + $0xc0] sm:%s200] %v257
                %v259 = vld [vmem:[%s207 + $0x190] sm:%s200]
                %260 = vst [vmem:[%s208 + $0xc8] sm:%s200] %v259
                %v261 = vld [vmem:[%s207 + $0x1a0] sm:%s200]
                %262 = vst [vmem:[%s208 + $0xd0] sm:%s200] %v261
                %v263 = vld [vmem:[%s207 + $0x1b0] sm:%s200]
                %264 = vst [vmem:[%s208 + $0xd8] sm:%s200] %v263
                %v265 = vld [vmem:[%s207 + $0x1c0] sm:%s200]
                %266 = vst [vmem:[%s208 + $0xe0] sm:%s200] %v265
                %v267 = vld [vmem:[%s207 + $0x1d0] sm:%s200]
                %268 = vst [vmem:[%s208 + $0xe8] sm:%s200] %v267
                %v269 = vld [vmem:[%s207 + $0x1e0] sm:%s200]
                %270 = vst [vmem:[%s208 + $0xf0] sm:%s200] %v269
                %v271 = vld [vmem:[%s207 + $0x1f0] sm:%s200]
                %272 = vst [vmem:[%s208 + $0xf8] sm:%s200] %v271
                %v273 = vld [vmem:[%s207 + $0x200] sm:%s200]
                %274 = vst [vmem:[%s208 + $0x100] sm:%s200] %v273
                %v275 = vld [vmem:[%s207 + $0x210] sm:%s200]
                %276 = vst [vmem:[%s208 + $0x108] sm:%s200] %v275
                %v277 = vld [vmem:[%s207 + $0x220] sm:%s200]
                %278 = vst [vmem:[%s208 + $0x110] sm:%s200] %v277
                %v279 = vld [vmem:[%s207 + $0x230] sm:%s200]
                %280 = vst [vmem:[%s208 + $0x118] sm:%s200] %v279
                %v281 = vld [vmem:[%s207 + $0x240] sm:%s200]
                %282 = vst [vmem:[%s208 + $0x120] sm:%s200] %v281
                %v283 = vld [vmem:[%s207 + $0x250] sm:%s200]
                %284 = vst [vmem:[%s208 + $0x128] sm:%s200] %v283
                %v285 = vld [vmem:[%s207 + $0x260] sm:%s200]
                %286 = vst [vmem:[%s208 + $0x130] sm:%s200] %v285
                %v287 = vld [vmem:[%s207 + $0x270] sm:%s200]
                %288 = vst [vmem:[%s208 + $0x138] sm:%s200] %v287
                %v289 = vld [vmem:[%s207 + $0x280] sm:%s200]
                %290 = vst [vmem:[%s208 + $0x140] sm:%s200] %v289
                %v291 = vld [vmem:[%s207 + $0x290] sm:%s200]
                %292 = vst [vmem:[%s208 + $0x148] sm:%s200] %v291
                %v293 = vld [vmem:[%s207 + $0x2a0] sm:%s200]
                %294 = vst [vmem:[%s208 + $0x150] sm:%s200] %v293
                %v295 = vld [vmem:[%s207 + $0x2b0] sm:%s200]
                %296 = vst [vmem:[%s208 + $0x158] sm:%s200] %v295
                %v297 = vld [vmem:[%s207 + $0x2c0] sm:%s200]
                %298 = vst [vmem:[%s208 + $0x160] sm:%s200] %v297
                %v299 = vld [vmem:[%s207 + $0x2d0] sm:%s200]
                %300 = vst [vmem:[%s208 + $0x168] sm:%s200] %v299
                %v301 = vld [vmem:[%s207 + $0x2e0] sm:%s200]
                %302 = vst [vmem:[%s208 + $0x170] sm:%s200] %v301
                %v303 = vld [vmem:[%s207 + $0x2f0] sm:%s200]
                %304 = vst [vmem:[%s208 + $0x178] sm:%s200] %v303
                %v305 = vld [vmem:[%s207 + $0x300] sm:%s200]
                %306 = vst [vmem:[%s208 + $0x180] sm:%s200] %v305
                %v307 = vld [vmem:[%s207 + $0x310] sm:%s200]
                %308 = vst [vmem:[%s208 + $0x188] sm:%s200] %v307
                %v309 = vld [vmem:[%s207 + $0x320] sm:%s200]
                %310 = vst [vmem:[%s208 + $0x190] sm:%s200] %v309
                %v311 = vld [vmem:[%s207 + $0x330] sm:%s200]
                %312 = vst [vmem:[%s208 + $0x198] sm:%s200] %v311
                %v313 = vld [vmem:[%s207 + $0x340] sm:%s200]
                %314 = vst [vmem:[%s208 + $0x1a0] sm:%s200] %v313
                %v315 = vld [vmem:[%s207 + $0x350] sm:%s200]
                %316 = vst [vmem:[%s208 + $0x1a8] sm:%s200] %v315
                %v317 = vld [vmem:[%s207 + $0x360] sm:%s200]
                %318 = vst [vmem:[%s208 + $0x1b0] sm:%s200] %v317
                %v319 = vld [vmem:[%s207 + $0x370] sm:%s200]
                %320 = vst [vmem:[%s208 + $0x1b8] sm:%s200] %v319
                %v321 = vld [vmem:[%s207 + $0x380] sm:%s200]
                %322 = vst [vmem:[%s208 + $0x1c0] sm:%s200] %v321
                %v323 = vld [vmem:[%s207 + $0x390] sm:%s200]
                %324 = vst [vmem:[%s208 + $0x1c8] sm:%s200] %v323
                %v325 = vld [vmem:[%s207 + $0x3a0] sm:%s200]
                %326 = vst [vmem:[%s208 + $0x1d0] sm:%s200] %v325
                %v327 = vld [vmem:[%s207 + $0x3b0] sm:%s200]
                %328 = vst [vmem:[%s208 + $0x1d8] sm:%s200] %v327
                %v329 = vld [vmem:[%s207 + $0x3c0] sm:%s200]
                %330 = vst [vmem:[%s208 + $0x1e0] sm:%s200] %v329
                %v331 = vld [vmem:[%s207 + $0x3d0] sm:%s200]
                %332 = vst [vmem:[%s208 + $0x1e8] sm:%s200] %v331
                %v333 = vld [vmem:[%s207 + $0x3e0] sm:%s200]
                %334 = vst [vmem:[%s208 + $0x1f0] sm:%s200] %v333
                %v335 = vld [vmem:[%s207 + $0x3f0] sm:%s200]
                %336 = vst [vmem:[%s208 + $0x1f8] sm:%s200] %v335
              $region41: #{resnet_forward.28} parent=35 // loop_footer
                %s206 = sadd.s32 1, %s202
              $region42: #{resnet_forward.28} parent=35 // loop_footer_branch
                %201 = sbr.rel target = $region38
              $region43: #{resnet_forward.28} parent=35 // loop_exit
                _
            $region36: #{resnet_forward.28} parent=27 // pred_fallthru
              _
          $region28: #{resnet_forward.28} parent=23 // pred_fallthru
            _
          %477 = vnop
        $region24: #{resnet_forward.28} parent=19 // pred_fallthru
          _
        // Predicated region
        $region59: #{resnet_forward.28} parent=19 // pred_check
          %p478 = pneg %p94
        $region60: #{resnet_forward.28} parent=19 // pred_check_branch
          %480 = sbr.rel (%p478) target = $region62
        $region61: #{resnet_forward.28} parent=19 // pred_region
          %s481 = smul.u32 2, %s18
          %p482 = scmp.lt.s32.totalorder %s481, 3
          %s483 = scalar_select %p482, %s481, 3
          %s484 = scalar_lea.vmem %s2, %s483
          %s485 = smul.u32 2, %s18
        $region62: #{resnet_forward.28} parent=19 // pred_fallthru
          _
        // Predicated region
        $region63: #{resnet_forward.28} parent=19 // pred_check
          %p486 = pneg %p122
        $region64: #{resnet_forward.28} parent=19 // pred_check_branch
          %488 = sbr.rel (%p486) target = $region66
        $region65: #{resnet_forward.28} parent=19 // pred_region
          %s489 = smul.u32 2, %s18
          %p490 = scmp.lt.s32.totalorder %s17, 0
          %s491 = scalar_select %p490, %s17, 0
          %p492 = scmp.lt.s32.totalorder %s489, 3
          %s493 = scalar_select %p492, %s489, 3
          %s494 = smul.addr %s491, 4
          %s495 = sadd.s32 %s493, %s494
          %s496 = smul.addr %s495, 8
          %s497 = scalar_lea.vmem %s3, %s496
          %s498 = smul.u32 2, %s18
        $region66: #{resnet_forward.28} parent=19 // pred_fallthru
          _
      $region20: #{resnet_forward.28} parent=5 // pred_fallthru
        _
      %p499 = scmp.le.s32.totalorder 1, %s10
      %p500 = scmp.lt.s32.totalorder %s10, 3
      %p501 = pnand %p499, %p500
      %p502 = pneg %p501
      // Predicated region
      $region67: #{resnet_forward.28} parent=5 // pred_check
        _
      $region68: #{resnet_forward.28} parent=5 // pred_check_branch
        %504 = sbr.rel (%p501) target = $region70
      $region69: #{resnet_forward.28} parent=5 // pred_region
        %s505 = ssub.s32 %s10, 1
        %s506 = sand.u32 %s61, 1
        %s507 = sand.u32 %s61, 1
        %s508 = smul.addr %s507, 512
        %s509 = scalar_lea.vmem [#allocation2], %s508
        // Predicated region
        $region71: #{resnet_forward.28} parent=69 // pred_check
          %p510 = pneg %p74
        $region72: #{resnet_forward.28} parent=69 // pred_check_branch
          %512 = sbr.rel (%p510) target = $region74
        $region73: #{resnet_forward.28} parent=69 // pred_region
          _
        $region74: #{resnet_forward.28} parent=69 // pred_fallthru
          _
        %p513 = scmp.lt.s32.totalorder %s19, 0
        %s514 = scalar_select %p513, %s19, 0
        %s515 = smul.addr %s514, 4
        %s516 = smul.addr %s515, 4
        %s517 = scalar_lea.vmem %s0, %s516
        %p518 = pneg %p48
        %p519 = pneg %p45
        %s520 = sand.u32 %s61, 1
        %s521 = sand.u32 %s61, 1
        %s522 = smul.addr %s521, 512
        %s523 = scalar_lea.vmem [#allocation2], %s522
        %p524 = pneg %p74
        %p525 = pneg %p71
        %s526 = smul.u32 2, %s20
        %p527 = scmp.lt.s32.totalorder %s526, 3
        %s528 = scalar_select %p527, %s526, 3
        %s529 = scalar_lea.vmem %s2, %s528
        %p530 = pneg %p100
        %p531 = pneg %p97
        %s532 = smul.u32 2, %s20
        %p533 = scmp.lt.s32.totalorder %s19, 0
        %s534 = scalar_select %p533, %s19, 0
        %p535 = scmp.lt.s32.totalorder %s532, 3
        %s536 = scalar_select %p535, %s532, 3
        %s537 = smul.addr %s534, 4
        %s538 = sadd.s32 %s536, %s537
        %s539 = smul.addr %s538, 8
        %s540 = scalar_lea.vmem %s3, %s539
        %p541 = pneg %p128
        %p542 = pneg %p125
        %p543 = pneg %p156
        %p544 = pneg %p153
        %s545 = smul.u32 2, %s20
        %p546 = scmp.lt.s32.totalorder %s19, 0
        %s547 = scalar_select %p546, %s19, 0
        %p548 = scmp.lt.s32.totalorder %s545, 3
        %s549 = scalar_select %p548, %s545, 3
        %s550 = smul.addr %s547, 4
        %s551 = sadd.s32 %s549, %s550
        %s552 = smul.addr %s551, 8
        %s553 = scalar_lea.vmem %s4, %s552
        %p554 = scmp.lt.s32.totalorder %s19, 0
        %s555 = scalar_select %p554, %s19, 0
        %s556 = smul.addr %s555, 4
        %s557 = smul.addr %s556, 4
        %s558 = scalar_lea.vmem %s0, %s557
        %s559 = smul.u32 2, %s20
        %s560 = smul.u32 2, %s20
        %p561 = scmp.lt.s32.totalorder %s560, 3
        %s562 = scalar_select %p561, %s560, 3
        %s563 = scalar_lea.vmem %s2, %s562
        %s564 = smul.u32 2, %s20
        %s565 = smul.u32 2, %s20
        %p566 = scmp.lt.s32.totalorder %s19, 0
        %s567 = scalar_select %p566, %s19, 0
        %p568 = scmp.lt.s32.totalorder %s565, 3
        %s569 = scalar_select %p568, %s565, 3
        %s570 = smul.addr %s567, 4
        %s571 = sadd.s32 %s569, %s570
        %s572 = smul.addr %s571, 8
        %s573 = scalar_lea.vmem %s3, %s572
        %s574 = smul.u32 2, %s20
        %s575 = smul.u32 2, %s20
        %p576 = scmp.lt.s32.totalorder %s19, 0
        %s577 = scalar_select %p576, %s19, 0
        %p578 = scmp.lt.s32.totalorder %s575, 3
        %s579 = scalar_select %p578, %s575, 3
        %s580 = smul.addr %s577, 4
        %s581 = sadd.s32 %s579, %s580
        %s582 = smul.addr %s581, 8
        %s583 = scalar_lea.vmem %s4, %s582
        %s584 = smul.u32 2, %s20
        %v585 = vld [vmem:[%s558] sm:$0xff]
        %v586 = vld [vmem:[%s558 + $0x8] sm:$0xff]
        %v587 = vld [vmem:[%s509] sm:$0xff]
        %v588 = vld [vmem:[%s509 + $0x8] sm:$0xff]
        %v589 = vld [vmem:[%s509 + $0x10] sm:$0xff]
        %v590 = vld [vmem:[%s509 + $0x18] sm:$0xff]
        %v591 = vld [vmem:[%s509 + $0x20] sm:$0xff]
        %v592 = vld [vmem:[%s509 + $0x28] sm:$0xff]
        %v593 = vld [vmem:[%s509 + $0x30] sm:$0xff]
        %v594 = vld [vmem:[%s509 + $0x38] sm:$0xff]
        %v595 = vld [vmem:[%s509 + $0x40] sm:$0xff]
        %v596 = vld [vmem:[%s509 + $0x48] sm:$0xff]
        %v597 = vld [vmem:[%s509 + $0x50] sm:$0xff]
        %v598 = vld [vmem:[%s509 + $0x58] sm:$0xff]
        %v599 = vld [vmem:[%s509 + $0x60] sm:$0xff]
        %v600 = vld [vmem:[%s509 + $0x68] sm:$0xff]
        %v601 = vld [vmem:[%s509 + $0x70] sm:$0xff]
        %v602 = vld [vmem:[%s509 + $0x78] sm:$0xff]
        %v603 = vld [vmem:[%s509 + $0x80] sm:$0xff]
        %v604 = vld [vmem:[%s509 + $0x88] sm:$0xff]
        %v605 = vld [vmem:[%s509 + $0x90] sm:$0xff]
        %v606 = vld [vmem:[%s509 + $0x98] sm:$0xff]
        %v607 = vld [vmem:[%s509 + $0xa0] sm:$0xff]
        %v608 = vld [vmem:[%s509 + $0xa8] sm:$0xff]
        %v609 = vld [vmem:[%s509 + $0xb0] sm:$0xff]
        %v610 = vld [vmem:[%s509 + $0xb8] sm:$0xff]
        %v611 = vld [vmem:[%s509 + $0xc0] sm:$0xff]
        %v612 = vld [vmem:[%s509 + $0xc8] sm:$0xff]
        %v613 = vld [vmem:[%s509 + $0xd0] sm:$0xff]
        %v614 = vld [vmem:[%s509 + $0xd8] sm:$0xff]
        %v615 = vld [vmem:[%s509 + $0xe0] sm:$0xff]
        %v616 = vld [vmem:[%s509 + $0xe8] sm:$0xff]
        %v617 = vld [vmem:[%s509 + $0xf0] sm:$0xff]
        %v618 = vld [vmem:[%s509 + $0xf8] sm:$0xff]
        %v619 = vld [vmem:[%s509 + $0x100] sm:$0xff]
        %v620 = vld [vmem:[%s509 + $0x108] sm:$0xff]
        %v621 = vld [vmem:[%s509 + $0x110] sm:$0xff]
        %v622 = vld [vmem:[%s509 + $0x118] sm:$0xff]
        %v623 = vld [vmem:[%s509 + $0x120] sm:$0xff]
        %v624 = vld [vmem:[%s509 + $0x128] sm:$0xff]
        %v625 = vld [vmem:[%s509 + $0x130] sm:$0xff]
        %v626 = vld [vmem:[%s509 + $0x138] sm:$0xff]
        %v627 = vld [vmem:[%s509 + $0x140] sm:$0xff]
        %v628 = vld [vmem:[%s509 + $0x148] sm:$0xff]
        %v629 = vld [vmem:[%s509 + $0x150] sm:$0xff]
        %v630 = vld [vmem:[%s509 + $0x158] sm:$0xff]
        %v631 = vld [vmem:[%s509 + $0x160] sm:$0xff]
        %v632 = vld [vmem:[%s509 + $0x168] sm:$0xff]
        %v633 = vld [vmem:[%s509 + $0x170] sm:$0xff]
        %v634 = vld [vmem:[%s509 + $0x178] sm:$0xff]
        %v635 = vld [vmem:[%s509 + $0x180] sm:$0xff]
        %v636 = vld [vmem:[%s509 + $0x188] sm:$0xff]
        %v637 = vld [vmem:[%s509 + $0x190] sm:$0xff]
        %v638 = vld [vmem:[%s509 + $0x198] sm:$0xff]
        %v639 = vld [vmem:[%s509 + $0x1a0] sm:$0xff]
        %v640 = vld [vmem:[%s509 + $0x1a8] sm:$0xff]
        %v641 = vld [vmem:[%s509 + $0x1b0] sm:$0xff]
        %v642 = vld [vmem:[%s509 + $0x1b8] sm:$0xff]
        %v643 = vld [vmem:[%s509 + $0x1c0] sm:$0xff]
        %v644 = vld [vmem:[%s509 + $0x1c8] sm:$0xff]
        %v645 = vld [vmem:[%s509 + $0x1d0] sm:$0xff]
        %v646 = vld [vmem:[%s509 + $0x1d8] sm:$0xff]
        %v647 = vld [vmem:[%s509 + $0x1e0] sm:$0xff]
        %v648 = vld [vmem:[%s509 + $0x1e8] sm:$0xff]
        %v649 = vld [vmem:[%s509 + $0x1f0] sm:$0xff]
        %v650 = vld [vmem:[%s509 + $0x1f8] sm:$0xff]
        %v651 = vld [vmem:[%s563] sm:$0x3]
        %v653 = vperm.slane %v651, 0
        %v654 = vperm.slane %v651, 1
        %v659 = vunpack.c.l.b16 %v585
        %v660 = vunpack.c.h.b16 %v585
        %v661 = vunpack.c.l.b16 %v586
        %v662 = vunpack.c.h.b16 %v586
        %v663 = vpack.c.b16 %v659, %v659
        %v664 = vpack.c.b16 %v660, %v660
        %v665 = vpack.c.b16 %v661, %v661
        %v666 = vpack.c.b16 %v662, %v662
        %v735 = vunpack.c.l.b16 %v587
        %v736 = vunpack.c.h.b16 %v587
        %v737 = vunpack.c.l.b16 %v588
        %v738 = vunpack.c.h.b16 %v588
        %v739 = vunpack.c.l.b16 %v589
        %v740 = vunpack.c.h.b16 %v589
        %v741 = vunpack.c.l.b16 %v590
        %v742 = vunpack.c.h.b16 %v590
        %v743 = vunpack.c.l.b16 %v591
        %v744 = vunpack.c.h.b16 %v591
        %v745 = vunpack.c.l.b16 %v592
        %v746 = vunpack.c.h.b16 %v592
        %v747 = vunpack.c.l.b16 %v593
        %v748 = vunpack.c.h.b16 %v593
        %v749 = vunpack.c.l.b16 %v594
        %v750 = vunpack.c.h.b16 %v594
        %v751 = vunpack.c.l.b16 %v595
        %v752 = vunpack.c.h.b16 %v595
        %v753 = vunpack.c.l.b16 %v596
        %v754 = vunpack.c.h.b16 %v596
        %v755 = vunpack.c.l.b16 %v597
        %v756 = vunpack.c.h.b16 %v597
        %v757 = vunpack.c.l.b16 %v598
        %v758 = vunpack.c.h.b16 %v598
        %v759 = vunpack.c.l.b16 %v599
        %v760 = vunpack.c.h.b16 %v599
        %v761 = vunpack.c.l.b16 %v600
        %v762 = vunpack.c.h.b16 %v600
        %v763 = vunpack.c.l.b16 %v601
        %v764 = vunpack.c.h.b16 %v601
        %v765 = vunpack.c.l.b16 %v602
        %v766 = vunpack.c.h.b16 %v602
        %v767 = vunpack.c.l.b16 %v603
        %v768 = vunpack.c.h.b16 %v603
        %v769 = vunpack.c.l.b16 %v604
        %v770 = vunpack.c.h.b16 %v604
        %v771 = vunpack.c.l.b16 %v605
        %v772 = vunpack.c.h.b16 %v605
        %v773 = vunpack.c.l.b16 %v606
        %v774 = vunpack.c.h.b16 %v606
        %v775 = vunpack.c.l.b16 %v607
        %v776 = vunpack.c.h.b16 %v607
        %v777 = vunpack.c.l.b16 %v608
        %v778 = vunpack.c.h.b16 %v608
        %v779 = vunpack.c.l.b16 %v609
        %v780 = vunpack.c.h.b16 %v609
        %v781 = vunpack.c.l.b16 %v610
        %v782 = vunpack.c.h.b16 %v610
        %v783 = vunpack.c.l.b16 %v611
        %v784 = vunpack.c.h.b16 %v611
        %v785 = vunpack.c.l.b16 %v612
        %v786 = vunpack.c.h.b16 %v612
        %v787 = vunpack.c.l.b16 %v613
        %v788 = vunpack.c.h.b16 %v613
        %v789 = vunpack.c.l.b16 %v614
        %v790 = vunpack.c.h.b16 %v614
        %v791 = vunpack.c.l.b16 %v615
        %v792 = vunpack.c.h.b16 %v615
        %v793 = vunpack.c.l.b16 %v616
        %v794 = vunpack.c.h.b16 %v616
        %v795 = vunpack.c.l.b16 %v617
        %v796 = vunpack.c.h.b16 %v617
        %v797 = vunpack.c.l.b16 %v618
        %v798 = vunpack.c.h.b16 %v618
        %v799 = vunpack.c.l.b16 %v619
        %v800 = vunpack.c.h.b16 %v619
        %v801 = vunpack.c.l.b16 %v620
        %v802 = vunpack.c.h.b16 %v620
        %v803 = vunpack.c.l.b16 %v621
        %v804 = vunpack.c.h.b16 %v621
        %v805 = vunpack.c.l.b16 %v622
        %v806 = vunpack.c.h.b16 %v622
        %v807 = vunpack.c.l.b16 %v623
        %v808 = vunpack.c.h.b16 %v623
        %v809 = vunpack.c.l.b16 %v624
        %v810 = vunpack.c.h.b16 %v624
        %v811 = vunpack.c.l.b16 %v625
        %v812 = vunpack.c.h.b16 %v625
        %v813 = vunpack.c.l.b16 %v626
        %v814 = vunpack.c.h.b16 %v626
        %v815 = vunpack.c.l.b16 %v627
        %v816 = vunpack.c.h.b16 %v627
        %v817 = vunpack.c.l.b16 %v628
        %v818 = vunpack.c.h.b16 %v628
        %v819 = vunpack.c.l.b16 %v629
        %v820 = vunpack.c.h.b16 %v629
        %v821 = vunpack.c.l.b16 %v630
        %v822 = vunpack.c.h.b16 %v630
        %v823 = vunpack.c.l.b16 %v631
        %v824 = vunpack.c.h.b16 %v631
        %v825 = vunpack.c.l.b16 %v632
        %v826 = vunpack.c.h.b16 %v632
        %v827 = vunpack.c.l.b16 %v633
        %v828 = vunpack.c.h.b16 %v633
        %v829 = vunpack.c.l.b16 %v634
        %v830 = vunpack.c.h.b16 %v634
        %v831 = vunpack.c.l.b16 %v635
        %v832 = vunpack.c.h.b16 %v635
        %v833 = vunpack.c.l.b16 %v636
        %v834 = vunpack.c.h.b16 %v636
        %v835 = vunpack.c.l.b16 %v637
        %v836 = vunpack.c.h.b16 %v637
        %v837 = vunpack.c.l.b16 %v638
        %v838 = vunpack.c.h.b16 %v638
        %v839 = vunpack.c.l.b16 %v639
        %v840 = vunpack.c.h.b16 %v639
        %v841 = vunpack.c.l.b16 %v640
        %v842 = vunpack.c.h.b16 %v640
        %v843 = vunpack.c.l.b16 %v641
        %v844 = vunpack.c.h.b16 %v641
        %v845 = vunpack.c.l.b16 %v642
        %v846 = vunpack.c.h.b16 %v642
        %v847 = vunpack.c.l.b16 %v643
        %v848 = vunpack.c.h.b16 %v643
        %v849 = vunpack.c.l.b16 %v644
        %v850 = vunpack.c.h.b16 %v644
        %v851 = vunpack.c.l.b16 %v645
        %v852 = vunpack.c.h.b16 %v645
        %v853 = vunpack.c.l.b16 %v646
        %v854 = vunpack.c.h.b16 %v646
        %v855 = vunpack.c.l.b16 %v647
        %v856 = vunpack.c.h.b16 %v647
        %v857 = vunpack.c.l.b16 %v648
        %v858 = vunpack.c.h.b16 %v648
        %v859 = vunpack.c.l.b16 %v649
        %v860 = vunpack.c.h.b16 %v649
        %v861 = vunpack.c.l.b16 %v650
        %v862 = vunpack.c.h.b16 %v650
        %v863 = vpack.c.b16 %v737, %v735
        %v864 = vpack.c.b16 %v738, %v736
        %v865 = vpack.c.b16 %v741, %v739
        %v866 = vpack.c.b16 %v742, %v740
        %v867 = vpack.c.b16 %v745, %v743
        %v868 = vpack.c.b16 %v746, %v744
        %v869 = vpack.c.b16 %v749, %v747
        %v870 = vpack.c.b16 %v750, %v748
        %v871 = vpack.c.b16 %v753, %v751
        %v872 = vpack.c.b16 %v754, %v752
        %v873 = vpack.c.b16 %v757, %v755
        %v874 = vpack.c.b16 %v758, %v756
        %v875 = vpack.c.b16 %v761, %v759
        %v876 = vpack.c.b16 %v762, %v760
        %v877 = vpack.c.b16 %v765, %v763
        %v878 = vpack.c.b16 %v766, %v764
        %v879 = vpack.c.b16 %v769, %v767
        %v880 = vpack.c.b16 %v770, %v768
        %v881 = vpack.c.b16 %v773, %v771
        %v882 = vpack.c.b16 %v774, %v772
        %v883 = vpack.c.b16 %v777, %v775
        %v884 = vpack.c.b16 %v778, %v776
        %v885 = vpack.c.b16 %v781, %v779
        %v886 = vpack.c.b16 %v782, %v780
        %v887 = vpack.c.b16 %v785, %v783
        %v888 = vpack.c.b16 %v786, %v784
        %v889 = vpack.c.b16 %v789, %v787
        %v890 = vpack.c.b16 %v790, %v788
        %v891 = vpack.c.b16 %v793, %v791
        %v892 = vpack.c.b16 %v794, %v792
        %v893 = vpack.c.b16 %v797, %v795
        %v894 = vpack.c.b16 %v798, %v796
        %v895 = vpack.c.b16 %v801, %v799
        %v896 = vpack.c.b16 %v802, %v800
        %v897 = vpack.c.b16 %v805, %v803
        %v898 = vpack.c.b16 %v806, %v804
        %v899 = vpack.c.b16 %v809, %v807
        %v900 = vpack.c.b16 %v810, %v808
        %v901 = vpack.c.b16 %v813, %v811
        %v902 = vpack.c.b16 %v814, %v812
        %v903 = vpack.c.b16 %v817, %v815
        %v904 = vpack.c.b16 %v818, %v816
        %v905 = vpack.c.b16 %v821, %v819
        %v906 = vpack.c.b16 %v822, %v820
        %v907 = vpack.c.b16 %v825, %v823
        %v908 = vpack.c.b16 %v826, %v824
        %v909 = vpack.c.b16 %v829, %v827
        %v910 = vpack.c.b16 %v830, %v828
        %v911 = vpack.c.b16 %v833, %v831
        %v912 = vpack.c.b16 %v834, %v832
        %v913 = vpack.c.b16 %v837, %v835
        %v914 = vpack.c.b16 %v838, %v836
        %v915 = vpack.c.b16 %v841, %v839
        %v916 = vpack.c.b16 %v842, %v840
        %v917 = vpack.c.b16 %v845, %v843
        %v918 = vpack.c.b16 %v846, %v844
        %v919 = vpack.c.b16 %v849, %v847
        %v920 = vpack.c.b16 %v850, %v848
        %v921 = vpack.c.b16 %v853, %v851
        %v922 = vpack.c.b16 %v854, %v852
        %v923 = vpack.c.b16 %v857, %v855
        %v924 = vpack.c.b16 %v858, %v856
        %v925 = vpack.c.b16 %v861, %v859
        %v926 = vpack.c.b16 %v862, %v860
        %991 = vmatpush.bf16.msra.mxu0 %v877
        %992 = vmatpush.bf16.msra.mxu0 %v875
        %993 = vmatpush.bf16.msra.mxu0 %v873
        %994 = vmatpush.bf16.msra.mxu0 %v871
        %995 = vmatpush.bf16.msra.mxu0 %v869
        %996 = vmatpush.bf16.msra.mxu0 %v867
        %997 = vmatpush.bf16.msra.mxu0 %v865
        %998 = vmatpush.bf16.msra.mxu0 %v863
        %999 = vmatmul.bf16.gmra.mxu0 %v663
        %v1000 = vpop.f32.mrf.mxu0
        %v1001 = vadd.f32 %v653, %v1000
        %v1002 = vpop.f32.mrf.mxu0
        %1003 = vdwg.mxu0
        %1004 = vmatpush.bf16.msra.mxu0 %v893
        %1005 = vmatpush.bf16.msra.mxu0 %v891
        %1006 = vmatpush.bf16.msra.mxu0 %v889
        %1007 = vmatpush.bf16.msra.mxu0 %v887
        %1008 = vmatpush.bf16.msra.mxu0 %v885
        %1009 = vmatpush.bf16.msra.mxu0 %v883
        %1010 = vmatpush.bf16.msra.mxu0 %v881
        %1011 = vmatpush.bf16.msra.mxu0 %v879
        %1012 = vmatmul.bf16.gmra.mxu0 %v664
        %v1013 = vpop.f32.mrf.mxu0
        %v1014 = vadd.f32 %v1001, %v1013
        %v1015 = vpop.f32.mrf.mxu0
        %1016 = vdwg.mxu0
        %1017 = vmatpush.bf16.msra.mxu0 %v909
        %1018 = vmatpush.bf16.msra.mxu0 %v907
        %1019 = vmatpush.bf16.msra.mxu0 %v905
        %1020 = vmatpush.bf16.msra.mxu0 %v903
        %1021 = vmatpush.bf16.msra.mxu0 %v901
        %1022 = vmatpush.bf16.msra.mxu0 %v899
        %1023 = vmatpush.bf16.msra.mxu0 %v897
        %1024 = vmatpush.bf16.msra.mxu0 %v895
        %1025 = vmatmul.bf16.gmra.mxu0 %v665
        %v1026 = vpop.f32.mrf.mxu0
        %v1027 = vadd.f32 %v1014, %v1026
        %v1028 = vpop.f32.mrf.mxu0
        %1029 = vdwg.mxu0
        %1030 = vmatpush.bf16.msra.mxu0 %v925
        %1031 = vmatpush.bf16.msra.mxu0 %v923
        %1032 = vmatpush.bf16.msra.mxu0 %v921
        %1033 = vmatpush.bf16.msra.mxu0 %v919
        %1034 = vmatpush.bf16.msra.mxu0 %v917
        %1035 = vmatpush.bf16.msra.mxu0 %v915
        %1036 = vmatpush.bf16.msra.mxu0 %v913
        %1037 = vmatpush.bf16.msra.mxu0 %v911
        %1038 = vmatmul.bf16.gmra.mxu0 %v666
        %v1039 = vpop.f32.mrf.mxu0
        %v1040 = vadd.f32 %v1027, %v1039
        %v1041 = vpop.f32.mrf.mxu0
        %1042 = vdwg.mxu0
        %1043 = vmatpush.bf16.msra.mxu0 %v878
        %1044 = vmatpush.bf16.msra.mxu0 %v876
        %1045 = vmatpush.bf16.msra.mxu0 %v874
        %1046 = vmatpush.bf16.msra.mxu0 %v872
        %1047 = vmatpush.bf16.msra.mxu0 %v870
        %1048 = vmatpush.bf16.msra.mxu0 %v868
        %1049 = vmatpush.bf16.msra.mxu0 %v866
        %1050 = vmatpush.bf16.msra.mxu0 %v864
        %1051 = vmatmul.bf16.gmra.mxu0 %v663
        %v1052 = vpop.f32.mrf.mxu0
        %v1053 = vadd.f32 %v654, %v1052
        %v1054 = vpop.f32.mrf.mxu0
        %1055 = vdwg.mxu0
        %1056 = vmatpush.bf16.msra.mxu0 %v894
        %1057 = vmatpush.bf16.msra.mxu0 %v892
        %1058 = vmatpush.bf16.msra.mxu0 %v890
        %1059 = vmatpush.bf16.msra.mxu0 %v888
        %1060 = vmatpush.bf16.msra.mxu0 %v886
        %1061 = vmatpush.bf16.msra.mxu0 %v884
        %1062 = vmatpush.bf16.msra.mxu0 %v882
        %1063 = vmatpush.bf16.msra.mxu0 %v880
        %1064 = vmatmul.bf16.gmra.mxu0 %v664
        %v1065 = vpop.f32.mrf.mxu0
        %v1066 = vadd.f32 %v1053, %v1065
        %v1067 = vpop.f32.mrf.mxu0
        %1068 = vdwg.mxu0
        %1069 = vmatpush.bf16.msra.mxu0 %v910
        %1070 = vmatpush.bf16.msra.mxu0 %v908
        %1071 = vmatpush.bf16.msra.mxu0 %v906
        %1072 = vmatpush.bf16.msra.mxu0 %v904
        %1073 = vmatpush.bf16.msra.mxu0 %v902
        %1074 = vmatpush.bf16.msra.mxu0 %v900
        %1075 = vmatpush.bf16.msra.mxu0 %v898
        %1076 = vmatpush.bf16.msra.mxu0 %v896
        %1077 = vmatmul.bf16.gmra.mxu0 %v665
        %v1078 = vpop.f32.mrf.mxu0
        %v1079 = vadd.f32 %v1066, %v1078
        %v1080 = vpop.f32.mrf.mxu0
        %1081 = vdwg.mxu0
        %1082 = vmatpush.bf16.msra.mxu0 %v926
        %1083 = vmatpush.bf16.msra.mxu0 %v924
        %1084 = vmatpush.bf16.msra.mxu0 %v922
        %1085 = vmatpush.bf16.msra.mxu0 %v920
        %1086 = vmatpush.bf16.msra.mxu0 %v918
        %1087 = vmatpush.bf16.msra.mxu0 %v916
        %1088 = vmatpush.bf16.msra.mxu0 %v914
        %1089 = vmatpush.bf16.msra.mxu0 %v912
        %1090 = vmatmul.bf16.gmra.mxu0 %v666
        %v1091 = vpop.f32.mrf.mxu0
        %v1092 = vadd.f32 %v1079, %v1091
        %v1093 = vpop.f32.mrf.mxu0
        %1094 = vdwg.mxu0
        %v1095 = vld [vmem:[%s573] sm:$0xff]
        %v1096 = vld [vmem:[%s573 + $0x8] sm:$0xff]
        %v1097 = vadd.f32 %v1040, %v1095
        %v1098 = vadd.f32 %v1092, %v1096
        %v1099 = vmax.f32 %v1097, 0.0
        %v1100 = vmax.f32 %v1098, 0.0
        %1101 = vst [vmem:[%s583] sm:$0xff] %v1099
        %1102 = vst [vmem:[%s583 + $0x8] sm:$0xff] %v1100
        %s1103 = smul.u32 2, %s20
        %p1104 = scmp.lt.s32.totalorder %s19, 0
        %s1105 = scalar_select %p1104, %s19, 0
        %p1106 = scmp.lt.s32.totalorder %s1103, 3
        %s1107 = scalar_select %p1106, %s1103, 3
        %s1108 = smul.addr %s1105, 4
        %s1109 = sadd.s32 %s1107, %s1108
        %s1110 = smul.addr %s1109, 8
        %s1111 = scalar_lea.vmem %s4, %s1110
        // Predicated region
        $region75: #{resnet_forward.28} parent=69 // pred_check
          %p1112 = pneg %p153
        $region76: #{resnet_forward.28} parent=69 // pred_check_branch
          %1114 = sbr.rel (%p1112) target = $region78
        $region77: #{resnet_forward.28} parent=69 // pred_region
          %s1115 = smul.u32 2, %s20
        $region78: #{resnet_forward.28} parent=69 // pred_fallthru
          _
      $region70: #{resnet_forward.28} parent=5 // pred_fallthru
        _
      %p1116 = scmp.le.s32.totalorder 2, %s10
      // Predicated region
      $region79: #{resnet_forward.28} parent=5 // pred_check
        %p1117 = pneg %p1116
      $region80: #{resnet_forward.28} parent=5 // pred_check_branch
        %1119 = sbr.rel (%p1117) target = $region82
      $region81: #{resnet_forward.28} parent=5 // pred_region
        %s1120 = ssub.s32 %s10, 2
        // Predicated region
        $region83: #{resnet_forward.28} parent=81 // pred_check
          %p1121 = pneg %p159
        $region84: #{resnet_forward.28} parent=81 // pred_check_branch
          %1123 = sbr.rel (%p1121) target = $region86
        $region85: #{resnet_forward.28} parent=81 // pred_region
          %s1124 = smul.u32 2, %s22
          %p1125 = scmp.lt.s32.totalorder %s21, 0
          %s1126 = scalar_select %p1125, %s21, 0
          %p1127 = scmp.lt.s32.totalorder %s1124, 3
          %s1128 = scalar_select %p1127, %s1124, 3
          %s1129 = smul.addr %s1126, 4
          %s1130 = sadd.s32 %s1128, %s1129
          %s1131 = smul.addr %s1130, 8
          %s1132 = scalar_lea.vmem %s4, %s1131
        $region86: #{resnet_forward.28} parent=81 // pred_fallthru
          _
      $region82: #{resnet_forward.28} parent=5 // pred_fallthru
        _
    $region6: #{resnet_forward.28} parent=1 // loop_footer
      %s14 = sadd.s32 1, %s10
    $region7: #{resnet_forward.28} parent=1 // loop_footer_branch
      %9 = sbr.rel target = $region3
    $region8: #{resnet_forward.28} parent=1 // loop_exit
      _

// kernel: resnet_forward.29
$region0: #{resnet_forward.29}
  #allocation0 [shape = 'u32[]', space=smem, size = 0x4, offset = 0x4, fixed_abs, tag = 'smem constant byte address 0x4 - core index']
  #allocation1 [shape = 'u32[72,128]{1,0:T(1,128)}', space=vmem, size = 0x9000, scoped, tag = 'internal scratch']
  %s0 = inlined_call_operand.vmem [shape: bf16[8,512], index: 0, kind: input, shape index: {}]
  %s1 = inlined_call_operand.vmem [shape: bf16[512,512], index: 1, kind: input, shape index: {}]
  %s2 = inlined_call_operand.vmem [shape: f32[1,512], index: 2, kind: input, shape index: {}]
  %s3 = inlined_call_operand.vmem [shape: f32[8,512], index: 3, kind: output, shape index: {}]
  %s4 = sld [smem:[#allocation0]]
  $region83: #{resnet_forward.29} parent=0
    _
  %s6 = ssub.s32 1, %s4
  %s7 = scalar_select 0, %s6, %s4
  $region1: #{resnet_forward.29} parent=0
    #allocation2 [shape = 'u8[524288]{0}', space=vmem, size = 0x80000, scoped, tag = 'input window, operand 1']
    loop: start=0, step=1, limit=4
    $region2: #{resnet_forward.29} parent=1 // loop_pre_header
      _
    $region3: #{resnet_forward.29} parent=1 // loop_header
      %s9 = sphi 0, %s13
      %p10 = scmp.ge.s32.totalorder %s9, 4
      %s16 = sphi 0, %s28
      %s17 = sphi 0, %s24
      %s18 = sphi 0, %s16
      %s19 = sphi 0, %s17
      %s20 = sphi 0, %s18
      %s21 = sphi 0, %s19
      %s31 = sphi 0, %s33
      %s34 = sphi 0, %s31
      %s35 = sphi 0, %s34
      %s51 = sphi 0, %s35
      %s57 = sphi 0, %s59
      %s60 = sphi 0, %s57
      %s61 = sphi 0, %s60
      %s77 = sphi 0, %s61
      %s83 = sphi 0, %s85
      %s86 = sphi 0, %s83
      %s87 = sphi 0, %s86
      %s103 = sphi 0, %s87
      %s111 = sphi 0, %s113
      %s114 = sphi 0, %s111
      %s115 = sphi 0, %s114
      %s131 = sphi 0, %s115
    $region4: #{resnet_forward.29} parent=1 // loop_header_branch
      %12 = sbr.rel (%p10) target = $region8
    $region5: #{resnet_forward.29} parent=1 // loop_body
      %s14 = ssub.s32 %s9, 1
      %s15 = ssub.s32 %s9, 2
      %s22 = sadd.s32 1, %s17
      %p23 = scmp.ge.s32.totalorder %s22, 2
      %s24 = scalar_select %p23, 0, %s22
      %s25 = sadd.s32 1, %s16
      %s26 = scalar_select %p23, %s25, %s16
      %p27 = scmp.ge.s32.totalorder %s26, 1
      %s28 = scalar_select %p27, 0, %s26
      %s29 = ssub.s32 %s16, %s28
      %p30 = scmp.eq.s32.totalorder %s29, 0
      %s32 = sadd.s32 %s31, 1
      %s33 = scalar_select %p30, %s31, %s32
      %p36 = pneg %p30
      %p37 = scmp.eq.s32.totalorder %s9, 1
      %p38 = por %p36, %p37
      %p39 = scmp.ne.s32.totalorder %s31, %s34
      %p40 = scmp.eq.s32.totalorder %s9, 0
      %p41 = por %p39, %p40
      %p42 = scmp.ne.s32.totalorder %s31, %s34
      %p43 = scmp.eq.s32.totalorder %s14, 1
      %p44 = por %p42, %p43
      %p45 = scmp.ne.s32.totalorder %s34, %s35
      %p46 = scmp.eq.s32.totalorder %s14, 0
      %p47 = por %p45, %p46
      %p48 = scmp.ne.s32.totalorder %s34, %s35
      %p49 = scmp.eq.s32.totalorder %s15, 1
      %p50 = por %p48, %p49
      %p52 = scmp.ne.s32.totalorder %s35, %s51
      %p53 = scmp.eq.s32.totalorder %s15, 0
      %p54 = por %p52, %p53
      %s55 = ssub.s32 %s17, %s24
      %p56 = scmp.eq.s32.totalorder %s55, 0
      %s58 = sadd.s32 %s57, 1
      %s59 = scalar_select %p56, %s57, %s58
      %p62 = pneg %p56
      %p63 = scmp.eq.s32.totalorder %s9, 1
      %p64 = por %p62, %p63
      %p65 = scmp.ne.s32.totalorder %s57, %s60
      %p66 = scmp.eq.s32.totalorder %s9, 0
      %p67 = por %p65, %p66
      %p68 = scmp.ne.s32.totalorder %s57, %s60
      %p69 = scmp.eq.s32.totalorder %s14, 1
      %p70 = por %p68, %p69
      %p71 = scmp.ne.s32.totalorder %s60, %s61
      %p72 = scmp.eq.s32.totalorder %s14, 0
      %p73 = por %p71, %p72
      %p74 = scmp.ne.s32.totalorder %s60, %s61
      %p75 = scmp.eq.s32.totalorder %s15, 1
      %p76 = por %p74, %p75
      %p78 = scmp.ne.s32.totalorder %s61, %s77
      %p79 = scmp.eq.s32.totalorder %s15, 0
      %p80 = por %p78, %p79
      %s81 = ssub.s32 %s17, %s24
      %p82 = scmp.eq.s32.totalorder %s81, 0
      %s84 = sadd.s32 %s83, 1
      %s85 = scalar_select %p82, %s83, %s84
      %p88 = pneg %p82
      %p89 = scmp.eq.s32.totalorder %s9, 1
      %p90 = por %p88, %p89
      %p91 = scmp.ne.s32.totalorder %s83, %s86
      %p92 = scmp.eq.s32.totalorder %s9, 0
      %p93 = por %p91, %p92
      %p94 = scmp.ne.s32.totalorder %s83, %s86
      %p95 = scmp.eq.s32.totalorder %s14, 1
      %p96 = por %p94, %p95
      %p97 = scmp.ne.s32.totalorder %s86, %s87
      %p98 = scmp.eq.s32.totalorder %s14, 0
      %p99 = por %p97, %p98
      %p100 = scmp.ne.s32.totalorder %s86, %s87
      %p101 = scmp.eq.s32.totalorder %s15, 1
      %p102 = por %p100, %p101
      %p104 = scmp.ne.s32.totalorder %s87, %s103
      %p105 = scmp.eq.s32.totalorder %s15, 0
      %p106 = por %p104, %p105
      %s107 = ssub.s32 %s16, %s28
      %s108 = ssub.s32 %s17, %s24
      %s109 = sor.u32 %s107, %s108
      %p110 = scmp.eq.s32.totalorder %s109, 0
      %s112 = sadd.s32 %s111, 1
      %s113 = scalar_select %p110, %s111, %s112
      %p116 = pneg %p110
      %p117 = scmp.eq.s32.totalorder %s9, 1
      %p118 = por %p116, %p117
      %p119 = scmp.ne.s32.totalorder %s111, %s114
      %p120 = scmp.eq.s32.totalorder %s9, 0
      %p121 = por %p119, %p120
      %p122 = scmp.ne.s32.totalorder %s111, %s114
      %p123 = scmp.eq.s32.totalorder %s14, 1
      %p124 = por %p122, %p123
      %p125 = scmp.ne.s32.totalorder %s114, %s115
      %p126 = scmp.eq.s32.totalorder %s14, 0
      %p127 = por %p125, %p126
      %p128 = scmp.ne.s32.totalorder %s114, %s115
      %p129 = scmp.eq.s32.totalorder %s15, 1
      %p130 = por %p128, %p129
      %p132 = scmp.ne.s32.totalorder %s115, %s131
      %p133 = scmp.eq.s32.totalorder %s15, 0
      %p134 = por %p132, %p133
      %p135 = scmp.le.s32.totalorder 1, %s9
      %p136 = scmp.lt.s32.totalorder %s9, 3
      %p137 = pnand %p135, %p136
      %p138 = pneg %p137
      // Predicated region
      $region9: #{resnet_forward.29} parent=5 // pred_check
        _
      $region10: #{resnet_forward.29} parent=5 // pred_check_branch
        %140 = sbr.rel (%p137) target = $region12
      $region11: #{resnet_forward.29} parent=5 // pred_region
        %s141 = ssub.s32 %s9, 1
        // Predicated region
        $region13: #{resnet_forward.29} parent=11 // pred_check
          %p142 = pneg %p47
        $region14: #{resnet_forward.29} parent=11 // pred_check_branch
          %144 = sbr.rel (%p142) target = $region16
        $region15: #{resnet_forward.29} parent=11 // pred_region
          %p145 = scmp.lt.s32.totalorder %s18, 0
          %s146 = scalar_select %p145, %s18, 0
          %s147 = smul.addr %s146, 4
          %s148 = smul.addr %s147, 4
          %s149 = scalar_lea.vmem %s0, %s148
        $region16: #{resnet_forward.29} parent=11 // pred_fallthru
          _
      $region12: #{resnet_forward.29} parent=5 // pred_fallthru
        _
      %p150 = scmp.lt.s32.totalorder %s9, 2
      // Predicated region
      $region17: #{resnet_forward.29} parent=5 // pred_check
        %p151 = pneg %p150
      $region18: #{resnet_forward.29} parent=5 // pred_check_branch
        %153 = sbr.rel (%p151) target = $region20
      $region19: #{resnet_forward.29} parent=5 // pred_region
        // Predicated region
        $region21: #{resnet_forward.29} parent=19 // pred_check
          %p154 = pneg %p67
        $region22: #{resnet_forward.29} parent=19 // pred_check_branch
          %156 = sbr.rel (%p154) target = $region24
        $region23: #{resnet_forward.29} parent=19 // pred_region
          %s157 = sand.u32 %s57, 1
          %s158 = sand.u32 %s57, 1
          %s159 = smul.addr %s158, 512
          %s160 = scalar_lea.vmem [#allocation2], %s159
          %s161 = smul.u32 2, %s17
          %s162 = smul.addr %s161, 4
          %s163 = scalar_lea.vmem %s1, %s162
          // Predicated region
          $region25: #{resnet_forward.29} parent=23 // pred_check
            _
          $region26: #{resnet_forward.29} parent=23 // pred_check_branch
            %165 = sbr.rel (0) target = $region28
          $region27: #{resnet_forward.29} parent=23 // pred_region
            // Predicated region
            $region29: #{resnet_forward.29} parent=27 // pred_check
              _
            $region30: #{resnet_forward.29} parent=27 // pred_check_branch
              %167 = sbr.rel (0) target = $region32
            $region31: #{resnet_forward.29} parent=27 // pred_region
              // Predicated region
              $region44: #{resnet_forward.29} parent=31 // pred_check
                _
              $region45: #{resnet_forward.29} parent=31 // pred_check_branch
                %309 = sbr.rel (0) target = $region47
              $region46: #{resnet_forward.29} parent=31 // pred_region
                loop: start=0, step=1, limit=1
                $region48: #{resnet_forward.29} parent=46 // loop_pre_header
                  _
                $region49: #{resnet_forward.29} parent=46 // loop_header
                  %s311 = sphi 0, %s315
                  %p312 = scmp.ge.s32.totalorder %s311, 1
                  %s316 = sphi %s163, %s163
                  %s317 = sphi %s160, %s160
                $region50: #{resnet_forward.29} parent=46 // loop_header_branch
                  %314 = sbr.rel (%p312) target = $region54
                $region51: #{resnet_forward.29} parent=46 // loop_body
                  %v318 = vld [vmem:[%s316] sm:$0xff]
                  %319 = vst [vmem:[%s317] sm:$0xff] %v318
                  %v320 = vld [vmem:[%s316 + $0x10] sm:$0xff]
                  %321 = vst [vmem:[%s317 + $0x8] sm:$0xff] %v320
                  %v322 = vld [vmem:[%s316 + $0x20] sm:$0xff]
                  %323 = vst [vmem:[%s317 + $0x10] sm:$0xff] %v322
                  %v324 = vld [vmem:[%s316 + $0x30] sm:$0xff]
                  %325 = vst [vmem:[%s317 + $0x18] sm:$0xff] %v324
                  %v326 = vld [vmem:[%s316 + $0x40] sm:$0xff]
                  %327 = vst [vmem:[%s317 + $0x20] sm:$0xff] %v326
                  %v328 = vld [vmem:[%s316 + $0x50] sm:$0xff]
                  %329 = vst [vmem:[%s317 + $0x28] sm:$0xff] %v328
                  %v330 = vld [vmem:[%s316 + $0x60] sm:$0xff]
                  %331 = vst [vmem:[%s317 + $0x30] sm:$0xff] %v330
                  %v332 = vld [vmem:[%s316 + $0x70] sm:$0xff]
                  %333 = vst [vmem:[%s317 + $0x38] sm:$0xff] %v332
                  %v334 = vld [vmem:[%s316 + $0x80] sm:$0xff]
                  %335 = vst [vmem:[%s317 + $0x40] sm:$0xff] %v334
                  %v336 = vld [vmem:[%s316 + $0x90] sm:$0xff]
                  %337 = vst [vmem:[%s317 + $0x48] sm:$0xff] %v336
                  %v338 = vld [vmem:[%s316 + $0xa0] sm:$0xff]
                  %339 = vst [vmem:[%s317 + $0x50] sm:$0xff] %v338
                  %v340 = vld [vmem:[%s316 + $0xb0] sm:$0xff]
                  %341 = vst [vmem:[%s317 + $0x58] sm:$0xff] %v340
                  %v342 = vld [vmem:[%s316 + $0xc0] sm:$0xff]
                  %343 = vst [vmem:[%s317 + $0x60] sm:$0xff] %v342
                  %v344 = vld [vmem:[%s316 + $0xd0] sm:$0xff]
                  %345 = vst [vmem:[%s317 + $0x68] sm:$0xff] %v344
                  %v346 = vld [vmem:[%s316 + $0xe0] sm:$0xff]
                  %347 = vst [vmem:[%s317 + $0x70] sm:$0xff] %v346
                  %v348 = vld [vmem:[%s316 + $0xf0] sm:$0xff]
                  %349 = vst [vmem:[%s317 + $0x78] sm:$0xff] %v348
                  %v350 = vld [vmem:[%s316 + $0x100] sm:$0xff]
                  %351 = vst [vmem:[%s317 + $0x80] sm:$0xff] %v350
                  %v352 = vld [vmem:[%s316 + $0x110] sm:$0xff]
                  %353 = vst [vmem:[%s317 + $0x88] sm:$0xff] %v352
                  %v354 = vld [vmem:[%s316 + $0x120] sm:$0xff]
                  %355 = vst [vmem:[%s317 + $0x90] sm:$0xff] %v354
                  %v356 = vld [vmem:[%s316 + $0x130] sm:$0xff]
                  %357 = vst [vmem:[%s317 + $0x98] sm:$0xff] %v356
                  %v358 = vld [vmem:[%s316 + $0x140] sm:$0xff]
                  %359 = vst [vmem:[%s317 + $0xa0] sm:$0xff] %v358
                  %v360 = vld [vmem:[%s316 + $0x150] sm:$0xff]
                  %361 = vst [vmem:[%s317 + $0xa8] sm:$0xff] %v360
                  %v362 = vld [vmem:[%s316 + $0x160] sm:$0xff]
                  %363 = vst [vmem:[%s317 + $0xb0] sm:$0xff] %v362
                  %v364 = vld [vmem:[%s316 + $0x170] sm:$0xff]
                  %365 = vst [vmem:[%s317 + $0xb8] sm:$0xff] %v364
                  %v366 = vld [vmem:[%s316 + $0x180] sm:$0xff]
                  %367 = vst [vmem:[%s317 + $0xc0] sm:$0xff] %v366
                  %v368 = vld [vmem:[%s316 + $0x190] sm:$0xff]
                  %369 = vst [vmem:[%s317 + $0xc8] sm:$0xff] %v368
                  %v370 = vld [vmem:[%s316 + $0x1a0] sm:$0xff]
                  %371 = vst [vmem:[%s317 + $0xd0] sm:$0xff] %v370
                  %v372 = vld [vmem:[%s316 + $0x1b0] sm:$0xff]
                  %373 = vst [vmem:[%s317 + $0xd8] sm:$0xff] %v372
                  %v374 = vld [vmem:[%s316 + $0x1c0] sm:$0xff]
                  %375 = vst [vmem:[%s317 + $0xe0] sm:$0xff] %v374
                  %v376 = vld [vmem:[%s316 + $0x1d0] sm:$0xff]
                  %377 = vst [vmem:[%s317 + $0xe8] sm:$0xff] %v376
                  %v378 = vld [vmem:[%s316 + $0x1e0] sm:$0xff]
                  %379 = vst [vmem:[%s317 + $0xf0] sm:$0xff] %v378
                  %v380 = vld [vmem:[%s316 + $0x1f0] sm:$0xff]
                  %381 = vst [vmem:[%s317 + $0xf8] sm:$0xff] %v380
                  %v382 = vld [vmem:[%s316 + $0x200] sm:$0xff]
                  %383 = vst [vmem:[%s317 + $0x100] sm:$0xff] %v382
                  %v384 = vld [vmem:[%s316 + $0x210] sm:$0xff]
                  %385 = vst [vmem:[%s317 + $0x108] sm:$0xff] %v384
                  %v386 = vld [vmem:[%s316 + $0x220] sm:$0xff]
                  %387 = vst [vmem:[%s317 + $0x110] sm:$0xff] %v386
                  %v388 = vld [vmem:[%s316 + $0x230] sm:$0xff]
                  %389 = vst [vmem:[%s317 + $0x118] sm:$0xff] %v388
                  %v390 = vld [vmem:[%s316 + $0x240] sm:$0xff]
                  %391 = vst [vmem:[%s317 + $0x120] sm:$0xff] %v390
                  %v392 = vld [vmem:[%s316 + $0x250] sm:$0xff]
                  %393 = vst [vmem:[%s317 + $0x128] sm:$0xff] %v392
                  %v394 = vld [vmem:[%s316 + $0x260] sm:$0xff]
                  %395 = vst [vmem:[%s317 + $0x130] sm:$0xff] %v394
                  %v396 = vld [vmem:[%s316 + $0x270] sm:$0xff]
                  %397 = vst [vmem:[%s317 + $0x138] sm:$0xff] %v396
                  %v398 = vld [vmem:[%s316 + $0x280] sm:$0xff]
                  %399 = vst [vmem:[%s317 + $0x140] sm:$0xff] %v398
                  %v400 = vld [vmem:[%s316 + $0x290] sm:$0xff]
                  %401 = vst [vmem:[%s317 + $0x148] sm:$0xff] %v400
                  %v402 = vld [vmem:[%s316 + $0x2a0] sm:$0xff]
                  %403 = vst [vmem:[%s317 + $0x150] sm:$0xff] %v402
                  %v404 = vld [vmem:[%s316 + $0x2b0] sm:$0xff]
                  %405 = vst [vmem:[%s317 + $0x158] sm:$0xff] %v404
                  %v406 = vld [vmem:[%s316 + $0x2c0] sm:$0xff]
                  %407 = vst [vmem:[%s317 + $0x160] sm:$0xff] %v406
                  %v408 = vld [vmem:[%s316 + $0x2d0] sm:$0xff]
                  %409 = vst [vmem:[%s317 + $0x168] sm:$0xff] %v408
                  %v410 = vld [vmem:[%s316 + $0x2e0] sm:$0xff]
                  %411 = vst [vmem:[%s317 + $0x170] sm:$0xff] %v410
                  %v412 = vld [vmem:[%s316 + $0x2f0] sm:$0xff]
                  %413 = vst [vmem:[%s317 + $0x178] sm:$0xff] %v412
                  %v414 = vld [vmem:[%s316 + $0x300] sm:$0xff]
                  %415 = vst [vmem:[%s317 + $0x180] sm:$0xff] %v414
                  %v416 = vld [vmem:[%s316 + $0x310] sm:$0xff]
                  %417 = vst [vmem:[%s317 + $0x188] sm:$0xff] %v416
                  %v418 = vld [vmem:[%s316 + $0x320] sm:$0xff]
                  %419 = vst [vmem:[%s317 + $0x190] sm:$0xff] %v418
                  %v420 = vld [vmem:[%s316 + $0x330] sm:$0xff]
                  %421 = vst [vmem:[%s317 + $0x198] sm:$0xff] %v420
                  %v422 = vld [vmem:[%s316 + $0x340] sm:$0xff]
                  %423 = vst [vmem:[%s317 + $0x1a0] sm:$0xff] %v422
                  %v424 = vld [vmem:[%s316 + $0x350] sm:$0xff]
                  %425 = vst [vmem:[%s317 + $0x1a8] sm:$0xff] %v424
                  %v426 = vld [vmem:[%s316 + $0x360] sm:$0xff]
                  %427 = vst [vmem:[%s317 + $0x1b0] sm:$0xff] %v426
                  %v428 = vld [vmem:[%s316 + $0x370] sm:$0xff]
                  %429 = vst [vmem:[%s317 + $0x1b8] sm:$0xff] %v428
                  %v430 = vld [vmem:[%s316 + $0x380] sm:$0xff]
                  %431 = vst [vmem:[%s317 + $0x1c0] sm:$0xff] %v430
                  %v432 = vld [vmem:[%s316 + $0x390] sm:$0xff]
                  %433 = vst [vmem:[%s317 + $0x1c8] sm:$0xff] %v432
                  %v434 = vld [vmem:[%s316 + $0x3a0] sm:$0xff]
                  %435 = vst [vmem:[%s317 + $0x1d0] sm:$0xff] %v434
                  %v436 = vld [vmem:[%s316 + $0x3b0] sm:$0xff]
                  %437 = vst [vmem:[%s317 + $0x1d8] sm:$0xff] %v436
                  %v438 = vld [vmem:[%s316 + $0x3c0] sm:$0xff]
                  %439 = vst [vmem:[%s317 + $0x1e0] sm:$0xff] %v438
                  %v440 = vld [vmem:[%s316 + $0x3d0] sm:$0xff]
                  %441 = vst [vmem:[%s317 + $0x1e8] sm:$0xff] %v440
                  %v442 = vld [vmem:[%s316 + $0x3e0] sm:$0xff]
                  %443 = vst [vmem:[%s317 + $0x1f0] sm:$0xff] %v442
                  %v444 = vld [vmem:[%s316 + $0x3f0] sm:$0xff]
                  %445 = vst [vmem:[%s317 + $0x1f8] sm:$0xff] %v444
                $region52: #{resnet_forward.29} parent=46 // loop_footer
                  %s315 = sadd.s32 1, %s311
                $region53: #{resnet_forward.29} parent=46 // loop_footer_branch
                  %310 = sbr.rel target = $region49
                $region54: #{resnet_forward.29} parent=46 // loop_exit
                  _
              $region47: #{resnet_forward.29} parent=31 // pred_fallthru
                _
              // Predicated region
              $region55: #{resnet_forward.29} parent=31 // pred_check
                _
              $region56: #{resnet_forward.29} parent=31 // pred_check_branch
                %447 = sbr.rel target = $region58
              $region57: #{resnet_forward.29} parent=31 // pred_region
                _
              $region58: #{resnet_forward.29} parent=31 // pred_fallthru
                _
            $region32: #{resnet_forward.29} parent=27 // pred_fallthru
              _
            // Predicated region
            $region33: #{resnet_forward.29} parent=27 // pred_check
              _
            $region34: #{resnet_forward.29} parent=27 // pred_check_branch
              %169 = sbr.rel target = $region36
            $region35: #{resnet_forward.29} parent=27 // pred_region
              %s171 = ssub.s32 256, 1
              loop: start=0, step=1, limit=1
              $region37: #{resnet_forward.29} parent=35 // loop_pre_header
                _
              $region38: #{resnet_forward.29} parent=35 // loop_header
                %s173 = sphi 0, %s177
                %p174 = scmp.ge.s32.totalorder %s173, 1
                %s178 = sphi %s163, %s163
                %s179 = sphi %s160, %s160
              $region39: #{resnet_forward.29} parent=35 // loop_header_branch
                %176 = sbr.rel (%p174) target = $region43
              $region40: #{resnet_forward.29} parent=35 // loop_body
                %v180 = vld [vmem:[%s178] sm:%s171]
                %181 = vst [vmem:[%s179] sm:%s171] %v180
                %v182 = vld [vmem:[%s178 + $0x10] sm:%s171]
                %183 = vst [vmem:[%s179 + $0x8] sm:%s171] %v182
                %v184 = vld [vmem:[%s178 + $0x20] sm:%s171]
                %185 = vst [vmem:[%s179 + $0x10] sm:%s171] %v184
                %v186 = vld [vmem:[%s178 + $0x30] sm:%s171]
                %187 = vst [vmem:[%s179 + $0x18] sm:%s171] %v186
                %v188 = vld [vmem:[%s178 + $0x40] sm:%s171]
                %189 = vst [vmem:[%s179 + $0x20] sm:%s171] %v188
                %v190 = vld [vmem:[%s178 + $0x50] sm:%s171]
                %191 = vst [vmem:[%s179 + $0x28] sm:%s171] %v190
                %v192 = vld [vmem:[%s178 + $0x60] sm:%s171]
                %193 = vst [vmem:[%s179 + $0x30] sm:%s171] %v192
                %v194 = vld [vmem:[%s178 + $0x70] sm:%s171]
                %195 = vst [vmem:[%s179 + $0x38] sm:%s171] %v194
                %v196 = vld [vmem:[%s178 + $0x80] sm:%s171]
                %197 = vst [vmem:[%s179 + $0x40] sm:%s171] %v196
                %v198 = vld [vmem:[%s178 + $0x90] sm:%s171]
                %199 = vst [vmem:[%s179 + $0x48] sm:%s171] %v198
                %v200 = vld [vmem:[%s178 + $0xa0] sm:%s171]
                %201 = vst [vmem:[%s179 + $0x50] sm:%s171] %v200
                %v202 = vld [vmem:[%s178 + $0xb0] sm:%s171]
                %203 = vst [vmem:[%s179 + $0x58] sm:%s171] %v202
                %v204 = vld [vmem:[%s178 + $0xc0] sm:%s171]
                %205 = vst [vmem:[%s179 + $0x60] sm:%s171] %v204
                %v206 = vld [vmem:[%s178 + $0xd0] sm:%s171]
                %207 = vst [vmem:[%s179 + $0x68] sm:%s171] %v206
                %v208 = vld [vmem:[%s178 + $0xe0] sm:%s171]
                %209 = vst [vmem:[%s179 + $0x70] sm:%s171] %v208
                %v210 = vld [vmem:[%s178 + $0xf0] sm:%s171]
                %211 = vst [vmem:[%s179 + $0x78] sm:%s171] %v210
                %v212 = vld [vmem:[%s178 + $0x100] sm:%s171]
                %213 = vst [vmem:[%s179 + $0x80] sm:%s171] %v212
                %v214 = vld [vmem:[%s178 + $0x110] sm:%s171]
                %215 = vst [vmem:[%s179 + $0x88] sm:%s171] %v214
                %v216 = vld [vmem:[%s178 + $0x120] sm:%s171]
                %217 = vst [vmem:[%s179 + $0x90] sm:%s171] %v216
                %v218 = vld [vmem:[%s178 + $0x130] sm:%s171]
                %219 = vst [vmem:[%s179 + $0x98] sm:%s171] %v218
                %v220 = vld [vmem:[%s178 + $0x140] sm:%s171]
                %221 = vst [vmem:[%s179 + $0xa0] sm:%s171] %v220
                %v222 = vld [vmem:[%s178 + $0x150] sm:%s171]
                %223 = vst [vmem:[%s179 + $0xa8] sm:%s171] %v222
                %v224 = vld [vmem:[%s178 + $0x160] sm:%s171]
                %225 = vst [vmem:[%s179 + $0xb0] sm:%s171] %v224
                %v226 = vld [vmem:[%s178 + $0x170] sm:%s171]
                %227 = vst [vmem:[%s179 + $0xb8] sm:%s171] %v226
                %v228 = vld [vmem:[%s178 + $0x180] sm:%s171]
                %229 = vst [vmem:[%s179 + $0xc0] sm:%s171] %v228
                %v230 = vld [vmem:[%s178 + $0x190] sm:%s171]
                %231 = vst [vmem:[%s179 + $0xc8] sm:%s171] %v230
                %v232 = vld [vmem:[%s178 + $0x1a0] sm:%s171]
                %233 = vst [vmem:[%s179 + $0xd0] sm:%s171] %v232
                %v234 = vld [vmem:[%s178 + $0x1b0] sm:%s171]
                %235 = vst [vmem:[%s179 + $0xd8] sm:%s171] %v234
                %v236 = vld [vmem:[%s178 + $0x1c0] sm:%s171]
                %237 = vst [vmem:[%s179 + $0xe0] sm:%s171] %v236
                %v238 = vld [vmem:[%s178 + $0x1d0] sm:%s171]
                %239 = vst [vmem:[%s179 + $0xe8] sm:%s171] %v238
                %v240 = vld [vmem:[%s178 + $0x1e0] sm:%s171]
                %241 = vst [vmem:[%s179 + $0xf0] sm:%s171] %v240
                %v242 = vld [vmem:[%s178 + $0x1f0] sm:%s171]
                %243 = vst [vmem:[%s179 + $0xf8] sm:%s171] %v242
                %v244 = vld [vmem:[%s178 + $0x200] sm:%s171]
                %245 = vst [vmem:[%s179 + $0x100] sm:%s171] %v244
                %v246 = vld [vmem:[%s178 + $0x210] sm:%s171]
                %247 = vst [vmem:[%s179 + $0x108] sm:%s171] %v246
                %v248 = vld [vmem:[%s178 + $0x220] sm:%s171]
                %249 = vst [vmem:[%s179 + $0x110] sm:%s171] %v248
                %v250 = vld [vmem:[%s178 + $0x230] sm:%s171]
                %251 = vst [vmem:[%s179 + $0x118] sm:%s171] %v250
                %v252 = vld [vmem:[%s178 + $0x240] sm:%s171]
                %253 = vst [vmem:[%s179 + $0x120] sm:%s171] %v252
                %v254 = vld [vmem:[%s178 + $0x250] sm:%s171]
                %255 = vst [vmem:[%s179 + $0x128] sm:%s171] %v254
                %v256 = vld [vmem:[%s178 + $0x260] sm:%s171]
                %257 = vst [vmem:[%s179 + $0x130] sm:%s171] %v256
                %v258 = vld [vmem:[%s178 + $0x270] sm:%s171]
                %259 = vst [vmem:[%s179 + $0x138] sm:%s171] %v258
                %v260 = vld [vmem:[%s178 + $0x280] sm:%s171]
                %261 = vst [vmem:[%s179 + $0x140] sm:%s171] %v260
                %v262 = vld [vmem:[%s178 + $0x290] sm:%s171]
                %263 = vst [vmem:[%s179 + $0x148] sm:%s171] %v262
                %v264 = vld [vmem:[%s178 + $0x2a0] sm:%s171]
                %265 = vst [vmem:[%s179 + $0x150] sm:%s171] %v264
                %v266 = vld [vmem:[%s178 + $0x2b0] sm:%s171]
                %267 = vst [vmem:[%s179 + $0x158] sm:%s171] %v266
                %v268 = vld [vmem:[%s178 + $0x2c0] sm:%s171]
                %269 = vst [vmem:[%s179 + $0x160] sm:%s171] %v268
                %v270 = vld [vmem:[%s178 + $0x2d0] sm:%s171]
                %271 = vst [vmem:[%s179 + $0x168] sm:%s171] %v270
                %v272 = vld [vmem:[%s178 + $0x2e0] sm:%s171]
                %273 = vst [vmem:[%s179 + $0x170] sm:%s171] %v272
                %v274 = vld [vmem:[%s178 + $0x2f0] sm:%s171]
                %275 = vst [vmem:[%s179 + $0x178] sm:%s171] %v274
                %v276 = vld [vmem:[%s178 + $0x300] sm:%s171]
                %277 = vst [vmem:[%s179 + $0x180] sm:%s171] %v276
                %v278 = vld [vmem:[%s178 + $0x310] sm:%s171]
                %279 = vst [vmem:[%s179 + $0x188] sm:%s171] %v278
                %v280 = vld [vmem:[%s178 + $0x320] sm:%s171]
                %281 = vst [vmem:[%s179 + $0x190] sm:%s171] %v280
                %v282 = vld [vmem:[%s178 + $0x330] sm:%s171]
                %283 = vst [vmem:[%s179 + $0x198] sm:%s171] %v282
                %v284 = vld [vmem:[%s178 + $0x340] sm:%s171]
                %285 = vst [vmem:[%s179 + $0x1a0] sm:%s171] %v284
                %v286 = vld [vmem:[%s178 + $0x350] sm:%s171]
                %287 = vst [vmem:[%s179 + $0x1a8] sm:%s171] %v286
                %v288 = vld [vmem:[%s178 + $0x360] sm:%s171]
                %289 = vst [vmem:[%s179 + $0x1b0] sm:%s171] %v288
                %v290 = vld [vmem:[%s178 + $0x370] sm:%s171]
                %291 = vst [vmem:[%s179 + $0x1b8] sm:%s171] %v290
                %v292 = vld [vmem:[%s178 + $0x380] sm:%s171]
                %293 = vst [vmem:[%s179 + $0x1c0] sm:%s171] %v292
                %v294 = vld [vmem:[%s178 + $0x390] sm:%s171]
                %295 = vst [vmem:[%s179 + $0x1c8] sm:%s171] %v294
                %v296 = vld [vmem:[%s178 + $0x3a0] sm:%s171]
                %297 = vst [vmem:[%s179 + $0x1d0] sm:%s171] %v296
                %v298 = vld [vmem:[%s178 + $0x3b0] sm:%s171]
                %299 = vst [vmem:[%s179 + $0x1d8] sm:%s171] %v298
                %v300 = vld [vmem:[%s178 + $0x3c0] sm:%s171]
                %301 = vst [vmem:[%s179 + $0x1e0] sm:%s171] %v300
                %v302 = vld [vmem:[%s178 + $0x3d0] sm:%s171]
                %303 = vst [vmem:[%s179 + $0x1e8] sm:%s171] %v302
                %v304 = vld [vmem:[%s178 + $0x3e0] sm:%s171]
                %305 = vst [vmem:[%s179 + $0x1f0] sm:%s171] %v304
                %v306 = vld [vmem:[%s178 + $0x3f0] sm:%s171]
                %307 = vst [vmem:[%s179 + $0x1f8] sm:%s171] %v306
              $region41: #{resnet_forward.29} parent=35 // loop_footer
                %s177 = sadd.s32 1, %s173
              $region42: #{resnet_forward.29} parent=35 // loop_footer_branch
                %172 = sbr.rel target = $region38
              $region43: #{resnet_forward.29} parent=35 // loop_exit
                _
            $region36: #{resnet_forward.29} parent=27 // pred_fallthru
              _
          $region28: #{resnet_forward.29} parent=23 // pred_fallthru
            _
          %448 = vnop
        $region24: #{resnet_forward.29} parent=19 // pred_fallthru
          _
        // Predicated region
        $region59: #{resnet_forward.29} parent=19 // pred_check
          %p449 = pneg %p93
        $region60: #{resnet_forward.29} parent=19 // pred_check_branch
          %451 = sbr.rel (%p449) target = $region62
        $region61: #{resnet_forward.29} parent=19 // pred_region
          %s452 = smul.u32 2, %s17
          %p453 = scmp.lt.s32.totalorder %s452, 3
          %s454 = scalar_select %p453, %s452, 3
          %s455 = scalar_lea.vmem %s2, %s454
          %s456 = smul.u32 2, %s17
        $region62: #{resnet_forward.29} parent=19 // pred_fallthru
          _
      $region20: #{resnet_forward.29} parent=5 // pred_fallthru
        _
      %p457 = scmp.le.s32.totalorder 1, %s9
      %p458 = scmp.lt.s32.totalorder %s9, 3
      %p459 = pnand %p457, %p458
      %p460 = pneg %p459
      // Predicated region
      $region63: #{resnet_forward.29} parent=5 // pred_check
        _
      $region64: #{resnet_forward.29} parent=5 // pred_check_branch
        %462 = sbr.rel (%p459) target = $region66
      $region65: #{resnet_forward.29} parent=5 // pred_region
        %s463 = ssub.s32 %s9, 1
        %s464 = sand.u32 %s60, 1
        %s465 = sand.u32 %s60, 1
        %s466 = smul.addr %s465, 512
        %s467 = scalar_lea.vmem [#allocation2], %s466
        // Predicated region
        $region67: #{resnet_forward.29} parent=65 // pred_check
          %p468 = pneg %p73
        $region68: #{resnet_forward.29} parent=65 // pred_check_branch
          %470 = sbr.rel (%p468) target = $region70
        $region69: #{resnet_forward.29} parent=65 // pred_region
          _
        $region70: #{resnet_forward.29} parent=65 // pred_fallthru
          _
        %p471 = scmp.lt.s32.totalorder %s18, 0
        %s472 = scalar_select %p471, %s18, 0
        %s473 = smul.addr %s472, 4
        %s474 = smul.addr %s473, 4
        %s475 = scalar_lea.vmem %s0, %s474
        %p476 = pneg %p47
        %p477 = pneg %p44
        %s478 = sand.u32 %s60, 1
        %s479 = sand.u32 %s60, 1
        %s480 = smul.addr %s479, 512
        %s481 = scalar_lea.vmem [#allocation2], %s480
        %p482 = pneg %p73
        %p483 = pneg %p70
        %s484 = smul.u32 2, %s19
        %p485 = scmp.lt.s32.totalorder %s484, 3
        %s486 = scalar_select %p485, %s484, 3
        %s487 = scalar_lea.vmem %s2, %s486
        %p488 = pneg %p99
        %p489 = pneg %p96
        %p490 = pneg %p127
        %p491 = pneg %p124
        %s492 = smul.u32 2, %s19
        %p493 = scmp.lt.s32.totalorder %s18, 0
        %s494 = scalar_select %p493, %s18, 0
        %p495 = scmp.lt.s32.totalorder %s492, 3
        %s496 = scalar_select %p495, %s492, 3
        %s497 = smul.addr %s494, 4
        %s498 = sadd.s32 %s496, %s497
        %s499 = smul.addr %s498, 8
        %s500 = scalar_lea.vmem %s3, %s499
        %p501 = scmp.lt.s32.totalorder %s18, 0
        %s502 = scalar_select %p501, %s18, 0
        %s503 = smul.addr %s502, 4
        %s504 = smul.addr %s503, 4
        %s505 = scalar_lea.vmem %s0, %s504
        %s506 = smul.u32 2, %s19
        %s507 = smul.u32 2, %s19
        %p508 = scmp.lt.s32.totalorder %s507, 3
        %s509 = scalar_select %p508, %s507, 3
        %s510 = scalar_lea.vmem %s2, %s509
        %s511 = smul.u32 2, %s19
        %s512 = smul.u32 2, %s19
        %p513 = scmp.lt.s32.totalorder %s18, 0
        %s514 = scalar_select %p513, %s18, 0
        %p515 = scmp.lt.s32.totalorder %s512, 3
        %s516 = scalar_select %p515, %s512, 3
        %s517 = smul.addr %s514, 4
        %s518 = sadd.s32 %s516, %s517
        %s519 = smul.addr %s518, 8
        %s520 = scalar_lea.vmem %s3, %s519
        %s521 = smul.u32 2, %s19
        %v522 = vld [vmem:[%s505] sm:$0xff]
        %v523 = vld [vmem:[%s505 + $0x8] sm:$0xff]
        %v524 = vld [vmem:[%s467] sm:$0xff]
        %v525 = vld [vmem:[%s467 + $0x8] sm:$0xff]
        %v526 = vld [vmem:[%s467 + $0x10] sm:$0xff]
        %v527 = vld [vmem:[%s467 + $0x18] sm:$0xff]
        %v528 = vld [vmem:[%s467 + $0x20] sm:$0xff]
        %v529 = vld [vmem:[%s467 + $0x28] sm:$0xff]
        %v530 = vld [vmem:[%s467 + $0x30] sm:$0xff]
        %v531 = vld [vmem:[%s467 + $0x38] sm:$0xff]
        %v532 = vld [vmem:[%s467 + $0x40] sm:$0xff]
        %v533 = vld [vmem:[%s467 + $0x48] sm:$0xff]
        %v534 = vld [vmem:[%s467 + $0x50] sm:$0xff]
        %v535 = vld [vmem:[%s467 + $0x58] sm:$0xff]
        %v536 = vld [vmem:[%s467 + $0x60] sm:$0xff]
        %v537 = vld [vmem:[%s467 + $0x68] sm:$0xff]
        %v538 = vld [vmem:[%s467 + $0x70] sm:$0xff]
        %v539 = vld [vmem:[%s467 + $0x78] sm:$0xff]
        %v540 = vld [vmem:[%s467 + $0x80] sm:$0xff]
        %v541 = vld [vmem:[%s467 + $0x88] sm:$0xff]
        %v542 = vld [vmem:[%s467 + $0x90] sm:$0xff]
        %v543 = vld [vmem:[%s467 + $0x98] sm:$0xff]
        %v544 = vld [vmem:[%s467 + $0xa0] sm:$0xff]
        %v545 = vld [vmem:[%s467 + $0xa8] sm:$0xff]
        %v546 = vld [vmem:[%s467 + $0xb0] sm:$0xff]
        %v547 = vld [vmem:[%s467 + $0xb8] sm:$0xff]
        %v548 = vld [vmem:[%s467 + $0xc0] sm:$0xff]
        %v549 = vld [vmem:[%s467 + $0xc8] sm:$0xff]
        %v550 = vld [vmem:[%s467 + $0xd0] sm:$0xff]
        %v551 = vld [vmem:[%s467 + $0xd8] sm:$0xff]
        %v552 = vld [vmem:[%s467 + $0xe0] sm:$0xff]
        %v553 = vld [vmem:[%s467 + $0xe8] sm:$0xff]
        %v554 = vld [vmem:[%s467 + $0xf0] sm:$0xff]
        %v555 = vld [vmem:[%s467 + $0xf8] sm:$0xff]
        %v556 = vld [vmem:[%s467 + $0x100] sm:$0xff]
        %v557 = vld [vmem:[%s467 + $0x108] sm:$0xff]
        %v558 = vld [vmem:[%s467 + $0x110] sm:$0xff]
        %v559 = vld [vmem:[%s467 + $0x118] sm:$0xff]
        %v560 = vld [vmem:[%s467 + $0x120] sm:$0xff]
        %v561 = vld [vmem:[%s467 + $0x128] sm:$0xff]
        %v562 = vld [vmem:[%s467 + $0x130] sm:$0xff]
        %v563 = vld [vmem:[%s467 + $0x138] sm:$0xff]
        %v564 = vld [vmem:[%s467 + $0x140] sm:$0xff]
        %v565 = vld [vmem:[%s467 + $0x148] sm:$0xff]
        %v566 = vld [vmem:[%s467 + $0x150] sm:$0xff]
        %v567 = vld [vmem:[%s467 + $0x158] sm:$0xff]
        %v568 = vld [vmem:[%s467 + $0x160] sm:$0xff]
        %v569 = vld [vmem:[%s467 + $0x168] sm:$0xff]
        %v570 = vld [vmem:[%s467 + $0x170] sm:$0xff]
        %v571 = vld [vmem:[%s467 + $0x178] sm:$0xff]
        %v572 = vld [vmem:[%s467 + $0x180] sm:$0xff]
        %v573 = vld [vmem:[%s467 + $0x188] sm:$0xff]
        %v574 = vld [vmem:[%s467 + $0x190] sm:$0xff]
        %v575 = vld [vmem:[%s467 + $0x198] sm:$0xff]
        %v576 = vld [vmem:[%s467 + $0x1a0] sm:$0xff]
        %v577 = vld [vmem:[%s467 + $0x1a8] sm:$0xff]
        %v578 = vld [vmem:[%s467 + $0x1b0] sm:$0xff]
        %v579 = vld [vmem:[%s467 + $0x1b8] sm:$0xff]
        %v580 = vld [vmem:[%s467 + $0x1c0] sm:$0xff]
        %v581 = vld [vmem:[%s467 + $0x1c8] sm:$0xff]
        %v582 = vld [vmem:[%s467 + $0x1d0] sm:$0xff]
        %v583 = vld [vmem:[%s467 + $0x1d8] sm:$0xff]
        %v584 = vld [vmem:[%s467 + $0x1e0] sm:$0xff]
        %v585 = vld [vmem:[%s467 + $0x1e8] sm:$0xff]
        %v586 = vld [vmem:[%s467 + $0x1f0] sm:$0xff]
        %v587 = vld [vmem:[%s467 + $0x1f8] sm:$0xff]
        %v588 = vld [vmem:[%s510] sm:$0x3]
        %v590 = vperm.slane %v588, 0
        %v591 = vperm.slane %v588, 1
        %v596 = vunpack.c.l.b16 %v522
        %v597 = vunpack.c.h.b16 %v522
        %v598 = vunpack.c.l.b16 %v523
        %v599 = vunpack.c.h.b16 %v523
        %v600 = vpack.c.b16 %v596, %v596
        %v601 = vpack.c.b16 %v597, %v597
        %v602 = vpack.c.b16 %v598, %v598
        %v603 = vpack.c.b16 %v599, %v599
        %v672 = vunpack.c.l.b16 %v524
        %v673 = vunpack.c.h.b16 %v524
        %v674 = vunpack.c.l.b16 %v525
        %v675 = vunpack.c.h.b16 %v525
        %v676 = vunpack.c.l.b16 %v526
        %v677 = vunpack.c.h.b16 %v526
        %v678 = vunpack.c.l.b16 %v527
        %v679 = vunpack.c.h.b16 %v527
        %v680 = vunpack.c.l.b16 %v528
        %v681 = vunpack.c.h.b16 %v528
        %v682 = vunpack.c.l.b16 %v529
        %v683 = vunpack.c.h.b16 %v529
        %v684 = vunpack.c.l.b16 %v530
        %v685 = vunpack.c.h.b16 %v530
        %v686 = vunpack.c.l.b16 %v531
        %v687 = vunpack.c.h.b16 %v531
        %v688 = vunpack.c.l.b16 %v532
        %v689 = vunpack.c.h.b16 %v532
        %v690 = vunpack.c.l.b16 %v533
        %v691 = vunpack.c.h.b16 %v533
        %v692 = vunpack.c.l.b16 %v534
        %v693 = vunpack.c.h.b16 %v534
        %v694 = vunpack.c.l.b16 %v535
        %v695 = vunpack.c.h.b16 %v535
        %v696 = vunpack.c.l.b16 %v536
        %v697 = vunpack.c.h.b16 %v536
        %v698 = vunpack.c.l.b16 %v537
        %v699 = vunpack.c.h.b16 %v537
        %v700 = vunpack.c.l.b16 %v538
        %v701 = vunpack.c.h.b16 %v538
        %v702 = vunpack.c.l.b16 %v539
        %v703 = vunpack.c.h.b16 %v539
        %v704 = vunpack.c.l.b16 %v540
        %v705 = vunpack.c.h.b16 %v540
        %v706 = vunpack.c.l.b16 %v541
        %v707 = vunpack.c.h.b16 %v541
        %v708 = vunpack.c.l.b16 %v542
        %v709 = vunpack.c.h.b16 %v542
        %v710 = vunpack.c.l.b16 %v543
        %v711 = vunpack.c.h.b16 %v543
        %v712 = vunpack.c.l.b16 %v544
        %v713 = vunpack.c.h.b16 %v544
        %v714 = vunpack.c.l.b16 %v545
        %v715 = vunpack.c.h.b16 %v545
        %v716 = vunpack.c.l.b16 %v546
        %v717 = vunpack.c.h.b16 %v546
        %v718 = vunpack.c.l.b16 %v547
        %v719 = vunpack.c.h.b16 %v547
        %v720 = vunpack.c.l.b16 %v548
        %v721 = vunpack.c.h.b16 %v548
        %v722 = vunpack.c.l.b16 %v549
        %v723 = vunpack.c.h.b16 %v549
        %v724 = vunpack.c.l.b16 %v550
        %v725 = vunpack.c.h.b16 %v550
        %v726 = vunpack.c.l.b16 %v551
        %v727 = vunpack.c.h.b16 %v551
        %v728 = vunpack.c.l.b16 %v552
        %v729 = vunpack.c.h.b16 %v552
        %v730 = vunpack.c.l.b16 %v553
        %v731 = vunpack.c.h.b16 %v553
        %v732 = vunpack.c.l.b16 %v554
        %v733 = vunpack.c.h.b16 %v554
        %v734 = vunpack.c.l.b16 %v555
        %v735 = vunpack.c.h.b16 %v555
        %v736 = vunpack.c.l.b16 %v556
        %v737 = vunpack.c.h.b16 %v556
        %v738 = vunpack.c.l.b16 %v557
        %v739 = vunpack.c.h.b16 %v557
        %v740 = vunpack.c.l.b16 %v558
        %v741 = vunpack.c.h.b16 %v558
        %v742 = vunpack.c.l.b16 %v559
        %v743 = vunpack.c.h.b16 %v559
        %v744 = vunpack.c.l.b16 %v560
        %v745 = vunpack.c.h.b16 %v560
        %v746 = vunpack.c.l.b16 %v561
        %v747 = vunpack.c.h.b16 %v561
        %v748 = vunpack.c.l.b16 %v562
        %v749 = vunpack.c.h.b16 %v562
        %v750 = vunpack.c.l.b16 %v563
        %v751 = vunpack.c.h.b16 %v563
        %v752 = vunpack.c.l.b16 %v564
        %v753 = vunpack.c.h.b16 %v564
        %v754 = vunpack.c.l.b16 %v565
        %v755 = vunpack.c.h.b16 %v565
        %v756 = vunpack.c.l.b16 %v566
        %v757 = vunpack.c.h.b16 %v566
        %v758 = vunpack.c.l.b16 %v567
        %v759 = vunpack.c.h.b16 %v567
        %v760 = vunpack.c.l.b16 %v568
        %v761 = vunpack.c.h.b16 %v568
        %v762 = vunpack.c.l.b16 %v569
        %v763 = vunpack.c.h.b16 %v569
        %v764 = vunpack.c.l.b16 %v570
        %v765 = vunpack.c.h.b16 %v570
        %v766 = vunpack.c.l.b16 %v571
        %v767 = vunpack.c.h.b16 %v571
        %v768 = vunpack.c.l.b16 %v572
        %v769 = vunpack.c.h.b16 %v572
        %v770 = vunpack.c.l.b16 %v573
        %v771 = vunpack.c.h.b16 %v573
        %v772 = vunpack.c.l.b16 %v574
        %v773 = vunpack.c.h.b16 %v574
        %v774 = vunpack.c.l.b16 %v575
        %v775 = vunpack.c.h.b16 %v575
        %v776 = vunpack.c.l.b16 %v576
        %v777 = vunpack.c.h.b16 %v576
        %v778 = vunpack.c.l.b16 %v577
        %v779 = vunpack.c.h.b16 %v577
        %v780 = vunpack.c.l.b16 %v578
        %v781 = vunpack.c.h.b16 %v578
        %v782 = vunpack.c.l.b16 %v579
        %v783 = vunpack.c.h.b16 %v579
        %v784 = vunpack.c.l.b16 %v580
        %v785 = vunpack.c.h.b16 %v580
        %v786 = vunpack.c.l.b16 %v581
        %v787 = vunpack.c.h.b16 %v581
        %v788 = vunpack.c.l.b16 %v582
        %v789 = vunpack.c.h.b16 %v582
        %v790 = vunpack.c.l.b16 %v583
        %v791 = vunpack.c.h.b16 %v583
        %v792 = vunpack.c.l.b16 %v584
        %v793 = vunpack.c.h.b16 %v584
        %v794 = vunpack.c.l.b16 %v585
        %v795 = vunpack.c.h.b16 %v585
        %v796 = vunpack.c.l.b16 %v586
        %v797 = vunpack.c.h.b16 %v586
        %v798 = vunpack.c.l.b16 %v587
        %v799 = vunpack.c.h.b16 %v587
        %v800 = vpack.c.b16 %v674, %v672
        %v801 = vpack.c.b16 %v675, %v673
        %v802 = vpack.c.b16 %v678, %v676
        %v803 = vpack.c.b16 %v679, %v677
        %v804 = vpack.c.b16 %v682, %v680
        %v805 = vpack.c.b16 %v683, %v681
        %v806 = vpack.c.b16 %v686, %v684
        %v807 = vpack.c.b16 %v687, %v685
        %v808 = vpack.c.b16 %v690, %v688
        %v809 = vpack.c.b16 %v691, %v689
        %v810 = vpack.c.b16 %v694, %v692
        %v811 = vpack.c.b16 %v695, %v693
        %v812 = vpack.c.b16 %v698, %v696
        %v813 = vpack.c.b16 %v699, %v697
        %v814 = vpack.c.b16 %v702, %v700
        %v815 = vpack.c.b16 %v703, %v701
        %v816 = vpack.c.b16 %v706, %v704
        %v817 = vpack.c.b16 %v707, %v705
        %v818 = vpack.c.b16 %v710, %v708
        %v819 = vpack.c.b16 %v711, %v709
        %v820 = vpack.c.b16 %v714, %v712
        %v821 = vpack.c.b16 %v715, %v713
        %v822 = vpack.c.b16 %v718, %v716
        %v823 = vpack.c.b16 %v719, %v717
        %v824 = vpack.c.b16 %v722, %v720
        %v825 = vpack.c.b16 %v723, %v721
        %v826 = vpack.c.b16 %v726, %v724
        %v827 = vpack.c.b16 %v727, %v725
        %v828 = vpack.c.b16 %v730, %v728
        %v829 = vpack.c.b16 %v731, %v729
        %v830 = vpack.c.b16 %v734, %v732
        %v831 = vpack.c.b16 %v735, %v733
        %v832 = vpack.c.b16 %v738, %v736
        %v833 = vpack.c.b16 %v739, %v737
        %v834 = vpack.c.b16 %v742, %v740
        %v835 = vpack.c.b16 %v743, %v741
        %v836 = vpack.c.b16 %v746, %v744
        %v837 = vpack.c.b16 %v747, %v745
        %v838 = vpack.c.b16 %v750, %v748
        %v839 = vpack.c.b16 %v751, %v749
        %v840 = vpack.c.b16 %v754, %v752
        %v841 = vpack.c.b16 %v755, %v753
        %v842 = vpack.c.b16 %v758, %v756
        %v843 = vpack.c.b16 %v759, %v757
        %v844 = vpack.c.b16 %v762, %v760
        %v845 = vpack.c.b16 %v763, %v761
        %v846 = vpack.c.b16 %v766, %v764
        %v847 = vpack.c.b16 %v767, %v765
        %v848 = vpack.c.b16 %v770, %v768
        %v849 = vpack.c.b16 %v771, %v769
        %v850 = vpack.c.b16 %v774, %v772
        %v851 = vpack.c.b16 %v775, %v773
        %v852 = vpack.c.b16 %v778, %v776
        %v853 = vpack.c.b16 %v779, %v777
        %v854 = vpack.c.b16 %v782, %v780
        %v855 = vpack.c.b16 %v783, %v781
        %v856 = vpack.c.b16 %v786, %v784
        %v857 = vpack.c.b16 %v787, %v785
        %v858 = vpack.c.b16 %v790, %v788
        %v859 = vpack.c.b16 %v791, %v789
        %v860 = vpack.c.b16 %v794, %v792
        %v861 = vpack.c.b16 %v795, %v793
        %v862 = vpack.c.b16 %v798, %v796
        %v863 = vpack.c.b16 %v799, %v797
        %928 = vmatpush.bf16.msra.mxu0 %v814
        %929 = vmatpush.bf16.msra.mxu0 %v812
        %930 = vmatpush.bf16.msra.mxu0 %v810
        %931 = vmatpush.bf16.msra.mxu0 %v808
        %932 = vmatpush.bf16.msra.mxu0 %v806
        %933 = vmatpush.bf16.msra.mxu0 %v804
        %934 = vmatpush.bf16.msra.mxu0 %v802
        %935 = vmatpush.bf16.msra.mxu0 %v800
        %936 = vmatmul.bf16.gmra.mxu0 %v600
        %v937 = vpop.f32.mrf.mxu0
        %v938 = vadd.f32 %v590, %v937
        %v939 = vpop.f32.mrf.mxu0
        %940 = vdwg.mxu0
        %941 = vmatpush.bf16.msra.mxu0 %v830
        %942 = vmatpush.bf16.msra.mxu0 %v828
        %943 = vmatpush.bf16.msra.mxu0 %v826
        %944 = vmatpush.bf16.msra.mxu0 %v824
        %945 = vmatpush.bf16.msra.mxu0 %v822
        %946 = vmatpush.bf16.msra.mxu0 %v820
        %947 = vmatpush.bf16.msra.mxu0 %v818
        %948 = vmatpush.bf16.msra.mxu0 %v816
        %949 = vmatmul.bf16.gmra.mxu0 %v601
        %v950 = vpop.f32.mrf.mxu0
        %v951 = vadd.f32 %v938, %v950
        %v952 = vpop.f32.mrf.mxu0
        %953 = vdwg.mxu0
        %954 = vmatpush.bf16.msra.mxu0 %v846
        %955 = vmatpush.bf16.msra.mxu0 %v844
        %956 = vmatpush.bf16.msra.mxu0 %v842
        %957 = vmatpush.bf16.msra.mxu0 %v840
        %958 = vmatpush.bf16.msra.mxu0 %v838
        %959 = vmatpush.bf16.msra.mxu0 %v836
        %960 = vmatpush.bf16.msra.mxu0 %v834
        %961 = vmatpush.bf16.msra.mxu0 %v832
        %962 = vmatmul.bf16.gmra.mxu0 %v602
        %v963 = vpop.f32.mrf.mxu0
        %v964 = vadd.f32 %v951, %v963
        %v965 = vpop.f32.mrf.mxu0
        %966 = vdwg.mxu0
        %967 = vmatpush.bf16.msra.mxu0 %v862
        %968 = vmatpush.bf16.msra.mxu0 %v860
        %969 = vmatpush.bf16.msra.mxu0 %v858
        %970 = vmatpush.bf16.msra.mxu0 %v856
        %971 = vmatpush.bf16.msra.mxu0 %v854
        %972 = vmatpush.bf16.msra.mxu0 %v852
        %973 = vmatpush.bf16.msra.mxu0 %v850
        %974 = vmatpush.bf16.msra.mxu0 %v848
        %975 = vmatmul.bf16.gmra.mxu0 %v603
        %v976 = vpop.f32.mrf.mxu0
        %v977 = vadd.f32 %v964, %v976
        %v978 = vpop.f32.mrf.mxu0
        %979 = vdwg.mxu0
        %980 = vmatpush.bf16.msra.mxu0 %v815
        %981 = vmatpush.bf16.msra.mxu0 %v813
        %982 = vmatpush.bf16.msra.mxu0 %v811
        %983 = vmatpush.bf16.msra.mxu0 %v809
        %984 = vmatpush.bf16.msra.mxu0 %v807
        %985 = vmatpush.bf16.msra.mxu0 %v805
        %986 = vmatpush.bf16.msra.mxu0 %v803
        %987 = vmatpush.bf16.msra.mxu0 %v801
        %988 = vmatmul.bf16.gmra.mxu0 %v600
        %v989 = vpop.f32.mrf.mxu0
        %v990 = vadd.f32 %v591, %v989
        %v991 = vpop.f32.mrf.mxu0
        %992 = vdwg.mxu0
        %993 = vmatpush.bf16.msra.mxu0 %v831
        %994 = vmatpush.bf16.msra.mxu0 %v829
        %995 = vmatpush.bf16.msra.mxu0 %v827
        %996 = vmatpush.bf16.msra.mxu0 %v825
        %997 = vmatpush.bf16.msra.mxu0 %v823
        %998 = vmatpush.bf16.msra.mxu0 %v821
        %999 = vmatpush.bf16.msra.mxu0 %v819
        %1000 = vmatpush.bf16.msra.mxu0 %v817
        %1001 = vmatmul.bf16.gmra.mxu0 %v601
        %v1002 = vpop.f32.mrf.mxu0
        %v1003 = vadd.f32 %v990, %v1002
        %v1004 = vpop.f32.mrf.mxu0
        %1005 = vdwg.mxu0
        %1006 = vmatpush.bf16.msra.mxu0 %v847
        %1007 = vmatpush.bf16.msra.mxu0 %v845
        %1008 = vmatpush.bf16.msra.mxu0 %v843
        %1009 = vmatpush.bf16.msra.mxu0 %v841
        %1010 = vmatpush.bf16.msra.mxu0 %v839
        %1011 = vmatpush.bf16.msra.mxu0 %v837
        %1012 = vmatpush.bf16.msra.mxu0 %v835
        %1013 = vmatpush.bf16.msra.mxu0 %v833
        %1014 = vmatmul.bf16.gmra.mxu0 %v602
        %v1015 = vpop.f32.mrf.mxu0
        %v1016 = vadd.f32 %v1003, %v1015
        %v1017 = vpop.f32.mrf.mxu0
        %1018 = vdwg.mxu0
        %1019 = vmatpush.bf16.msra.mxu0 %v863
        %1020 = vmatpush.bf16.msra.mxu0 %v861
        %1021 = vmatpush.bf16.msra.mxu0 %v859
        %1022 = vmatpush.bf16.msra.mxu0 %v857
        %1023 = vmatpush.bf16.msra.mxu0 %v855
        %1024 = vmatpush.bf16.msra.mxu0 %v853
        %1025 = vmatpush.bf16.msra.mxu0 %v851
        %1026 = vmatpush.bf16.msra.mxu0 %v849
        %1027 = vmatmul.bf16.gmra.mxu0 %v603
        %v1028 = vpop.f32.mrf.mxu0
        %v1029 = vadd.f32 %v1016, %v1028
        %v1030 = vpop.f32.mrf.mxu0
        %1031 = vdwg.mxu0
        %1032 = vst [vmem:[%s520] sm:$0xff] %v977
        %1033 = vst [vmem:[%s520 + $0x8] sm:$0xff] %v1029
        %s1034 = smul.u32 2, %s19
        %p1035 = scmp.lt.s32.totalorder %s18, 0
        %s1036 = scalar_select %p1035, %s18, 0
        %p1037 = scmp.lt.s32.totalorder %s1034, 3
        %s1038 = scalar_select %p1037, %s1034, 3
        %s1039 = smul.addr %s1036, 4
        %s1040 = sadd.s32 %s1038, %s1039
        %s1041 = smul.addr %s1040, 8
        %s1042 = scalar_lea.vmem %s3, %s1041
        // Predicated region
        $region71: #{resnet_forward.29} parent=65 // pred_check
          %p1043 = pneg %p124
        $region72: #{resnet_forward.29} parent=65 // pred_check_branch
          %1045 = sbr.rel (%p1043) target = $region74
        $region73: #{resnet_forward.29} parent=65 // pred_region
          %s1046 = smul.u32 2, %s19
        $region74: #{resnet_forward.29} parent=65 // pred_fallthru
          _
      $region66: #{resnet_forward.29} parent=5 // pred_fallthru
        _
      %p1047 = scmp.le.s32.totalorder 2, %s9
      // Predicated region
      $region75: #{resnet_forward.29} parent=5 // pred_check
        %p1048 = pneg %p1047
      $region76: #{resnet_forward.29} parent=5 // pred_check_branch
        %1050 = sbr.rel (%p1048) target = $region78
      $region77: #{resnet_forward.29} parent=5 // pred_region
        %s1051 = ssub.s32 %s9, 2
        // Predicated region
        $region79: #{resnet_forward.29} parent=77 // pred_check
          %p1052 = pneg %p130
        $region80: #{resnet_forward.29} parent=77 // pred_check_branch
          %1054 = sbr.rel (%p1052) target = $region82
        $region81: #{resnet_forward.29} parent=77 // pred_region
          %s1055 = smul.u32 2, %s21
          %p1056 = scmp.lt.s32.totalorder %s20, 0
          %s1057 = scalar_select %p1056, %s20, 0
          %p1058 = scmp.lt.s32.totalorder %s1055, 3
          %s1059 = scalar_select %p1058, %s1055, 3
          %s1060 = smul.addr %s1057, 4
          %s1061 = sadd.s32 %s1059, %s1060
          %s1062 = smul.addr %s1061, 8
          %s1063 = scalar_lea.vmem %s3, %s1062
        $region82: #{resnet_forward.29} parent=77 // pred_fallthru
          _
      $region78: #{resnet_forward.29} parent=5 // pred_fallthru
        _
    $region6: #{resnet_forward.29} parent=1 // loop_footer
      %s13 = sadd.s32 1, %s9
    $region7: #{resnet_forward.29} parent=1 // loop_footer_branch
      %8 = sbr.rel target = $region3
    $region8: #{resnet_forward.29} parent=1 // loop_exit
      _

</llo_original>
